<compile_context>
chip_gen: v6e
topology: v6e:2x2x1
jax: 0.10.0
libtpu: 0.0.40
codegen_flags: <defaults>
</compile_context>

<pallas_src>
import functools

import jax
import jax.numpy as jnp
from jax.experimental import pallas as pl
from jax.experimental.pallas import tpu as pltpu

EPS = 1e-5                    # PyTorch BatchNorm2d default eps
MXU_DTYPE = jnp.bfloat16      # bf16 MXU operands (native on v5e/v6e/v7x); f32 accumulate
MAXCIN3 = 48                  # largest 3x3-conv input channel count in this block
PATCH_LANES = 3 * MAXCIN3     # dx-patch lane width (covers cin = 32 and 48)


# ----------------------------------------------------------------------------
# Fused Pallas kernel (one grid step == one image of the batch)
# ----------------------------------------------------------------------------

def inception_res_a_kernel(x_ref, ws_ref, bs_ref,
                           w21_ref, b21_ref, w31_ref, b31_ref,
                           w32_ref, b32_ref, wl_ref, bl_ref,
                           o_ref, rp_ref, *, h, w):
    hw = h * w

    # Zero ONLY the never-written conv halo rows (top/bottom image-row halo) of the
    # row-patch scratch; every other stripe is rewritten before it is read, so no
    # full-buffer zero fill (and no stale / NaN VMEM ever reaches the MXU).
    halo_zeros = jnp.zeros((w, rp_ref.shape[1]), MXU_DTYPE)
    rp_ref[0:w, :] = halo_zeros
    rp_ref[(h + 1) * w:(h + 2) * w, :] = halo_zeros

    # Column-boundary masks for the horizontal (dx) shifts, hoisted out of conv3x3.
    col = jax.lax.broadcasted_iota(jnp.int32, (hw, 1), 0) % w
    first_col = col == 0
    last_col = col == (w - 1)

    # x = relu(x), fused (no separate relu kernel / HBM round trip).
    xr = jnp.maximum(x_ref[0], 0.0)                      # (HW, C) f32

    # The three branch-stem 1x1 ConvBlocks (in->32 each) fused into ONE matmul with
    # densely packed output columns 0/32/64 (N = 96 instead of 384).
    stems = jnp.dot(xr.astype(MXU_DTYPE), ws_ref[...],
                    preferred_element_type=jnp.float32)
    stems = jnp.maximum(stems + bs_ref[...], 0.0)        # (HW, 96) f32
    b1 = stems[:, 0:32]      # branch 1 output
    t2 = stems[:, 32:64]     # branch 2 stem
    t3 = stems[:, 64:96]     # branch 3 stem

    def conv3x3(x2d, cin, w_ref, b_ref):
        # 3x3 "same" ConvBlock: materialize only the 3 horizontal (dx) shifts into the
        # row-halo patch (dense K = 3*cin), then 3 accumulating MXU matmuls whose A
        # operand is a dy-shifted, sublane-aligned row window of that patch.
        x_ctr = x2d.astype(MXU_DTYPE)
        x_left = jnp.where(first_col, 0.0,
                           pltpu.roll(x2d, 1, axis=0)).astype(MXU_DTYPE)
        x_right = jnp.where(last_col, 0.0,
                            pltpu.roll(x2d, hw - 1, axis=0)).astype(MXU_DTYPE)
        rp_ref[w:w + hw, 0:cin] = x_left                 # kernel column kx = 0
        rp_ref[w:w + hw, cin:2 * cin] = x_ctr            # kernel column kx = 1
        rp_ref[w:w + hw, 2 * cin:3 * cin] = x_right      # kernel column kx = 2
        k3 = 3 * cin
        acc = jnp.dot(rp_ref[0:hw, 0:k3], w_ref[0:k3, :],
                      preferred_element_type=jnp.float32)
        acc += jnp.dot(rp_ref[w:w + hw, 0:k3], w_ref[k3:2 * k3, :],
                       preferred_element_type=jnp.float32)
        acc += jnp.dot(rp_ref[2 * w:2 * w + hw, 0:k3], w_ref[2 * k3:3 * k3, :],
                       preferred_element_type=jnp.float32)
        return jnp.maximum(acc + b_ref[...], 0.0)        # folded BN + ReLU (f32)

    b2 = conv3x3(t2, 32, w21_ref, b21_ref)               # ConvBlock(32,32,3x3) -> (HW,32)
    t3b = conv3x3(t3, 32, w31_ref, b31_ref)              # ConvBlock(32,48,3x3) -> (HW,48)
    b3 = conv3x3(t3b, 48, w32_ref, b32_ref)              # ConvBlock(48,64,3x3) -> (HW,64)

    # Final 1x1 ConvBlock over concat([b1, b2, b3]); the concat is elided by splitting
    # the contraction over the three branch outputs.
    y = (jnp.dot(b1.astype(MXU_DTYPE), wl_ref[0:32, :],
                 preferred_element_type=jnp.float32)
         + jnp.dot(b2.astype(MXU_DTYPE), wl_ref[32:64, :],
                   preferred_element_type=jnp.float32)
         + jnp.dot(b3.astype(MXU_DTYPE), wl_ref[64:128, :],
                   preferred_element_type=jnp.float32))
    y = jnp.maximum(y + bl_ref[...], 0.0)                # ConvBlock's folded BN + ReLU
    o_ref[0] = jnp.maximum(xr + y, 0.0).astype(o_ref.dtype)   # residual add + ReLU


# ----------------------------------------------------------------------------
# Wrapper (single pallas_call for the whole block)
# ----------------------------------------------------------------------------

@jax.jit
def inception_res_a_forward(x, params):
    N, H, W, C = x.shape
    HW = H * W

    ws, bs = params["stem_w"], params["stem_b"]
    w21, b21 = params["c2_1"]
    w31, b31 = params["c3_1"]
    w32, b32 = params["c3_2"]
    wl, bl = params["c_last"]
    weights = (ws, bs, w21, b21, w31, b31, w32, b32, wl, bl)

    def const_spec(a):
        return pl.BlockSpec(a.shape, lambda n, nd=a.ndim: (0,) * nd)

    kernel = functools.partial(inception_res_a_kernel, h=H, w=W)

    out = pl.pallas_call(
        kernel,
        out_shape=jax.ShapeDtypeStruct((N, HW, C), jnp.float32),
        grid=(N,),
        in_specs=[pl.BlockSpec((1, HW, C), lambda n: (n, 0, 0))]
                 + [const_spec(a) for a in weights],
        out_specs=pl.BlockSpec((1, HW, C), lambda n: (n, 0, 0)),
        scratch_shapes=[
            pltpu.VMEM(((H + 2) * W, PATCH_LANES), MXU_DTYPE),   # dx row-halo patch
        ],
        compiler_params=pltpu.CompilerParams(
            dimension_semantics=("parallel",),                   # batch across cores
            vmem_limit_bytes=32 * 1024 * 1024,
        ),
    )(x.reshape(N, HW, C), *weights)
    return out.reshape(N, H, W, C)


# ----------------------------------------------------------------------------
# Parameter setup (deterministic, synthetic; BN folded into conv, eval mode)
# ----------------------------------------------------------------------------

def make_convblock_params(key, cin, cout, k):
    """Returns BN-folded f32 weights (k,k,cin,cout) [HWIO] and bias (cout,)."""
    ks = jax.random.split(key, 5)
    fan_in = k * k * cin
    w = jax.random.normal(ks[0], (k, k, cin, cout), jnp.float32) / jnp.sqrt(fan_in)
    gamma = 1.0 + 0.1 * jax.random.normal(ks[1], (cout,), jnp.float32)
    beta = 0.1 * jax.random.normal(ks[2], (cout,), jnp.float32)
    mean = 0.1 * jax.random.normal(ks[3], (cout,), jnp.float32)
    var = jax.nn.softplus(jax.random.normal(ks[4], (cout,), jnp.float32)) + 0.5
    scale = gamma / jnp.sqrt(var + EPS)
    w_eff = (w * scale).astype(jnp.float32)              # broadcast over Cout
    b_eff = (beta - scale * mean).astype(jnp.float32)    # Conv2d has bias=False
    return w_eff, b_eff


def make_inception_res_a_params(key, in_size):
    keys = jax.random.split(key, 7)
    ref = {
        "c1_0": make_convblock_params(keys[0], in_size, 32, 1),
        "c2_0": make_convblock_params(keys[1], in_size, 32, 1),
        "c3_0": make_convblock_params(keys[2], in_size, 32, 1),
        "c2_1": make_convblock_params(keys[3], 32, 32, 3),
        "c3_1": make_convblock_params(keys[4], 32, 48, 3),
        "c3_2": make_convblock_params(keys[5], 48, 64, 3),
        "c_last": make_convblock_params(keys[6], 128, in_size, 1),
    }

    # Kernel-side packing: bf16 MXU-operand weights (cast ONCE here, not per grid
    # step); biases stay f32 for the f32 epilogue.
    def pack1x1(p):
        w, b = p
        return w.reshape(w.shape[2], w.shape[3]).astype(MXU_DTYPE), b.reshape(1, -1)

    def pack3x3(p):
        # Row order (ky, kx, cin) matches the kernel's per-dy weight slices and the
        # [left | center | right] lane packing of the dx row-patch.  No zero rows.
        w, b = p
        kh, kw, cin, cout = w.shape
        return w.reshape(kh * kw * cin, cout).astype(MXU_DTYPE), b.reshape(1, -1)

    stem_w = jnp.concatenate(
        [pack1x1(ref[k])[0] for k in ("c1_0", "c2_0", "c3_0")], axis=1)   # (Cin, 96) bf16
    stem_b = jnp.concatenate(
        [pack1x1(ref[k])[1] for k in ("c1_0", "c2_0", "c3_0")], axis=1)   # (1, 96) f32

    kern = {
        "stem_w": stem_w,
        "stem_b": stem_b,
        "c2_1": pack3x3(ref["c2_1"]),
        "c3_1": pack3x3(ref["c3_1"]),
        "c3_2": pack3x3(ref["c3_2"]),
        "c_last": pack1x1(ref["c_last"]),
    }
    return kern, ref


# ----------------------------------------------------------------------------
# Pure-JAX f32 reference (eval-mode semantics) for a tolerance check
# ----------------------------------------------------------------------------

def _convblock_ref(x, p):
    w, b = p
    y = jax.lax.conv_general_dilated(
        x, w, window_strides=(1, 1), padding="SAME",
        dimension_numbers=("NHWC", "HWIO", "NHWC"),
        precision=jax.lax.Precision.HIGHEST)
    return jax.nn.relu(y + b)


def inception_res_a_ref(x, ref):
    xr = jax.nn.relu(x)
    b1 = _convblock_ref(xr, ref["c1_0"])
    b2 = _convblock_ref(_convblock_ref(xr, ref["c2_0"]), ref["c2_1"])
    b3 = _convblock_ref(
        _convblock_ref(_convblock_ref(xr, ref["c3_0"]), ref["c3_1"]), ref["c3_2"])
    y = _convblock_ref(jnp.concatenate([b1, b2, b3], axis=-1), ref["c_last"])
    return jax.nn.relu(xr + y)


# ----------------------------------------------------------------------------
# Main
# ----------------------------------------------------------------------------

if __name__ == "__main__":
    key = jax.random.PRNGKey(0)
    k_x, k_p = jax.random.split(key)

    N, H, W, Cin = 2, 16, 16, 4   # NHWC; equivalent to NCHW x of shape (2, 4, 16, 16)
    x = jax.random.normal(k_x, (N, H, W, Cin), jnp.float32)
    params, ref_params = make_inception_res_a_params(k_p, Cin)

    out = jax.block_until_ready(inception_res_a_forward(x, params))
    assert out.shape == x.shape, (out.shape, x.shape)
    assert out.dtype == jnp.float32

    # bf16 MXU operands with f32 accumulation: tolerance-based check vs f32 reference.
    expected = inception_res_a_ref(x, ref_params)
    max_err = float(jnp.max(jnp.abs(out - expected)))
    assert bool(jnp.allclose(out, expected, rtol=5e-2, atol=5e-2)), max_err

    print("KERNEL_OK")
</pallas_src>

<mosaic_0001>
module attributes {stable_mosaic.version = 11 : i64} {
  func.func @inception_res_a_kernel(%arg0: i32, %arg1: memref<1x256x4xf32, #tpu.memory_space<vmem>>, %arg2: memref<4x96xbf16, #tpu.memory_space<vmem>>, %arg3: memref<1x96xf32, #tpu.memory_space<vmem>>, %arg4: memref<288x32xbf16, #tpu.memory_space<vmem>>, %arg5: memref<1x32xf32, #tpu.memory_space<vmem>>, %arg6: memref<288x48xbf16, #tpu.memory_space<vmem>>, %arg7: memref<1x48xf32, #tpu.memory_space<vmem>>, %arg8: memref<432x64xbf16, #tpu.memory_space<vmem>>, %arg9: memref<1x64xf32, #tpu.memory_space<vmem>>, %arg10: memref<128x4xbf16, #tpu.memory_space<vmem>>, %arg11: memref<1x4xf32, #tpu.memory_space<vmem>>, %arg12: memref<1x256x4xf32, #tpu.memory_space<vmem>>, %arg13: memref<288x144xbf16, #tpu.memory_space<vmem>>) attributes {dimension_semantics = [#tpu.dimension_semantics<parallel>], iteration_bounds = array<i64: 2>, scalar_prefetch = 0 : i64, scratch_operands = 1 : i64, tpu.core_type = #tpu.core_type<tc>, window_params = [{transform_indices = @transform_0, window_bounds = array<i64: 1, 256, 4>}, {pipeline_mode = #tpu.pipeline_mode<synchronous>, transform_indices = @transform_1, window_bounds = array<i64: 4, 96>}, {pipeline_mode = #tpu.pipeline_mode<synchronous>, transform_indices = @transform_2, window_bounds = array<i64: 1, 96>}, {pipeline_mode = #tpu.pipeline_mode<synchronous>, transform_indices = @transform_3, window_bounds = array<i64: 288, 32>}, {pipeline_mode = #tpu.pipeline_mode<synchronous>, transform_indices = @transform_4, window_bounds = array<i64: 1, 32>}, {pipeline_mode = #tpu.pipeline_mode<synchronous>, transform_indices = @transform_5, window_bounds = array<i64: 288, 48>}, {pipeline_mode = #tpu.pipeline_mode<synchronous>, transform_indices = @transform_6, window_bounds = array<i64: 1, 48>}, {pipeline_mode = #tpu.pipeline_mode<synchronous>, transform_indices = @transform_7, window_bounds = array<i64: 432, 64>}, {pipeline_mode = #tpu.pipeline_mode<synchronous>, transform_indices = @transform_8, window_bounds = array<i64: 1, 64>}, {pipeline_mode = #tpu.pipeline_mode<synchronous>, transform_indices = @transform_9, window_bounds = array<i64: 128, 4>}, {pipeline_mode = #tpu.pipeline_mode<synchronous>, transform_indices = @transform_10, window_bounds = array<i64: 1, 4>}, {transform_indices = @transform_11, window_bounds = array<i64: 1, 256, 4>}]} {
    %cst = arith.constant 0.000000e+00 : bf16
    %0 = vector.broadcast %cst : bf16 to vector<16x144xbf16>
    %c0 = arith.constant 0 : index
    %c0_0 = arith.constant 0 : index
    %1 = vector.load %arg13[%c0, %c0_0] : memref<288x144xbf16, #tpu.memory_space<vmem>>, vector<16x144xbf16>
    tpu.vector_store %arg13[%c0, %c0_0], %0 {strides = array<i32>} : memref<288x144xbf16, #tpu.memory_space<vmem>>, vector<16x144xbf16>,
    %c272 = arith.constant 272 : index
    %c0_1 = arith.constant 0 : index
    %2 = vector.load %arg13[%c272, %c0_1] : memref<288x144xbf16, #tpu.memory_space<vmem>>, vector<16x144xbf16>
    tpu.vector_store %arg13[%c272, %c0_1], %0 {strides = array<i32>} : memref<288x144xbf16, #tpu.memory_space<vmem>>, vector<16x144xbf16>,
    %3 = tpu.iota {dimensions = array<i32: 0>} : vector<256x1xi32>
    %c16_i32 = arith.constant 16 : i32
    %c0_i32 = arith.constant 0 : i32
    %4 = arith.cmpi eq, %c16_i32, %c0_i32 : i32
    %c1_i32 = arith.constant 1 : i32
    %5 = arith.select %4, %c1_i32, %c16_i32 : i32
    %6 = vector.broadcast %5 : i32 to vector<256x1xi32>
    %7 = arith.remsi %3, %6 : vector<256x1xi32>
    %c0_i32_2 = arith.constant 0 : i32
    %8 = vector.broadcast %c0_i32_2 : i32 to vector<256x1xi32>
    %9 = arith.cmpi ne, %7, %8 : vector<256x1xi32>
    %c0_i32_3 = arith.constant 0 : i32
    %10 = vector.broadcast %c0_i32_3 : i32 to vector<256x1xi32>
    %11 = arith.cmpi slt, %7, %10 : vector<256x1xi32>
    %c0_i32_4 = arith.constant 0 : i32
    %12 = arith.cmpi slt, %5, %c0_i32_4 : i32
    %13 = vector.broadcast %12 : i1 to vector<256x1xi1>
    %14 = vector.broadcast %13 : vector<256x1xi1> to vector<256x1xi1>
    %15 = arith.xori %11, %14 : vector<256x1xi1>
    %16 = arith.andi %15, %9 : vector<256x1xi1>
    %17 = vector.broadcast %5 : i32 to vector<256x1xi32>
    %18 = arith.addi %7, %17 : vector<256x1xi32>
    %19 = arith.select %16, %18, %7 : vector<256x1xi1>, vector<256x1xi32>
    %c0_i32_5 = arith.constant 0 : i32
    %20 = vector.broadcast %c0_i32_5 : i32 to vector<256x1xi32>
    %21 = arith.cmpi eq, %19, %20 : vector<256x1xi32>
    %c15_i32 = arith.constant 15 : i32
    %22 = vector.broadcast %c15_i32 : i32 to vector<256x1xi32>
    %23 = arith.cmpi eq, %19, %22 : vector<256x1xi32>
    %c0_6 = arith.constant 0 : index
    %c0_7 = arith.constant 0 : index
    %c0_8 = arith.constant 0 : index
    %24 = vector.load %arg1[%c0_6, %c0_7, %c0_8] : memref<1x256x4xf32, #tpu.memory_space<vmem>>, vector<1x256x4xf32>
    %25 = vector.shape_cast %24 : vector<1x256x4xf32> to vector<256x4xf32>
    %cst_9 = arith.constant 0.000000e+00 : f32
    %26 = vector.broadcast %cst_9 : f32 to vector<256x4xf32>
    %27 = arith.maximumf %25, %26 : vector<256x4xf32>
    %28 = arith.truncf %27 : vector<256x4xf32> to vector<256x4xbf16>
    %c0_10 = arith.constant 0 : index
    %c0_11 = arith.constant 0 : index
    %29 = vector.load %arg2[%c0_10, %c0_11] : memref<4x96xbf16, #tpu.memory_space<vmem>>, vector<4x96xbf16>
    %cst_12 = arith.constant dense<0.000000e+00> : vector<256x96xf32>
    %30 = tpu.matmul %28, %29, %cst_12 {dimension_numbers = #tpu.dot_dimension_numbers<[1], [0], [0], [1], [0, 0, 1, 1], [], []>} : vector<256x4xbf16>, vector<4x96xbf16>, vector<256x96xf32> -> vector<256x96xf32>
    %c0_13 = arith.constant 0 : index
    %c0_14 = arith.constant 0 : index
    %31 = vector.load %arg3[%c0_13, %c0_14] : memref<1x96xf32, #tpu.memory_space<vmem>>, vector<1x96xf32>
    %32 = vector.broadcast %31 : vector<1x96xf32> to vector<256x96xf32>
    %33 = arith.addf %30, %32 : vector<256x96xf32>
    %cst_15 = arith.constant 0.000000e+00 : f32
    %34 = vector.broadcast %cst_15 : f32 to vector<256x96xf32>
    %35 = arith.maximumf %33, %34 : vector<256x96xf32>
    %36 = vector.extract_strided_slice %35 {offsets = [0, 0], sizes = [256, 32], strides = [1, 1]} : vector<256x96xf32> to vector<256x32xf32>
    %37 = vector.extract_strided_slice %35 {offsets = [0, 32], sizes = [256, 32], strides = [1, 1]} : vector<256x96xf32> to vector<256x32xf32>
    %38 = vector.extract_strided_slice %35 {offsets = [0, 64], sizes = [256, 32], strides = [1, 1]} : vector<256x96xf32> to vector<256x32xf32>
    %39 = arith.truncf %37 : vector<256x32xf32> to vector<256x32xbf16>
    %c1_i32_16 = arith.constant 1 : i32
    %40 = tpu.dynamic_rotate %37 by %c1_i32_16 dim 0 : vector<256x32xf32>, i32 -> vector<256x32xf32>
    %cst_17 = arith.constant 0.000000e+00 : f32
    %41 = vector.shape_cast %21 : vector<256x1xi1> to vector<256x1xi1>
    %42 = vector.broadcast %41 : vector<256x1xi1> to vector<256x32xi1>
    %43 = vector.broadcast %cst_17 : f32 to vector<256x32xf32>
    %44 = arith.select %42, %43, %40 : vector<256x32xi1>, vector<256x32xf32>
    %45 = arith.truncf %44 : vector<256x32xf32> to vector<256x32xbf16>
    %c255_i32 = arith.constant 255 : i32
    %46 = tpu.dynamic_rotate %37 by %c255_i32 dim 0 : vector<256x32xf32>, i32 -> vector<256x32xf32>
    %cst_18 = arith.constant 0.000000e+00 : f32
    %47 = vector.shape_cast %23 : vector<256x1xi1> to vector<256x1xi1>
    %48 = vector.broadcast %47 : vector<256x1xi1> to vector<256x32xi1>
    %49 = vector.broadcast %cst_18 : f32 to vector<256x32xf32>
    %50 = arith.select %48, %49, %46 : vector<256x32xi1>, vector<256x32xf32>
    %51 = arith.truncf %50 : vector<256x32xf32> to vector<256x32xbf16>
    %c16 = arith.constant 16 : index
    %c0_19 = arith.constant 0 : index
    %52 = vector.load %arg13[%c16, %c0_19] : memref<288x144xbf16, #tpu.memory_space<vmem>>, vector<256x32xbf16>
    tpu.vector_store %arg13[%c16, %c0_19], %45 {strides = array<i32>} : memref<288x144xbf16, #tpu.memory_space<vmem>>, vector<256x32xbf16>,
    %c16_20 = arith.constant 16 : index
    %c32 = arith.constant 32 : index
    %53 = vector.load %arg13[%c16_20, %c32] : memref<288x144xbf16, #tpu.memory_space<vmem>>, vector<256x32xbf16>
    tpu.vector_store %arg13[%c16_20, %c32], %39 {strides = array<i32>} : memref<288x144xbf16, #tpu.memory_space<vmem>>, vector<256x32xbf16>,
    %c16_21 = arith.constant 16 : index
    %c64 = arith.constant 64 : index
    %54 = vector.load %arg13[%c16_21, %c64] : memref<288x144xbf16, #tpu.memory_space<vmem>>, vector<256x32xbf16>
    tpu.vector_store %arg13[%c16_21, %c64], %51 {strides = array<i32>} : memref<288x144xbf16, #tpu.memory_space<vmem>>, vector<256x32xbf16>,
    %c0_22 = arith.constant 0 : index
    %c0_23 = arith.constant 0 : index
    %55 = vector.load %arg13[%c0_22, %c0_23] : memref<288x144xbf16, #tpu.memory_space<vmem>>, vector<256x96xbf16>
    %c0_24 = arith.constant 0 : index
    %c0_25 = arith.constant 0 : index
    %56 = vector.load %arg4[%c0_24, %c0_25] : memref<288x32xbf16, #tpu.memory_space<vmem>>, vector<96x32xbf16>
    %cst_26 = arith.constant dense<0.000000e+00> : vector<256x32xf32>
    %57 = tpu.matmul %55, %56, %cst_26 {dimension_numbers = #tpu.dot_dimension_numbers<[1], [0], [0], [1], [0, 0, 1, 1], [], []>} : vector<256x96xbf16>, vector<96x32xbf16>, vector<256x32xf32> -> vector<256x32xf32>
    %c16_27 = arith.constant 16 : index
    %c0_28 = arith.constant 0 : index
    %58 = vector.load %arg13[%c16_27, %c0_28] : memref<288x144xbf16, #tpu.memory_space<vmem>>, vector<256x96xbf16>
    %c96 = arith.constant 96 : index
    %c0_29 = arith.constant 0 : index
    %59 = vector.load %arg4[%c96, %c0_29] : memref<288x32xbf16, #tpu.memory_space<vmem>>, vector<96x32xbf16>
    %cst_30 = arith.constant dense<0.000000e+00> : vector<256x32xf32>
    %60 = tpu.matmul %58, %59, %cst_30 {dimension_numbers = #tpu.dot_dimension_numbers<[1], [0], [0], [1], [0, 0, 1, 1], [], []>} : vector<256x96xbf16>, vector<96x32xbf16>, vector<256x32xf32> -> vector<256x32xf32>
    %61 = arith.addf %57, %60 : vector<256x32xf32>
    %c32_31 = arith.constant 32 : index
    %c0_32 = arith.constant 0 : index
    %62 = vector.load %arg13[%c32_31, %c0_32] : memref<288x144xbf16, #tpu.memory_space<vmem>>, vector<256x96xbf16>
    %c192 = arith.constant 192 : index
    %c0_33 = arith.constant 0 : index
    %63 = vector.load %arg4[%c192, %c0_33] : memref<288x32xbf16, #tpu.memory_space<vmem>>, vector<96x32xbf16>
    %cst_34 = arith.constant dense<0.000000e+00> : vector<256x32xf32>
    %64 = tpu.matmul %62, %63, %cst_34 {dimension_numbers = #tpu.dot_dimension_numbers<[1], [0], [0], [1], [0, 0, 1, 1], [], []>} : vector<256x96xbf16>, vector<96x32xbf16>, vector<256x32xf32> -> vector<256x32xf32>
    %65 = arith.addf %61, %64 : vector<256x32xf32>
    %c0_35 = arith.constant 0 : index
    %c0_36 = arith.constant 0 : index
    %66 = vector.load %arg5[%c0_35, %c0_36] : memref<1x32xf32, #tpu.memory_space<vmem>>, vector<1x32xf32>
    %67 = vector.broadcast %66 : vector<1x32xf32> to vector<256x32xf32>
    %68 = arith.addf %65, %67 : vector<256x32xf32>
    %cst_37 = arith.constant 0.000000e+00 : f32
    %69 = vector.broadcast %cst_37 : f32 to vector<256x32xf32>
    %70 = arith.maximumf %68, %69 : vector<256x32xf32>
    %71 = arith.truncf %38 : vector<256x32xf32> to vector<256x32xbf16>
    %c1_i32_38 = arith.constant 1 : i32
    %72 = tpu.dynamic_rotate %38 by %c1_i32_38 dim 0 : vector<256x32xf32>, i32 -> vector<256x32xf32>
    %cst_39 = arith.constant 0.000000e+00 : f32
    %73 = vector.shape_cast %21 : vector<256x1xi1> to vector<256x1xi1>
    %74 = vector.broadcast %73 : vector<256x1xi1> to vector<256x32xi1>
    %75 = vector.broadcast %cst_39 : f32 to vector<256x32xf32>
    %76 = arith.select %74, %75, %72 : vector<256x32xi1>, vector<256x32xf32>
    %77 = arith.truncf %76 : vector<256x32xf32> to vector<256x32xbf16>
    %c255_i32_40 = arith.constant 255 : i32
    %78 = tpu.dynamic_rotate %38 by %c255_i32_40 dim 0 : vector<256x32xf32>, i32 -> vector<256x32xf32>
    %cst_41 = arith.constant 0.000000e+00 : f32
    %79 = vector.shape_cast %23 : vector<256x1xi1> to vector<256x1xi1>
    %80 = vector.broadcast %79 : vector<256x1xi1> to vector<256x32xi1>
    %81 = vector.broadcast %cst_41 : f32 to vector<256x32xf32>
    %82 = arith.select %80, %81, %78 : vector<256x32xi1>, vector<256x32xf32>
    %83 = arith.truncf %82 : vector<256x32xf32> to vector<256x32xbf16>
    %c16_42 = arith.constant 16 : index
    %c0_43 = arith.constant 0 : index
    %84 = vector.load %arg13[%c16_42, %c0_43] : memref<288x144xbf16, #tpu.memory_space<vmem>>, vector<256x32xbf16>
    tpu.vector_store %arg13[%c16_42, %c0_43], %77 {strides = array<i32>} : memref<288x144xbf16, #tpu.memory_space<vmem>>, vector<256x32xbf16>,
    %c16_44 = arith.constant 16 : index
    %c32_45 = arith.constant 32 : index
    %85 = vector.load %arg13[%c16_44, %c32_45] : memref<288x144xbf16, #tpu.memory_space<vmem>>, vector<256x32xbf16>
    tpu.vector_store %arg13[%c16_44, %c32_45], %71 {strides = array<i32>} : memref<288x144xbf16, #tpu.memory_space<vmem>>, vector<256x32xbf16>,
    %c16_46 = arith.constant 16 : index
    %c64_47 = arith.constant 64 : index
    %86 = vector.load %arg13[%c16_46, %c64_47] : memref<288x144xbf16, #tpu.memory_space<vmem>>, vector<256x32xbf16>
    tpu.vector_store %arg13[%c16_46, %c64_47], %83 {strides = array<i32>} : memref<288x144xbf16, #tpu.memory_space<vmem>>, vector<256x32xbf16>,
    %c0_48 = arith.constant 0 : index
    %c0_49 = arith.constant 0 : index
    %87 = vector.load %arg13[%c0_48, %c0_49] : memref<288x144xbf16, #tpu.memory_space<vmem>>, vector<256x96xbf16>
    %c0_50 = arith.constant 0 : index
    %c0_51 = arith.constant 0 : index
    %88 = vector.load %arg6[%c0_50, %c0_51] : memref<288x48xbf16, #tpu.memory_space<vmem>>, vector<96x48xbf16>
    %cst_52 = arith.constant dense<0.000000e+00> : vector<256x48xf32>
    %89 = tpu.matmul %87, %88, %cst_52 {dimension_numbers = #tpu.dot_dimension_numbers<[1], [0], [0], [1], [0, 0, 1, 1], [], []>} : vector<256x96xbf16>, vector<96x48xbf16>, vector<256x48xf32> -> vector<256x48xf32>
    %c16_53 = arith.constant 16 : index
    %c0_54 = arith.constant 0 : index
    %90 = vector.load %arg13[%c16_53, %c0_54] : memref<288x144xbf16, #tpu.memory_space<vmem>>, vector<256x96xbf16>
    %c96_55 = arith.constant 96 : index
    %c0_56 = arith.constant 0 : index
    %91 = vector.load %arg6[%c96_55, %c0_56] : memref<288x48xbf16, #tpu.memory_space<vmem>>, vector<96x48xbf16>
    %cst_57 = arith.constant dense<0.000000e+00> : vector<256x48xf32>
    %92 = tpu.matmul %90, %91, %cst_57 {dimension_numbers = #tpu.dot_dimension_numbers<[1], [0], [0], [1], [0, 0, 1, 1], [], []>} : vector<256x96xbf16>, vector<96x48xbf16>, vector<256x48xf32> -> vector<256x48xf32>
    %93 = arith.addf %89, %92 : vector<256x48xf32>
    %c32_58 = arith.constant 32 : index
    %c0_59 = arith.constant 0 : index
    %94 = vector.load %arg13[%c32_58, %c0_59] : memref<288x144xbf16, #tpu.memory_space<vmem>>, vector<256x96xbf16>
    %c192_60 = arith.constant 192 : index
    %c0_61 = arith.constant 0 : index
    %95 = vector.load %arg6[%c192_60, %c0_61] : memref<288x48xbf16, #tpu.memory_space<vmem>>, vector<96x48xbf16>
    %cst_62 = arith.constant dense<0.000000e+00> : vector<256x48xf32>
    %96 = tpu.matmul %94, %95, %cst_62 {dimension_numbers = #tpu.dot_dimension_numbers<[1], [0], [0], [1], [0, 0, 1, 1], [], []>} : vector<256x96xbf16>, vector<96x48xbf16>, vector<256x48xf32> -> vector<256x48xf32>
    %97 = arith.addf %93, %96 : vector<256x48xf32>
    %c0_63 = arith.constant 0 : index
    %c0_64 = arith.constant 0 : index
    %98 = vector.load %arg7[%c0_63, %c0_64] : memref<1x48xf32, #tpu.memory_space<vmem>>, vector<1x48xf32>
    %99 = vector.broadcast %98 : vector<1x48xf32> to vector<256x48xf32>
    %100 = arith.addf %97, %99 : vector<256x48xf32>
    %cst_65 = arith.constant 0.000000e+00 : f32
    %101 = vector.broadcast %cst_65 : f32 to vector<256x48xf32>
    %102 = arith.maximumf %100, %101 : vector<256x48xf32>
    %103 = arith.truncf %102 : vector<256x48xf32> to vector<256x48xbf16>
    %c1_i32_66 = arith.constant 1 : i32
    %104 = tpu.dynamic_rotate %102 by %c1_i32_66 dim 0 : vector<256x48xf32>, i32 -> vector<256x48xf32>
    %cst_67 = arith.constant 0.000000e+00 : f32
    %105 = vector.shape_cast %21 : vector<256x1xi1> to vector<256x1xi1>
    %106 = vector.broadcast %105 : vector<256x1xi1> to vector<256x48xi1>
    %107 = vector.broadcast %cst_67 : f32 to vector<256x48xf32>
    %108 = arith.select %106, %107, %104 : vector<256x48xi1>, vector<256x48xf32>
    %109 = arith.truncf %108 : vector<256x48xf32> to vector<256x48xbf16>
    %c255_i32_68 = arith.constant 255 : i32
    %110 = tpu.dynamic_rotate %102 by %c255_i32_68 dim 0 : vector<256x48xf32>, i32 -> vector<256x48xf32>
    %cst_69 = arith.constant 0.000000e+00 : f32
    %111 = vector.shape_cast %23 : vector<256x1xi1> to vector<256x1xi1>
    %112 = vector.broadcast %111 : vector<256x1xi1> to vector<256x48xi1>
    %113 = vector.broadcast %cst_69 : f32 to vector<256x48xf32>
    %114 = arith.select %112, %113, %110 : vector<256x48xi1>, vector<256x48xf32>
    %115 = arith.truncf %114 : vector<256x48xf32> to vector<256x48xbf16>
    %c16_70 = arith.constant 16 : index
    %c0_71 = arith.constant 0 : index
    %116 = vector.load %arg13[%c16_70, %c0_71] : memref<288x144xbf16, #tpu.memory_space<vmem>>, vector<256x48xbf16>
    tpu.vector_store %arg13[%c16_70, %c0_71], %109 {strides = array<i32>} : memref<288x144xbf16, #tpu.memory_space<vmem>>, vector<256x48xbf16>,
    %c16_72 = arith.constant 16 : index
    %c48 = arith.constant 48 : index
    %117 = vector.load %arg13[%c16_72, %c48] : memref<288x144xbf16, #tpu.memory_space<vmem>>, vector<256x48xbf16>
    tpu.vector_store %arg13[%c16_72, %c48], %103 {strides = array<i32>} : memref<288x144xbf16, #tpu.memory_space<vmem>>, vector<256x48xbf16>,
    %c16_73 = arith.constant 16 : index
    %c96_74 = arith.constant 96 : index
    %118 = vector.load %arg13[%c16_73, %c96_74] : memref<288x144xbf16, #tpu.memory_space<vmem>>, vector<256x48xbf16>
    tpu.vector_store %arg13[%c16_73, %c96_74], %115 {strides = array<i32>} : memref<288x144xbf16, #tpu.memory_space<vmem>>, vector<256x48xbf16>,
    %c0_75 = arith.constant 0 : index
    %c0_76 = arith.constant 0 : index
    %119 = vector.load %arg13[%c0_75, %c0_76] : memref<288x144xbf16, #tpu.memory_space<vmem>>, vector<256x144xbf16>
    %c0_77 = arith.constant 0 : index
    %c0_78 = arith.constant 0 : index
    %120 = vector.load %arg8[%c0_77, %c0_78] : memref<432x64xbf16, #tpu.memory_space<vmem>>, vector<144x64xbf16>
    %cst_79 = arith.constant dense<0.000000e+00> : vector<256x64xf32>
    %121 = tpu.matmul %119, %120, %cst_79 {dimension_numbers = #tpu.dot_dimension_numbers<[1], [0], [0], [1], [0, 0, 1, 1], [], []>} : vector<256x144xbf16>, vector<144x64xbf16>, vector<256x64xf32> -> vector<256x64xf32>
    %c16_80 = arith.constant 16 : index
    %c0_81 = arith.constant 0 : index
    %122 = vector.load %arg13[%c16_80, %c0_81] : memref<288x144xbf16, #tpu.memory_space<vmem>>, vector<256x144xbf16>
    %c144 = arith.constant 144 : index
    %c0_82 = arith.constant 0 : index
    %123 = vector.load %arg8[%c144, %c0_82] : memref<432x64xbf16, #tpu.memory_space<vmem>>, vector<144x64xbf16>
    %cst_83 = arith.constant dense<0.000000e+00> : vector<256x64xf32>
    %124 = tpu.matmul %122, %123, %cst_83 {dimension_numbers = #tpu.dot_dimension_numbers<[1], [0], [0], [1], [0, 0, 1, 1], [], []>} : vector<256x144xbf16>, vector<144x64xbf16>, vector<256x64xf32> -> vector<256x64xf32>
    %125 = arith.addf %121, %124 : vector<256x64xf32>
    %c32_84 = arith.constant 32 : index
    %c0_85 = arith.constant 0 : index
    %126 = vector.load %arg13[%c32_84, %c0_85] : memref<288x144xbf16, #tpu.memory_space<vmem>>, vector<256x144xbf16>
    %c288 = arith.constant 288 : index
    %c0_86 = arith.constant 0 : index
    %127 = vector.load %arg8[%c288, %c0_86] : memref<432x64xbf16, #tpu.memory_space<vmem>>, vector<144x64xbf16>
    %cst_87 = arith.constant dense<0.000000e+00> : vector<256x64xf32>
    %128 = tpu.matmul %126, %127, %cst_87 {dimension_numbers = #tpu.dot_dimension_numbers<[1], [0], [0], [1], [0, 0, 1, 1], [], []>} : vector<256x144xbf16>, vector<144x64xbf16>, vector<256x64xf32> -> vector<256x64xf32>
    %129 = arith.addf %125, %128 : vector<256x64xf32>
    %c0_88 = arith.constant 0 : index
    %c0_89 = arith.constant 0 : index
    %130 = vector.load %arg9[%c0_88, %c0_89] : memref<1x64xf32, #tpu.memory_space<vmem>>, vector<1x64xf32>
    %131 = vector.broadcast %130 : vector<1x64xf32> to vector<256x64xf32>
    %132 = arith.addf %129, %131 : vector<256x64xf32>
    %cst_90 = arith.constant 0.000000e+00 : f32
    %133 = vector.broadcast %cst_90 : f32 to vector<256x64xf32>
    %134 = arith.maximumf %132, %133 : vector<256x64xf32>
    %135 = arith.truncf %36 : vector<256x32xf32> to vector<256x32xbf16>
    %c0_91 = arith.constant 0 : index
    %c0_92 = arith.constant 0 : index
    %136 = vector.load %arg10[%c0_91, %c0_92] : memref<128x4xbf16, #tpu.memory_space<vmem>>, vector<32x4xbf16>
    %cst_93 = arith.constant dense<0.000000e+00> : vector<256x4xf32>
    %137 = tpu.matmul %135, %136, %cst_93 {dimension_numbers = #tpu.dot_dimension_numbers<[1], [0], [0], [1], [0, 0, 1, 1], [], []>} : vector<256x32xbf16>, vector<32x4xbf16>, vector<256x4xf32> -> vector<256x4xf32>
    %138 = arith.truncf %70 : vector<256x32xf32> to vector<256x32xbf16>
    %c32_94 = arith.constant 32 : index
    %c0_95 = arith.constant 0 : index
    %139 = vector.load %arg10[%c32_94, %c0_95] : memref<128x4xbf16, #tpu.memory_space<vmem>>, vector<32x4xbf16>
    %cst_96 = arith.constant dense<0.000000e+00> : vector<256x4xf32>
    %140 = tpu.matmul %138, %139, %cst_96 {dimension_numbers = #tpu.dot_dimension_numbers<[1], [0], [0], [1], [0, 0, 1, 1], [], []>} : vector<256x32xbf16>, vector<32x4xbf16>, vector<256x4xf32> -> vector<256x4xf32>
    %141 = arith.addf %137, %140 : vector<256x4xf32>
    %142 = arith.truncf %134 : vector<256x64xf32> to vector<256x64xbf16>
    %c64_97 = arith.constant 64 : index
    %c0_98 = arith.constant 0 : index
    %143 = vector.load %arg10[%c64_97, %c0_98] : memref<128x4xbf16, #tpu.memory_space<vmem>>, vector<64x4xbf16>
    %cst_99 = arith.constant dense<0.000000e+00> : vector<256x4xf32>
    %144 = tpu.matmul %142, %143, %cst_99 {dimension_numbers = #tpu.dot_dimension_numbers<[1], [0], [0], [1], [0, 0, 1, 1], [], []>} : vector<256x64xbf16>, vector<64x4xbf16>, vector<256x4xf32> -> vector<256x4xf32>
    %145 = arith.addf %141, %144 : vector<256x4xf32>
    %c0_100 = arith.constant 0 : index
    %c0_101 = arith.constant 0 : index
    %146 = vector.load %arg11[%c0_100, %c0_101] : memref<1x4xf32, #tpu.memory_space<vmem>>, vector<1x4xf32>
    %147 = vector.broadcast %146 : vector<1x4xf32> to vector<256x4xf32>
    %148 = arith.addf %145, %147 : vector<256x4xf32>
    %cst_102 = arith.constant 0.000000e+00 : f32
    %149 = vector.broadcast %cst_102 : f32 to vector<256x4xf32>
    %150 = arith.maximumf %148, %149 : vector<256x4xf32>
    %151 = arith.addf %27, %150 : vector<256x4xf32>
    %cst_103 = arith.constant 0.000000e+00 : f32
    %152 = vector.broadcast %cst_103 : f32 to vector<256x4xf32>
    %153 = arith.maximumf %151, %152 : vector<256x4xf32>
    %c0_104 = arith.constant 0 : index
    %c0_105 = arith.constant 0 : index
    %c0_106 = arith.constant 0 : index
    %154 = vector.load %arg12[%c0_104, %c0_105, %c0_106] : memref<1x256x4xf32, #tpu.memory_space<vmem>>, vector<1x256x4xf32>
    %155 = vector.shape_cast %154 : vector<1x256x4xf32> to vector<256x4xf32>
    %156 = vector.shape_cast %153 : vector<256x4xf32> to vector<1x256x4xf32>
    tpu.vector_store %arg12[%c0_104, %c0_105, %c0_106], %156 {strides = array<i32>} : memref<1x256x4xf32, #tpu.memory_space<vmem>>, vector<1x256x4xf32>,
    return
  }
  func.func @transform_0(%arg0: i32) -> (i32, i32, i32) {
    %c0_i32 = arith.constant 0 : i32
    %c0_i32_0 = arith.constant 0 : i32
    %c0_i32_1 = arith.constant 0 : i32
    return %arg0, %c0_i32, %c0_i32_0 : i32, i32, i32
  }
  func.func @transform_1(%arg0: i32) -> (i32, i32) {
    %c0_i32 = arith.constant 0 : i32
    %c0_i32_0 = arith.constant 0 : i32
    %c0_i32_1 = arith.constant 0 : i32
    return %c0_i32, %c0_i32_0 : i32, i32
  }
  func.func @transform_2(%arg0: i32) -> (i32, i32) {
    %c0_i32 = arith.constant 0 : i32
    %c0_i32_0 = arith.constant 0 : i32
    %c0_i32_1 = arith.constant 0 : i32
    return %c0_i32, %c0_i32_0 : i32, i32
  }
  func.func @transform_3(%arg0: i32) -> (i32, i32) {
    %c0_i32 = arith.constant 0 : i32
    %c0_i32_0 = arith.constant 0 : i32
    %c0_i32_1 = arith.constant 0 : i32
    return %c0_i32, %c0_i32_0 : i32, i32
  }
  func.func @transform_4(%arg0: i32) -> (i32, i32) {
    %c0_i32 = arith.constant 0 : i32
    %c0_i32_0 = arith.constant 0 : i32
    %c0_i32_1 = arith.constant 0 : i32
    return %c0_i32, %c0_i32_0 : i32, i32
  }
  func.func @transform_5(%arg0: i32) -> (i32, i32) {
    %c0_i32 = arith.constant 0 : i32
    %c0_i32_0 = arith.constant 0 : i32
    %c0_i32_1 = arith.constant 0 : i32
    return %c0_i32, %c0_i32_0 : i32, i32
  }
  func.func @transform_6(%arg0: i32) -> (i32, i32) {
    %c0_i32 = arith.constant 0 : i32
    %c0_i32_0 = arith.constant 0 : i32
    %c0_i32_1 = arith.constant 0 : i32
    return %c0_i32, %c0_i32_0 : i32, i32
  }
  func.func @transform_7(%arg0: i32) -> (i32, i32) {
    %c0_i32 = arith.constant 0 : i32
    %c0_i32_0 = arith.constant 0 : i32
    %c0_i32_1 = arith.constant 0 : i32
    return %c0_i32, %c0_i32_0 : i32, i32
  }
  func.func @transform_8(%arg0: i32) -> (i32, i32) {
    %c0_i32 = arith.constant 0 : i32
    %c0_i32_0 = arith.constant 0 : i32
    %c0_i32_1 = arith.constant 0 : i32
    return %c0_i32, %c0_i32_0 : i32, i32
  }
  func.func @transform_9(%arg0: i32) -> (i32, i32) {
    %c0_i32 = arith.constant 0 : i32
    %c0_i32_0 = arith.constant 0 : i32
    %c0_i32_1 = arith.constant 0 : i32
    return %c0_i32, %c0_i32_0 : i32, i32
  }
  func.func @transform_10(%arg0: i32) -> (i32, i32) {
    %c0_i32 = arith.constant 0 : i32
    %c0_i32_0 = arith.constant 0 : i32
    %c0_i32_1 = arith.constant 0 : i32
    return %c0_i32, %c0_i32_0 : i32, i32
  }
  func.func @transform_11(%arg0: i32) -> (i32, i32, i32) {
    %c0_i32 = arith.constant 0 : i32
    %c0_i32_0 = arith.constant 0 : i32
    %c0_i32_1 = arith.constant 0 : i32
    return %arg0, %c0_i32, %c0_i32_0 : i32, i32, i32
  }
}

</mosaic_0001>

<llo_original>
// kernel: inception_res_a_forward.1
$region0: #{inception_res_a_forward.1}
  #allocation0 [shape = 'u32[]', space=smem, size = 0x4, offset = 0x4, fixed_abs, tag = 'smem constant byte address 0x4 - core index']
  #allocation1 [shape = 'u32[144,128]{1,0:T(1,128)}', space=vmem, size = 0x12000, scoped, tag = 'internal scratch']
  #allocation2 [shape = 'bf16[288,144]{1,0:T(8,128)(2,1)}', space=vmem, size = 0x24000, scoped, tag = 'scratch operand']
  %s0 = inlined_call_operand.vmem [shape: f32[2,256,4], index: 0, kind: input, shape index: {}]
  %s1 = inlined_call_operand.vmem [shape: bf16[4,96], index: 1, kind: input, shape index: {}]
  %s2 = inlined_call_operand.vmem [shape: f32[1,96], index: 2, kind: input, shape index: {}]
  %s3 = inlined_call_operand.vmem [shape: bf16[288,32], index: 3, kind: input, shape index: {}]
  %s4 = inlined_call_operand.vmem [shape: f32[1,32], index: 4, kind: input, shape index: {}]
  %s5 = inlined_call_operand.vmem [shape: bf16[288,48], index: 5, kind: input, shape index: {}]
  %s6 = inlined_call_operand.vmem [shape: f32[1,48], index: 6, kind: input, shape index: {}]
  %s7 = inlined_call_operand.vmem [shape: bf16[432,64], index: 7, kind: input, shape index: {}]
  %s8 = inlined_call_operand.vmem [shape: f32[1,64], index: 8, kind: input, shape index: {}]
  %s9 = inlined_call_operand.vmem [shape: bf16[128,4], index: 9, kind: input, shape index: {}]
  %s10 = inlined_call_operand.vmem [shape: f32[1,4], index: 10, kind: input, shape index: {}]
  %s11 = inlined_call_operand.vmem [shape: f32[2,256,4], index: 11, kind: output, shape index: {}]
  %s12 = sld [smem:[#allocation0]]
  $region77: #{inception_res_a_forward.1} parent=0
    _
  %s14 = ssub.s32 1, %s12
  %s15 = scalar_select 0, %s14, %s12
  loop: start=0, step=1, limit=4
  $region2: #{inception_res_a_forward.1} parent=0 // loop_pre_header
    _
  $region3: #{inception_res_a_forward.1} parent=0 // loop_header
    %s17 = sphi 0, %s21
    %p18 = scmp.ge.s32.totalorder %s17, 4
    %s27 = sphi 0, %s29
    %s30 = sphi 0, %s27
    %s31 = sphi 0, %s30
    %s47 = sphi 0, %s31
    %s51 = sphi 0, %s51
    %s53 = sphi 0, %s51
    %s54 = sphi 0, %s53
    %s68 = sphi 0, %s54
    %s72 = sphi 0, %s72
    %s74 = sphi 0, %s72
    %s75 = sphi 0, %s74
    %s89 = sphi 0, %s75
    %s93 = sphi 0, %s93
    %s95 = sphi 0, %s93
    %s96 = sphi 0, %s95
    %s110 = sphi 0, %s96
    %s114 = sphi 0, %s114
    %s116 = sphi 0, %s114
    %s117 = sphi 0, %s116
    %s131 = sphi 0, %s117
    %s135 = sphi 0, %s135
    %s137 = sphi 0, %s135
    %s138 = sphi 0, %s137
    %s152 = sphi 0, %s138
    %s156 = sphi 0, %s156
    %s158 = sphi 0, %s156
    %s159 = sphi 0, %s158
    %s173 = sphi 0, %s159
    %s177 = sphi 0, %s177
    %s179 = sphi 0, %s177
    %s180 = sphi 0, %s179
    %s194 = sphi 0, %s180
    %s198 = sphi 0, %s198
    %s200 = sphi 0, %s198
    %s201 = sphi 0, %s200
    %s215 = sphi 0, %s201
    %s219 = sphi 0, %s219
    %s221 = sphi 0, %s219
    %s222 = sphi 0, %s221
    %s236 = sphi 0, %s222
    %s240 = sphi 0, %s240
    %s242 = sphi 0, %s240
    %s243 = sphi 0, %s242
    %s257 = sphi 0, %s243
    %s263 = sphi 0, %s265
    %s266 = sphi 0, %s263
    %s267 = sphi 0, %s266
    %s283 = sphi 0, %s267
  $region4: #{inception_res_a_forward.1} parent=0 // loop_header_branch
    %20 = sbr.rel (%p18) target = $region8
  $region5: #{inception_res_a_forward.1} parent=0 // loop_body
    %s22 = ssub.s32 %s17, 1
    %s23 = ssub.s32 %s17, 2
    %s24 = sadd.s32 %s17, 1
    %s25 = ssub.s32 %s17, %s24
    %p26 = scmp.eq.s32.totalorder %s25, 0
    %s28 = sadd.s32 %s27, 1
    %s29 = scalar_select %p26, %s27, %s28
    %p32 = pneg %p26
    %p33 = scmp.eq.s32.totalorder %s17, 1
    %p34 = por %p32, %p33
    %p35 = scmp.ne.s32.totalorder %s27, %s30
    %p36 = scmp.eq.s32.totalorder %s17, 0
    %p37 = por %p35, %p36
    %p38 = scmp.ne.s32.totalorder %s27, %s30
    %p39 = scmp.eq.s32.totalorder %s22, 1
    %p40 = por %p38, %p39
    %p41 = scmp.ne.s32.totalorder %s30, %s31
    %p42 = scmp.eq.s32.totalorder %s22, 0
    %p43 = por %p41, %p42
    %p44 = scmp.ne.s32.totalorder %s30, %s31
    %p45 = scmp.eq.s32.totalorder %s23, 1
    %p46 = por %p44, %p45
    %p48 = scmp.ne.s32.totalorder %s31, %s47
    %p49 = scmp.eq.s32.totalorder %s23, 0
    %p50 = por %p48, %p49
    %s52 = sadd.s32 %s51, 1
    %p55 = scmp.eq.s32.totalorder %s17, 1
    %p56 = scmp.ne.s32.totalorder %s51, %s53
    %p57 = scmp.eq.s32.totalorder %s17, 0
    %p58 = por %p56, %p57
    %p59 = scmp.ne.s32.totalorder %s51, %s53
    %p60 = scmp.eq.s32.totalorder %s22, 1
    %p61 = por %p59, %p60
    %p62 = scmp.ne.s32.totalorder %s53, %s54
    %p63 = scmp.eq.s32.totalorder %s22, 0
    %p64 = por %p62, %p63
    %p65 = scmp.ne.s32.totalorder %s53, %s54
    %p66 = scmp.eq.s32.totalorder %s23, 1
    %p67 = por %p65, %p66
    %p69 = scmp.ne.s32.totalorder %s54, %s68
    %p70 = scmp.eq.s32.totalorder %s23, 0
    %p71 = por %p69, %p70
    %s73 = sadd.s32 %s72, 1
    %p76 = scmp.eq.s32.totalorder %s17, 1
    %p77 = scmp.ne.s32.totalorder %s72, %s74
    %p78 = scmp.eq.s32.totalorder %s17, 0
    %p79 = por %p77, %p78
    %p80 = scmp.ne.s32.totalorder %s72, %s74
    %p81 = scmp.eq.s32.totalorder %s22, 1
    %p82 = por %p80, %p81
    %p83 = scmp.ne.s32.totalorder %s74, %s75
    %p84 = scmp.eq.s32.totalorder %s22, 0
    %p85 = por %p83, %p84
    %p86 = scmp.ne.s32.totalorder %s74, %s75
    %p87 = scmp.eq.s32.totalorder %s23, 1
    %p88 = por %p86, %p87
    %p90 = scmp.ne.s32.totalorder %s75, %s89
    %p91 = scmp.eq.s32.totalorder %s23, 0
    %p92 = por %p90, %p91
    %s94 = sadd.s32 %s93, 1
    %p97 = scmp.eq.s32.totalorder %s17, 1
    %p98 = scmp.ne.s32.totalorder %s93, %s95
    %p99 = scmp.eq.s32.totalorder %s17, 0
    %p100 = por %p98, %p99
    %p101 = scmp.ne.s32.totalorder %s93, %s95
    %p102 = scmp.eq.s32.totalorder %s22, 1
    %p103 = por %p101, %p102
    %p104 = scmp.ne.s32.totalorder %s95, %s96
    %p105 = scmp.eq.s32.totalorder %s22, 0
    %p106 = por %p104, %p105
    %p107 = scmp.ne.s32.totalorder %s95, %s96
    %p108 = scmp.eq.s32.totalorder %s23, 1
    %p109 = por %p107, %p108
    %p111 = scmp.ne.s32.totalorder %s96, %s110
    %p112 = scmp.eq.s32.totalorder %s23, 0
    %p113 = por %p111, %p112
    %s115 = sadd.s32 %s114, 1
    %p118 = scmp.eq.s32.totalorder %s17, 1
    %p119 = scmp.ne.s32.totalorder %s114, %s116
    %p120 = scmp.eq.s32.totalorder %s17, 0
    %p121 = por %p119, %p120
    %p122 = scmp.ne.s32.totalorder %s114, %s116
    %p123 = scmp.eq.s32.totalorder %s22, 1
    %p124 = por %p122, %p123
    %p125 = scmp.ne.s32.totalorder %s116, %s117
    %p126 = scmp.eq.s32.totalorder %s22, 0
    %p127 = por %p125, %p126
    %p128 = scmp.ne.s32.totalorder %s116, %s117
    %p129 = scmp.eq.s32.totalorder %s23, 1
    %p130 = por %p128, %p129
    %p132 = scmp.ne.s32.totalorder %s117, %s131
    %p133 = scmp.eq.s32.totalorder %s23, 0
    %p134 = por %p132, %p133
    %s136 = sadd.s32 %s135, 1
    %p139 = scmp.eq.s32.totalorder %s17, 1
    %p140 = scmp.ne.s32.totalorder %s135, %s137
    %p141 = scmp.eq.s32.totalorder %s17, 0
    %p142 = por %p140, %p141
    %p143 = scmp.ne.s32.totalorder %s135, %s137
    %p144 = scmp.eq.s32.totalorder %s22, 1
    %p145 = por %p143, %p144
    %p146 = scmp.ne.s32.totalorder %s137, %s138
    %p147 = scmp.eq.s32.totalorder %s22, 0
    %p148 = por %p146, %p147
    %p149 = scmp.ne.s32.totalorder %s137, %s138
    %p150 = scmp.eq.s32.totalorder %s23, 1
    %p151 = por %p149, %p150
    %p153 = scmp.ne.s32.totalorder %s138, %s152
    %p154 = scmp.eq.s32.totalorder %s23, 0
    %p155 = por %p153, %p154
    %s157 = sadd.s32 %s156, 1
    %p160 = scmp.eq.s32.totalorder %s17, 1
    %p161 = scmp.ne.s32.totalorder %s156, %s158
    %p162 = scmp.eq.s32.totalorder %s17, 0
    %p163 = por %p161, %p162
    %p164 = scmp.ne.s32.totalorder %s156, %s158
    %p165 = scmp.eq.s32.totalorder %s22, 1
    %p166 = por %p164, %p165
    %p167 = scmp.ne.s32.totalorder %s158, %s159
    %p168 = scmp.eq.s32.totalorder %s22, 0
    %p169 = por %p167, %p168
    %p170 = scmp.ne.s32.totalorder %s158, %s159
    %p171 = scmp.eq.s32.totalorder %s23, 1
    %p172 = por %p170, %p171
    %p174 = scmp.ne.s32.totalorder %s159, %s173
    %p175 = scmp.eq.s32.totalorder %s23, 0
    %p176 = por %p174, %p175
    %s178 = sadd.s32 %s177, 1
    %p181 = scmp.eq.s32.totalorder %s17, 1
    %p182 = scmp.ne.s32.totalorder %s177, %s179
    %p183 = scmp.eq.s32.totalorder %s17, 0
    %p184 = por %p182, %p183
    %p185 = scmp.ne.s32.totalorder %s177, %s179
    %p186 = scmp.eq.s32.totalorder %s22, 1
    %p187 = por %p185, %p186
    %p188 = scmp.ne.s32.totalorder %s179, %s180
    %p189 = scmp.eq.s32.totalorder %s22, 0
    %p190 = por %p188, %p189
    %p191 = scmp.ne.s32.totalorder %s179, %s180
    %p192 = scmp.eq.s32.totalorder %s23, 1
    %p193 = por %p191, %p192
    %p195 = scmp.ne.s32.totalorder %s180, %s194
    %p196 = scmp.eq.s32.totalorder %s23, 0
    %p197 = por %p195, %p196
    %s199 = sadd.s32 %s198, 1
    %p202 = scmp.eq.s32.totalorder %s17, 1
    %p203 = scmp.ne.s32.totalorder %s198, %s200
    %p204 = scmp.eq.s32.totalorder %s17, 0
    %p205 = por %p203, %p204
    %p206 = scmp.ne.s32.totalorder %s198, %s200
    %p207 = scmp.eq.s32.totalorder %s22, 1
    %p208 = por %p206, %p207
    %p209 = scmp.ne.s32.totalorder %s200, %s201
    %p210 = scmp.eq.s32.totalorder %s22, 0
    %p211 = por %p209, %p210
    %p212 = scmp.ne.s32.totalorder %s200, %s201
    %p213 = scmp.eq.s32.totalorder %s23, 1
    %p214 = por %p212, %p213
    %p216 = scmp.ne.s32.totalorder %s201, %s215
    %p217 = scmp.eq.s32.totalorder %s23, 0
    %p218 = por %p216, %p217
    %s220 = sadd.s32 %s219, 1
    %p223 = scmp.eq.s32.totalorder %s17, 1
    %p224 = scmp.ne.s32.totalorder %s219, %s221
    %p225 = scmp.eq.s32.totalorder %s17, 0
    %p226 = por %p224, %p225
    %p227 = scmp.ne.s32.totalorder %s219, %s221
    %p228 = scmp.eq.s32.totalorder %s22, 1
    %p229 = por %p227, %p228
    %p230 = scmp.ne.s32.totalorder %s221, %s222
    %p231 = scmp.eq.s32.totalorder %s22, 0
    %p232 = por %p230, %p231
    %p233 = scmp.ne.s32.totalorder %s221, %s222
    %p234 = scmp.eq.s32.totalorder %s23, 1
    %p235 = por %p233, %p234
    %p237 = scmp.ne.s32.totalorder %s222, %s236
    %p238 = scmp.eq.s32.totalorder %s23, 0
    %p239 = por %p237, %p238
    %s241 = sadd.s32 %s240, 1
    %p244 = scmp.eq.s32.totalorder %s17, 1
    %p245 = scmp.ne.s32.totalorder %s240, %s242
    %p246 = scmp.eq.s32.totalorder %s17, 0
    %p247 = por %p245, %p246
    %p248 = scmp.ne.s32.totalorder %s240, %s242
    %p249 = scmp.eq.s32.totalorder %s22, 1
    %p250 = por %p248, %p249
    %p251 = scmp.ne.s32.totalorder %s242, %s243
    %p252 = scmp.eq.s32.totalorder %s22, 0
    %p253 = por %p251, %p252
    %p254 = scmp.ne.s32.totalorder %s242, %s243
    %p255 = scmp.eq.s32.totalorder %s23, 1
    %p256 = por %p254, %p255
    %p258 = scmp.ne.s32.totalorder %s243, %s257
    %p259 = scmp.eq.s32.totalorder %s23, 0
    %p260 = por %p258, %p259
    %s261 = ssub.s32 %s17, %s24
    %p262 = scmp.eq.s32.totalorder %s261, 0
    %s264 = sadd.s32 %s263, 1
    %s265 = scalar_select %p262, %s263, %s264
    %p268 = pneg %p262
    %p269 = scmp.eq.s32.totalorder %s17, 1
    %p270 = por %p268, %p269
    %p271 = scmp.ne.s32.totalorder %s263, %s266
    %p272 = scmp.eq.s32.totalorder %s17, 0
    %p273 = por %p271, %p272
    %p274 = scmp.ne.s32.totalorder %s263, %s266
    %p275 = scmp.eq.s32.totalorder %s22, 1
    %p276 = por %p274, %p275
    %p277 = scmp.ne.s32.totalorder %s266, %s267
    %p278 = scmp.eq.s32.totalorder %s22, 0
    %p279 = por %p277, %p278
    %p280 = scmp.ne.s32.totalorder %s266, %s267
    %p281 = scmp.eq.s32.totalorder %s23, 1
    %p282 = por %p280, %p281
    %p284 = scmp.ne.s32.totalorder %s267, %s283
    %p285 = scmp.eq.s32.totalorder %s23, 0
    %p286 = por %p284, %p285
    %p287 = scmp.le.s32.totalorder 1, %s17
    %p288 = scmp.lt.s32.totalorder %s17, 3
    %p289 = pnand %p287, %p288
    %p290 = pneg %p289
    // Predicated region
    $region9: #{inception_res_a_forward.1} parent=5 // pred_check
      _
    $region10: #{inception_res_a_forward.1} parent=5 // pred_check_branch
      %292 = sbr.rel (%p289) target = $region12
    $region11: #{inception_res_a_forward.1} parent=5 // pred_region
      %s293 = ssub.s32 %s17, 1
      // Predicated region
      $region13: #{inception_res_a_forward.1} parent=11 // pred_check
        %p294 = pneg %p64
      $region14: #{inception_res_a_forward.1} parent=11 // pred_check_branch
        %296 = sbr.rel (%p294) target = $region16
      $region15: #{inception_res_a_forward.1} parent=11 // pred_region
        _
      $region16: #{inception_res_a_forward.1} parent=11 // pred_fallthru
        _
      // Predicated region
      $region17: #{inception_res_a_forward.1} parent=11 // pred_check
        %p297 = pneg %p85
      $region18: #{inception_res_a_forward.1} parent=11 // pred_check_branch
        %299 = sbr.rel (%p297) target = $region20
      $region19: #{inception_res_a_forward.1} parent=11 // pred_region
        _
      $region20: #{inception_res_a_forward.1} parent=11 // pred_fallthru
        _
      // Predicated region
      $region21: #{inception_res_a_forward.1} parent=11 // pred_check
        %p300 = pneg %p106
      $region22: #{inception_res_a_forward.1} parent=11 // pred_check_branch
        %302 = sbr.rel (%p300) target = $region24
      $region23: #{inception_res_a_forward.1} parent=11 // pred_region
        _
      $region24: #{inception_res_a_forward.1} parent=11 // pred_fallthru
        _
      // Predicated region
      $region25: #{inception_res_a_forward.1} parent=11 // pred_check
        %p303 = pneg %p127
      $region26: #{inception_res_a_forward.1} parent=11 // pred_check_branch
        %305 = sbr.rel (%p303) target = $region28
      $region27: #{inception_res_a_forward.1} parent=11 // pred_region
        _
      $region28: #{inception_res_a_forward.1} parent=11 // pred_fallthru
        _
      // Predicated region
      $region29: #{inception_res_a_forward.1} parent=11 // pred_check
        %p306 = pneg %p148
      $region30: #{inception_res_a_forward.1} parent=11 // pred_check_branch
        %308 = sbr.rel (%p306) target = $region32
      $region31: #{inception_res_a_forward.1} parent=11 // pred_region
        _
      $region32: #{inception_res_a_forward.1} parent=11 // pred_fallthru
        _
      // Predicated region
      $region33: #{inception_res_a_forward.1} parent=11 // pred_check
        %p309 = pneg %p169
      $region34: #{inception_res_a_forward.1} parent=11 // pred_check_branch
        %311 = sbr.rel (%p309) target = $region36
      $region35: #{inception_res_a_forward.1} parent=11 // pred_region
        _
      $region36: #{inception_res_a_forward.1} parent=11 // pred_fallthru
        _
      // Predicated region
      $region37: #{inception_res_a_forward.1} parent=11 // pred_check
        %p312 = pneg %p190
      $region38: #{inception_res_a_forward.1} parent=11 // pred_check_branch
        %314 = sbr.rel (%p312) target = $region40
      $region39: #{inception_res_a_forward.1} parent=11 // pred_region
        _
      $region40: #{inception_res_a_forward.1} parent=11 // pred_fallthru
        _
      // Predicated region
      $region41: #{inception_res_a_forward.1} parent=11 // pred_check
        %p315 = pneg %p211
      $region42: #{inception_res_a_forward.1} parent=11 // pred_check_branch
        %317 = sbr.rel (%p315) target = $region44
      $region43: #{inception_res_a_forward.1} parent=11 // pred_region
        _
      $region44: #{inception_res_a_forward.1} parent=11 // pred_fallthru
        _
      // Predicated region
      $region45: #{inception_res_a_forward.1} parent=11 // pred_check
        %p318 = pneg %p232
      $region46: #{inception_res_a_forward.1} parent=11 // pred_check_branch
        %320 = sbr.rel (%p318) target = $region48
      $region47: #{inception_res_a_forward.1} parent=11 // pred_region
        _
      $region48: #{inception_res_a_forward.1} parent=11 // pred_fallthru
        _
      // Predicated region
      $region49: #{inception_res_a_forward.1} parent=11 // pred_check
        %p321 = pneg %p253
      $region50: #{inception_res_a_forward.1} parent=11 // pred_check_branch
        %323 = sbr.rel (%p321) target = $region52
      $region51: #{inception_res_a_forward.1} parent=11 // pred_region
        _
      $region52: #{inception_res_a_forward.1} parent=11 // pred_fallthru
        _
    $region12: #{inception_res_a_forward.1} parent=5 // pred_fallthru
      _
    %p324 = scmp.lt.s32.totalorder %s17, 2
    // Predicated region
    $region53: #{inception_res_a_forward.1} parent=5 // pred_check
      %p325 = pneg %p324
    $region54: #{inception_res_a_forward.1} parent=5 // pred_check_branch
      %327 = sbr.rel (%p325) target = $region56
    $region55: #{inception_res_a_forward.1} parent=5 // pred_region
      // Predicated region
      $region57: #{inception_res_a_forward.1} parent=55 // pred_check
        %p328 = pneg %p37
      $region58: #{inception_res_a_forward.1} parent=55 // pred_check_branch
        %330 = sbr.rel (%p328) target = $region60
      $region59: #{inception_res_a_forward.1} parent=55 // pred_region
        %p331 = scmp.lt.s32.totalorder %s17, 1
        %s332 = scalar_select %p331, %s17, 1
        %s333 = smul.addr %s332, 32
        %s334 = smul.addr %s333, 8
        %s335 = scalar_lea.vmem %s0, %s334
      $region60: #{inception_res_a_forward.1} parent=55 // pred_fallthru
        _
    $region56: #{inception_res_a_forward.1} parent=5 // pred_fallthru
      _
    %p336 = scmp.le.s32.totalorder 1, %s17
    %p337 = scmp.lt.s32.totalorder %s17, 3
    %p338 = pnand %p336, %p337
    %p339 = pneg %p338
    // Predicated region
    $region61: #{inception_res_a_forward.1} parent=5 // pred_check
      _
    $region62: #{inception_res_a_forward.1} parent=5 // pred_check_branch
      %341 = sbr.rel (%p338) target = $region64
    $region63: #{inception_res_a_forward.1} parent=5 // pred_region
      %s342 = ssub.s32 %s17, 1
      %p343 = scmp.lt.s32.totalorder %s22, 1
      %s344 = scalar_select %p343, %s22, 1
      %s345 = smul.addr %s344, 32
      %s346 = smul.addr %s345, 8
      %s347 = scalar_lea.vmem %s0, %s346
      %p348 = pneg %p43
      %p349 = pneg %p40
      %p350 = pneg %p64
      %p351 = pneg %p61
      %p352 = pneg %p85
      %p353 = pneg %p82
      %p354 = pneg %p106
      %p355 = pneg %p103
      %p356 = pneg %p127
      %p357 = pneg %p124
      %p358 = pneg %p148
      %p359 = pneg %p145
      %p360 = pneg %p169
      %p361 = pneg %p166
      %p362 = pneg %p190
      %p363 = pneg %p187
      %p364 = pneg %p211
      %p365 = pneg %p208
      %p366 = pneg %p232
      %p367 = pneg %p229
      %p368 = pneg %p253
      %p369 = pneg %p250
      %p370 = pneg %p279
      %p371 = pneg %p276
      %p372 = scmp.lt.s32.totalorder %s22, 1
      %s373 = scalar_select %p372, %s22, 1
      %s374 = smul.addr %s373, 32
      %s375 = smul.addr %s374, 8
      %s376 = scalar_lea.vmem %s11, %s375
      %p377 = scmp.lt.s32.totalorder %s22, 1
      %s378 = scalar_select %p377, %s22, 1
      %s379 = smul.addr %s378, 32
      %s380 = smul.addr %s379, 8
      %s381 = scalar_lea.vmem %s0, %s380
      %p382 = scmp.lt.s32.totalorder %s22, 1
      %s383 = scalar_select %p382, %s22, 1
      %s384 = smul.addr %s383, 32
      %s385 = smul.addr %s384, 8
      %s386 = scalar_lea.vmem %s11, %s385
      %vm388 = vcmask 1043456
      %vm389 = vcmask 130052
      %vm390 = vmor %vm389, %vm388
      %391 = vst.msk [vmem:[#allocation2] sm:$0xff] %vm390, 0
      %392 = vst.msk [vmem:[#allocation2 + $0x8] sm:$0xff] %vm390, 0
      %393 = vst.msk [vmem:[#allocation2 + $0x110] sm:$0xff] %vm390, 0
      %394 = vst.msk [vmem:[#allocation2 + $0x118] sm:$0xff] %vm390, 0
      %v395 = vlaneseq
      %v396 = vshrl.u32 %v395, 7
      %v397 = vadd.s32 %v396, 8
      %v398 = vadd.s32 %v396, 16
      %v399 = vadd.s32 %v396, 24
      %v400 = vadd.s32 %v396, 32
      %v401 = vadd.s32 %v396, 40
      %v402 = vadd.s32 %v396, 48
      %v403 = vadd.s32 %v396, 56
      %v404 = vadd.s32 %v396, 64
      %v405 = vadd.s32 %v396, 72
      %v406 = vadd.s32 %v396, 80
      %v407 = vadd.s32 %v396, 88
      %v408 = vadd.s32 %v396, 96
      %v409 = vadd.s32 %v396, 104
      %v410 = vadd.s32 %v396, 112
      %v411 = vadd.s32 %v396, 120
      %v412 = vadd.s32 %v396, 128
      %v413 = vadd.s32 %v396, 136
      %v414 = vadd.s32 %v396, 144
      %v415 = vadd.s32 %v396, 152
      %v416 = vadd.s32 %v396, 160
      %v417 = vadd.s32 %v396, 168
      %v418 = vadd.s32 %v396, 176
      %v419 = vadd.s32 %v396, 184
      %v420 = vadd.s32 %v396, 192
      %v421 = vadd.s32 %v396, 200
      %v422 = vadd.s32 %v396, 208
      %v423 = vadd.s32 %v396, 216
      %v424 = vadd.s32 %v396, 224
      %v425 = vadd.s32 %v396, 232
      %v426 = vadd.s32 %v396, 240
      %v427 = vadd.s32 %v396, 248
      %vm428 = vcmp.lt.s32.totalorder %v396, 0
      %v429 = vsub.s32 0, %v396
      %v430 = vsel %vm428, %v429, %v396
      %v431 = vshrl.u32 %v430, 4
      %v432 = vand.u32 %v430, 15
      %v433 = vsub.s32 0, %v432
      %v434 = vsel %vm428, %v433, %v432
      %vm435 = vcmp.lt.s32.totalorder %v397, 0
      %v436 = vsub.s32 0, %v397
      %v437 = vsel %vm435, %v436, %v397
      %v438 = vshrl.u32 %v437, 4
      %v439 = vand.u32 %v437, 15
      %v440 = vsub.s32 0, %v439
      %v441 = vsel %vm435, %v440, %v439
      %vm442 = vcmp.lt.s32.totalorder %v398, 0
      %v443 = vsub.s32 0, %v398
      %v444 = vsel %vm442, %v443, %v398
      %v445 = vshrl.u32 %v444, 4
      %v446 = vand.u32 %v444, 15
      %v447 = vsub.s32 0, %v446
      %v448 = vsel %vm442, %v447, %v446
      %vm449 = vcmp.lt.s32.totalorder %v399, 0
      %v450 = vsub.s32 0, %v399
      %v451 = vsel %vm449, %v450, %v399
      %v452 = vshrl.u32 %v451, 4
      %v453 = vand.u32 %v451, 15
      %v454 = vsub.s32 0, %v453
      %v455 = vsel %vm449, %v454, %v453
      %vm456 = vcmp.lt.s32.totalorder %v400, 0
      %v457 = vsub.s32 0, %v400
      %v458 = vsel %vm456, %v457, %v400
      %v459 = vshrl.u32 %v458, 4
      %v460 = vand.u32 %v458, 15
      %v461 = vsub.s32 0, %v460
      %v462 = vsel %vm456, %v461, %v460
      %vm463 = vcmp.lt.s32.totalorder %v401, 0
      %v464 = vsub.s32 0, %v401
      %v465 = vsel %vm463, %v464, %v401
      %v466 = vshrl.u32 %v465, 4
      %v467 = vand.u32 %v465, 15
      %v468 = vsub.s32 0, %v467
      %v469 = vsel %vm463, %v468, %v467
      %vm470 = vcmp.lt.s32.totalorder %v402, 0
      %v471 = vsub.s32 0, %v402
      %v472 = vsel %vm470, %v471, %v402
      %v473 = vshrl.u32 %v472, 4
      %v474 = vand.u32 %v472, 15
      %v475 = vsub.s32 0, %v474
      %v476 = vsel %vm470, %v475, %v474
      %vm477 = vcmp.lt.s32.totalorder %v403, 0
      %v478 = vsub.s32 0, %v403
      %v479 = vsel %vm477, %v478, %v403
      %v480 = vshrl.u32 %v479, 4
      %v481 = vand.u32 %v479, 15
      %v482 = vsub.s32 0, %v481
      %v483 = vsel %vm477, %v482, %v481
      %vm484 = vcmp.lt.s32.totalorder %v404, 0
      %v485 = vsub.s32 0, %v404
      %v486 = vsel %vm484, %v485, %v404
      %v487 = vshrl.u32 %v486, 4
      %v488 = vand.u32 %v486, 15
      %v489 = vsub.s32 0, %v488
      %v490 = vsel %vm484, %v489, %v488
      %vm491 = vcmp.lt.s32.totalorder %v405, 0
      %v492 = vsub.s32 0, %v405
      %v493 = vsel %vm491, %v492, %v405
      %v494 = vshrl.u32 %v493, 4
      %v495 = vand.u32 %v493, 15
      %v496 = vsub.s32 0, %v495
      %v497 = vsel %vm491, %v496, %v495
      %vm498 = vcmp.lt.s32.totalorder %v406, 0
      %v499 = vsub.s32 0, %v406
      %v500 = vsel %vm498, %v499, %v406
      %v501 = vshrl.u32 %v500, 4
      %v502 = vand.u32 %v500, 15
      %v503 = vsub.s32 0, %v502
      %v504 = vsel %vm498, %v503, %v502
      %vm505 = vcmp.lt.s32.totalorder %v407, 0
      %v506 = vsub.s32 0, %v407
      %v507 = vsel %vm505, %v506, %v407
      %v508 = vshrl.u32 %v507, 4
      %v509 = vand.u32 %v507, 15
      %v510 = vsub.s32 0, %v509
      %v511 = vsel %vm505, %v510, %v509
      %vm512 = vcmp.lt.s32.totalorder %v408, 0
      %v513 = vsub.s32 0, %v408
      %v514 = vsel %vm512, %v513, %v408
      %v515 = vshrl.u32 %v514, 4
      %v516 = vand.u32 %v514, 15
      %v517 = vsub.s32 0, %v516
      %v518 = vsel %vm512, %v517, %v516
      %vm519 = vcmp.lt.s32.totalorder %v409, 0
      %v520 = vsub.s32 0, %v409
      %v521 = vsel %vm519, %v520, %v409
      %v522 = vshrl.u32 %v521, 4
      %v523 = vand.u32 %v521, 15
      %v524 = vsub.s32 0, %v523
      %v525 = vsel %vm519, %v524, %v523
      %vm526 = vcmp.lt.s32.totalorder %v410, 0
      %v527 = vsub.s32 0, %v410
      %v528 = vsel %vm526, %v527, %v410
      %v529 = vshrl.u32 %v528, 4
      %v530 = vand.u32 %v528, 15
      %v531 = vsub.s32 0, %v530
      %v532 = vsel %vm526, %v531, %v530
      %vm533 = vcmp.lt.s32.totalorder %v411, 0
      %v534 = vsub.s32 0, %v411
      %v535 = vsel %vm533, %v534, %v411
      %v536 = vshrl.u32 %v535, 4
      %v537 = vand.u32 %v535, 15
      %v538 = vsub.s32 0, %v537
      %v539 = vsel %vm533, %v538, %v537
      %vm540 = vcmp.lt.s32.totalorder %v412, 0
      %v541 = vsub.s32 0, %v412
      %v542 = vsel %vm540, %v541, %v412
      %v543 = vshrl.u32 %v542, 4
      %v544 = vand.u32 %v542, 15
      %v545 = vsub.s32 0, %v544
      %v546 = vsel %vm540, %v545, %v544
      %vm547 = vcmp.lt.s32.totalorder %v413, 0
      %v548 = vsub.s32 0, %v413
      %v549 = vsel %vm547, %v548, %v413
      %v550 = vshrl.u32 %v549, 4
      %v551 = vand.u32 %v549, 15
      %v552 = vsub.s32 0, %v551
      %v553 = vsel %vm547, %v552, %v551
      %vm554 = vcmp.lt.s32.totalorder %v414, 0
      %v555 = vsub.s32 0, %v414
      %v556 = vsel %vm554, %v555, %v414
      %v557 = vshrl.u32 %v556, 4
      %v558 = vand.u32 %v556, 15
      %v559 = vsub.s32 0, %v558
      %v560 = vsel %vm554, %v559, %v558
      %vm561 = vcmp.lt.s32.totalorder %v415, 0
      %v562 = vsub.s32 0, %v415
      %v563 = vsel %vm561, %v562, %v415
      %v564 = vshrl.u32 %v563, 4
      %v565 = vand.u32 %v563, 15
      %v566 = vsub.s32 0, %v565
      %v567 = vsel %vm561, %v566, %v565
      %vm568 = vcmp.lt.s32.totalorder %v416, 0
      %v569 = vsub.s32 0, %v416
      %v570 = vsel %vm568, %v569, %v416
      %v571 = vshrl.u32 %v570, 4
      %v572 = vand.u32 %v570, 15
      %v573 = vsub.s32 0, %v572
      %v574 = vsel %vm568, %v573, %v572
      %vm575 = vcmp.lt.s32.totalorder %v417, 0
      %v576 = vsub.s32 0, %v417
      %v577 = vsel %vm575, %v576, %v417
      %v578 = vshrl.u32 %v577, 4
      %v579 = vand.u32 %v577, 15
      %v580 = vsub.s32 0, %v579
      %v581 = vsel %vm575, %v580, %v579
      %vm582 = vcmp.lt.s32.totalorder %v418, 0
      %v583 = vsub.s32 0, %v418
      %v584 = vsel %vm582, %v583, %v418
      %v585 = vshrl.u32 %v584, 4
      %v586 = vand.u32 %v584, 15
      %v587 = vsub.s32 0, %v586
      %v588 = vsel %vm582, %v587, %v586
      %vm589 = vcmp.lt.s32.totalorder %v419, 0
      %v590 = vsub.s32 0, %v419
      %v591 = vsel %vm589, %v590, %v419
      %v592 = vshrl.u32 %v591, 4
      %v593 = vand.u32 %v591, 15
      %v594 = vsub.s32 0, %v593
      %v595 = vsel %vm589, %v594, %v593
      %vm596 = vcmp.lt.s32.totalorder %v420, 0
      %v597 = vsub.s32 0, %v420
      %v598 = vsel %vm596, %v597, %v420
      %v599 = vshrl.u32 %v598, 4
      %v600 = vand.u32 %v598, 15
      %v601 = vsub.s32 0, %v600
      %v602 = vsel %vm596, %v601, %v600
      %vm603 = vcmp.lt.s32.totalorder %v421, 0
      %v604 = vsub.s32 0, %v421
      %v605 = vsel %vm603, %v604, %v421
      %v606 = vshrl.u32 %v605, 4
      %v607 = vand.u32 %v605, 15
      %v608 = vsub.s32 0, %v607
      %v609 = vsel %vm603, %v608, %v607
      %vm610 = vcmp.lt.s32.totalorder %v422, 0
      %v611 = vsub.s32 0, %v422
      %v612 = vsel %vm610, %v611, %v422
      %v613 = vshrl.u32 %v612, 4
      %v614 = vand.u32 %v612, 15
      %v615 = vsub.s32 0, %v614
      %v616 = vsel %vm610, %v615, %v614
      %vm617 = vcmp.lt.s32.totalorder %v423, 0
      %v618 = vsub.s32 0, %v423
      %v619 = vsel %vm617, %v618, %v423
      %v620 = vshrl.u32 %v619, 4
      %v621 = vand.u32 %v619, 15
      %v622 = vsub.s32 0, %v621
      %v623 = vsel %vm617, %v622, %v621
      %vm624 = vcmp.lt.s32.totalorder %v424, 0
      %v625 = vsub.s32 0, %v424
      %v626 = vsel %vm624, %v625, %v424
      %v627 = vshrl.u32 %v626, 4
      %v628 = vand.u32 %v626, 15
      %v629 = vsub.s32 0, %v628
      %v630 = vsel %vm624, %v629, %v628
      %vm631 = vcmp.lt.s32.totalorder %v425, 0
      %v632 = vsub.s32 0, %v425
      %v633 = vsel %vm631, %v632, %v425
      %v634 = vshrl.u32 %v633, 4
      %v635 = vand.u32 %v633, 15
      %v636 = vsub.s32 0, %v635
      %v637 = vsel %vm631, %v636, %v635
      %vm638 = vcmp.lt.s32.totalorder %v426, 0
      %v639 = vsub.s32 0, %v426
      %v640 = vsel %vm638, %v639, %v426
      %v641 = vshrl.u32 %v640, 4
      %v642 = vand.u32 %v640, 15
      %v643 = vsub.s32 0, %v642
      %v644 = vsel %vm638, %v643, %v642
      %vm645 = vcmp.lt.s32.totalorder %v427, 0
      %v646 = vsub.s32 0, %v427
      %v647 = vsel %vm645, %v646, %v427
      %v648 = vshrl.u32 %v647, 4
      %v649 = vand.u32 %v647, 15
      %v650 = vsub.s32 0, %v649
      %v651 = vsel %vm645, %v650, %v649
      %vm652 = vcmp.ne.s32.totalorder %v434, 0
      %vm653 = vcmp.ne.s32.totalorder %v441, 0
      %vm654 = vcmp.ne.s32.totalorder %v448, 0
      %vm655 = vcmp.ne.s32.totalorder %v455, 0
      %vm656 = vcmp.ne.s32.totalorder %v462, 0
      %vm657 = vcmp.ne.s32.totalorder %v469, 0
      %vm658 = vcmp.ne.s32.totalorder %v476, 0
      %vm659 = vcmp.ne.s32.totalorder %v483, 0
      %vm660 = vcmp.ne.s32.totalorder %v490, 0
      %vm661 = vcmp.ne.s32.totalorder %v497, 0
      %vm662 = vcmp.ne.s32.totalorder %v504, 0
      %vm663 = vcmp.ne.s32.totalorder %v511, 0
      %vm664 = vcmp.ne.s32.totalorder %v518, 0
      %vm665 = vcmp.ne.s32.totalorder %v525, 0
      %vm666 = vcmp.ne.s32.totalorder %v532, 0
      %vm667 = vcmp.ne.s32.totalorder %v539, 0
      %vm668 = vcmp.ne.s32.totalorder %v546, 0
      %vm669 = vcmp.ne.s32.totalorder %v553, 0
      %vm670 = vcmp.ne.s32.totalorder %v560, 0
      %vm671 = vcmp.ne.s32.totalorder %v567, 0
      %vm672 = vcmp.ne.s32.totalorder %v574, 0
      %vm673 = vcmp.ne.s32.totalorder %v581, 0
      %vm674 = vcmp.ne.s32.totalorder %v588, 0
      %vm675 = vcmp.ne.s32.totalorder %v595, 0
      %vm676 = vcmp.ne.s32.totalorder %v602, 0
      %vm677 = vcmp.ne.s32.totalorder %v609, 0
      %vm678 = vcmp.ne.s32.totalorder %v616, 0
      %vm679 = vcmp.ne.s32.totalorder %v623, 0
      %vm680 = vcmp.ne.s32.totalorder %v630, 0
      %vm681 = vcmp.ne.s32.totalorder %v637, 0
      %vm682 = vcmp.ne.s32.totalorder %v644, 0
      %vm683 = vcmp.ne.s32.totalorder %v651, 0
      %vm684 = vcmp.lt.s32.totalorder %v434, 0
      %vm685 = vcmp.lt.s32.totalorder %v441, 0
      %vm686 = vcmp.lt.s32.totalorder %v448, 0
      %vm687 = vcmp.lt.s32.totalorder %v455, 0
      %vm688 = vcmp.lt.s32.totalorder %v462, 0
      %vm689 = vcmp.lt.s32.totalorder %v469, 0
      %vm690 = vcmp.lt.s32.totalorder %v476, 0
      %vm691 = vcmp.lt.s32.totalorder %v483, 0
      %vm692 = vcmp.lt.s32.totalorder %v490, 0
      %vm693 = vcmp.lt.s32.totalorder %v497, 0
      %vm694 = vcmp.lt.s32.totalorder %v504, 0
      %vm695 = vcmp.lt.s32.totalorder %v511, 0
      %vm696 = vcmp.lt.s32.totalorder %v518, 0
      %vm697 = vcmp.lt.s32.totalorder %v525, 0
      %vm698 = vcmp.lt.s32.totalorder %v532, 0
      %vm699 = vcmp.lt.s32.totalorder %v539, 0
      %vm700 = vcmp.lt.s32.totalorder %v546, 0
      %vm701 = vcmp.lt.s32.totalorder %v553, 0
      %vm702 = vcmp.lt.s32.totalorder %v560, 0
      %vm703 = vcmp.lt.s32.totalorder %v567, 0
      %vm704 = vcmp.lt.s32.totalorder %v574, 0
      %vm705 = vcmp.lt.s32.totalorder %v581, 0
      %vm706 = vcmp.lt.s32.totalorder %v588, 0
      %vm707 = vcmp.lt.s32.totalorder %v595, 0
      %vm708 = vcmp.lt.s32.totalorder %v602, 0
      %vm709 = vcmp.lt.s32.totalorder %v609, 0
      %vm710 = vcmp.lt.s32.totalorder %v616, 0
      %vm711 = vcmp.lt.s32.totalorder %v623, 0
      %vm712 = vcmp.lt.s32.totalorder %v630, 0
      %vm713 = vcmp.lt.s32.totalorder %v637, 0
      %vm714 = vcmp.lt.s32.totalorder %v644, 0
      %vm715 = vcmp.lt.s32.totalorder %v651, 0
      %vm716 = vmand %vm684, %vm652
      %vm717 = vmand %vm685, %vm653
      %vm718 = vmand %vm686, %vm654
      %vm719 = vmand %vm687, %vm655
      %vm720 = vmand %vm688, %vm656
      %vm721 = vmand %vm689, %vm657
      %vm722 = vmand %vm690, %vm658
      %vm723 = vmand %vm691, %vm659
      %vm724 = vmand %vm692, %vm660
      %vm725 = vmand %vm693, %vm661
      %vm726 = vmand %vm694, %vm662
      %vm727 = vmand %vm695, %vm663
      %vm728 = vmand %vm696, %vm664
      %vm729 = vmand %vm697, %vm665
      %vm730 = vmand %vm698, %vm666
      %vm731 = vmand %vm699, %vm667
      %vm732 = vmand %vm700, %vm668
      %vm733 = vmand %vm701, %vm669
      %vm734 = vmand %vm702, %vm670
      %vm735 = vmand %vm703, %vm671
      %vm736 = vmand %vm704, %vm672
      %vm737 = vmand %vm705, %vm673
      %vm738 = vmand %vm706, %vm674
      %vm739 = vmand %vm707, %vm675
      %vm740 = vmand %vm708, %vm676
      %vm741 = vmand %vm709, %vm677
      %vm742 = vmand %vm710, %vm678
      %vm743 = vmand %vm711, %vm679
      %vm744 = vmand %vm712, %vm680
      %vm745 = vmand %vm713, %vm681
      %vm746 = vmand %vm714, %vm682
      %vm747 = vmand %vm715, %vm683
      %v748 = vadd.s32 %v434, 16
      %v749 = vadd.s32 %v441, 16
      %v750 = vadd.s32 %v448, 16
      %v751 = vadd.s32 %v455, 16
      %v752 = vadd.s32 %v462, 16
      %v753 = vadd.s32 %v469, 16
      %v754 = vadd.s32 %v476, 16
      %v755 = vadd.s32 %v483, 16
      %v756 = vadd.s32 %v490, 16
      %v757 = vadd.s32 %v497, 16
      %v758 = vadd.s32 %v504, 16
      %v759 = vadd.s32 %v511, 16
      %v760 = vadd.s32 %v518, 16
      %v761 = vadd.s32 %v525, 16
      %v762 = vadd.s32 %v532, 16
      %v763 = vadd.s32 %v539, 16
      %v764 = vadd.s32 %v546, 16
      %v765 = vadd.s32 %v553, 16
      %v766 = vadd.s32 %v560, 16
      %v767 = vadd.s32 %v567, 16
      %v768 = vadd.s32 %v574, 16
      %v769 = vadd.s32 %v581, 16
      %v770 = vadd.s32 %v588, 16
      %v771 = vadd.s32 %v595, 16
      %v772 = vadd.s32 %v602, 16
      %v773 = vadd.s32 %v609, 16
      %v774 = vadd.s32 %v616, 16
      %v775 = vadd.s32 %v623, 16
      %v776 = vadd.s32 %v630, 16
      %v777 = vadd.s32 %v637, 16
      %v778 = vadd.s32 %v644, 16
      %v779 = vadd.s32 %v651, 16
      %v780 = vsel %vm716, %v748, %v434
      %v781 = vsel %vm717, %v749, %v441
      %v782 = vsel %vm718, %v750, %v448
      %v783 = vsel %vm719, %v751, %v455
      %v784 = vsel %vm720, %v752, %v462
      %v785 = vsel %vm721, %v753, %v469
      %v786 = vsel %vm722, %v754, %v476
      %v787 = vsel %vm723, %v755, %v483
      %v788 = vsel %vm724, %v756, %v490
      %v789 = vsel %vm725, %v757, %v497
      %v790 = vsel %vm726, %v758, %v504
      %v791 = vsel %vm727, %v759, %v511
      %v792 = vsel %vm728, %v760, %v518
      %v793 = vsel %vm729, %v761, %v525
      %v794 = vsel %vm730, %v762, %v532
      %v795 = vsel %vm731, %v763, %v539
      %v796 = vsel %vm732, %v764, %v546
      %v797 = vsel %vm733, %v765, %v553
      %v798 = vsel %vm734, %v766, %v560
      %v799 = vsel %vm735, %v767, %v567
      %v800 = vsel %vm736, %v768, %v574
      %v801 = vsel %vm737, %v769, %v581
      %v802 = vsel %vm738, %v770, %v588
      %v803 = vsel %vm739, %v771, %v595
      %v804 = vsel %vm740, %v772, %v602
      %v805 = vsel %vm741, %v773, %v609
      %v806 = vsel %vm742, %v774, %v616
      %v807 = vsel %vm743, %v775, %v623
      %v808 = vsel %vm744, %v776, %v630
      %v809 = vsel %vm745, %v777, %v637
      %v810 = vsel %vm746, %v778, %v644
      %v811 = vsel %vm747, %v779, %v651
      %vm812 = vcmp.eq.s32.totalorder %v780, 0
      %vm813 = vcmp.eq.s32.totalorder %v781, 0
      %vm814 = vcmp.eq.s32.totalorder %v782, 0
      %vm815 = vcmp.eq.s32.totalorder %v783, 0
      %vm816 = vcmp.eq.s32.totalorder %v784, 0
      %vm817 = vcmp.eq.s32.totalorder %v785, 0
      %vm818 = vcmp.eq.s32.totalorder %v786, 0
      %vm819 = vcmp.eq.s32.totalorder %v787, 0
      %vm820 = vcmp.eq.s32.totalorder %v788, 0
      %vm821 = vcmp.eq.s32.totalorder %v789, 0
      %vm822 = vcmp.eq.s32.totalorder %v790, 0
      %vm823 = vcmp.eq.s32.totalorder %v791, 0
      %vm824 = vcmp.eq.s32.totalorder %v792, 0
      %vm825 = vcmp.eq.s32.totalorder %v793, 0
      %vm826 = vcmp.eq.s32.totalorder %v794, 0
      %vm827 = vcmp.eq.s32.totalorder %v795, 0
      %vm828 = vcmp.eq.s32.totalorder %v796, 0
      %vm829 = vcmp.eq.s32.totalorder %v797, 0
      %vm830 = vcmp.eq.s32.totalorder %v798, 0
      %vm831 = vcmp.eq.s32.totalorder %v799, 0
      %vm832 = vcmp.eq.s32.totalorder %v800, 0
      %vm833 = vcmp.eq.s32.totalorder %v801, 0
      %vm834 = vcmp.eq.s32.totalorder %v802, 0
      %vm835 = vcmp.eq.s32.totalorder %v803, 0
      %vm836 = vcmp.eq.s32.totalorder %v804, 0
      %vm837 = vcmp.eq.s32.totalorder %v805, 0
      %vm838 = vcmp.eq.s32.totalorder %v806, 0
      %vm839 = vcmp.eq.s32.totalorder %v807, 0
      %vm840 = vcmp.eq.s32.totalorder %v808, 0
      %vm841 = vcmp.eq.s32.totalorder %v809, 0
      %vm842 = vcmp.eq.s32.totalorder %v810, 0
      %vm843 = vcmp.eq.s32.totalorder %v811, 0
      %vm844 = vcmp.eq.s32.totalorder %v780, 15
      %vm845 = vcmp.eq.s32.totalorder %v781, 15
      %vm846 = vcmp.eq.s32.totalorder %v782, 15
      %vm847 = vcmp.eq.s32.totalorder %v783, 15
      %vm848 = vcmp.eq.s32.totalorder %v784, 15
      %vm849 = vcmp.eq.s32.totalorder %v785, 15
      %vm850 = vcmp.eq.s32.totalorder %v786, 15
      %vm851 = vcmp.eq.s32.totalorder %v787, 15
      %vm852 = vcmp.eq.s32.totalorder %v788, 15
      %vm853 = vcmp.eq.s32.totalorder %v789, 15
      %vm854 = vcmp.eq.s32.totalorder %v790, 15
      %vm855 = vcmp.eq.s32.totalorder %v791, 15
      %vm856 = vcmp.eq.s32.totalorder %v792, 15
      %vm857 = vcmp.eq.s32.totalorder %v793, 15
      %vm858 = vcmp.eq.s32.totalorder %v794, 15
      %vm859 = vcmp.eq.s32.totalorder %v795, 15
      %vm860 = vcmp.eq.s32.totalorder %v796, 15
      %vm861 = vcmp.eq.s32.totalorder %v797, 15
      %vm862 = vcmp.eq.s32.totalorder %v798, 15
      %vm863 = vcmp.eq.s32.totalorder %v799, 15
      %vm864 = vcmp.eq.s32.totalorder %v800, 15
      %vm865 = vcmp.eq.s32.totalorder %v801, 15
      %vm866 = vcmp.eq.s32.totalorder %v802, 15
      %vm867 = vcmp.eq.s32.totalorder %v803, 15
      %vm868 = vcmp.eq.s32.totalorder %v804, 15
      %vm869 = vcmp.eq.s32.totalorder %v805, 15
      %vm870 = vcmp.eq.s32.totalorder %v806, 15
      %vm871 = vcmp.eq.s32.totalorder %v807, 15
      %vm872 = vcmp.eq.s32.totalorder %v808, 15
      %vm873 = vcmp.eq.s32.totalorder %v809, 15
      %vm874 = vcmp.eq.s32.totalorder %v810, 15
      %vm875 = vcmp.eq.s32.totalorder %v811, 15
      %v876 = vld [vmem:[%s381] sm:$0xff]
      %v877 = vld [vmem:[%s381 + $0x8] sm:$0xff]
      %v878 = vld [vmem:[%s381 + $0x10] sm:$0xff]
      %v879 = vld [vmem:[%s381 + $0x18] sm:$0xff]
      %v880 = vld [vmem:[%s381 + $0x20] sm:$0xff]
      %v881 = vld [vmem:[%s381 + $0x28] sm:$0xff]
      %v882 = vld [vmem:[%s381 + $0x30] sm:$0xff]
      %v883 = vld [vmem:[%s381 + $0x38] sm:$0xff]
      %v884 = vld [vmem:[%s381 + $0x40] sm:$0xff]
      %v885 = vld [vmem:[%s381 + $0x48] sm:$0xff]
      %v886 = vld [vmem:[%s381 + $0x50] sm:$0xff]
      %v887 = vld [vmem:[%s381 + $0x58] sm:$0xff]
      %v888 = vld [vmem:[%s381 + $0x60] sm:$0xff]
      %v889 = vld [vmem:[%s381 + $0x68] sm:$0xff]
      %v890 = vld [vmem:[%s381 + $0x70] sm:$0xff]
      %v891 = vld [vmem:[%s381 + $0x78] sm:$0xff]
      %v892 = vld [vmem:[%s381 + $0x80] sm:$0xff]
      %v893 = vld [vmem:[%s381 + $0x88] sm:$0xff]
      %v894 = vld [vmem:[%s381 + $0x90] sm:$0xff]
      %v895 = vld [vmem:[%s381 + $0x98] sm:$0xff]
      %v896 = vld [vmem:[%s381 + $0xa0] sm:$0xff]
      %v897 = vld [vmem:[%s381 + $0xa8] sm:$0xff]
      %v898 = vld [vmem:[%s381 + $0xb0] sm:$0xff]
      %v899 = vld [vmem:[%s381 + $0xb8] sm:$0xff]
      %v900 = vld [vmem:[%s381 + $0xc0] sm:$0xff]
      %v901 = vld [vmem:[%s381 + $0xc8] sm:$0xff]
      %v902 = vld [vmem:[%s381 + $0xd0] sm:$0xff]
      %v903 = vld [vmem:[%s381 + $0xd8] sm:$0xff]
      %v904 = vld [vmem:[%s381 + $0xe0] sm:$0xff]
      %v905 = vld [vmem:[%s381 + $0xe8] sm:$0xff]
      %v906 = vld [vmem:[%s381 + $0xf0] sm:$0xff]
      %v907 = vld [vmem:[%s381 + $0xf8] sm:$0xff]
      %v908 = vmax.f32 %v876, 0.0
      %v909 = vmax.f32 %v877, 0.0
      %v910 = vmax.f32 %v878, 0.0
      %v911 = vmax.f32 %v879, 0.0
      %v912 = vmax.f32 %v880, 0.0
      %v913 = vmax.f32 %v881, 0.0
      %v914 = vmax.f32 %v882, 0.0
      %v915 = vmax.f32 %v883, 0.0
      %v916 = vmax.f32 %v884, 0.0
      %v917 = vmax.f32 %v885, 0.0
      %v918 = vmax.f32 %v886, 0.0
      %v919 = vmax.f32 %v887, 0.0
      %v920 = vmax.f32 %v888, 0.0
      %v921 = vmax.f32 %v889, 0.0
      %v922 = vmax.f32 %v890, 0.0
      %v923 = vmax.f32 %v891, 0.0
      %v924 = vmax.f32 %v892, 0.0
      %v925 = vmax.f32 %v893, 0.0
      %v926 = vmax.f32 %v894, 0.0
      %v927 = vmax.f32 %v895, 0.0
      %v928 = vmax.f32 %v896, 0.0
      %v929 = vmax.f32 %v897, 0.0
      %v930 = vmax.f32 %v898, 0.0
      %v931 = vmax.f32 %v899, 0.0
      %v932 = vmax.f32 %v900, 0.0
      %v933 = vmax.f32 %v901, 0.0
      %v934 = vmax.f32 %v902, 0.0
      %v935 = vmax.f32 %v903, 0.0
      %v936 = vmax.f32 %v904, 0.0
      %v937 = vmax.f32 %v905, 0.0
      %v938 = vmax.f32 %v906, 0.0
      %v939 = vmax.f32 %v907, 0.0
      %v940 = vpack.c.bf16 %v909, %v908
      %v941 = vpack.c.bf16 %v911, %v910
      %v942 = vpack.c.bf16 %v913, %v912
      %v943 = vpack.c.bf16 %v915, %v914
      %v944 = vpack.c.bf16 %v917, %v916
      %v945 = vpack.c.bf16 %v919, %v918
      %v946 = vpack.c.bf16 %v921, %v920
      %v947 = vpack.c.bf16 %v923, %v922
      %v948 = vpack.c.bf16 %v925, %v924
      %v949 = vpack.c.bf16 %v927, %v926
      %v950 = vpack.c.bf16 %v929, %v928
      %v951 = vpack.c.bf16 %v931, %v930
      %v952 = vpack.c.bf16 %v933, %v932
      %v953 = vpack.c.bf16 %v935, %v934
      %v954 = vpack.c.bf16 %v937, %v936
      %v955 = vpack.c.bf16 %v939, %v938
      %v956 = vld [vmem:[%s1] sm:$0x3]
      %v957 = vld [vmem:[%s2] sm:$0x1]
      %v959 = vlaneseq
      %v960 = vshrl.u32 %v959, 7
      %v961 = vsub.s32 0, %v960
      %v962 = vrot.slane %v957, %v961
      %vm964 = vcmask 31744
      %v966 = vsel %vm964, %v940, 0
      %v969 = vsel %vm964, %v941, 0
      %v972 = vsel %vm964, %v942, 0
      %v975 = vsel %vm964, %v943, 0
      %v978 = vsel %vm964, %v944, 0
      %v981 = vsel %vm964, %v945, 0
      %v984 = vsel %vm964, %v946, 0
      %v987 = vsel %vm964, %v947, 0
      %v990 = vsel %vm964, %v948, 0
      %v993 = vsel %vm964, %v949, 0
      %v996 = vsel %vm964, %v950, 0
      %v999 = vsel %vm964, %v951, 0
      %v1002 = vsel %vm964, %v952, 0
      %v1005 = vsel %vm964, %v953, 0
      %v1008 = vsel %vm964, %v954, 0
      %v1011 = vsel %vm964, %v955, 0
      %vm1013 = vcmask 1041408
      %v1015 = vsel %vm1013, %v956, 0
      %1017 = vmatprep.subr.bf16.mxu0 0
      %1018 = vmatpush1.bf16.msra.mxu0 0
      %1019 = vmatprep.subr.bf16.mxu0 0
      %1020 = vmatpush1.bf16.msra.mxu0 0
      %1021 = vmatprep.subr.bf16.mxu0 0
      %1022 = vmatpush1.bf16.msra.mxu0 0
      %1023 = vmatprep.subr.bf16.mxu0 0
      %1024 = vmatpush1.bf16.msra.mxu0 0
      %1025 = vmatprep.subr.bf16.mxu0 0
      %1026 = vmatpush1.bf16.msra.mxu0 0
      %1027 = vmatprep.subr.bf16.mxu0 0
      %1028 = vmatpush1.bf16.msra.mxu0 0
      %1029 = vmatprep.subr.bf16.mxu0 0
      %1030 = vmatpush1.bf16.msra.mxu0 0
      %1031 = vmatprep.subr.bf16.mxu0 0
      %1032 = vmatpush1.bf16.msra.mxu0 %v1015
      %1033 = vmatprep.subr.bf16.mxu0 0
      %1034 = vmatpush2.bf16.msra.mxu0 0
      %1035 = vmatprep.subr.bf16.mxu0 0
      %1036 = vmatpush2.bf16.msra.mxu0 0
      %1037 = vmatprep.subr.bf16.mxu0 0
      %1038 = vmatpush2.bf16.msra.mxu0 0
      %1039 = vmatprep.subr.bf16.mxu0 0
      %1040 = vmatpush2.bf16.msra.mxu0 0
      %1041 = vmatprep.subr.bf16.mxu0 0
      %1042 = vmatpush2.bf16.msra.mxu0 0
      %1043 = vmatprep.subr.bf16.mxu0 0
      %1044 = vmatpush2.bf16.msra.mxu0 0
      %1045 = vmatprep.subr.bf16.mxu0 0
      %1046 = vmatpush2.bf16.msra.mxu0 0
      %1047 = vmatprep.subr.bf16.mxu0 0
      %1048 = vmatpush2.bf16.msra.mxu0 0
      %1049 = vmatprep.mubr.bf16.mxu0 0
      %1050 = vmatmul.mubr.bf16.gmra.mxu0 %v966
      %v1051 = vpop.f32.mrf.mxu0
      %v1052 = vadd.f32 %v962, %v1051
      %v1053 = vpop.f32.mrf.mxu0
      %v1054 = vpop.f32.mrf.mxu0
      %v1055 = vadd.f32 %v962, %v1054
      %v1056 = vpop.f32.mrf.mxu0
      %1057 = vmatprep.mubr.bf16.mxu0 0
      %1058 = vmatmul.mubr.bf16.gmra.mxu0 %v969
      %v1059 = vpop.f32.mrf.mxu0
      %v1060 = vadd.f32 %v962, %v1059
      %v1061 = vpop.f32.mrf.mxu0
      %v1062 = vpop.f32.mrf.mxu0
      %v1063 = vadd.f32 %v962, %v1062
      %v1064 = vpop.f32.mrf.mxu0
      %1065 = vmatprep.mubr.bf16.mxu0 0
      %1066 = vmatmul.mubr.bf16.gmra.mxu0 %v972
      %v1067 = vpop.f32.mrf.mxu0
      %v1068 = vadd.f32 %v962, %v1067
      %v1069 = vpop.f32.mrf.mxu0
      %v1070 = vpop.f32.mrf.mxu0
      %v1071 = vadd.f32 %v962, %v1070
      %v1072 = vpop.f32.mrf.mxu0
      %1073 = vmatprep.mubr.bf16.mxu0 0
      %1074 = vmatmul.mubr.bf16.gmra.mxu0 %v975
      %v1075 = vpop.f32.mrf.mxu0
      %v1076 = vadd.f32 %v962, %v1075
      %v1077 = vpop.f32.mrf.mxu0
      %v1078 = vpop.f32.mrf.mxu0
      %v1079 = vadd.f32 %v962, %v1078
      %v1080 = vpop.f32.mrf.mxu0
      %1081 = vmatprep.mubr.bf16.mxu0 0
      %1082 = vmatmul.mubr.bf16.gmra.mxu0 %v978
      %v1083 = vpop.f32.mrf.mxu0
      %v1084 = vadd.f32 %v962, %v1083
      %v1085 = vpop.f32.mrf.mxu0
      %v1086 = vpop.f32.mrf.mxu0
      %v1087 = vadd.f32 %v962, %v1086
      %v1088 = vpop.f32.mrf.mxu0
      %1089 = vmatprep.mubr.bf16.mxu0 0
      %1090 = vmatmul.mubr.bf16.gmra.mxu0 %v981
      %v1091 = vpop.f32.mrf.mxu0
      %v1092 = vadd.f32 %v962, %v1091
      %v1093 = vpop.f32.mrf.mxu0
      %v1094 = vpop.f32.mrf.mxu0
      %v1095 = vadd.f32 %v962, %v1094
      %v1096 = vpop.f32.mrf.mxu0
      %1097 = vmatprep.mubr.bf16.mxu0 0
      %1098 = vmatmul.mubr.bf16.gmra.mxu0 %v984
      %v1099 = vpop.f32.mrf.mxu0
      %v1100 = vadd.f32 %v962, %v1099
      %v1101 = vpop.f32.mrf.mxu0
      %v1102 = vpop.f32.mrf.mxu0
      %v1103 = vadd.f32 %v962, %v1102
      %v1104 = vpop.f32.mrf.mxu0
      %1105 = vmatprep.mubr.bf16.mxu0 0
      %1106 = vmatmul.mubr.bf16.gmra.mxu0 %v987
      %v1107 = vpop.f32.mrf.mxu0
      %v1108 = vadd.f32 %v962, %v1107
      %v1109 = vpop.f32.mrf.mxu0
      %v1110 = vpop.f32.mrf.mxu0
      %v1111 = vadd.f32 %v962, %v1110
      %v1112 = vpop.f32.mrf.mxu0
      %1113 = vmatprep.mubr.bf16.mxu0 0
      %1114 = vmatmul.mubr.bf16.gmra.mxu0 %v990
      %v1115 = vpop.f32.mrf.mxu0
      %v1116 = vadd.f32 %v962, %v1115
      %v1117 = vpop.f32.mrf.mxu0
      %v1118 = vpop.f32.mrf.mxu0
      %v1119 = vadd.f32 %v962, %v1118
      %v1120 = vpop.f32.mrf.mxu0
      %1121 = vmatprep.mubr.bf16.mxu0 0
      %1122 = vmatmul.mubr.bf16.gmra.mxu0 %v993
      %v1123 = vpop.f32.mrf.mxu0
      %v1124 = vadd.f32 %v962, %v1123
      %v1125 = vpop.f32.mrf.mxu0
      %v1126 = vpop.f32.mrf.mxu0
      %v1127 = vadd.f32 %v962, %v1126
      %v1128 = vpop.f32.mrf.mxu0
      %1129 = vmatprep.mubr.bf16.mxu0 0
      %1130 = vmatmul.mubr.bf16.gmra.mxu0 %v996
      %v1131 = vpop.f32.mrf.mxu0
      %v1132 = vadd.f32 %v962, %v1131
      %v1133 = vpop.f32.mrf.mxu0
      %v1134 = vpop.f32.mrf.mxu0
      %v1135 = vadd.f32 %v962, %v1134
      %v1136 = vpop.f32.mrf.mxu0
      %1137 = vmatprep.mubr.bf16.mxu0 0
      %1138 = vmatmul.mubr.bf16.gmra.mxu0 %v999
      %v1139 = vpop.f32.mrf.mxu0
      %v1140 = vadd.f32 %v962, %v1139
      %v1141 = vpop.f32.mrf.mxu0
      %v1142 = vpop.f32.mrf.mxu0
      %v1143 = vadd.f32 %v962, %v1142
      %v1144 = vpop.f32.mrf.mxu0
      %1145 = vmatprep.mubr.bf16.mxu0 0
      %1146 = vmatmul.mubr.bf16.gmra.mxu0 %v1002
      %v1147 = vpop.f32.mrf.mxu0
      %v1148 = vadd.f32 %v962, %v1147
      %v1149 = vpop.f32.mrf.mxu0
      %v1150 = vpop.f32.mrf.mxu0
      %v1151 = vadd.f32 %v962, %v1150
      %v1152 = vpop.f32.mrf.mxu0
      %1153 = vmatprep.mubr.bf16.mxu0 0
      %1154 = vmatmul.mubr.bf16.gmra.mxu0 %v1005
      %v1155 = vpop.f32.mrf.mxu0
      %v1156 = vadd.f32 %v962, %v1155
      %v1157 = vpop.f32.mrf.mxu0
      %v1158 = vpop.f32.mrf.mxu0
      %v1159 = vadd.f32 %v962, %v1158
      %v1160 = vpop.f32.mrf.mxu0
      %1161 = vmatprep.mubr.bf16.mxu0 0
      %1162 = vmatmul.mubr.bf16.gmra.mxu0 %v1008
      %v1163 = vpop.f32.mrf.mxu0
      %v1164 = vadd.f32 %v962, %v1163
      %v1165 = vpop.f32.mrf.mxu0
      %v1166 = vpop.f32.mrf.mxu0
      %v1167 = vadd.f32 %v962, %v1166
      %v1168 = vpop.f32.mrf.mxu0
      %1169 = vmatprep.mubr.bf16.mxu0 0
      %1170 = vmatmul.mubr.bf16.gmra.mxu0 %v1011
      %v1171 = vpop.f32.mrf.mxu0
      %v1172 = vadd.f32 %v962, %v1171
      %v1173 = vpop.f32.mrf.mxu0
      %v1174 = vpop.f32.mrf.mxu0
      %v1175 = vadd.f32 %v962, %v1174
      %v1176 = vpop.f32.mrf.mxu0
      %1177 = vdwg.mxu0
      %v1178 = vmax.f32 %v1052, 0.0
      %v1179 = vmax.f32 %v1055, 0.0
      %v1180 = vmax.f32 %v1060, 0.0
      %v1181 = vmax.f32 %v1063, 0.0
      %v1182 = vmax.f32 %v1068, 0.0
      %v1183 = vmax.f32 %v1071, 0.0
      %v1184 = vmax.f32 %v1076, 0.0
      %v1185 = vmax.f32 %v1079, 0.0
      %v1186 = vmax.f32 %v1084, 0.0
      %v1187 = vmax.f32 %v1087, 0.0
      %v1188 = vmax.f32 %v1092, 0.0
      %v1189 = vmax.f32 %v1095, 0.0
      %v1190 = vmax.f32 %v1100, 0.0
      %v1191 = vmax.f32 %v1103, 0.0
      %v1192 = vmax.f32 %v1108, 0.0
      %v1193 = vmax.f32 %v1111, 0.0
      %v1194 = vmax.f32 %v1116, 0.0
      %v1195 = vmax.f32 %v1119, 0.0
      %v1196 = vmax.f32 %v1124, 0.0
      %v1197 = vmax.f32 %v1127, 0.0
      %v1198 = vmax.f32 %v1132, 0.0
      %v1199 = vmax.f32 %v1135, 0.0
      %v1200 = vmax.f32 %v1140, 0.0
      %v1201 = vmax.f32 %v1143, 0.0
      %v1202 = vmax.f32 %v1148, 0.0
      %v1203 = vmax.f32 %v1151, 0.0
      %v1204 = vmax.f32 %v1156, 0.0
      %v1205 = vmax.f32 %v1159, 0.0
      %v1206 = vmax.f32 %v1164, 0.0
      %v1207 = vmax.f32 %v1167, 0.0
      %v1208 = vmax.f32 %v1172, 0.0
      %v1209 = vmax.f32 %v1175, 0.0
      %v1210 = vpack.c.bf16 %v1179, %v1178
      %v1211 = vpack.c.bf16 %v1181, %v1180
      %v1212 = vpack.c.bf16 %v1183, %v1182
      %v1213 = vpack.c.bf16 %v1185, %v1184
      %v1214 = vpack.c.bf16 %v1187, %v1186
      %v1215 = vpack.c.bf16 %v1189, %v1188
      %v1216 = vpack.c.bf16 %v1191, %v1190
      %v1217 = vpack.c.bf16 %v1193, %v1192
      %v1218 = vpack.c.bf16 %v1195, %v1194
      %v1219 = vpack.c.bf16 %v1197, %v1196
      %v1220 = vpack.c.bf16 %v1199, %v1198
      %v1221 = vpack.c.bf16 %v1201, %v1200
      %v1222 = vpack.c.bf16 %v1203, %v1202
      %v1223 = vpack.c.bf16 %v1205, %v1204
      %v1224 = vpack.c.bf16 %v1207, %v1206
      %v1225 = vpack.c.bf16 %v1209, %v1208
      %1258 = vrot.lane.b32.xlu0 %v1178, 96
      %v1259 = vpop.permute.xlu0 %1258
      %1260 = vrot.lane.b32.xlu0 %v1179, 96
      %v1261 = vpop.permute.xlu0 %1260
      %1262 = vrot.lane.b32.xlu0 %v1180, 96
      %v1263 = vpop.permute.xlu0 %1262
      %1264 = vrot.lane.b32.xlu0 %v1181, 96
      %v1265 = vpop.permute.xlu0 %1264
      %1266 = vrot.lane.b32.xlu0 %v1182, 96
      %v1267 = vpop.permute.xlu0 %1266
      %1268 = vrot.lane.b32.xlu0 %v1183, 96
      %v1269 = vpop.permute.xlu0 %1268
      %1270 = vrot.lane.b32.xlu0 %v1184, 96
      %v1271 = vpop.permute.xlu0 %1270
      %1272 = vrot.lane.b32.xlu0 %v1185, 96
      %v1273 = vpop.permute.xlu0 %1272
      %1274 = vrot.lane.b32.xlu0 %v1186, 96
      %v1275 = vpop.permute.xlu0 %1274
      %1276 = vrot.lane.b32.xlu0 %v1187, 96
      %v1277 = vpop.permute.xlu0 %1276
      %1278 = vrot.lane.b32.xlu0 %v1188, 96
      %v1279 = vpop.permute.xlu0 %1278
      %1280 = vrot.lane.b32.xlu0 %v1189, 96
      %v1281 = vpop.permute.xlu0 %1280
      %1282 = vrot.lane.b32.xlu0 %v1190, 96
      %v1283 = vpop.permute.xlu0 %1282
      %1284 = vrot.lane.b32.xlu0 %v1191, 96
      %v1285 = vpop.permute.xlu0 %1284
      %1286 = vrot.lane.b32.xlu0 %v1192, 96
      %v1287 = vpop.permute.xlu0 %1286
      %1288 = vrot.lane.b32.xlu0 %v1193, 96
      %v1289 = vpop.permute.xlu0 %1288
      %1290 = vrot.lane.b32.xlu0 %v1194, 96
      %v1291 = vpop.permute.xlu0 %1290
      %1292 = vrot.lane.b32.xlu0 %v1195, 96
      %v1293 = vpop.permute.xlu0 %1292
      %1294 = vrot.lane.b32.xlu0 %v1196, 96
      %v1295 = vpop.permute.xlu0 %1294
      %1296 = vrot.lane.b32.xlu0 %v1197, 96
      %v1297 = vpop.permute.xlu0 %1296
      %1298 = vrot.lane.b32.xlu0 %v1198, 96
      %v1299 = vpop.permute.xlu0 %1298
      %1300 = vrot.lane.b32.xlu0 %v1199, 96
      %v1301 = vpop.permute.xlu0 %1300
      %1302 = vrot.lane.b32.xlu0 %v1200, 96
      %v1303 = vpop.permute.xlu0 %1302
      %1304 = vrot.lane.b32.xlu0 %v1201, 96
      %v1305 = vpop.permute.xlu0 %1304
      %1306 = vrot.lane.b32.xlu0 %v1202, 96
      %v1307 = vpop.permute.xlu0 %1306
      %1308 = vrot.lane.b32.xlu0 %v1203, 96
      %v1309 = vpop.permute.xlu0 %1308
      %1310 = vrot.lane.b32.xlu0 %v1204, 96
      %v1311 = vpop.permute.xlu0 %1310
      %1312 = vrot.lane.b32.xlu0 %v1205, 96
      %v1313 = vpop.permute.xlu0 %1312
      %1314 = vrot.lane.b32.xlu0 %v1206, 96
      %v1315 = vpop.permute.xlu0 %1314
      %1316 = vrot.lane.b32.xlu0 %v1207, 96
      %v1317 = vpop.permute.xlu0 %1316
      %1318 = vrot.lane.b32.xlu0 %v1208, 96
      %v1319 = vpop.permute.xlu0 %1318
      %1320 = vrot.lane.b32.xlu0 %v1209, 96
      %v1321 = vpop.permute.xlu0 %1320
      %v1354 = vrot.slane %v1259, 7
      %v1355 = vrot.slane %v1261, 7
      %v1356 = vrot.slane %v1263, 7
      %v1357 = vrot.slane %v1265, 7
      %v1358 = vrot.slane %v1267, 7
      %v1359 = vrot.slane %v1269, 7
      %v1360 = vrot.slane %v1271, 7
      %v1361 = vrot.slane %v1273, 7
      %v1362 = vrot.slane %v1275, 7
      %v1363 = vrot.slane %v1277, 7
      %v1364 = vrot.slane %v1279, 7
      %v1365 = vrot.slane %v1281, 7
      %v1366 = vrot.slane %v1283, 7
      %v1367 = vrot.slane %v1285, 7
      %v1368 = vrot.slane %v1287, 7
      %v1369 = vrot.slane %v1289, 7
      %v1370 = vrot.slane %v1291, 7
      %v1371 = vrot.slane %v1293, 7
      %v1372 = vrot.slane %v1295, 7
      %v1373 = vrot.slane %v1297, 7
      %v1374 = vrot.slane %v1299, 7
      %v1375 = vrot.slane %v1301, 7
      %v1376 = vrot.slane %v1303, 7
      %v1377 = vrot.slane %v1305, 7
      %v1378 = vrot.slane %v1307, 7
      %v1379 = vrot.slane %v1309, 7
      %v1380 = vrot.slane %v1311, 7
      %v1381 = vrot.slane %v1313, 7
      %v1382 = vrot.slane %v1315, 7
      %v1383 = vrot.slane %v1317, 7
      %v1384 = vrot.slane %v1319, 7
      %v1385 = vrot.slane %v1321, 7
      %vm1386 = vcmp.lt.s32.totalorder %v396, 1
      %v1387 = vsel %vm1386, %v1384, %v1385
      %v1388 = vsel %vm1386, %v1383, %v1384
      %v1389 = vsel %vm1386, %v1382, %v1383
      %v1390 = vsel %vm1386, %v1381, %v1382
      %v1391 = vsel %vm1386, %v1380, %v1381
      %v1392 = vsel %vm1386, %v1379, %v1380
      %v1393 = vsel %vm1386, %v1378, %v1379
      %v1394 = vsel %vm1386, %v1377, %v1378
      %v1395 = vsel %vm1386, %v1376, %v1377
      %v1396 = vsel %vm1386, %v1375, %v1376
      %v1397 = vsel %vm1386, %v1374, %v1375
      %v1398 = vsel %vm1386, %v1373, %v1374
      %v1399 = vsel %vm1386, %v1372, %v1373
      %v1400 = vsel %vm1386, %v1371, %v1372
      %v1401 = vsel %vm1386, %v1370, %v1371
      %v1402 = vsel %vm1386, %v1369, %v1370
      %v1403 = vsel %vm1386, %v1368, %v1369
      %v1404 = vsel %vm1386, %v1367, %v1368
      %v1405 = vsel %vm1386, %v1366, %v1367
      %v1406 = vsel %vm1386, %v1365, %v1366
      %v1407 = vsel %vm1386, %v1364, %v1365
      %v1408 = vsel %vm1386, %v1363, %v1364
      %v1409 = vsel %vm1386, %v1362, %v1363
      %v1410 = vsel %vm1386, %v1361, %v1362
      %v1411 = vsel %vm1386, %v1360, %v1361
      %v1412 = vsel %vm1386, %v1359, %v1360
      %v1413 = vsel %vm1386, %v1358, %v1359
      %v1414 = vsel %vm1386, %v1357, %v1358
      %v1415 = vsel %vm1386, %v1356, %v1357
      %v1416 = vsel %vm1386, %v1355, %v1356
      %v1417 = vsel %vm1386, %v1354, %v1355
      %v1418 = vsel %vm1386, %v1385, %v1354
      %v1419 = vsel %vm812, 1, 0
      %v1420 = vsel %vm813, 1, 0
      %v1421 = vsel %vm814, 1, 0
      %v1422 = vsel %vm815, 1, 0
      %v1423 = vsel %vm816, 1, 0
      %v1424 = vsel %vm817, 1, 0
      %v1425 = vsel %vm818, 1, 0
      %v1426 = vsel %vm819, 1, 0
      %v1427 = vsel %vm820, 1, 0
      %v1428 = vsel %vm821, 1, 0
      %v1429 = vsel %vm822, 1, 0
      %v1430 = vsel %vm823, 1, 0
      %v1431 = vsel %vm824, 1, 0
      %v1432 = vsel %vm825, 1, 0
      %v1433 = vsel %vm826, 1, 0
      %v1434 = vsel %vm827, 1, 0
      %v1435 = vsel %vm828, 1, 0
      %v1436 = vsel %vm829, 1, 0
      %v1437 = vsel %vm830, 1, 0
      %v1438 = vsel %vm831, 1, 0
      %v1439 = vsel %vm832, 1, 0
      %v1440 = vsel %vm833, 1, 0
      %v1441 = vsel %vm834, 1, 0
      %v1442 = vsel %vm835, 1, 0
      %v1443 = vsel %vm836, 1, 0
      %v1444 = vsel %vm837, 1, 0
      %v1445 = vsel %vm838, 1, 0
      %v1446 = vsel %vm839, 1, 0
      %v1447 = vsel %vm840, 1, 0
      %v1448 = vsel %vm841, 1, 0
      %v1449 = vsel %vm842, 1, 0
      %v1450 = vsel %vm843, 1, 0
      %vm1451 = vcmp.eq.s32.totalorder %v1419, 1
      %vm1452 = vcmp.eq.s32.totalorder %v1420, 1
      %vm1453 = vcmp.eq.s32.totalorder %v1421, 1
      %vm1454 = vcmp.eq.s32.totalorder %v1422, 1
      %vm1455 = vcmp.eq.s32.totalorder %v1423, 1
      %vm1456 = vcmp.eq.s32.totalorder %v1424, 1
      %vm1457 = vcmp.eq.s32.totalorder %v1425, 1
      %vm1458 = vcmp.eq.s32.totalorder %v1426, 1
      %vm1459 = vcmp.eq.s32.totalorder %v1427, 1
      %vm1460 = vcmp.eq.s32.totalorder %v1428, 1
      %vm1461 = vcmp.eq.s32.totalorder %v1429, 1
      %vm1462 = vcmp.eq.s32.totalorder %v1430, 1
      %vm1463 = vcmp.eq.s32.totalorder %v1431, 1
      %vm1464 = vcmp.eq.s32.totalorder %v1432, 1
      %vm1465 = vcmp.eq.s32.totalorder %v1433, 1
      %vm1466 = vcmp.eq.s32.totalorder %v1434, 1
      %vm1467 = vcmp.eq.s32.totalorder %v1435, 1
      %vm1468 = vcmp.eq.s32.totalorder %v1436, 1
      %vm1469 = vcmp.eq.s32.totalorder %v1437, 1
      %vm1470 = vcmp.eq.s32.totalorder %v1438, 1
      %vm1471 = vcmp.eq.s32.totalorder %v1439, 1
      %vm1472 = vcmp.eq.s32.totalorder %v1440, 1
      %vm1473 = vcmp.eq.s32.totalorder %v1441, 1
      %vm1474 = vcmp.eq.s32.totalorder %v1442, 1
      %vm1475 = vcmp.eq.s32.totalorder %v1443, 1
      %vm1476 = vcmp.eq.s32.totalorder %v1444, 1
      %vm1477 = vcmp.eq.s32.totalorder %v1445, 1
      %vm1478 = vcmp.eq.s32.totalorder %v1446, 1
      %vm1479 = vcmp.eq.s32.totalorder %v1447, 1
      %vm1480 = vcmp.eq.s32.totalorder %v1448, 1
      %vm1481 = vcmp.eq.s32.totalorder %v1449, 1
      %vm1482 = vcmp.eq.s32.totalorder %v1450, 1
      %v1483 = vsel %vm1451, 0.0, %v1418
      %v1484 = vsel %vm1452, 0.0, %v1417
      %v1485 = vsel %vm1453, 0.0, %v1416
      %v1486 = vsel %vm1454, 0.0, %v1415
      %v1487 = vsel %vm1455, 0.0, %v1414
      %v1488 = vsel %vm1456, 0.0, %v1413
      %v1489 = vsel %vm1457, 0.0, %v1412
      %v1490 = vsel %vm1458, 0.0, %v1411
      %v1491 = vsel %vm1459, 0.0, %v1410
      %v1492 = vsel %vm1460, 0.0, %v1409
      %v1493 = vsel %vm1461, 0.0, %v1408
      %v1494 = vsel %vm1462, 0.0, %v1407
      %v1495 = vsel %vm1463, 0.0, %v1406
      %v1496 = vsel %vm1464, 0.0, %v1405
      %v1497 = vsel %vm1465, 0.0, %v1404
      %v1498 = vsel %vm1466, 0.0, %v1403
      %v1499 = vsel %vm1467, 0.0, %v1402
      %v1500 = vsel %vm1468, 0.0, %v1401
      %v1501 = vsel %vm1469, 0.0, %v1400
      %v1502 = vsel %vm1470, 0.0, %v1399
      %v1503 = vsel %vm1471, 0.0, %v1398
      %v1504 = vsel %vm1472, 0.0, %v1397
      %v1505 = vsel %vm1473, 0.0, %v1396
      %v1506 = vsel %vm1474, 0.0, %v1395
      %v1507 = vsel %vm1475, 0.0, %v1394
      %v1508 = vsel %vm1476, 0.0, %v1393
      %v1509 = vsel %vm1477, 0.0, %v1392
      %v1510 = vsel %vm1478, 0.0, %v1391
      %v1511 = vsel %vm1479, 0.0, %v1390
      %v1512 = vsel %vm1480, 0.0, %v1389
      %v1513 = vsel %vm1481, 0.0, %v1388
      %v1514 = vsel %vm1482, 0.0, %v1387
      %v1515 = vpack.c.bf16 %v1484, %v1483
      %v1516 = vpack.c.bf16 %v1486, %v1485
      %v1517 = vpack.c.bf16 %v1488, %v1487
      %v1518 = vpack.c.bf16 %v1490, %v1489
      %v1519 = vpack.c.bf16 %v1492, %v1491
      %v1520 = vpack.c.bf16 %v1494, %v1493
      %v1521 = vpack.c.bf16 %v1496, %v1495
      %v1522 = vpack.c.bf16 %v1498, %v1497
      %v1523 = vpack.c.bf16 %v1500, %v1499
      %v1524 = vpack.c.bf16 %v1502, %v1501
      %v1525 = vpack.c.bf16 %v1504, %v1503
      %v1526 = vpack.c.bf16 %v1506, %v1505
      %v1527 = vpack.c.bf16 %v1508, %v1507
      %v1528 = vpack.c.bf16 %v1510, %v1509
      %v1529 = vpack.c.bf16 %v1512, %v1511
      %v1530 = vpack.c.bf16 %v1514, %v1513
      %v1531 = vrot.slane %v1259, 1
      %v1532 = vrot.slane %v1261, 1
      %v1533 = vrot.slane %v1263, 1
      %v1534 = vrot.slane %v1265, 1
      %v1535 = vrot.slane %v1267, 1
      %v1536 = vrot.slane %v1269, 1
      %v1537 = vrot.slane %v1271, 1
      %v1538 = vrot.slane %v1273, 1
      %v1539 = vrot.slane %v1275, 1
      %v1540 = vrot.slane %v1277, 1
      %v1541 = vrot.slane %v1279, 1
      %v1542 = vrot.slane %v1281, 1
      %v1543 = vrot.slane %v1283, 1
      %v1544 = vrot.slane %v1285, 1
      %v1545 = vrot.slane %v1287, 1
      %v1546 = vrot.slane %v1289, 1
      %v1547 = vrot.slane %v1291, 1
      %v1548 = vrot.slane %v1293, 1
      %v1549 = vrot.slane %v1295, 1
      %v1550 = vrot.slane %v1297, 1
      %v1551 = vrot.slane %v1299, 1
      %v1552 = vrot.slane %v1301, 1
      %v1553 = vrot.slane %v1303, 1
      %v1554 = vrot.slane %v1305, 1
      %v1555 = vrot.slane %v1307, 1
      %v1556 = vrot.slane %v1309, 1
      %v1557 = vrot.slane %v1311, 1
      %v1558 = vrot.slane %v1313, 1
      %v1559 = vrot.slane %v1315, 1
      %v1560 = vrot.slane %v1317, 1
      %v1561 = vrot.slane %v1319, 1
      %v1562 = vrot.slane %v1321, 1
      %vm1563 = vcmp.lt.s32.totalorder %v396, 7
      %v1564 = vsel %vm1563, %v1561, %v1562
      %v1565 = vsel %vm1563, %v1560, %v1561
      %v1566 = vsel %vm1563, %v1559, %v1560
      %v1567 = vsel %vm1563, %v1558, %v1559
      %v1568 = vsel %vm1563, %v1557, %v1558
      %v1569 = vsel %vm1563, %v1556, %v1557
      %v1570 = vsel %vm1563, %v1555, %v1556
      %v1571 = vsel %vm1563, %v1554, %v1555
      %v1572 = vsel %vm1563, %v1553, %v1554
      %v1573 = vsel %vm1563, %v1552, %v1553
      %v1574 = vsel %vm1563, %v1551, %v1552
      %v1575 = vsel %vm1563, %v1550, %v1551
      %v1576 = vsel %vm1563, %v1549, %v1550
      %v1577 = vsel %vm1563, %v1548, %v1549
      %v1578 = vsel %vm1563, %v1547, %v1548
      %v1579 = vsel %vm1563, %v1546, %v1547
      %v1580 = vsel %vm1563, %v1545, %v1546
      %v1581 = vsel %vm1563, %v1544, %v1545
      %v1582 = vsel %vm1563, %v1543, %v1544
      %v1583 = vsel %vm1563, %v1542, %v1543
      %v1584 = vsel %vm1563, %v1541, %v1542
      %v1585 = vsel %vm1563, %v1540, %v1541
      %v1586 = vsel %vm1563, %v1539, %v1540
      %v1587 = vsel %vm1563, %v1538, %v1539
      %v1588 = vsel %vm1563, %v1537, %v1538
      %v1589 = vsel %vm1563, %v1536, %v1537
      %v1590 = vsel %vm1563, %v1535, %v1536
      %v1591 = vsel %vm1563, %v1534, %v1535
      %v1592 = vsel %vm1563, %v1533, %v1534
      %v1593 = vsel %vm1563, %v1532, %v1533
      %v1594 = vsel %vm1563, %v1531, %v1532
      %v1595 = vsel %vm1563, %v1562, %v1531
      %v1596 = vsel %vm844, 1, 0
      %v1597 = vsel %vm845, 1, 0
      %v1598 = vsel %vm846, 1, 0
      %v1599 = vsel %vm847, 1, 0
      %v1600 = vsel %vm848, 1, 0
      %v1601 = vsel %vm849, 1, 0
      %v1602 = vsel %vm850, 1, 0
      %v1603 = vsel %vm851, 1, 0
      %v1604 = vsel %vm852, 1, 0
      %v1605 = vsel %vm853, 1, 0
      %v1606 = vsel %vm854, 1, 0
      %v1607 = vsel %vm855, 1, 0
      %v1608 = vsel %vm856, 1, 0
      %v1609 = vsel %vm857, 1, 0
      %v1610 = vsel %vm858, 1, 0
      %v1611 = vsel %vm859, 1, 0
      %v1612 = vsel %vm860, 1, 0
      %v1613 = vsel %vm861, 1, 0
      %v1614 = vsel %vm862, 1, 0
      %v1615 = vsel %vm863, 1, 0
      %v1616 = vsel %vm864, 1, 0
      %v1617 = vsel %vm865, 1, 0
      %v1618 = vsel %vm866, 1, 0
      %v1619 = vsel %vm867, 1, 0
      %v1620 = vsel %vm868, 1, 0
      %v1621 = vsel %vm869, 1, 0
      %v1622 = vsel %vm870, 1, 0
      %v1623 = vsel %vm871, 1, 0
      %v1624 = vsel %vm872, 1, 0
      %v1625 = vsel %vm873, 1, 0
      %v1626 = vsel %vm874, 1, 0
      %v1627 = vsel %vm875, 1, 0
      %vm1628 = vcmp.eq.s32.totalorder %v1596, 1
      %vm1629 = vcmp.eq.s32.totalorder %v1597, 1
      %vm1630 = vcmp.eq.s32.totalorder %v1598, 1
      %vm1631 = vcmp.eq.s32.totalorder %v1599, 1
      %vm1632 = vcmp.eq.s32.totalorder %v1600, 1
      %vm1633 = vcmp.eq.s32.totalorder %v1601, 1
      %vm1634 = vcmp.eq.s32.totalorder %v1602, 1
      %vm1635 = vcmp.eq.s32.totalorder %v1603, 1
      %vm1636 = vcmp.eq.s32.totalorder %v1604, 1
      %vm1637 = vcmp.eq.s32.totalorder %v1605, 1
      %vm1638 = vcmp.eq.s32.totalorder %v1606, 1
      %vm1639 = vcmp.eq.s32.totalorder %v1607, 1
      %vm1640 = vcmp.eq.s32.totalorder %v1608, 1
      %vm1641 = vcmp.eq.s32.totalorder %v1609, 1
      %vm1642 = vcmp.eq.s32.totalorder %v1610, 1
      %vm1643 = vcmp.eq.s32.totalorder %v1611, 1
      %vm1644 = vcmp.eq.s32.totalorder %v1612, 1
      %vm1645 = vcmp.eq.s32.totalorder %v1613, 1
      %vm1646 = vcmp.eq.s32.totalorder %v1614, 1
      %vm1647 = vcmp.eq.s32.totalorder %v1615, 1
      %vm1648 = vcmp.eq.s32.totalorder %v1616, 1
      %vm1649 = vcmp.eq.s32.totalorder %v1617, 1
      %vm1650 = vcmp.eq.s32.totalorder %v1618, 1
      %vm1651 = vcmp.eq.s32.totalorder %v1619, 1
      %vm1652 = vcmp.eq.s32.totalorder %v1620, 1
      %vm1653 = vcmp.eq.s32.totalorder %v1621, 1
      %vm1654 = vcmp.eq.s32.totalorder %v1622, 1
      %vm1655 = vcmp.eq.s32.totalorder %v1623, 1
      %vm1656 = vcmp.eq.s32.totalorder %v1624, 1
      %vm1657 = vcmp.eq.s32.totalorder %v1625, 1
      %vm1658 = vcmp.eq.s32.totalorder %v1626, 1
      %vm1659 = vcmp.eq.s32.totalorder %v1627, 1
      %v1660 = vsel %vm1628, 0.0, %v1594
      %v1661 = vsel %vm1629, 0.0, %v1593
      %v1662 = vsel %vm1630, 0.0, %v1592
      %v1663 = vsel %vm1631, 0.0, %v1591
      %v1664 = vsel %vm1632, 0.0, %v1590
      %v1665 = vsel %vm1633, 0.0, %v1589
      %v1666 = vsel %vm1634, 0.0, %v1588
      %v1667 = vsel %vm1635, 0.0, %v1587
      %v1668 = vsel %vm1636, 0.0, %v1586
      %v1669 = vsel %vm1637, 0.0, %v1585
      %v1670 = vsel %vm1638, 0.0, %v1584
      %v1671 = vsel %vm1639, 0.0, %v1583
      %v1672 = vsel %vm1640, 0.0, %v1582
      %v1673 = vsel %vm1641, 0.0, %v1581
      %v1674 = vsel %vm1642, 0.0, %v1580
      %v1675 = vsel %vm1643, 0.0, %v1579
      %v1676 = vsel %vm1644, 0.0, %v1578
      %v1677 = vsel %vm1645, 0.0, %v1577
      %v1678 = vsel %vm1646, 0.0, %v1576
      %v1679 = vsel %vm1647, 0.0, %v1575
      %v1680 = vsel %vm1648, 0.0, %v1574
      %v1681 = vsel %vm1649, 0.0, %v1573
      %v1682 = vsel %vm1650, 0.0, %v1572
      %v1683 = vsel %vm1651, 0.0, %v1571
      %v1684 = vsel %vm1652, 0.0, %v1570
      %v1685 = vsel %vm1653, 0.0, %v1569
      %v1686 = vsel %vm1654, 0.0, %v1568
      %v1687 = vsel %vm1655, 0.0, %v1567
      %v1688 = vsel %vm1656, 0.0, %v1566
      %v1689 = vsel %vm1657, 0.0, %v1565
      %v1690 = vsel %vm1658, 0.0, %v1564
      %v1691 = vsel %vm1659, 0.0, %v1595
      %v1692 = vpack.c.bf16 %v1661, %v1660
      %v1693 = vpack.c.bf16 %v1663, %v1662
      %v1694 = vpack.c.bf16 %v1665, %v1664
      %v1695 = vpack.c.bf16 %v1667, %v1666
      %v1696 = vpack.c.bf16 %v1669, %v1668
      %v1697 = vpack.c.bf16 %v1671, %v1670
      %v1698 = vpack.c.bf16 %v1673, %v1672
      %v1699 = vpack.c.bf16 %v1675, %v1674
      %v1700 = vpack.c.bf16 %v1677, %v1676
      %v1701 = vpack.c.bf16 %v1679, %v1678
      %v1702 = vpack.c.bf16 %v1681, %v1680
      %v1703 = vpack.c.bf16 %v1683, %v1682
      %v1704 = vpack.c.bf16 %v1685, %v1684
      %v1705 = vpack.c.bf16 %v1687, %v1686
      %v1706 = vpack.c.bf16 %v1689, %v1688
      %v1707 = vpack.c.bf16 %v1691, %v1690
      %v1724 = vunpack.c.l.b16 %v1515
      %v1725 = vunpack.c.h.b16 %v1515
      %v1726 = vunpack.c.l.b16 %v1516
      %v1727 = vunpack.c.h.b16 %v1516
      %v1728 = vunpack.c.l.b16 %v1517
      %v1729 = vunpack.c.h.b16 %v1517
      %v1730 = vunpack.c.l.b16 %v1518
      %v1731 = vunpack.c.h.b16 %v1518
      %v1732 = vunpack.c.l.b16 %v1519
      %v1733 = vunpack.c.h.b16 %v1519
      %v1734 = vunpack.c.l.b16 %v1520
      %v1735 = vunpack.c.h.b16 %v1520
      %v1736 = vunpack.c.l.b16 %v1521
      %v1737 = vunpack.c.h.b16 %v1521
      %v1738 = vunpack.c.l.b16 %v1522
      %v1739 = vunpack.c.h.b16 %v1522
      %v1740 = vunpack.c.l.b16 %v1523
      %v1741 = vunpack.c.h.b16 %v1523
      %v1742 = vunpack.c.l.b16 %v1524
      %v1743 = vunpack.c.h.b16 %v1524
      %v1744 = vunpack.c.l.b16 %v1525
      %v1745 = vunpack.c.h.b16 %v1525
      %v1746 = vunpack.c.l.b16 %v1526
      %v1747 = vunpack.c.h.b16 %v1526
      %v1748 = vunpack.c.l.b16 %v1527
      %v1749 = vunpack.c.h.b16 %v1527
      %v1750 = vunpack.c.l.b16 %v1528
      %v1751 = vunpack.c.h.b16 %v1528
      %v1752 = vunpack.c.l.b16 %v1529
      %v1753 = vunpack.c.h.b16 %v1529
      %v1754 = vunpack.c.l.b16 %v1530
      %v1755 = vunpack.c.h.b16 %v1530
      %v1756 = vpack.c.b16 %v1724, %v1724
      %v1757 = vpack.c.b16 %v1725, %v1725
      %v1758 = vpack.c.b16 %v1726, %v1726
      %v1759 = vpack.c.b16 %v1727, %v1727
      %v1760 = vpack.c.b16 %v1728, %v1728
      %v1761 = vpack.c.b16 %v1729, %v1729
      %v1762 = vpack.c.b16 %v1730, %v1730
      %v1763 = vpack.c.b16 %v1731, %v1731
      %v1764 = vpack.c.b16 %v1732, %v1732
      %v1765 = vpack.c.b16 %v1733, %v1733
      %v1766 = vpack.c.b16 %v1734, %v1734
      %v1767 = vpack.c.b16 %v1735, %v1735
      %v1768 = vpack.c.b16 %v1736, %v1736
      %v1769 = vpack.c.b16 %v1737, %v1737
      %v1770 = vpack.c.b16 %v1738, %v1738
      %v1771 = vpack.c.b16 %v1739, %v1739
      %v1772 = vpack.c.b16 %v1740, %v1740
      %v1773 = vpack.c.b16 %v1741, %v1741
      %v1774 = vpack.c.b16 %v1742, %v1742
      %v1775 = vpack.c.b16 %v1743, %v1743
      %v1776 = vpack.c.b16 %v1744, %v1744
      %v1777 = vpack.c.b16 %v1745, %v1745
      %v1778 = vpack.c.b16 %v1746, %v1746
      %v1779 = vpack.c.b16 %v1747, %v1747
      %v1780 = vpack.c.b16 %v1748, %v1748
      %v1781 = vpack.c.b16 %v1749, %v1749
      %v1782 = vpack.c.b16 %v1750, %v1750
      %v1783 = vpack.c.b16 %v1751, %v1751
      %v1784 = vpack.c.b16 %v1752, %v1752
      %v1785 = vpack.c.b16 %v1753, %v1753
      %v1786 = vpack.c.b16 %v1754, %v1754
      %v1787 = vpack.c.b16 %v1755, %v1755
      %vm1820 = vcmask 257024
      %1821 = vst.msk [vmem:[#allocation2 + $0x10] sm:$0xf] %vm1820, %v1756
      %1822 = vst.msk [vmem:[#allocation2 + $0x18] sm:$0xf] %vm1820, %v1757
      %1823 = vst.msk [vmem:[#allocation2 + $0x20] sm:$0xf] %vm1820, %v1758
      %1824 = vst.msk [vmem:[#allocation2 + $0x28] sm:$0xf] %vm1820, %v1759
      %1825 = vst.msk [vmem:[#allocation2 + $0x30] sm:$0xf] %vm1820, %v1760
      %1826 = vst.msk [vmem:[#allocation2 + $0x38] sm:$0xf] %vm1820, %v1761
      %1827 = vst.msk [vmem:[#allocation2 + $0x40] sm:$0xf] %vm1820, %v1762
      %1828 = vst.msk [vmem:[#allocation2 + $0x48] sm:$0xf] %vm1820, %v1763
      %1829 = vst.msk [vmem:[#allocation2 + $0x50] sm:$0xf] %vm1820, %v1764
      %1830 = vst.msk [vmem:[#allocation2 + $0x58] sm:$0xf] %vm1820, %v1765
      %1831 = vst.msk [vmem:[#allocation2 + $0x60] sm:$0xf] %vm1820, %v1766
      %1832 = vst.msk [vmem:[#allocation2 + $0x68] sm:$0xf] %vm1820, %v1767
      %1833 = vst.msk [vmem:[#allocation2 + $0x70] sm:$0xf] %vm1820, %v1768
      %1834 = vst.msk [vmem:[#allocation2 + $0x78] sm:$0xf] %vm1820, %v1769
      %1835 = vst.msk [vmem:[#allocation2 + $0x80] sm:$0xf] %vm1820, %v1770
      %1836 = vst.msk [vmem:[#allocation2 + $0x88] sm:$0xf] %vm1820, %v1771
      %1837 = vst.msk [vmem:[#allocation2 + $0x90] sm:$0xf] %vm1820, %v1772
      %1838 = vst.msk [vmem:[#allocation2 + $0x98] sm:$0xf] %vm1820, %v1773
      %1839 = vst.msk [vmem:[#allocation2 + $0xa0] sm:$0xf] %vm1820, %v1774
      %1840 = vst.msk [vmem:[#allocation2 + $0xa8] sm:$0xf] %vm1820, %v1775
      %1841 = vst.msk [vmem:[#allocation2 + $0xb0] sm:$0xf] %vm1820, %v1776
      %1842 = vst.msk [vmem:[#allocation2 + $0xb8] sm:$0xf] %vm1820, %v1777
      %1843 = vst.msk [vmem:[#allocation2 + $0xc0] sm:$0xf] %vm1820, %v1778
      %1844 = vst.msk [vmem:[#allocation2 + $0xc8] sm:$0xf] %vm1820, %v1779
      %1845 = vst.msk [vmem:[#allocation2 + $0xd0] sm:$0xf] %vm1820, %v1780
      %1846 = vst.msk [vmem:[#allocation2 + $0xd8] sm:$0xf] %vm1820, %v1781
      %1847 = vst.msk [vmem:[#allocation2 + $0xe0] sm:$0xf] %vm1820, %v1782
      %1848 = vst.msk [vmem:[#allocation2 + $0xe8] sm:$0xf] %vm1820, %v1783
      %1849 = vst.msk [vmem:[#allocation2 + $0xf0] sm:$0xf] %vm1820, %v1784
      %1850 = vst.msk [vmem:[#allocation2 + $0xf8] sm:$0xf] %vm1820, %v1785
      %1851 = vst.msk [vmem:[#allocation2 + $0x100] sm:$0xf] %vm1820, %v1786
      %1852 = vst.msk [vmem:[#allocation2 + $0x108] sm:$0xf] %vm1820, %v1787
      %v1869 = vunpack.c.l.b16 %v1210
      %v1870 = vunpack.c.h.b16 %v1210
      %v1871 = vunpack.c.l.b16 %v1211
      %v1872 = vunpack.c.h.b16 %v1211
      %v1873 = vunpack.c.l.b16 %v1212
      %v1874 = vunpack.c.h.b16 %v1212
      %v1875 = vunpack.c.l.b16 %v1213
      %v1876 = vunpack.c.h.b16 %v1213
      %v1877 = vunpack.c.l.b16 %v1214
      %v1878 = vunpack.c.h.b16 %v1214
      %v1879 = vunpack.c.l.b16 %v1215
      %v1880 = vunpack.c.h.b16 %v1215
      %v1881 = vunpack.c.l.b16 %v1216
      %v1882 = vunpack.c.h.b16 %v1216
      %v1883 = vunpack.c.l.b16 %v1217
      %v1884 = vunpack.c.h.b16 %v1217
      %v1885 = vunpack.c.l.b16 %v1218
      %v1886 = vunpack.c.h.b16 %v1218
      %v1887 = vunpack.c.l.b16 %v1219
      %v1888 = vunpack.c.h.b16 %v1219
      %v1889 = vunpack.c.l.b16 %v1220
      %v1890 = vunpack.c.h.b16 %v1220
      %v1891 = vunpack.c.l.b16 %v1221
      %v1892 = vunpack.c.h.b16 %v1221
      %v1893 = vunpack.c.l.b16 %v1222
      %v1894 = vunpack.c.h.b16 %v1222
      %v1895 = vunpack.c.l.b16 %v1223
      %v1896 = vunpack.c.h.b16 %v1223
      %v1897 = vunpack.c.l.b16 %v1224
      %v1898 = vunpack.c.h.b16 %v1224
      %v1899 = vunpack.c.l.b16 %v1225
      %v1900 = vunpack.c.h.b16 %v1225
      %v1901 = vpack.c.b16 %v1869, %v1869
      %v1902 = vpack.c.b16 %v1870, %v1870
      %v1903 = vpack.c.b16 %v1871, %v1871
      %v1904 = vpack.c.b16 %v1872, %v1872
      %v1905 = vpack.c.b16 %v1873, %v1873
      %v1906 = vpack.c.b16 %v1874, %v1874
      %v1907 = vpack.c.b16 %v1875, %v1875
      %v1908 = vpack.c.b16 %v1876, %v1876
      %v1909 = vpack.c.b16 %v1877, %v1877
      %v1910 = vpack.c.b16 %v1878, %v1878
      %v1911 = vpack.c.b16 %v1879, %v1879
      %v1912 = vpack.c.b16 %v1880, %v1880
      %v1913 = vpack.c.b16 %v1881, %v1881
      %v1914 = vpack.c.b16 %v1882, %v1882
      %v1915 = vpack.c.b16 %v1883, %v1883
      %v1916 = vpack.c.b16 %v1884, %v1884
      %v1917 = vpack.c.b16 %v1885, %v1885
      %v1918 = vpack.c.b16 %v1886, %v1886
      %v1919 = vpack.c.b16 %v1887, %v1887
      %v1920 = vpack.c.b16 %v1888, %v1888
      %v1921 = vpack.c.b16 %v1889, %v1889
      %v1922 = vpack.c.b16 %v1890, %v1890
      %v1923 = vpack.c.b16 %v1891, %v1891
      %v1924 = vpack.c.b16 %v1892, %v1892
      %v1925 = vpack.c.b16 %v1893, %v1893
      %v1926 = vpack.c.b16 %v1894, %v1894
      %v1927 = vpack.c.b16 %v1895, %v1895
      %v1928 = vpack.c.b16 %v1896, %v1896
      %v1929 = vpack.c.b16 %v1897, %v1897
      %v1930 = vpack.c.b16 %v1898, %v1898
      %v1931 = vpack.c.b16 %v1899, %v1899
      %v1932 = vpack.c.b16 %v1900, %v1900
      %vm1965 = vcmask 519424
      %1966 = vst.msk [vmem:[#allocation2 + $0x10] sm:$0xf] %vm1965, %v1901
      %1967 = vst.msk [vmem:[#allocation2 + $0x18] sm:$0xf] %vm1965, %v1902
      %1968 = vst.msk [vmem:[#allocation2 + $0x20] sm:$0xf] %vm1965, %v1903
      %1969 = vst.msk [vmem:[#allocation2 + $0x28] sm:$0xf] %vm1965, %v1904
      %1970 = vst.msk [vmem:[#allocation2 + $0x30] sm:$0xf] %vm1965, %v1905
      %1971 = vst.msk [vmem:[#allocation2 + $0x38] sm:$0xf] %vm1965, %v1906
      %1972 = vst.msk [vmem:[#allocation2 + $0x40] sm:$0xf] %vm1965, %v1907
      %1973 = vst.msk [vmem:[#allocation2 + $0x48] sm:$0xf] %vm1965, %v1908
      %1974 = vst.msk [vmem:[#allocation2 + $0x50] sm:$0xf] %vm1965, %v1909
      %1975 = vst.msk [vmem:[#allocation2 + $0x58] sm:$0xf] %vm1965, %v1910
      %1976 = vst.msk [vmem:[#allocation2 + $0x60] sm:$0xf] %vm1965, %v1911
      %1977 = vst.msk [vmem:[#allocation2 + $0x68] sm:$0xf] %vm1965, %v1912
      %1978 = vst.msk [vmem:[#allocation2 + $0x70] sm:$0xf] %vm1965, %v1913
      %1979 = vst.msk [vmem:[#allocation2 + $0x78] sm:$0xf] %vm1965, %v1914
      %1980 = vst.msk [vmem:[#allocation2 + $0x80] sm:$0xf] %vm1965, %v1915
      %1981 = vst.msk [vmem:[#allocation2 + $0x88] sm:$0xf] %vm1965, %v1916
      %1982 = vst.msk [vmem:[#allocation2 + $0x90] sm:$0xf] %vm1965, %v1917
      %1983 = vst.msk [vmem:[#allocation2 + $0x98] sm:$0xf] %vm1965, %v1918
      %1984 = vst.msk [vmem:[#allocation2 + $0xa0] sm:$0xf] %vm1965, %v1919
      %1985 = vst.msk [vmem:[#allocation2 + $0xa8] sm:$0xf] %vm1965, %v1920
      %1986 = vst.msk [vmem:[#allocation2 + $0xb0] sm:$0xf] %vm1965, %v1921
      %1987 = vst.msk [vmem:[#allocation2 + $0xb8] sm:$0xf] %vm1965, %v1922
      %1988 = vst.msk [vmem:[#allocation2 + $0xc0] sm:$0xf] %vm1965, %v1923
      %1989 = vst.msk [vmem:[#allocation2 + $0xc8] sm:$0xf] %vm1965, %v1924
      %1990 = vst.msk [vmem:[#allocation2 + $0xd0] sm:$0xf] %vm1965, %v1925
      %1991 = vst.msk [vmem:[#allocation2 + $0xd8] sm:$0xf] %vm1965, %v1926
      %1992 = vst.msk [vmem:[#allocation2 + $0xe0] sm:$0xf] %vm1965, %v1927
      %1993 = vst.msk [vmem:[#allocation2 + $0xe8] sm:$0xf] %vm1965, %v1928
      %1994 = vst.msk [vmem:[#allocation2 + $0xf0] sm:$0xf] %vm1965, %v1929
      %1995 = vst.msk [vmem:[#allocation2 + $0xf8] sm:$0xf] %vm1965, %v1930
      %1996 = vst.msk [vmem:[#allocation2 + $0x100] sm:$0xf] %vm1965, %v1931
      %1997 = vst.msk [vmem:[#allocation2 + $0x108] sm:$0xf] %vm1965, %v1932
      %v2014 = vunpack.c.l.b16 %v1692
      %v2015 = vunpack.c.h.b16 %v1692
      %v2016 = vunpack.c.l.b16 %v1693
      %v2017 = vunpack.c.h.b16 %v1693
      %v2018 = vunpack.c.l.b16 %v1694
      %v2019 = vunpack.c.h.b16 %v1694
      %v2020 = vunpack.c.l.b16 %v1695
      %v2021 = vunpack.c.h.b16 %v1695
      %v2022 = vunpack.c.l.b16 %v1696
      %v2023 = vunpack.c.h.b16 %v1696
      %v2024 = vunpack.c.l.b16 %v1697
      %v2025 = vunpack.c.h.b16 %v1697
      %v2026 = vunpack.c.l.b16 %v1698
      %v2027 = vunpack.c.h.b16 %v1698
      %v2028 = vunpack.c.l.b16 %v1699
      %v2029 = vunpack.c.h.b16 %v1699
      %v2030 = vunpack.c.l.b16 %v1700
      %v2031 = vunpack.c.h.b16 %v1700
      %v2032 = vunpack.c.l.b16 %v1701
      %v2033 = vunpack.c.h.b16 %v1701
      %v2034 = vunpack.c.l.b16 %v1702
      %v2035 = vunpack.c.h.b16 %v1702
      %v2036 = vunpack.c.l.b16 %v1703
      %v2037 = vunpack.c.h.b16 %v1703
      %v2038 = vunpack.c.l.b16 %v1704
      %v2039 = vunpack.c.h.b16 %v1704
      %v2040 = vunpack.c.l.b16 %v1705
      %v2041 = vunpack.c.h.b16 %v1705
      %v2042 = vunpack.c.l.b16 %v1706
      %v2043 = vunpack.c.h.b16 %v1706
      %v2044 = vunpack.c.l.b16 %v1707
      %v2045 = vunpack.c.h.b16 %v1707
      %v2046 = vpack.c.b16 %v2014, %v2014
      %v2047 = vpack.c.b16 %v2015, %v2015
      %v2048 = vpack.c.b16 %v2016, %v2016
      %v2049 = vpack.c.b16 %v2017, %v2017
      %v2050 = vpack.c.b16 %v2018, %v2018
      %v2051 = vpack.c.b16 %v2019, %v2019
      %v2052 = vpack.c.b16 %v2020, %v2020
      %v2053 = vpack.c.b16 %v2021, %v2021
      %v2054 = vpack.c.b16 %v2022, %v2022
      %v2055 = vpack.c.b16 %v2023, %v2023
      %v2056 = vpack.c.b16 %v2024, %v2024
      %v2057 = vpack.c.b16 %v2025, %v2025
      %v2058 = vpack.c.b16 %v2026, %v2026
      %v2059 = vpack.c.b16 %v2027, %v2027
      %v2060 = vpack.c.b16 %v2028, %v2028
      %v2061 = vpack.c.b16 %v2029, %v2029
      %v2062 = vpack.c.b16 %v2030, %v2030
      %v2063 = vpack.c.b16 %v2031, %v2031
      %v2064 = vpack.c.b16 %v2032, %v2032
      %v2065 = vpack.c.b16 %v2033, %v2033
      %v2066 = vpack.c.b16 %v2034, %v2034
      %v2067 = vpack.c.b16 %v2035, %v2035
      %v2068 = vpack.c.b16 %v2036, %v2036
      %v2069 = vpack.c.b16 %v2037, %v2037
      %v2070 = vpack.c.b16 %v2038, %v2038
      %v2071 = vpack.c.b16 %v2039, %v2039
      %v2072 = vpack.c.b16 %v2040, %v2040
      %v2073 = vpack.c.b16 %v2041, %v2041
      %v2074 = vpack.c.b16 %v2042, %v2042
      %v2075 = vpack.c.b16 %v2043, %v2043
      %v2076 = vpack.c.b16 %v2044, %v2044
      %v2077 = vpack.c.b16 %v2045, %v2045
      %2078 = vrot.lane.b32.xlu0 %v2046, 64
      %v2079 = vpop.permute.xlu0 %2078
      %2080 = vrot.lane.b32.xlu0 %v2047, 64
      %v2081 = vpop.permute.xlu0 %2080
      %2082 = vrot.lane.b32.xlu0 %v2048, 64
      %v2083 = vpop.permute.xlu0 %2082
      %2084 = vrot.lane.b32.xlu0 %v2049, 64
      %v2085 = vpop.permute.xlu0 %2084
      %2086 = vrot.lane.b32.xlu0 %v2050, 64
      %v2087 = vpop.permute.xlu0 %2086
      %2088 = vrot.lane.b32.xlu0 %v2051, 64
      %v2089 = vpop.permute.xlu0 %2088
      %2090 = vrot.lane.b32.xlu0 %v2052, 64
      %v2091 = vpop.permute.xlu0 %2090
      %2092 = vrot.lane.b32.xlu0 %v2053, 64
      %v2093 = vpop.permute.xlu0 %2092
      %2094 = vrot.lane.b32.xlu0 %v2054, 64
      %v2095 = vpop.permute.xlu0 %2094
      %2096 = vrot.lane.b32.xlu0 %v2055, 64
      %v2097 = vpop.permute.xlu0 %2096
      %2098 = vrot.lane.b32.xlu0 %v2056, 64
      %v2099 = vpop.permute.xlu0 %2098
      %2100 = vrot.lane.b32.xlu0 %v2057, 64
      %v2101 = vpop.permute.xlu0 %2100
      %2102 = vrot.lane.b32.xlu0 %v2058, 64
      %v2103 = vpop.permute.xlu0 %2102
      %2104 = vrot.lane.b32.xlu0 %v2059, 64
      %v2105 = vpop.permute.xlu0 %2104
      %2106 = vrot.lane.b32.xlu0 %v2060, 64
      %v2107 = vpop.permute.xlu0 %2106
      %2108 = vrot.lane.b32.xlu0 %v2061, 64
      %v2109 = vpop.permute.xlu0 %2108
      %2110 = vrot.lane.b32.xlu0 %v2062, 64
      %v2111 = vpop.permute.xlu0 %2110
      %2112 = vrot.lane.b32.xlu0 %v2063, 64
      %v2113 = vpop.permute.xlu0 %2112
      %2114 = vrot.lane.b32.xlu0 %v2064, 64
      %v2115 = vpop.permute.xlu0 %2114
      %2116 = vrot.lane.b32.xlu0 %v2065, 64
      %v2117 = vpop.permute.xlu0 %2116
      %2118 = vrot.lane.b32.xlu0 %v2066, 64
      %v2119 = vpop.permute.xlu0 %2118
      %2120 = vrot.lane.b32.xlu0 %v2067, 64
      %v2121 = vpop.permute.xlu0 %2120
      %2122 = vrot.lane.b32.xlu0 %v2068, 64
      %v2123 = vpop.permute.xlu0 %2122
      %2124 = vrot.lane.b32.xlu0 %v2069, 64
      %v2125 = vpop.permute.xlu0 %2124
      %2126 = vrot.lane.b32.xlu0 %v2070, 64
      %v2127 = vpop.permute.xlu0 %2126
      %2128 = vrot.lane.b32.xlu0 %v2071, 64
      %v2129 = vpop.permute.xlu0 %2128
      %2130 = vrot.lane.b32.xlu0 %v2072, 64
      %v2131 = vpop.permute.xlu0 %2130
      %2132 = vrot.lane.b32.xlu0 %v2073, 64
      %v2133 = vpop.permute.xlu0 %2132
      %2134 = vrot.lane.b32.xlu0 %v2074, 64
      %v2135 = vpop.permute.xlu0 %2134
      %2136 = vrot.lane.b32.xlu0 %v2075, 64
      %v2137 = vpop.permute.xlu0 %2136
      %2138 = vrot.lane.b32.xlu0 %v2076, 64
      %v2139 = vpop.permute.xlu0 %2138
      %2140 = vrot.lane.b32.xlu0 %v2077, 64
      %v2141 = vpop.permute.xlu0 %2140
      %vm2174 = vcmask 781824
      %2175 = vst.msk [vmem:[#allocation2 + $0x10] sm:$0xf] %vm2174, %v2079
      %2176 = vst.msk [vmem:[#allocation2 + $0x18] sm:$0xf] %vm2174, %v2081
      %2177 = vst.msk [vmem:[#allocation2 + $0x20] sm:$0xf] %vm2174, %v2083
      %2178 = vst.msk [vmem:[#allocation2 + $0x28] sm:$0xf] %vm2174, %v2085
      %2179 = vst.msk [vmem:[#allocation2 + $0x30] sm:$0xf] %vm2174, %v2087
      %2180 = vst.msk [vmem:[#allocation2 + $0x38] sm:$0xf] %vm2174, %v2089
      %2181 = vst.msk [vmem:[#allocation2 + $0x40] sm:$0xf] %vm2174, %v2091
      %2182 = vst.msk [vmem:[#allocation2 + $0x48] sm:$0xf] %vm2174, %v2093
      %2183 = vst.msk [vmem:[#allocation2 + $0x50] sm:$0xf] %vm2174, %v2095
      %2184 = vst.msk [vmem:[#allocation2 + $0x58] sm:$0xf] %vm2174, %v2097
      %2185 = vst.msk [vmem:[#allocation2 + $0x60] sm:$0xf] %vm2174, %v2099
      %2186 = vst.msk [vmem:[#allocation2 + $0x68] sm:$0xf] %vm2174, %v2101
      %2187 = vst.msk [vmem:[#allocation2 + $0x70] sm:$0xf] %vm2174, %v2103
      %2188 = vst.msk [vmem:[#allocation2 + $0x78] sm:$0xf] %vm2174, %v2105
      %2189 = vst.msk [vmem:[#allocation2 + $0x80] sm:$0xf] %vm2174, %v2107
      %2190 = vst.msk [vmem:[#allocation2 + $0x88] sm:$0xf] %vm2174, %v2109
      %2191 = vst.msk [vmem:[#allocation2 + $0x90] sm:$0xf] %vm2174, %v2111
      %2192 = vst.msk [vmem:[#allocation2 + $0x98] sm:$0xf] %vm2174, %v2113
      %2193 = vst.msk [vmem:[#allocation2 + $0xa0] sm:$0xf] %vm2174, %v2115
      %2194 = vst.msk [vmem:[#allocation2 + $0xa8] sm:$0xf] %vm2174, %v2117
      %2195 = vst.msk [vmem:[#allocation2 + $0xb0] sm:$0xf] %vm2174, %v2119
      %2196 = vst.msk [vmem:[#allocation2 + $0xb8] sm:$0xf] %vm2174, %v2121
      %2197 = vst.msk [vmem:[#allocation2 + $0xc0] sm:$0xf] %vm2174, %v2123
      %2198 = vst.msk [vmem:[#allocation2 + $0xc8] sm:$0xf] %vm2174, %v2125
      %2199 = vst.msk [vmem:[#allocation2 + $0xd0] sm:$0xf] %vm2174, %v2127
      %2200 = vst.msk [vmem:[#allocation2 + $0xd8] sm:$0xf] %vm2174, %v2129
      %2201 = vst.msk [vmem:[#allocation2 + $0xe0] sm:$0xf] %vm2174, %v2131
      %2202 = vst.msk [vmem:[#allocation2 + $0xe8] sm:$0xf] %vm2174, %v2133
      %2203 = vst.msk [vmem:[#allocation2 + $0xf0] sm:$0xf] %vm2174, %v2135
      %2204 = vst.msk [vmem:[#allocation2 + $0xf8] sm:$0xf] %vm2174, %v2137
      %2205 = vst.msk [vmem:[#allocation2 + $0x100] sm:$0xf] %vm2174, %v2139
      %2206 = vst.msk [vmem:[#allocation2 + $0x108] sm:$0xf] %vm2174, %v2141
      %v2207 = vld [vmem:[#allocation2] sm:$0xf]
      %v2208 = vld [vmem:[#allocation2 + $0x8] sm:$0xf]
      %v2209 = vld [vmem:[#allocation2 + $0x10] sm:$0xf]
      %v2210 = vld [vmem:[#allocation2 + $0x18] sm:$0xf]
      %v2211 = vld [vmem:[#allocation2 + $0x20] sm:$0xf]
      %v2212 = vld [vmem:[#allocation2 + $0x28] sm:$0xf]
      %v2213 = vld [vmem:[#allocation2 + $0x30] sm:$0xf]
      %v2214 = vld [vmem:[#allocation2 + $0x38] sm:$0xf]
      %v2215 = vld [vmem:[#allocation2 + $0x40] sm:$0xf]
      %v2216 = vld [vmem:[#allocation2 + $0x48] sm:$0xf]
      %v2217 = vld [vmem:[#allocation2 + $0x50] sm:$0xf]
      %v2218 = vld [vmem:[#allocation2 + $0x58] sm:$0xf]
      %v2219 = vld [vmem:[#allocation2 + $0x60] sm:$0xf]
      %v2220 = vld [vmem:[#allocation2 + $0x68] sm:$0xf]
      %v2221 = vld [vmem:[#allocation2 + $0x70] sm:$0xf]
      %v2222 = vld [vmem:[#allocation2 + $0x78] sm:$0xf]
      %v2223 = vld [vmem:[#allocation2 + $0x80] sm:$0xf]
      %v2224 = vld [vmem:[#allocation2 + $0x88] sm:$0xf]
      %v2225 = vld [vmem:[#allocation2 + $0x90] sm:$0xf]
      %v2226 = vld [vmem:[#allocation2 + $0x98] sm:$0xf]
      %v2227 = vld [vmem:[#allocation2 + $0xa0] sm:$0xf]
      %v2228 = vld [vmem:[#allocation2 + $0xa8] sm:$0xf]
      %v2229 = vld [vmem:[#allocation2 + $0xb0] sm:$0xf]
      %v2230 = vld [vmem:[#allocation2 + $0xb8] sm:$0xf]
      %v2231 = vld [vmem:[#allocation2 + $0xc0] sm:$0xf]
      %v2232 = vld [vmem:[#allocation2 + $0xc8] sm:$0xf]
      %v2233 = vld [vmem:[#allocation2 + $0xd0] sm:$0xf]
      %v2234 = vld [vmem:[#allocation2 + $0xd8] sm:$0xf]
      %v2235 = vld [vmem:[#allocation2 + $0xe0] sm:$0xf]
      %v2236 = vld [vmem:[#allocation2 + $0xe8] sm:$0xf]
      %v2237 = vld [vmem:[#allocation2 + $0xf0] sm:$0xf]
      %v2238 = vld [vmem:[#allocation2 + $0xf8] sm:$0xf]
      %v2239 = vld [vmem:[%s3] sm:$0xf]
      %v2240 = vld [vmem:[%s3 + $0x4] sm:$0xf]
      %v2241 = vld [vmem:[%s3 + $0x8] sm:$0xf]
      %v2242 = vld [vmem:[%s3 + $0xc] sm:$0xf]
      %v2243 = vld [vmem:[%s3 + $0x10] sm:$0xf]
      %v2244 = vld [vmem:[%s3 + $0x14] sm:$0xf]
      %v2245 = vld [vmem:[%s3 + $0x18] sm:$0xf]
      %v2246 = vld [vmem:[%s3 + $0x1c] sm:$0xf]
      %v2247 = vld [vmem:[%s3 + $0x20] sm:$0xf]
      %v2248 = vld [vmem:[%s3 + $0x24] sm:$0xf]
      %v2249 = vld [vmem:[%s3 + $0x28] sm:$0xf]
      %v2250 = vld [vmem:[%s3 + $0x2c] sm:$0xf]
      %v2251 = vld [vmem:[#allocation2 + $0x100] sm:$0xf]
      %v2252 = vld [vmem:[#allocation2 + $0x108] sm:$0xf]
      %v2253 = vld [vmem:[%s3 + $0x30] sm:$0xf]
      %v2254 = vld [vmem:[%s3 + $0x34] sm:$0xf]
      %v2255 = vld [vmem:[%s3 + $0x38] sm:$0xf]
      %v2256 = vld [vmem:[%s3 + $0x3c] sm:$0xf]
      %v2257 = vld [vmem:[%s3 + $0x40] sm:$0xf]
      %v2258 = vld [vmem:[%s3 + $0x44] sm:$0xf]
      %v2259 = vld [vmem:[%s3 + $0x48] sm:$0xf]
      %v2260 = vld [vmem:[%s3 + $0x4c] sm:$0xf]
      %v2261 = vld [vmem:[%s3 + $0x50] sm:$0xf]
      %v2262 = vld [vmem:[%s3 + $0x54] sm:$0xf]
      %v2263 = vld [vmem:[%s3 + $0x58] sm:$0xf]
      %v2264 = vld [vmem:[%s3 + $0x5c] sm:$0xf]
      %v2297 = vunpack.c.l.b16 %v2209
      %v2298 = vunpack.c.l.b16 %v2210
      %v2299 = vunpack.c.l.b16 %v2211
      %v2300 = vunpack.c.l.b16 %v2212
      %v2301 = vunpack.c.l.b16 %v2213
      %v2302 = vunpack.c.l.b16 %v2214
      %v2303 = vunpack.c.l.b16 %v2215
      %v2304 = vunpack.c.l.b16 %v2216
      %v2305 = vunpack.c.l.b16 %v2217
      %v2306 = vunpack.c.l.b16 %v2218
      %v2307 = vunpack.c.l.b16 %v2219
      %v2308 = vunpack.c.l.b16 %v2220
      %v2309 = vunpack.c.l.b16 %v2221
      %v2310 = vunpack.c.l.b16 %v2222
      %v2311 = vunpack.c.l.b16 %v2223
      %v2312 = vunpack.c.l.b16 %v2224
      %v2313 = vunpack.c.l.b16 %v2225
      %v2314 = vunpack.c.l.b16 %v2226
      %v2315 = vunpack.c.l.b16 %v2227
      %v2316 = vunpack.c.l.b16 %v2228
      %v2317 = vunpack.c.l.b16 %v2229
      %v2318 = vunpack.c.l.b16 %v2230
      %v2319 = vunpack.c.l.b16 %v2231
      %v2320 = vunpack.c.l.b16 %v2232
      %v2321 = vunpack.c.l.b16 %v2233
      %v2322 = vunpack.c.l.b16 %v2234
      %v2323 = vunpack.c.l.b16 %v2235
      %v2324 = vunpack.c.l.b16 %v2236
      %v2325 = vunpack.c.l.b16 %v2237
      %v2326 = vunpack.c.l.b16 %v2238
      %v2327 = vunpack.c.l.b16 %v2251
      %v2328 = vunpack.c.l.b16 %v2252
      %v2329 = vpack.c.b16 %v2298, %v2297
      %v2330 = vpack.c.b16 %v2300, %v2299
      %v2331 = vpack.c.b16 %v2302, %v2301
      %v2332 = vpack.c.b16 %v2304, %v2303
      %v2333 = vpack.c.b16 %v2306, %v2305
      %v2334 = vpack.c.b16 %v2308, %v2307
      %v2335 = vpack.c.b16 %v2310, %v2309
      %v2336 = vpack.c.b16 %v2312, %v2311
      %v2337 = vpack.c.b16 %v2314, %v2313
      %v2338 = vpack.c.b16 %v2316, %v2315
      %v2339 = vpack.c.b16 %v2318, %v2317
      %v2340 = vpack.c.b16 %v2320, %v2319
      %v2341 = vpack.c.b16 %v2322, %v2321
      %v2342 = vpack.c.b16 %v2324, %v2323
      %v2343 = vpack.c.b16 %v2326, %v2325
      %v2344 = vpack.c.b16 %v2328, %v2327
      %v2357 = vunpack.c.l.b16 %v2253
      %v2358 = vunpack.c.l.b16 %v2254
      %v2359 = vunpack.c.l.b16 %v2255
      %v2360 = vunpack.c.l.b16 %v2256
      %v2361 = vunpack.c.l.b16 %v2257
      %v2362 = vunpack.c.l.b16 %v2258
      %v2363 = vunpack.c.l.b16 %v2259
      %v2364 = vunpack.c.l.b16 %v2260
      %v2365 = vunpack.c.l.b16 %v2261
      %v2366 = vunpack.c.l.b16 %v2262
      %v2367 = vunpack.c.l.b16 %v2263
      %v2368 = vunpack.c.l.b16 %v2264
      %v2369 = vpack.c.b16 %v2358, %v2357
      %v2370 = vpack.c.b16 %v2360, %v2359
      %v2371 = vpack.c.b16 %v2362, %v2361
      %v2372 = vpack.c.b16 %v2364, %v2363
      %v2373 = vpack.c.b16 %v2366, %v2365
      %v2374 = vpack.c.b16 %v2368, %v2367
      %vm2381 = vcmask 785408
      %v2383 = vsel %vm2381, %v2329, 0
      %v2386 = vsel %vm2381, %v2330, 0
      %v2389 = vsel %vm2381, %v2331, 0
      %v2392 = vsel %vm2381, %v2332, 0
      %v2395 = vsel %vm2381, %v2333, 0
      %v2398 = vsel %vm2381, %v2334, 0
      %v2401 = vsel %vm2381, %v2335, 0
      %v2404 = vsel %vm2381, %v2336, 0
      %v2407 = vsel %vm2381, %v2337, 0
      %v2410 = vsel %vm2381, %v2338, 0
      %v2413 = vsel %vm2381, %v2339, 0
      %v2416 = vsel %vm2381, %v2340, 0
      %v2419 = vsel %vm2381, %v2341, 0
      %v2422 = vsel %vm2381, %v2342, 0
      %v2425 = vsel %vm2381, %v2343, 0
      %v2428 = vsel %vm2381, %v2344, 0
      %2430 = vmatprep.subr.bf16.mxu0 0
      %2431 = vmatpush1.bf16.msra.mxu0 0
      %2432 = vmatprep.subr.bf16.mxu0 0
      %2433 = vmatpush1.bf16.msra.mxu0 0
      %2434 = vmatprep.subr.bf16.mxu0 0
      %2435 = vmatpush1.bf16.msra.mxu0 %v2374
      %2436 = vmatprep.subr.bf16.mxu0 0
      %2437 = vmatpush1.bf16.msra.mxu0 %v2373
      %2438 = vmatprep.subr.bf16.mxu0 0
      %2439 = vmatpush1.bf16.msra.mxu0 %v2372
      %2440 = vmatprep.subr.bf16.mxu0 0
      %2441 = vmatpush1.bf16.msra.mxu0 %v2371
      %2442 = vmatprep.subr.bf16.mxu0 0
      %2443 = vmatpush1.bf16.msra.mxu0 %v2370
      %2444 = vmatprep.subr.bf16.mxu0 0
      %2445 = vmatpush1.bf16.msra.mxu0 %v2369
      %2446 = vmatprep.subr.bf16.mxu0 0
      %2447 = vmatpush2.bf16.msra.mxu0 0
      %2448 = vmatprep.subr.bf16.mxu0 0
      %2449 = vmatpush2.bf16.msra.mxu0 0
      %2450 = vmatprep.subr.bf16.mxu0 0
      %2451 = vmatpush2.bf16.msra.mxu0 0
      %2452 = vmatprep.subr.bf16.mxu0 0
      %2453 = vmatpush2.bf16.msra.mxu0 0
      %2454 = vmatprep.subr.bf16.mxu0 0
      %2455 = vmatpush2.bf16.msra.mxu0 0
      %2456 = vmatprep.subr.bf16.mxu0 0
      %2457 = vmatpush2.bf16.msra.mxu0 0
      %2458 = vmatprep.subr.bf16.mxu0 0
      %2459 = vmatpush2.bf16.msra.mxu0 0
      %2460 = vmatprep.subr.bf16.mxu0 0
      %2461 = vmatpush2.bf16.msra.mxu0 0
      %2462 = vmatprep.mubr.bf16.mxu0 0
      %2463 = vmatmul.mubr.bf16.gmra.mxu0 %v2383
      %v2464 = vpop.f32.mrf.mxu0
      %v2465 = vadd.f32 0.0, %v2464
      %v2466 = vpop.f32.mrf.mxu0
      %v2467 = vpop.f32.mrf.mxu0
      %v2468 = vadd.f32 0.0, %v2467
      %v2469 = vpop.f32.mrf.mxu0
      %2470 = vmatprep.mubr.bf16.mxu0 0
      %2471 = vmatmul.mubr.bf16.gmra.mxu0 %v2386
      %v2472 = vpop.f32.mrf.mxu0
      %v2473 = vadd.f32 0.0, %v2472
      %v2474 = vpop.f32.mrf.mxu0
      %v2475 = vpop.f32.mrf.mxu0
      %v2476 = vadd.f32 0.0, %v2475
      %v2477 = vpop.f32.mrf.mxu0
      %2478 = vmatprep.mubr.bf16.mxu0 0
      %2479 = vmatmul.mubr.bf16.gmra.mxu0 %v2389
      %v2480 = vpop.f32.mrf.mxu0
      %v2481 = vadd.f32 0.0, %v2480
      %v2482 = vpop.f32.mrf.mxu0
      %v2483 = vpop.f32.mrf.mxu0
      %v2484 = vadd.f32 0.0, %v2483
      %v2485 = vpop.f32.mrf.mxu0
      %2486 = vmatprep.mubr.bf16.mxu0 0
      %2487 = vmatmul.mubr.bf16.gmra.mxu0 %v2392
      %v2488 = vpop.f32.mrf.mxu0
      %v2489 = vadd.f32 0.0, %v2488
      %v2490 = vpop.f32.mrf.mxu0
      %v2491 = vpop.f32.mrf.mxu0
      %v2492 = vadd.f32 0.0, %v2491
      %v2493 = vpop.f32.mrf.mxu0
      %2494 = vmatprep.mubr.bf16.mxu0 0
      %2495 = vmatmul.mubr.bf16.gmra.mxu0 %v2395
      %v2496 = vpop.f32.mrf.mxu0
      %v2497 = vadd.f32 0.0, %v2496
      %v2498 = vpop.f32.mrf.mxu0
      %v2499 = vpop.f32.mrf.mxu0
      %v2500 = vadd.f32 0.0, %v2499
      %v2501 = vpop.f32.mrf.mxu0
      %2502 = vmatprep.mubr.bf16.mxu0 0
      %2503 = vmatmul.mubr.bf16.gmra.mxu0 %v2398
      %v2504 = vpop.f32.mrf.mxu0
      %v2505 = vadd.f32 0.0, %v2504
      %v2506 = vpop.f32.mrf.mxu0
      %v2507 = vpop.f32.mrf.mxu0
      %v2508 = vadd.f32 0.0, %v2507
      %v2509 = vpop.f32.mrf.mxu0
      %2510 = vmatprep.mubr.bf16.mxu0 0
      %2511 = vmatmul.mubr.bf16.gmra.mxu0 %v2401
      %v2512 = vpop.f32.mrf.mxu0
      %v2513 = vadd.f32 0.0, %v2512
      %v2514 = vpop.f32.mrf.mxu0
      %v2515 = vpop.f32.mrf.mxu0
      %v2516 = vadd.f32 0.0, %v2515
      %v2517 = vpop.f32.mrf.mxu0
      %2518 = vmatprep.mubr.bf16.mxu0 0
      %2519 = vmatmul.mubr.bf16.gmra.mxu0 %v2404
      %v2520 = vpop.f32.mrf.mxu0
      %v2521 = vadd.f32 0.0, %v2520
      %v2522 = vpop.f32.mrf.mxu0
      %v2523 = vpop.f32.mrf.mxu0
      %v2524 = vadd.f32 0.0, %v2523
      %v2525 = vpop.f32.mrf.mxu0
      %2526 = vmatprep.mubr.bf16.mxu0 0
      %2527 = vmatmul.mubr.bf16.gmra.mxu0 %v2407
      %v2528 = vpop.f32.mrf.mxu0
      %v2529 = vadd.f32 0.0, %v2528
      %v2530 = vpop.f32.mrf.mxu0
      %v2531 = vpop.f32.mrf.mxu0
      %v2532 = vadd.f32 0.0, %v2531
      %v2533 = vpop.f32.mrf.mxu0
      %2534 = vmatprep.mubr.bf16.mxu0 0
      %2535 = vmatmul.mubr.bf16.gmra.mxu0 %v2410
      %v2536 = vpop.f32.mrf.mxu0
      %v2537 = vadd.f32 0.0, %v2536
      %v2538 = vpop.f32.mrf.mxu0
      %v2539 = vpop.f32.mrf.mxu0
      %v2540 = vadd.f32 0.0, %v2539
      %v2541 = vpop.f32.mrf.mxu0
      %2542 = vmatprep.mubr.bf16.mxu0 0
      %2543 = vmatmul.mubr.bf16.gmra.mxu0 %v2413
      %v2544 = vpop.f32.mrf.mxu0
      %v2545 = vadd.f32 0.0, %v2544
      %v2546 = vpop.f32.mrf.mxu0
      %v2547 = vpop.f32.mrf.mxu0
      %v2548 = vadd.f32 0.0, %v2547
      %v2549 = vpop.f32.mrf.mxu0
      %2550 = vmatprep.mubr.bf16.mxu0 0
      %2551 = vmatmul.mubr.bf16.gmra.mxu0 %v2416
      %v2552 = vpop.f32.mrf.mxu0
      %v2553 = vadd.f32 0.0, %v2552
      %v2554 = vpop.f32.mrf.mxu0
      %v2555 = vpop.f32.mrf.mxu0
      %v2556 = vadd.f32 0.0, %v2555
      %v2557 = vpop.f32.mrf.mxu0
      %2558 = vmatprep.mubr.bf16.mxu0 0
      %2559 = vmatmul.mubr.bf16.gmra.mxu0 %v2419
      %v2560 = vpop.f32.mrf.mxu0
      %v2561 = vadd.f32 0.0, %v2560
      %v2562 = vpop.f32.mrf.mxu0
      %v2563 = vpop.f32.mrf.mxu0
      %v2564 = vadd.f32 0.0, %v2563
      %v2565 = vpop.f32.mrf.mxu0
      %2566 = vmatprep.mubr.bf16.mxu0 0
      %2567 = vmatmul.mubr.bf16.gmra.mxu0 %v2422
      %v2568 = vpop.f32.mrf.mxu0
      %v2569 = vadd.f32 0.0, %v2568
      %v2570 = vpop.f32.mrf.mxu0
      %v2571 = vpop.f32.mrf.mxu0
      %v2572 = vadd.f32 0.0, %v2571
      %v2573 = vpop.f32.mrf.mxu0
      %2574 = vmatprep.mubr.bf16.mxu0 0
      %2575 = vmatmul.mubr.bf16.gmra.mxu0 %v2425
      %v2576 = vpop.f32.mrf.mxu0
      %v2577 = vadd.f32 0.0, %v2576
      %v2578 = vpop.f32.mrf.mxu0
      %v2579 = vpop.f32.mrf.mxu0
      %v2580 = vadd.f32 0.0, %v2579
      %v2581 = vpop.f32.mrf.mxu0
      %2582 = vmatprep.mubr.bf16.mxu0 0
      %2583 = vmatmul.mubr.bf16.gmra.mxu0 %v2428
      %v2584 = vpop.f32.mrf.mxu0
      %v2585 = vadd.f32 0.0, %v2584
      %v2586 = vpop.f32.mrf.mxu0
      %v2587 = vpop.f32.mrf.mxu0
      %v2588 = vadd.f32 0.0, %v2587
      %v2589 = vpop.f32.mrf.mxu0
      %2590 = vdwg.mxu0
      %v2593 = vunpack.c.l.b16 %v2207
      %v2594 = vunpack.c.l.b16 %v2208
      %v2595 = vpack.c.b16 %v2594, %v2593
      %v2608 = vunpack.c.l.b16 %v2239
      %v2609 = vunpack.c.l.b16 %v2240
      %v2610 = vunpack.c.l.b16 %v2241
      %v2611 = vunpack.c.l.b16 %v2242
      %v2612 = vunpack.c.l.b16 %v2243
      %v2613 = vunpack.c.l.b16 %v2244
      %v2614 = vunpack.c.l.b16 %v2245
      %v2615 = vunpack.c.l.b16 %v2246
      %v2616 = vunpack.c.l.b16 %v2247
      %v2617 = vunpack.c.l.b16 %v2248
      %v2618 = vunpack.c.l.b16 %v2249
      %v2619 = vunpack.c.l.b16 %v2250
      %v2620 = vpack.c.b16 %v2609, %v2608
      %v2621 = vpack.c.b16 %v2611, %v2610
      %v2622 = vpack.c.b16 %v2613, %v2612
      %v2623 = vpack.c.b16 %v2615, %v2614
      %v2624 = vpack.c.b16 %v2617, %v2616
      %v2625 = vpack.c.b16 %v2619, %v2618
      %v2633 = vsel %vm2381, %v2595, 0
      %2635 = vmatprep.subr.bf16.mxu0 0
      %2636 = vmatpush1.bf16.msra.mxu0 0
      %2637 = vmatprep.subr.bf16.mxu0 0
      %2638 = vmatpush1.bf16.msra.mxu0 0
      %2639 = vmatprep.subr.bf16.mxu0 0
      %2640 = vmatpush1.bf16.msra.mxu0 %v2625
      %2641 = vmatprep.subr.bf16.mxu0 0
      %2642 = vmatpush1.bf16.msra.mxu0 %v2624
      %2643 = vmatprep.subr.bf16.mxu0 0
      %2644 = vmatpush1.bf16.msra.mxu0 %v2623
      %2645 = vmatprep.subr.bf16.mxu0 0
      %2646 = vmatpush1.bf16.msra.mxu0 %v2622
      %2647 = vmatprep.subr.bf16.mxu0 0
      %2648 = vmatpush1.bf16.msra.mxu0 %v2621
      %2649 = vmatprep.subr.bf16.mxu0 0
      %2650 = vmatpush1.bf16.msra.mxu0 %v2620
      %2651 = vmatprep.subr.bf16.mxu0 0
      %2652 = vmatpush2.bf16.msra.mxu0 0
      %2653 = vmatprep.subr.bf16.mxu0 0
      %2654 = vmatpush2.bf16.msra.mxu0 0
      %2655 = vmatprep.subr.bf16.mxu0 0
      %2656 = vmatpush2.bf16.msra.mxu0 0
      %2657 = vmatprep.subr.bf16.mxu0 0
      %2658 = vmatpush2.bf16.msra.mxu0 0
      %2659 = vmatprep.subr.bf16.mxu0 0
      %2660 = vmatpush2.bf16.msra.mxu0 0
      %2661 = vmatprep.subr.bf16.mxu0 0
      %2662 = vmatpush2.bf16.msra.mxu0 0
      %2663 = vmatprep.subr.bf16.mxu0 0
      %2664 = vmatpush2.bf16.msra.mxu0 0
      %2665 = vmatprep.subr.bf16.mxu0 0
      %2666 = vmatpush2.bf16.msra.mxu0 0
      %2667 = vmatprep.mubr.bf16.mxu0 0
      %2668 = vmatmul.mubr.bf16.gmra.mxu0 %v2633
      %v2669 = vpop.f32.mrf.mxu0
      %v2670 = vadd.f32 %v2465, %v2669
      %v2671 = vpop.f32.mrf.mxu0
      %v2672 = vpop.f32.mrf.mxu0
      %v2673 = vadd.f32 %v2468, %v2672
      %v2674 = vpop.f32.mrf.mxu0
      %2675 = vmatprep.mubr.bf16.mxu0 0
      %2676 = vmatmul.mubr.bf16.gmra.mxu0 %v2383
      %v2677 = vpop.f32.mrf.mxu0
      %v2678 = vadd.f32 %v2473, %v2677
      %v2679 = vpop.f32.mrf.mxu0
      %v2680 = vpop.f32.mrf.mxu0
      %v2681 = vadd.f32 %v2476, %v2680
      %v2682 = vpop.f32.mrf.mxu0
      %2683 = vmatprep.mubr.bf16.mxu0 0
      %2684 = vmatmul.mubr.bf16.gmra.mxu0 %v2386
      %v2685 = vpop.f32.mrf.mxu0
      %v2686 = vadd.f32 %v2481, %v2685
      %v2687 = vpop.f32.mrf.mxu0
      %v2688 = vpop.f32.mrf.mxu0
      %v2689 = vadd.f32 %v2484, %v2688
      %v2690 = vpop.f32.mrf.mxu0
      %2691 = vmatprep.mubr.bf16.mxu0 0
      %2692 = vmatmul.mubr.bf16.gmra.mxu0 %v2389
      %v2693 = vpop.f32.mrf.mxu0
      %v2694 = vadd.f32 %v2489, %v2693
      %v2695 = vpop.f32.mrf.mxu0
      %v2696 = vpop.f32.mrf.mxu0
      %v2697 = vadd.f32 %v2492, %v2696
      %v2698 = vpop.f32.mrf.mxu0
      %2699 = vmatprep.mubr.bf16.mxu0 0
      %2700 = vmatmul.mubr.bf16.gmra.mxu0 %v2392
      %v2701 = vpop.f32.mrf.mxu0
      %v2702 = vadd.f32 %v2497, %v2701
      %v2703 = vpop.f32.mrf.mxu0
      %v2704 = vpop.f32.mrf.mxu0
      %v2705 = vadd.f32 %v2500, %v2704
      %v2706 = vpop.f32.mrf.mxu0
      %2707 = vmatprep.mubr.bf16.mxu0 0
      %2708 = vmatmul.mubr.bf16.gmra.mxu0 %v2395
      %v2709 = vpop.f32.mrf.mxu0
      %v2710 = vadd.f32 %v2505, %v2709
      %v2711 = vpop.f32.mrf.mxu0
      %v2712 = vpop.f32.mrf.mxu0
      %v2713 = vadd.f32 %v2508, %v2712
      %v2714 = vpop.f32.mrf.mxu0
      %2715 = vmatprep.mubr.bf16.mxu0 0
      %2716 = vmatmul.mubr.bf16.gmra.mxu0 %v2398
      %v2717 = vpop.f32.mrf.mxu0
      %v2718 = vadd.f32 %v2513, %v2717
      %v2719 = vpop.f32.mrf.mxu0
      %v2720 = vpop.f32.mrf.mxu0
      %v2721 = vadd.f32 %v2516, %v2720
      %v2722 = vpop.f32.mrf.mxu0
      %2723 = vmatprep.mubr.bf16.mxu0 0
      %2724 = vmatmul.mubr.bf16.gmra.mxu0 %v2401
      %v2725 = vpop.f32.mrf.mxu0
      %v2726 = vadd.f32 %v2521, %v2725
      %v2727 = vpop.f32.mrf.mxu0
      %v2728 = vpop.f32.mrf.mxu0
      %v2729 = vadd.f32 %v2524, %v2728
      %v2730 = vpop.f32.mrf.mxu0
      %2731 = vmatprep.mubr.bf16.mxu0 0
      %2732 = vmatmul.mubr.bf16.gmra.mxu0 %v2404
      %v2733 = vpop.f32.mrf.mxu0
      %v2734 = vadd.f32 %v2529, %v2733
      %v2735 = vpop.f32.mrf.mxu0
      %v2736 = vpop.f32.mrf.mxu0
      %v2737 = vadd.f32 %v2532, %v2736
      %v2738 = vpop.f32.mrf.mxu0
      %2739 = vmatprep.mubr.bf16.mxu0 0
      %2740 = vmatmul.mubr.bf16.gmra.mxu0 %v2407
      %v2741 = vpop.f32.mrf.mxu0
      %v2742 = vadd.f32 %v2537, %v2741
      %v2743 = vpop.f32.mrf.mxu0
      %v2744 = vpop.f32.mrf.mxu0
      %v2745 = vadd.f32 %v2540, %v2744
      %v2746 = vpop.f32.mrf.mxu0
      %2747 = vmatprep.mubr.bf16.mxu0 0
      %2748 = vmatmul.mubr.bf16.gmra.mxu0 %v2410
      %v2749 = vpop.f32.mrf.mxu0
      %v2750 = vadd.f32 %v2545, %v2749
      %v2751 = vpop.f32.mrf.mxu0
      %v2752 = vpop.f32.mrf.mxu0
      %v2753 = vadd.f32 %v2548, %v2752
      %v2754 = vpop.f32.mrf.mxu0
      %2755 = vmatprep.mubr.bf16.mxu0 0
      %2756 = vmatmul.mubr.bf16.gmra.mxu0 %v2413
      %v2757 = vpop.f32.mrf.mxu0
      %v2758 = vadd.f32 %v2553, %v2757
      %v2759 = vpop.f32.mrf.mxu0
      %v2760 = vpop.f32.mrf.mxu0
      %v2761 = vadd.f32 %v2556, %v2760
      %v2762 = vpop.f32.mrf.mxu0
      %2763 = vmatprep.mubr.bf16.mxu0 0
      %2764 = vmatmul.mubr.bf16.gmra.mxu0 %v2416
      %v2765 = vpop.f32.mrf.mxu0
      %v2766 = vadd.f32 %v2561, %v2765
      %v2767 = vpop.f32.mrf.mxu0
      %v2768 = vpop.f32.mrf.mxu0
      %v2769 = vadd.f32 %v2564, %v2768
      %v2770 = vpop.f32.mrf.mxu0
      %2771 = vmatprep.mubr.bf16.mxu0 0
      %2772 = vmatmul.mubr.bf16.gmra.mxu0 %v2419
      %v2773 = vpop.f32.mrf.mxu0
      %v2774 = vadd.f32 %v2569, %v2773
      %v2775 = vpop.f32.mrf.mxu0
      %v2776 = vpop.f32.mrf.mxu0
      %v2777 = vadd.f32 %v2572, %v2776
      %v2778 = vpop.f32.mrf.mxu0
      %2779 = vmatprep.mubr.bf16.mxu0 0
      %2780 = vmatmul.mubr.bf16.gmra.mxu0 %v2422
      %v2781 = vpop.f32.mrf.mxu0
      %v2782 = vadd.f32 %v2577, %v2781
      %v2783 = vpop.f32.mrf.mxu0
      %v2784 = vpop.f32.mrf.mxu0
      %v2785 = vadd.f32 %v2580, %v2784
      %v2786 = vpop.f32.mrf.mxu0
      %2787 = vmatprep.mubr.bf16.mxu0 0
      %2788 = vmatmul.mubr.bf16.gmra.mxu0 %v2425
      %v2789 = vpop.f32.mrf.mxu0
      %v2790 = vadd.f32 %v2585, %v2789
      %v2791 = vpop.f32.mrf.mxu0
      %v2792 = vpop.f32.mrf.mxu0
      %v2793 = vadd.f32 %v2588, %v2792
      %v2794 = vpop.f32.mrf.mxu0
      %2795 = vdwg.mxu0
      %v2796 = vld [vmem:[#allocation2 + $0x20] sm:$0xf]
      %v2797 = vld [vmem:[#allocation2 + $0x28] sm:$0xf]
      %v2798 = vld [vmem:[#allocation2 + $0x30] sm:$0xf]
      %v2799 = vld [vmem:[#allocation2 + $0x38] sm:$0xf]
      %v2800 = vld [vmem:[#allocation2 + $0x40] sm:$0xf]
      %v2801 = vld [vmem:[#allocation2 + $0x48] sm:$0xf]
      %v2802 = vld [vmem:[#allocation2 + $0x50] sm:$0xf]
      %v2803 = vld [vmem:[#allocation2 + $0x58] sm:$0xf]
      %v2804 = vld [vmem:[#allocation2 + $0x60] sm:$0xf]
      %v2805 = vld [vmem:[#allocation2 + $0x68] sm:$0xf]
      %v2806 = vld [vmem:[#allocation2 + $0x70] sm:$0xf]
      %v2807 = vld [vmem:[#allocation2 + $0x78] sm:$0xf]
      %v2808 = vld [vmem:[#allocation2 + $0x80] sm:$0xf]
      %v2809 = vld [vmem:[#allocation2 + $0x88] sm:$0xf]
      %v2810 = vld [vmem:[#allocation2 + $0x90] sm:$0xf]
      %v2811 = vld [vmem:[#allocation2 + $0x98] sm:$0xf]
      %v2812 = vld [vmem:[#allocation2 + $0xa0] sm:$0xf]
      %v2813 = vld [vmem:[#allocation2 + $0xa8] sm:$0xf]
      %v2814 = vld [vmem:[#allocation2 + $0xb0] sm:$0xf]
      %v2815 = vld [vmem:[#allocation2 + $0xb8] sm:$0xf]
      %v2816 = vld [vmem:[#allocation2 + $0xc0] sm:$0xf]
      %v2817 = vld [vmem:[#allocation2 + $0xc8] sm:$0xf]
      %v2818 = vld [vmem:[#allocation2 + $0xd0] sm:$0xf]
      %v2819 = vld [vmem:[#allocation2 + $0xd8] sm:$0xf]
      %v2820 = vld [vmem:[#allocation2 + $0xe0] sm:$0xf]
      %v2821 = vld [vmem:[#allocation2 + $0xe8] sm:$0xf]
      %v2822 = vld [vmem:[#allocation2 + $0xf0] sm:$0xf]
      %v2823 = vld [vmem:[#allocation2 + $0xf8] sm:$0xf]
      %v2824 = vld [vmem:[#allocation2 + $0x100] sm:$0xf]
      %v2825 = vld [vmem:[#allocation2 + $0x108] sm:$0xf]
      %v2826 = vld [vmem:[#allocation2 + $0x110] sm:$0xf]
      %v2827 = vld [vmem:[#allocation2 + $0x118] sm:$0xf]
      %v2828 = vld [vmem:[%s3 + $0x60] sm:$0xf]
      %v2829 = vld [vmem:[%s3 + $0x64] sm:$0xf]
      %v2830 = vld [vmem:[%s3 + $0x68] sm:$0xf]
      %v2831 = vld [vmem:[%s3 + $0x6c] sm:$0xf]
      %v2832 = vld [vmem:[%s3 + $0x70] sm:$0xf]
      %v2833 = vld [vmem:[%s3 + $0x74] sm:$0xf]
      %v2834 = vld [vmem:[%s3 + $0x78] sm:$0xf]
      %v2835 = vld [vmem:[%s3 + $0x7c] sm:$0xf]
      %v2836 = vld [vmem:[%s3 + $0x80] sm:$0xf]
      %v2837 = vld [vmem:[%s3 + $0x84] sm:$0xf]
      %v2838 = vld [vmem:[%s3 + $0x88] sm:$0xf]
      %v2839 = vld [vmem:[%s3 + $0x8c] sm:$0xf]
      %v2872 = vunpack.c.l.b16 %v2796
      %v2873 = vunpack.c.l.b16 %v2797
      %v2874 = vunpack.c.l.b16 %v2798
      %v2875 = vunpack.c.l.b16 %v2799
      %v2876 = vunpack.c.l.b16 %v2800
      %v2877 = vunpack.c.l.b16 %v2801
      %v2878 = vunpack.c.l.b16 %v2802
      %v2879 = vunpack.c.l.b16 %v2803
      %v2880 = vunpack.c.l.b16 %v2804
      %v2881 = vunpack.c.l.b16 %v2805
      %v2882 = vunpack.c.l.b16 %v2806
      %v2883 = vunpack.c.l.b16 %v2807
      %v2884 = vunpack.c.l.b16 %v2808
      %v2885 = vunpack.c.l.b16 %v2809
      %v2886 = vunpack.c.l.b16 %v2810
      %v2887 = vunpack.c.l.b16 %v2811
      %v2888 = vunpack.c.l.b16 %v2812
      %v2889 = vunpack.c.l.b16 %v2813
      %v2890 = vunpack.c.l.b16 %v2814
      %v2891 = vunpack.c.l.b16 %v2815
      %v2892 = vunpack.c.l.b16 %v2816
      %v2893 = vunpack.c.l.b16 %v2817
      %v2894 = vunpack.c.l.b16 %v2818
      %v2895 = vunpack.c.l.b16 %v2819
      %v2896 = vunpack.c.l.b16 %v2820
      %v2897 = vunpack.c.l.b16 %v2821
      %v2898 = vunpack.c.l.b16 %v2822
      %v2899 = vunpack.c.l.b16 %v2823
      %v2900 = vunpack.c.l.b16 %v2824
      %v2901 = vunpack.c.l.b16 %v2825
      %v2902 = vunpack.c.l.b16 %v2826
      %v2903 = vunpack.c.l.b16 %v2827
      %v2904 = vpack.c.b16 %v2873, %v2872
      %v2905 = vpack.c.b16 %v2875, %v2874
      %v2906 = vpack.c.b16 %v2877, %v2876
      %v2907 = vpack.c.b16 %v2879, %v2878
      %v2908 = vpack.c.b16 %v2881, %v2880
      %v2909 = vpack.c.b16 %v2883, %v2882
      %v2910 = vpack.c.b16 %v2885, %v2884
      %v2911 = vpack.c.b16 %v2887, %v2886
      %v2912 = vpack.c.b16 %v2889, %v2888
      %v2913 = vpack.c.b16 %v2891, %v2890
      %v2914 = vpack.c.b16 %v2893, %v2892
      %v2915 = vpack.c.b16 %v2895, %v2894
      %v2916 = vpack.c.b16 %v2897, %v2896
      %v2917 = vpack.c.b16 %v2899, %v2898
      %v2918 = vpack.c.b16 %v2901, %v2900
      %v2919 = vpack.c.b16 %v2903, %v2902
      %v2932 = vunpack.c.l.b16 %v2828
      %v2933 = vunpack.c.l.b16 %v2829
      %v2934 = vunpack.c.l.b16 %v2830
      %v2935 = vunpack.c.l.b16 %v2831
      %v2936 = vunpack.c.l.b16 %v2832
      %v2937 = vunpack.c.l.b16 %v2833
      %v2938 = vunpack.c.l.b16 %v2834
      %v2939 = vunpack.c.l.b16 %v2835
      %v2940 = vunpack.c.l.b16 %v2836
      %v2941 = vunpack.c.l.b16 %v2837
      %v2942 = vunpack.c.l.b16 %v2838
      %v2943 = vunpack.c.l.b16 %v2839
      %v2944 = vpack.c.b16 %v2933, %v2932
      %v2945 = vpack.c.b16 %v2935, %v2934
      %v2946 = vpack.c.b16 %v2937, %v2936
      %v2947 = vpack.c.b16 %v2939, %v2938
      %v2948 = vpack.c.b16 %v2941, %v2940
      %v2949 = vpack.c.b16 %v2943, %v2942
      %v2957 = vsel %vm2381, %v2904, 0
      %v2960 = vsel %vm2381, %v2905, 0
      %v2963 = vsel %vm2381, %v2906, 0
      %v2966 = vsel %vm2381, %v2907, 0
      %v2969 = vsel %vm2381, %v2908, 0
      %v2972 = vsel %vm2381, %v2909, 0
      %v2975 = vsel %vm2381, %v2910, 0
      %v2978 = vsel %vm2381, %v2911, 0
      %v2981 = vsel %vm2381, %v2912, 0
      %v2984 = vsel %vm2381, %v2913, 0
      %v2987 = vsel %vm2381, %v2914, 0
      %v2990 = vsel %vm2381, %v2915, 0
      %v2993 = vsel %vm2381, %v2916, 0
      %v2996 = vsel %vm2381, %v2917, 0
      %v2999 = vsel %vm2381, %v2918, 0
      %v3002 = vsel %vm2381, %v2919, 0
      %3004 = vmatprep.subr.bf16.mxu0 0
      %3005 = vmatpush1.bf16.msra.mxu0 0
      %3006 = vmatprep.subr.bf16.mxu0 0
      %3007 = vmatpush1.bf16.msra.mxu0 0
      %3008 = vmatprep.subr.bf16.mxu0 0
      %3009 = vmatpush1.bf16.msra.mxu0 %v2949
      %3010 = vmatprep.subr.bf16.mxu0 0
      %3011 = vmatpush1.bf16.msra.mxu0 %v2948
      %3012 = vmatprep.subr.bf16.mxu0 0
      %3013 = vmatpush1.bf16.msra.mxu0 %v2947
      %3014 = vmatprep.subr.bf16.mxu0 0
      %3015 = vmatpush1.bf16.msra.mxu0 %v2946
      %3016 = vmatprep.subr.bf16.mxu0 0
      %3017 = vmatpush1.bf16.msra.mxu0 %v2945
      %3018 = vmatprep.subr.bf16.mxu0 0
      %3019 = vmatpush1.bf16.msra.mxu0 %v2944
      %3020 = vmatprep.subr.bf16.mxu0 0
      %3021 = vmatpush2.bf16.msra.mxu0 0
      %3022 = vmatprep.subr.bf16.mxu0 0
      %3023 = vmatpush2.bf16.msra.mxu0 0
      %3024 = vmatprep.subr.bf16.mxu0 0
      %3025 = vmatpush2.bf16.msra.mxu0 0
      %3026 = vmatprep.subr.bf16.mxu0 0
      %3027 = vmatpush2.bf16.msra.mxu0 0
      %3028 = vmatprep.subr.bf16.mxu0 0
      %3029 = vmatpush2.bf16.msra.mxu0 0
      %3030 = vmatprep.subr.bf16.mxu0 0
      %3031 = vmatpush2.bf16.msra.mxu0 0
      %3032 = vmatprep.subr.bf16.mxu0 0
      %3033 = vmatpush2.bf16.msra.mxu0 0
      %3034 = vmatprep.subr.bf16.mxu0 0
      %3035 = vmatpush2.bf16.msra.mxu0 0
      %3036 = vmatprep.mubr.bf16.mxu0 0
      %3037 = vmatmul.mubr.bf16.gmra.mxu0 %v2957
      %v3038 = vpop.f32.mrf.mxu0
      %v3039 = vadd.f32 0.0, %v3038
      %v3040 = vpop.f32.mrf.mxu0
      %v3041 = vpop.f32.mrf.mxu0
      %v3042 = vadd.f32 0.0, %v3041
      %v3043 = vpop.f32.mrf.mxu0
      %3044 = vmatprep.mubr.bf16.mxu0 0
      %3045 = vmatmul.mubr.bf16.gmra.mxu0 %v2960
      %v3046 = vpop.f32.mrf.mxu0
      %v3047 = vadd.f32 0.0, %v3046
      %v3048 = vpop.f32.mrf.mxu0
      %v3049 = vpop.f32.mrf.mxu0
      %v3050 = vadd.f32 0.0, %v3049
      %v3051 = vpop.f32.mrf.mxu0
      %3052 = vmatprep.mubr.bf16.mxu0 0
      %3053 = vmatmul.mubr.bf16.gmra.mxu0 %v2963
      %v3054 = vpop.f32.mrf.mxu0
      %v3055 = vadd.f32 0.0, %v3054
      %v3056 = vpop.f32.mrf.mxu0
      %v3057 = vpop.f32.mrf.mxu0
      %v3058 = vadd.f32 0.0, %v3057
      %v3059 = vpop.f32.mrf.mxu0
      %3060 = vmatprep.mubr.bf16.mxu0 0
      %3061 = vmatmul.mubr.bf16.gmra.mxu0 %v2966
      %v3062 = vpop.f32.mrf.mxu0
      %v3063 = vadd.f32 0.0, %v3062
      %v3064 = vpop.f32.mrf.mxu0
      %v3065 = vpop.f32.mrf.mxu0
      %v3066 = vadd.f32 0.0, %v3065
      %v3067 = vpop.f32.mrf.mxu0
      %3068 = vmatprep.mubr.bf16.mxu0 0
      %3069 = vmatmul.mubr.bf16.gmra.mxu0 %v2969
      %v3070 = vpop.f32.mrf.mxu0
      %v3071 = vadd.f32 0.0, %v3070
      %v3072 = vpop.f32.mrf.mxu0
      %v3073 = vpop.f32.mrf.mxu0
      %v3074 = vadd.f32 0.0, %v3073
      %v3075 = vpop.f32.mrf.mxu0
      %3076 = vmatprep.mubr.bf16.mxu0 0
      %3077 = vmatmul.mubr.bf16.gmra.mxu0 %v2972
      %v3078 = vpop.f32.mrf.mxu0
      %v3079 = vadd.f32 0.0, %v3078
      %v3080 = vpop.f32.mrf.mxu0
      %v3081 = vpop.f32.mrf.mxu0
      %v3082 = vadd.f32 0.0, %v3081
      %v3083 = vpop.f32.mrf.mxu0
      %3084 = vmatprep.mubr.bf16.mxu0 0
      %3085 = vmatmul.mubr.bf16.gmra.mxu0 %v2975
      %v3086 = vpop.f32.mrf.mxu0
      %v3087 = vadd.f32 0.0, %v3086
      %v3088 = vpop.f32.mrf.mxu0
      %v3089 = vpop.f32.mrf.mxu0
      %v3090 = vadd.f32 0.0, %v3089
      %v3091 = vpop.f32.mrf.mxu0
      %3092 = vmatprep.mubr.bf16.mxu0 0
      %3093 = vmatmul.mubr.bf16.gmra.mxu0 %v2978
      %v3094 = vpop.f32.mrf.mxu0
      %v3095 = vadd.f32 0.0, %v3094
      %v3096 = vpop.f32.mrf.mxu0
      %v3097 = vpop.f32.mrf.mxu0
      %v3098 = vadd.f32 0.0, %v3097
      %v3099 = vpop.f32.mrf.mxu0
      %3100 = vmatprep.mubr.bf16.mxu0 0
      %3101 = vmatmul.mubr.bf16.gmra.mxu0 %v2981
      %v3102 = vpop.f32.mrf.mxu0
      %v3103 = vadd.f32 0.0, %v3102
      %v3104 = vpop.f32.mrf.mxu0
      %v3105 = vpop.f32.mrf.mxu0
      %v3106 = vadd.f32 0.0, %v3105
      %v3107 = vpop.f32.mrf.mxu0
      %3108 = vmatprep.mubr.bf16.mxu0 0
      %3109 = vmatmul.mubr.bf16.gmra.mxu0 %v2984
      %v3110 = vpop.f32.mrf.mxu0
      %v3111 = vadd.f32 0.0, %v3110
      %v3112 = vpop.f32.mrf.mxu0
      %v3113 = vpop.f32.mrf.mxu0
      %v3114 = vadd.f32 0.0, %v3113
      %v3115 = vpop.f32.mrf.mxu0
      %3116 = vmatprep.mubr.bf16.mxu0 0
      %3117 = vmatmul.mubr.bf16.gmra.mxu0 %v2987
      %v3118 = vpop.f32.mrf.mxu0
      %v3119 = vadd.f32 0.0, %v3118
      %v3120 = vpop.f32.mrf.mxu0
      %v3121 = vpop.f32.mrf.mxu0
      %v3122 = vadd.f32 0.0, %v3121
      %v3123 = vpop.f32.mrf.mxu0
      %3124 = vmatprep.mubr.bf16.mxu0 0
      %3125 = vmatmul.mubr.bf16.gmra.mxu0 %v2990
      %v3126 = vpop.f32.mrf.mxu0
      %v3127 = vadd.f32 0.0, %v3126
      %v3128 = vpop.f32.mrf.mxu0
      %v3129 = vpop.f32.mrf.mxu0
      %v3130 = vadd.f32 0.0, %v3129
      %v3131 = vpop.f32.mrf.mxu0
      %3132 = vmatprep.mubr.bf16.mxu0 0
      %3133 = vmatmul.mubr.bf16.gmra.mxu0 %v2993
      %v3134 = vpop.f32.mrf.mxu0
      %v3135 = vadd.f32 0.0, %v3134
      %v3136 = vpop.f32.mrf.mxu0
      %v3137 = vpop.f32.mrf.mxu0
      %v3138 = vadd.f32 0.0, %v3137
      %v3139 = vpop.f32.mrf.mxu0
      %3140 = vmatprep.mubr.bf16.mxu0 0
      %3141 = vmatmul.mubr.bf16.gmra.mxu0 %v2996
      %v3142 = vpop.f32.mrf.mxu0
      %v3143 = vadd.f32 0.0, %v3142
      %v3144 = vpop.f32.mrf.mxu0
      %v3145 = vpop.f32.mrf.mxu0
      %v3146 = vadd.f32 0.0, %v3145
      %v3147 = vpop.f32.mrf.mxu0
      %3148 = vmatprep.mubr.bf16.mxu0 0
      %3149 = vmatmul.mubr.bf16.gmra.mxu0 %v2999
      %v3150 = vpop.f32.mrf.mxu0
      %v3151 = vadd.f32 0.0, %v3150
      %v3152 = vpop.f32.mrf.mxu0
      %v3153 = vpop.f32.mrf.mxu0
      %v3154 = vadd.f32 0.0, %v3153
      %v3155 = vpop.f32.mrf.mxu0
      %3156 = vmatprep.mubr.bf16.mxu0 0
      %3157 = vmatmul.mubr.bf16.gmra.mxu0 %v3002
      %v3158 = vpop.f32.mrf.mxu0
      %v3159 = vadd.f32 0.0, %v3158
      %v3160 = vpop.f32.mrf.mxu0
      %v3161 = vpop.f32.mrf.mxu0
      %v3162 = vadd.f32 0.0, %v3161
      %v3163 = vpop.f32.mrf.mxu0
      %3164 = vdwg.mxu0
      %v3165 = vadd.f32 %v2670, %v3039
      %v3166 = vadd.f32 %v2673, %v3042
      %v3167 = vadd.f32 %v2678, %v3047
      %v3168 = vadd.f32 %v2681, %v3050
      %v3169 = vadd.f32 %v2686, %v3055
      %v3170 = vadd.f32 %v2689, %v3058
      %v3171 = vadd.f32 %v2694, %v3063
      %v3172 = vadd.f32 %v2697, %v3066
      %v3173 = vadd.f32 %v2702, %v3071
      %v3174 = vadd.f32 %v2705, %v3074
      %v3175 = vadd.f32 %v2710, %v3079
      %v3176 = vadd.f32 %v2713, %v3082
      %v3177 = vadd.f32 %v2718, %v3087
      %v3178 = vadd.f32 %v2721, %v3090
      %v3179 = vadd.f32 %v2726, %v3095
      %v3180 = vadd.f32 %v2729, %v3098
      %v3181 = vadd.f32 %v2734, %v3103
      %v3182 = vadd.f32 %v2737, %v3106
      %v3183 = vadd.f32 %v2742, %v3111
      %v3184 = vadd.f32 %v2745, %v3114
      %v3185 = vadd.f32 %v2750, %v3119
      %v3186 = vadd.f32 %v2753, %v3122
      %v3187 = vadd.f32 %v2758, %v3127
      %v3188 = vadd.f32 %v2761, %v3130
      %v3189 = vadd.f32 %v2766, %v3135
      %v3190 = vadd.f32 %v2769, %v3138
      %v3191 = vadd.f32 %v2774, %v3143
      %v3192 = vadd.f32 %v2777, %v3146
      %v3193 = vadd.f32 %v2782, %v3151
      %v3194 = vadd.f32 %v2785, %v3154
      %v3195 = vadd.f32 %v2790, %v3159
      %v3196 = vadd.f32 %v2793, %v3162
      %v3197 = vld [vmem:[%s4] sm:$0x1]
      %v3199 = vlaneseq
      %v3200 = vshrl.u32 %v3199, 7
      %v3201 = vsub.s32 0, %v3200
      %v3202 = vrot.slane %v3197, %v3201
      %v3204 = vadd.f32 %v3165, %v3202
      %v3205 = vadd.f32 %v3166, %v3202
      %v3206 = vadd.f32 %v3167, %v3202
      %v3207 = vadd.f32 %v3168, %v3202
      %v3208 = vadd.f32 %v3169, %v3202
      %v3209 = vadd.f32 %v3170, %v3202
      %v3210 = vadd.f32 %v3171, %v3202
      %v3211 = vadd.f32 %v3172, %v3202
      %v3212 = vadd.f32 %v3173, %v3202
      %v3213 = vadd.f32 %v3174, %v3202
      %v3214 = vadd.f32 %v3175, %v3202
      %v3215 = vadd.f32 %v3176, %v3202
      %v3216 = vadd.f32 %v3177, %v3202
      %v3217 = vadd.f32 %v3178, %v3202
      %v3218 = vadd.f32 %v3179, %v3202
      %v3219 = vadd.f32 %v3180, %v3202
      %v3220 = vadd.f32 %v3181, %v3202
      %v3221 = vadd.f32 %v3182, %v3202
      %v3222 = vadd.f32 %v3183, %v3202
      %v3223 = vadd.f32 %v3184, %v3202
      %v3224 = vadd.f32 %v3185, %v3202
      %v3225 = vadd.f32 %v3186, %v3202
      %v3226 = vadd.f32 %v3187, %v3202
      %v3227 = vadd.f32 %v3188, %v3202
      %v3228 = vadd.f32 %v3189, %v3202
      %v3229 = vadd.f32 %v3190, %v3202
      %v3230 = vadd.f32 %v3191, %v3202
      %v3231 = vadd.f32 %v3192, %v3202
      %v3232 = vadd.f32 %v3193, %v3202
      %v3233 = vadd.f32 %v3194, %v3202
      %v3234 = vadd.f32 %v3195, %v3202
      %v3235 = vadd.f32 %v3196, %v3202
      %v3236 = vmax.f32 %v3204, 0.0
      %v3237 = vmax.f32 %v3205, 0.0
      %v3238 = vmax.f32 %v3206, 0.0
      %v3239 = vmax.f32 %v3207, 0.0
      %v3240 = vmax.f32 %v3208, 0.0
      %v3241 = vmax.f32 %v3209, 0.0
      %v3242 = vmax.f32 %v3210, 0.0
      %v3243 = vmax.f32 %v3211, 0.0
      %v3244 = vmax.f32 %v3212, 0.0
      %v3245 = vmax.f32 %v3213, 0.0
      %v3246 = vmax.f32 %v3214, 0.0
      %v3247 = vmax.f32 %v3215, 0.0
      %v3248 = vmax.f32 %v3216, 0.0
      %v3249 = vmax.f32 %v3217, 0.0
      %v3250 = vmax.f32 %v3218, 0.0
      %v3251 = vmax.f32 %v3219, 0.0
      %v3252 = vmax.f32 %v3220, 0.0
      %v3253 = vmax.f32 %v3221, 0.0
      %v3254 = vmax.f32 %v3222, 0.0
      %v3255 = vmax.f32 %v3223, 0.0
      %v3256 = vmax.f32 %v3224, 0.0
      %v3257 = vmax.f32 %v3225, 0.0
      %v3258 = vmax.f32 %v3226, 0.0
      %v3259 = vmax.f32 %v3227, 0.0
      %v3260 = vmax.f32 %v3228, 0.0
      %v3261 = vmax.f32 %v3229, 0.0
      %v3262 = vmax.f32 %v3230, 0.0
      %v3263 = vmax.f32 %v3231, 0.0
      %v3264 = vmax.f32 %v3232, 0.0
      %v3265 = vmax.f32 %v3233, 0.0
      %v3266 = vmax.f32 %v3234, 0.0
      %v3267 = vmax.f32 %v3235, 0.0
      %3268 = vrot.lane.b32.xlu0 %v1178, 64
      %v3269 = vpop.permute.xlu0 %3268
      %3270 = vrot.lane.b32.xlu0 %v1179, 64
      %v3271 = vpop.permute.xlu0 %3270
      %3272 = vrot.lane.b32.xlu0 %v1180, 64
      %v3273 = vpop.permute.xlu0 %3272
      %3274 = vrot.lane.b32.xlu0 %v1181, 64
      %v3275 = vpop.permute.xlu0 %3274
      %3276 = vrot.lane.b32.xlu0 %v1182, 64
      %v3277 = vpop.permute.xlu0 %3276
      %3278 = vrot.lane.b32.xlu0 %v1183, 64
      %v3279 = vpop.permute.xlu0 %3278
      %3280 = vrot.lane.b32.xlu0 %v1184, 64
      %v3281 = vpop.permute.xlu0 %3280
      %3282 = vrot.lane.b32.xlu0 %v1185, 64
      %v3283 = vpop.permute.xlu0 %3282
      %3284 = vrot.lane.b32.xlu0 %v1186, 64
      %v3285 = vpop.permute.xlu0 %3284
      %3286 = vrot.lane.b32.xlu0 %v1187, 64
      %v3287 = vpop.permute.xlu0 %3286
      %3288 = vrot.lane.b32.xlu0 %v1188, 64
      %v3289 = vpop.permute.xlu0 %3288
      %3290 = vrot.lane.b32.xlu0 %v1189, 64
      %v3291 = vpop.permute.xlu0 %3290
      %3292 = vrot.lane.b32.xlu0 %v1190, 64
      %v3293 = vpop.permute.xlu0 %3292
      %3294 = vrot.lane.b32.xlu0 %v1191, 64
      %v3295 = vpop.permute.xlu0 %3294
      %3296 = vrot.lane.b32.xlu0 %v1192, 64
      %v3297 = vpop.permute.xlu0 %3296
      %3298 = vrot.lane.b32.xlu0 %v1193, 64
      %v3299 = vpop.permute.xlu0 %3298
      %3300 = vrot.lane.b32.xlu0 %v1194, 64
      %v3301 = vpop.permute.xlu0 %3300
      %3302 = vrot.lane.b32.xlu0 %v1195, 64
      %v3303 = vpop.permute.xlu0 %3302
      %3304 = vrot.lane.b32.xlu0 %v1196, 64
      %v3305 = vpop.permute.xlu0 %3304
      %3306 = vrot.lane.b32.xlu0 %v1197, 64
      %v3307 = vpop.permute.xlu0 %3306
      %3308 = vrot.lane.b32.xlu0 %v1198, 64
      %v3309 = vpop.permute.xlu0 %3308
      %3310 = vrot.lane.b32.xlu0 %v1199, 64
      %v3311 = vpop.permute.xlu0 %3310
      %3312 = vrot.lane.b32.xlu0 %v1200, 64
      %v3313 = vpop.permute.xlu0 %3312
      %3314 = vrot.lane.b32.xlu0 %v1201, 64
      %v3315 = vpop.permute.xlu0 %3314
      %3316 = vrot.lane.b32.xlu0 %v1202, 64
      %v3317 = vpop.permute.xlu0 %3316
      %3318 = vrot.lane.b32.xlu0 %v1203, 64
      %v3319 = vpop.permute.xlu0 %3318
      %3320 = vrot.lane.b32.xlu0 %v1204, 64
      %v3321 = vpop.permute.xlu0 %3320
      %3322 = vrot.lane.b32.xlu0 %v1205, 64
      %v3323 = vpop.permute.xlu0 %3322
      %3324 = vrot.lane.b32.xlu0 %v1206, 64
      %v3325 = vpop.permute.xlu0 %3324
      %3326 = vrot.lane.b32.xlu0 %v1207, 64
      %v3327 = vpop.permute.xlu0 %3326
      %3328 = vrot.lane.b32.xlu0 %v1208, 64
      %v3329 = vpop.permute.xlu0 %3328
      %3330 = vrot.lane.b32.xlu0 %v1209, 64
      %v3331 = vpop.permute.xlu0 %3330
      %v3364 = vrot.slane %v3269, 7
      %v3365 = vrot.slane %v3271, 7
      %v3366 = vrot.slane %v3273, 7
      %v3367 = vrot.slane %v3275, 7
      %v3368 = vrot.slane %v3277, 7
      %v3369 = vrot.slane %v3279, 7
      %v3370 = vrot.slane %v3281, 7
      %v3371 = vrot.slane %v3283, 7
      %v3372 = vrot.slane %v3285, 7
      %v3373 = vrot.slane %v3287, 7
      %v3374 = vrot.slane %v3289, 7
      %v3375 = vrot.slane %v3291, 7
      %v3376 = vrot.slane %v3293, 7
      %v3377 = vrot.slane %v3295, 7
      %v3378 = vrot.slane %v3297, 7
      %v3379 = vrot.slane %v3299, 7
      %v3380 = vrot.slane %v3301, 7
      %v3381 = vrot.slane %v3303, 7
      %v3382 = vrot.slane %v3305, 7
      %v3383 = vrot.slane %v3307, 7
      %v3384 = vrot.slane %v3309, 7
      %v3385 = vrot.slane %v3311, 7
      %v3386 = vrot.slane %v3313, 7
      %v3387 = vrot.slane %v3315, 7
      %v3388 = vrot.slane %v3317, 7
      %v3389 = vrot.slane %v3319, 7
      %v3390 = vrot.slane %v3321, 7
      %v3391 = vrot.slane %v3323, 7
      %v3392 = vrot.slane %v3325, 7
      %v3393 = vrot.slane %v3327, 7
      %v3394 = vrot.slane %v3329, 7
      %v3395 = vrot.slane %v3331, 7
      %v3396 = vsel %vm1386, %v3394, %v3395
      %v3397 = vsel %vm1386, %v3393, %v3394
      %v3398 = vsel %vm1386, %v3392, %v3393
      %v3399 = vsel %vm1386, %v3391, %v3392
      %v3400 = vsel %vm1386, %v3390, %v3391
      %v3401 = vsel %vm1386, %v3389, %v3390
      %v3402 = vsel %vm1386, %v3388, %v3389
      %v3403 = vsel %vm1386, %v3387, %v3388
      %v3404 = vsel %vm1386, %v3386, %v3387
      %v3405 = vsel %vm1386, %v3385, %v3386
      %v3406 = vsel %vm1386, %v3384, %v3385
      %v3407 = vsel %vm1386, %v3383, %v3384
      %v3408 = vsel %vm1386, %v3382, %v3383
      %v3409 = vsel %vm1386, %v3381, %v3382
      %v3410 = vsel %vm1386, %v3380, %v3381
      %v3411 = vsel %vm1386, %v3379, %v3380
      %v3412 = vsel %vm1386, %v3378, %v3379
      %v3413 = vsel %vm1386, %v3377, %v3378
      %v3414 = vsel %vm1386, %v3376, %v3377
      %v3415 = vsel %vm1386, %v3375, %v3376
      %v3416 = vsel %vm1386, %v3374, %v3375
      %v3417 = vsel %vm1386, %v3373, %v3374
      %v3418 = vsel %vm1386, %v3372, %v3373
      %v3419 = vsel %vm1386, %v3371, %v3372
      %v3420 = vsel %vm1386, %v3370, %v3371
      %v3421 = vsel %vm1386, %v3369, %v3370
      %v3422 = vsel %vm1386, %v3368, %v3369
      %v3423 = vsel %vm1386, %v3367, %v3368
      %v3424 = vsel %vm1386, %v3366, %v3367
      %v3425 = vsel %vm1386, %v3365, %v3366
      %v3426 = vsel %vm1386, %v3364, %v3365
      %v3427 = vsel %vm1386, %v3395, %v3364
      %v3428 = vsel %vm1451, 0.0, %v3427
      %v3429 = vsel %vm1452, 0.0, %v3426
      %v3430 = vsel %vm1453, 0.0, %v3425
      %v3431 = vsel %vm1454, 0.0, %v3424
      %v3432 = vsel %vm1455, 0.0, %v3423
      %v3433 = vsel %vm1456, 0.0, %v3422
      %v3434 = vsel %vm1457, 0.0, %v3421
      %v3435 = vsel %vm1458, 0.0, %v3420
      %v3436 = vsel %vm1459, 0.0, %v3419
      %v3437 = vsel %vm1460, 0.0, %v3418
      %v3438 = vsel %vm1461, 0.0, %v3417
      %v3439 = vsel %vm1462, 0.0, %v3416
      %v3440 = vsel %vm1463, 0.0, %v3415
      %v3441 = vsel %vm1464, 0.0, %v3414
      %v3442 = vsel %vm1465, 0.0, %v3413
      %v3443 = vsel %vm1466, 0.0, %v3412
      %v3444 = vsel %vm1467, 0.0, %v3411
      %v3445 = vsel %vm1468, 0.0, %v3410
      %v3446 = vsel %vm1469, 0.0, %v3409
      %v3447 = vsel %vm1470, 0.0, %v3408
      %v3448 = vsel %vm1471, 0.0, %v3407
      %v3449 = vsel %vm1472, 0.0, %v3406
      %v3450 = vsel %vm1473, 0.0, %v3405
      %v3451 = vsel %vm1474, 0.0, %v3404
      %v3452 = vsel %vm1475, 0.0, %v3403
      %v3453 = vsel %vm1476, 0.0, %v3402
      %v3454 = vsel %vm1477, 0.0, %v3401
      %v3455 = vsel %vm1478, 0.0, %v3400
      %v3456 = vsel %vm1479, 0.0, %v3399
      %v3457 = vsel %vm1480, 0.0, %v3398
      %v3458 = vsel %vm1481, 0.0, %v3397
      %v3459 = vsel %vm1482, 0.0, %v3396
      %v3460 = vpack.c.bf16 %v3429, %v3428
      %v3461 = vpack.c.bf16 %v3431, %v3430
      %v3462 = vpack.c.bf16 %v3433, %v3432
      %v3463 = vpack.c.bf16 %v3435, %v3434
      %v3464 = vpack.c.bf16 %v3437, %v3436
      %v3465 = vpack.c.bf16 %v3439, %v3438
      %v3466 = vpack.c.bf16 %v3441, %v3440
      %v3467 = vpack.c.bf16 %v3443, %v3442
      %v3468 = vpack.c.bf16 %v3445, %v3444
      %v3469 = vpack.c.bf16 %v3447, %v3446
      %v3470 = vpack.c.bf16 %v3449, %v3448
      %v3471 = vpack.c.bf16 %v3451, %v3450
      %v3472 = vpack.c.bf16 %v3453, %v3452
      %v3473 = vpack.c.bf16 %v3455, %v3454
      %v3474 = vpack.c.bf16 %v3457, %v3456
      %v3475 = vpack.c.bf16 %v3459, %v3458
      %v3476 = vrot.slane %v3269, 1
      %v3477 = vrot.slane %v3271, 1
      %v3478 = vrot.slane %v3273, 1
      %v3479 = vrot.slane %v3275, 1
      %v3480 = vrot.slane %v3277, 1
      %v3481 = vrot.slane %v3279, 1
      %v3482 = vrot.slane %v3281, 1
      %v3483 = vrot.slane %v3283, 1
      %v3484 = vrot.slane %v3285, 1
      %v3485 = vrot.slane %v3287, 1
      %v3486 = vrot.slane %v3289, 1
      %v3487 = vrot.slane %v3291, 1
      %v3488 = vrot.slane %v3293, 1
      %v3489 = vrot.slane %v3295, 1
      %v3490 = vrot.slane %v3297, 1
      %v3491 = vrot.slane %v3299, 1
      %v3492 = vrot.slane %v3301, 1
      %v3493 = vrot.slane %v3303, 1
      %v3494 = vrot.slane %v3305, 1
      %v3495 = vrot.slane %v3307, 1
      %v3496 = vrot.slane %v3309, 1
      %v3497 = vrot.slane %v3311, 1
      %v3498 = vrot.slane %v3313, 1
      %v3499 = vrot.slane %v3315, 1
      %v3500 = vrot.slane %v3317, 1
      %v3501 = vrot.slane %v3319, 1
      %v3502 = vrot.slane %v3321, 1
      %v3503 = vrot.slane %v3323, 1
      %v3504 = vrot.slane %v3325, 1
      %v3505 = vrot.slane %v3327, 1
      %v3506 = vrot.slane %v3329, 1
      %v3507 = vrot.slane %v3331, 1
      %v3508 = vsel %vm1563, %v3506, %v3507
      %v3509 = vsel %vm1563, %v3505, %v3506
      %v3510 = vsel %vm1563, %v3504, %v3505
      %v3511 = vsel %vm1563, %v3503, %v3504
      %v3512 = vsel %vm1563, %v3502, %v3503
      %v3513 = vsel %vm1563, %v3501, %v3502
      %v3514 = vsel %vm1563, %v3500, %v3501
      %v3515 = vsel %vm1563, %v3499, %v3500
      %v3516 = vsel %vm1563, %v3498, %v3499
      %v3517 = vsel %vm1563, %v3497, %v3498
      %v3518 = vsel %vm1563, %v3496, %v3497
      %v3519 = vsel %vm1563, %v3495, %v3496
      %v3520 = vsel %vm1563, %v3494, %v3495
      %v3521 = vsel %vm1563, %v3493, %v3494
      %v3522 = vsel %vm1563, %v3492, %v3493
      %v3523 = vsel %vm1563, %v3491, %v3492
      %v3524 = vsel %vm1563, %v3490, %v3491
      %v3525 = vsel %vm1563, %v3489, %v3490
      %v3526 = vsel %vm1563, %v3488, %v3489
      %v3527 = vsel %vm1563, %v3487, %v3488
      %v3528 = vsel %vm1563, %v3486, %v3487
      %v3529 = vsel %vm1563, %v3485, %v3486
      %v3530 = vsel %vm1563, %v3484, %v3485
      %v3531 = vsel %vm1563, %v3483, %v3484
      %v3532 = vsel %vm1563, %v3482, %v3483
      %v3533 = vsel %vm1563, %v3481, %v3482
      %v3534 = vsel %vm1563, %v3480, %v3481
      %v3535 = vsel %vm1563, %v3479, %v3480
      %v3536 = vsel %vm1563, %v3478, %v3479
      %v3537 = vsel %vm1563, %v3477, %v3478
      %v3538 = vsel %vm1563, %v3476, %v3477
      %v3539 = vsel %vm1563, %v3507, %v3476
      %v3540 = vsel %vm1628, 0.0, %v3538
      %v3541 = vsel %vm1629, 0.0, %v3537
      %v3542 = vsel %vm1630, 0.0, %v3536
      %v3543 = vsel %vm1631, 0.0, %v3535
      %v3544 = vsel %vm1632, 0.0, %v3534
      %v3545 = vsel %vm1633, 0.0, %v3533
      %v3546 = vsel %vm1634, 0.0, %v3532
      %v3547 = vsel %vm1635, 0.0, %v3531
      %v3548 = vsel %vm1636, 0.0, %v3530
      %v3549 = vsel %vm1637, 0.0, %v3529
      %v3550 = vsel %vm1638, 0.0, %v3528
      %v3551 = vsel %vm1639, 0.0, %v3527
      %v3552 = vsel %vm1640, 0.0, %v3526
      %v3553 = vsel %vm1641, 0.0, %v3525
      %v3554 = vsel %vm1642, 0.0, %v3524
      %v3555 = vsel %vm1643, 0.0, %v3523
      %v3556 = vsel %vm1644, 0.0, %v3522
      %v3557 = vsel %vm1645, 0.0, %v3521
      %v3558 = vsel %vm1646, 0.0, %v3520
      %v3559 = vsel %vm1647, 0.0, %v3519
      %v3560 = vsel %vm1648, 0.0, %v3518
      %v3561 = vsel %vm1649, 0.0, %v3517
      %v3562 = vsel %vm1650, 0.0, %v3516
      %v3563 = vsel %vm1651, 0.0, %v3515
      %v3564 = vsel %vm1652, 0.0, %v3514
      %v3565 = vsel %vm1653, 0.0, %v3513
      %v3566 = vsel %vm1654, 0.0, %v3512
      %v3567 = vsel %vm1655, 0.0, %v3511
      %v3568 = vsel %vm1656, 0.0, %v3510
      %v3569 = vsel %vm1657, 0.0, %v3509
      %v3570 = vsel %vm1658, 0.0, %v3508
      %v3571 = vsel %vm1659, 0.0, %v3539
      %v3572 = vpack.c.bf16 %v3541, %v3540
      %v3573 = vpack.c.bf16 %v3543, %v3542
      %v3574 = vpack.c.bf16 %v3545, %v3544
      %v3575 = vpack.c.bf16 %v3547, %v3546
      %v3576 = vpack.c.bf16 %v3549, %v3548
      %v3577 = vpack.c.bf16 %v3551, %v3550
      %v3578 = vpack.c.bf16 %v3553, %v3552
      %v3579 = vpack.c.bf16 %v3555, %v3554
      %v3580 = vpack.c.bf16 %v3557, %v3556
      %v3581 = vpack.c.bf16 %v3559, %v3558
      %v3582 = vpack.c.bf16 %v3561, %v3560
      %v3583 = vpack.c.bf16 %v3563, %v3562
      %v3584 = vpack.c.bf16 %v3565, %v3564
      %v3585 = vpack.c.bf16 %v3567, %v3566
      %v3586 = vpack.c.bf16 %v3569, %v3568
      %v3587 = vpack.c.bf16 %v3571, %v3570
      %v3604 = vunpack.c.l.b16 %v3460
      %v3605 = vunpack.c.h.b16 %v3460
      %v3606 = vunpack.c.l.b16 %v3461
      %v3607 = vunpack.c.h.b16 %v3461
      %v3608 = vunpack.c.l.b16 %v3462
      %v3609 = vunpack.c.h.b16 %v3462
      %v3610 = vunpack.c.l.b16 %v3463
      %v3611 = vunpack.c.h.b16 %v3463
      %v3612 = vunpack.c.l.b16 %v3464
      %v3613 = vunpack.c.h.b16 %v3464
      %v3614 = vunpack.c.l.b16 %v3465
      %v3615 = vunpack.c.h.b16 %v3465
      %v3616 = vunpack.c.l.b16 %v3466
      %v3617 = vunpack.c.h.b16 %v3466
      %v3618 = vunpack.c.l.b16 %v3467
      %v3619 = vunpack.c.h.b16 %v3467
      %v3620 = vunpack.c.l.b16 %v3468
      %v3621 = vunpack.c.h.b16 %v3468
      %v3622 = vunpack.c.l.b16 %v3469
      %v3623 = vunpack.c.h.b16 %v3469
      %v3624 = vunpack.c.l.b16 %v3470
      %v3625 = vunpack.c.h.b16 %v3470
      %v3626 = vunpack.c.l.b16 %v3471
      %v3627 = vunpack.c.h.b16 %v3471
      %v3628 = vunpack.c.l.b16 %v3472
      %v3629 = vunpack.c.h.b16 %v3472
      %v3630 = vunpack.c.l.b16 %v3473
      %v3631 = vunpack.c.h.b16 %v3473
      %v3632 = vunpack.c.l.b16 %v3474
      %v3633 = vunpack.c.h.b16 %v3474
      %v3634 = vunpack.c.l.b16 %v3475
      %v3635 = vunpack.c.h.b16 %v3475
      %v3636 = vpack.c.b16 %v3604, %v3604
      %v3637 = vpack.c.b16 %v3605, %v3605
      %v3638 = vpack.c.b16 %v3606, %v3606
      %v3639 = vpack.c.b16 %v3607, %v3607
      %v3640 = vpack.c.b16 %v3608, %v3608
      %v3641 = vpack.c.b16 %v3609, %v3609
      %v3642 = vpack.c.b16 %v3610, %v3610
      %v3643 = vpack.c.b16 %v3611, %v3611
      %v3644 = vpack.c.b16 %v3612, %v3612
      %v3645 = vpack.c.b16 %v3613, %v3613
      %v3646 = vpack.c.b16 %v3614, %v3614
      %v3647 = vpack.c.b16 %v3615, %v3615
      %v3648 = vpack.c.b16 %v3616, %v3616
      %v3649 = vpack.c.b16 %v3617, %v3617
      %v3650 = vpack.c.b16 %v3618, %v3618
      %v3651 = vpack.c.b16 %v3619, %v3619
      %v3652 = vpack.c.b16 %v3620, %v3620
      %v3653 = vpack.c.b16 %v3621, %v3621
      %v3654 = vpack.c.b16 %v3622, %v3622
      %v3655 = vpack.c.b16 %v3623, %v3623
      %v3656 = vpack.c.b16 %v3624, %v3624
      %v3657 = vpack.c.b16 %v3625, %v3625
      %v3658 = vpack.c.b16 %v3626, %v3626
      %v3659 = vpack.c.b16 %v3627, %v3627
      %v3660 = vpack.c.b16 %v3628, %v3628
      %v3661 = vpack.c.b16 %v3629, %v3629
      %v3662 = vpack.c.b16 %v3630, %v3630
      %v3663 = vpack.c.b16 %v3631, %v3631
      %v3664 = vpack.c.b16 %v3632, %v3632
      %v3665 = vpack.c.b16 %v3633, %v3633
      %v3666 = vpack.c.b16 %v3634, %v3634
      %v3667 = vpack.c.b16 %v3635, %v3635
      %3700 = vst.msk [vmem:[#allocation2 + $0x10] sm:$0xf] %vm1820, %v3636
      %3701 = vst.msk [vmem:[#allocation2 + $0x18] sm:$0xf] %vm1820, %v3637
      %3702 = vst.msk [vmem:[#allocation2 + $0x20] sm:$0xf] %vm1820, %v3638
      %3703 = vst.msk [vmem:[#allocation2 + $0x28] sm:$0xf] %vm1820, %v3639
      %3704 = vst.msk [vmem:[#allocation2 + $0x30] sm:$0xf] %vm1820, %v3640
      %3705 = vst.msk [vmem:[#allocation2 + $0x38] sm:$0xf] %vm1820, %v3641
      %3706 = vst.msk [vmem:[#allocation2 + $0x40] sm:$0xf] %vm1820, %v3642
      %3707 = vst.msk [vmem:[#allocation2 + $0x48] sm:$0xf] %vm1820, %v3643
      %3708 = vst.msk [vmem:[#allocation2 + $0x50] sm:$0xf] %vm1820, %v3644
      %3709 = vst.msk [vmem:[#allocation2 + $0x58] sm:$0xf] %vm1820, %v3645
      %3710 = vst.msk [vmem:[#allocation2 + $0x60] sm:$0xf] %vm1820, %v3646
      %3711 = vst.msk [vmem:[#allocation2 + $0x68] sm:$0xf] %vm1820, %v3647
      %3712 = vst.msk [vmem:[#allocation2 + $0x70] sm:$0xf] %vm1820, %v3648
      %3713 = vst.msk [vmem:[#allocation2 + $0x78] sm:$0xf] %vm1820, %v3649
      %3714 = vst.msk [vmem:[#allocation2 + $0x80] sm:$0xf] %vm1820, %v3650
      %3715 = vst.msk [vmem:[#allocation2 + $0x88] sm:$0xf] %vm1820, %v3651
      %3716 = vst.msk [vmem:[#allocation2 + $0x90] sm:$0xf] %vm1820, %v3652
      %3717 = vst.msk [vmem:[#allocation2 + $0x98] sm:$0xf] %vm1820, %v3653
      %3718 = vst.msk [vmem:[#allocation2 + $0xa0] sm:$0xf] %vm1820, %v3654
      %3719 = vst.msk [vmem:[#allocation2 + $0xa8] sm:$0xf] %vm1820, %v3655
      %3720 = vst.msk [vmem:[#allocation2 + $0xb0] sm:$0xf] %vm1820, %v3656
      %3721 = vst.msk [vmem:[#allocation2 + $0xb8] sm:$0xf] %vm1820, %v3657
      %3722 = vst.msk [vmem:[#allocation2 + $0xc0] sm:$0xf] %vm1820, %v3658
      %3723 = vst.msk [vmem:[#allocation2 + $0xc8] sm:$0xf] %vm1820, %v3659
      %3724 = vst.msk [vmem:[#allocation2 + $0xd0] sm:$0xf] %vm1820, %v3660
      %3725 = vst.msk [vmem:[#allocation2 + $0xd8] sm:$0xf] %vm1820, %v3661
      %3726 = vst.msk [vmem:[#allocation2 + $0xe0] sm:$0xf] %vm1820, %v3662
      %3727 = vst.msk [vmem:[#allocation2 + $0xe8] sm:$0xf] %vm1820, %v3663
      %3728 = vst.msk [vmem:[#allocation2 + $0xf0] sm:$0xf] %vm1820, %v3664
      %3729 = vst.msk [vmem:[#allocation2 + $0xf8] sm:$0xf] %vm1820, %v3665
      %3730 = vst.msk [vmem:[#allocation2 + $0x100] sm:$0xf] %vm1820, %v3666
      %3731 = vst.msk [vmem:[#allocation2 + $0x108] sm:$0xf] %vm1820, %v3667
      %3732 = vrot.lane.b32.xlu0 %v1901, 96
      %v3733 = vpop.permute.xlu0 %3732
      %3734 = vrot.lane.b32.xlu0 %v1902, 96
      %v3735 = vpop.permute.xlu0 %3734
      %3736 = vrot.lane.b32.xlu0 %v1903, 96
      %v3737 = vpop.permute.xlu0 %3736
      %3738 = vrot.lane.b32.xlu0 %v1904, 96
      %v3739 = vpop.permute.xlu0 %3738
      %3740 = vrot.lane.b32.xlu0 %v1905, 96
      %v3741 = vpop.permute.xlu0 %3740
      %3742 = vrot.lane.b32.xlu0 %v1906, 96
      %v3743 = vpop.permute.xlu0 %3742
      %3744 = vrot.lane.b32.xlu0 %v1907, 96
      %v3745 = vpop.permute.xlu0 %3744
      %3746 = vrot.lane.b32.xlu0 %v1908, 96
      %v3747 = vpop.permute.xlu0 %3746
      %3748 = vrot.lane.b32.xlu0 %v1909, 96
      %v3749 = vpop.permute.xlu0 %3748
      %3750 = vrot.lane.b32.xlu0 %v1910, 96
      %v3751 = vpop.permute.xlu0 %3750
      %3752 = vrot.lane.b32.xlu0 %v1911, 96
      %v3753 = vpop.permute.xlu0 %3752
      %3754 = vrot.lane.b32.xlu0 %v1912, 96
      %v3755 = vpop.permute.xlu0 %3754
      %3756 = vrot.lane.b32.xlu0 %v1913, 96
      %v3757 = vpop.permute.xlu0 %3756
      %3758 = vrot.lane.b32.xlu0 %v1914, 96
      %v3759 = vpop.permute.xlu0 %3758
      %3760 = vrot.lane.b32.xlu0 %v1915, 96
      %v3761 = vpop.permute.xlu0 %3760
      %3762 = vrot.lane.b32.xlu0 %v1916, 96
      %v3763 = vpop.permute.xlu0 %3762
      %3764 = vrot.lane.b32.xlu0 %v1917, 96
      %v3765 = vpop.permute.xlu0 %3764
      %3766 = vrot.lane.b32.xlu0 %v1918, 96
      %v3767 = vpop.permute.xlu0 %3766
      %3768 = vrot.lane.b32.xlu0 %v1919, 96
      %v3769 = vpop.permute.xlu0 %3768
      %3770 = vrot.lane.b32.xlu0 %v1920, 96
      %v3771 = vpop.permute.xlu0 %3770
      %3772 = vrot.lane.b32.xlu0 %v1921, 96
      %v3773 = vpop.permute.xlu0 %3772
      %3774 = vrot.lane.b32.xlu0 %v1922, 96
      %v3775 = vpop.permute.xlu0 %3774
      %3776 = vrot.lane.b32.xlu0 %v1923, 96
      %v3777 = vpop.permute.xlu0 %3776
      %3778 = vrot.lane.b32.xlu0 %v1924, 96
      %v3779 = vpop.permute.xlu0 %3778
      %3780 = vrot.lane.b32.xlu0 %v1925, 96
      %v3781 = vpop.permute.xlu0 %3780
      %3782 = vrot.lane.b32.xlu0 %v1926, 96
      %v3783 = vpop.permute.xlu0 %3782
      %3784 = vrot.lane.b32.xlu0 %v1927, 96
      %v3785 = vpop.permute.xlu0 %3784
      %3786 = vrot.lane.b32.xlu0 %v1928, 96
      %v3787 = vpop.permute.xlu0 %3786
      %3788 = vrot.lane.b32.xlu0 %v1929, 96
      %v3789 = vpop.permute.xlu0 %3788
      %3790 = vrot.lane.b32.xlu0 %v1930, 96
      %v3791 = vpop.permute.xlu0 %3790
      %3792 = vrot.lane.b32.xlu0 %v1931, 96
      %v3793 = vpop.permute.xlu0 %3792
      %3794 = vrot.lane.b32.xlu0 %v1932, 96
      %v3795 = vpop.permute.xlu0 %3794
      %3828 = vst.msk [vmem:[#allocation2 + $0x10] sm:$0xf] %vm1965, %v3733
      %3829 = vst.msk [vmem:[#allocation2 + $0x18] sm:$0xf] %vm1965, %v3735
      %3830 = vst.msk [vmem:[#allocation2 + $0x20] sm:$0xf] %vm1965, %v3737
      %3831 = vst.msk [vmem:[#allocation2 + $0x28] sm:$0xf] %vm1965, %v3739
      %3832 = vst.msk [vmem:[#allocation2 + $0x30] sm:$0xf] %vm1965, %v3741
      %3833 = vst.msk [vmem:[#allocation2 + $0x38] sm:$0xf] %vm1965, %v3743
      %3834 = vst.msk [vmem:[#allocation2 + $0x40] sm:$0xf] %vm1965, %v3745
      %3835 = vst.msk [vmem:[#allocation2 + $0x48] sm:$0xf] %vm1965, %v3747
      %3836 = vst.msk [vmem:[#allocation2 + $0x50] sm:$0xf] %vm1965, %v3749
      %3837 = vst.msk [vmem:[#allocation2 + $0x58] sm:$0xf] %vm1965, %v3751
      %3838 = vst.msk [vmem:[#allocation2 + $0x60] sm:$0xf] %vm1965, %v3753
      %3839 = vst.msk [vmem:[#allocation2 + $0x68] sm:$0xf] %vm1965, %v3755
      %3840 = vst.msk [vmem:[#allocation2 + $0x70] sm:$0xf] %vm1965, %v3757
      %3841 = vst.msk [vmem:[#allocation2 + $0x78] sm:$0xf] %vm1965, %v3759
      %3842 = vst.msk [vmem:[#allocation2 + $0x80] sm:$0xf] %vm1965, %v3761
      %3843 = vst.msk [vmem:[#allocation2 + $0x88] sm:$0xf] %vm1965, %v3763
      %3844 = vst.msk [vmem:[#allocation2 + $0x90] sm:$0xf] %vm1965, %v3765
      %3845 = vst.msk [vmem:[#allocation2 + $0x98] sm:$0xf] %vm1965, %v3767
      %3846 = vst.msk [vmem:[#allocation2 + $0xa0] sm:$0xf] %vm1965, %v3769
      %3847 = vst.msk [vmem:[#allocation2 + $0xa8] sm:$0xf] %vm1965, %v3771
      %3848 = vst.msk [vmem:[#allocation2 + $0xb0] sm:$0xf] %vm1965, %v3773
      %3849 = vst.msk [vmem:[#allocation2 + $0xb8] sm:$0xf] %vm1965, %v3775
      %3850 = vst.msk [vmem:[#allocation2 + $0xc0] sm:$0xf] %vm1965, %v3777
      %3851 = vst.msk [vmem:[#allocation2 + $0xc8] sm:$0xf] %vm1965, %v3779
      %3852 = vst.msk [vmem:[#allocation2 + $0xd0] sm:$0xf] %vm1965, %v3781
      %3853 = vst.msk [vmem:[#allocation2 + $0xd8] sm:$0xf] %vm1965, %v3783
      %3854 = vst.msk [vmem:[#allocation2 + $0xe0] sm:$0xf] %vm1965, %v3785
      %3855 = vst.msk [vmem:[#allocation2 + $0xe8] sm:$0xf] %vm1965, %v3787
      %3856 = vst.msk [vmem:[#allocation2 + $0xf0] sm:$0xf] %vm1965, %v3789
      %3857 = vst.msk [vmem:[#allocation2 + $0xf8] sm:$0xf] %vm1965, %v3791
      %3858 = vst.msk [vmem:[#allocation2 + $0x100] sm:$0xf] %vm1965, %v3793
      %3859 = vst.msk [vmem:[#allocation2 + $0x108] sm:$0xf] %vm1965, %v3795
      %v3876 = vunpack.c.l.b16 %v3572
      %v3877 = vunpack.c.h.b16 %v3572
      %v3878 = vunpack.c.l.b16 %v3573
      %v3879 = vunpack.c.h.b16 %v3573
      %v3880 = vunpack.c.l.b16 %v3574
      %v3881 = vunpack.c.h.b16 %v3574
      %v3882 = vunpack.c.l.b16 %v3575
      %v3883 = vunpack.c.h.b16 %v3575
      %v3884 = vunpack.c.l.b16 %v3576
      %v3885 = vunpack.c.h.b16 %v3576
      %v3886 = vunpack.c.l.b16 %v3577
      %v3887 = vunpack.c.h.b16 %v3577
      %v3888 = vunpack.c.l.b16 %v3578
      %v3889 = vunpack.c.h.b16 %v3578
      %v3890 = vunpack.c.l.b16 %v3579
      %v3891 = vunpack.c.h.b16 %v3579
      %v3892 = vunpack.c.l.b16 %v3580
      %v3893 = vunpack.c.h.b16 %v3580
      %v3894 = vunpack.c.l.b16 %v3581
      %v3895 = vunpack.c.h.b16 %v3581
      %v3896 = vunpack.c.l.b16 %v3582
      %v3897 = vunpack.c.h.b16 %v3582
      %v3898 = vunpack.c.l.b16 %v3583
      %v3899 = vunpack.c.h.b16 %v3583
      %v3900 = vunpack.c.l.b16 %v3584
      %v3901 = vunpack.c.h.b16 %v3584
      %v3902 = vunpack.c.l.b16 %v3585
      %v3903 = vunpack.c.h.b16 %v3585
      %v3904 = vunpack.c.l.b16 %v3586
      %v3905 = vunpack.c.h.b16 %v3586
      %v3906 = vunpack.c.l.b16 %v3587
      %v3907 = vunpack.c.h.b16 %v3587
      %v3908 = vpack.c.b16 %v3876, %v3876
      %v3909 = vpack.c.b16 %v3877, %v3877
      %v3910 = vpack.c.b16 %v3878, %v3878
      %v3911 = vpack.c.b16 %v3879, %v3879
      %v3912 = vpack.c.b16 %v3880, %v3880
      %v3913 = vpack.c.b16 %v3881, %v3881
      %v3914 = vpack.c.b16 %v3882, %v3882
      %v3915 = vpack.c.b16 %v3883, %v3883
      %v3916 = vpack.c.b16 %v3884, %v3884
      %v3917 = vpack.c.b16 %v3885, %v3885
      %v3918 = vpack.c.b16 %v3886, %v3886
      %v3919 = vpack.c.b16 %v3887, %v3887
      %v3920 = vpack.c.b16 %v3888, %v3888
      %v3921 = vpack.c.b16 %v3889, %v3889
      %v3922 = vpack.c.b16 %v3890, %v3890
      %v3923 = vpack.c.b16 %v3891, %v3891
      %v3924 = vpack.c.b16 %v3892, %v3892
      %v3925 = vpack.c.b16 %v3893, %v3893
      %v3926 = vpack.c.b16 %v3894, %v3894
      %v3927 = vpack.c.b16 %v3895, %v3895
      %v3928 = vpack.c.b16 %v3896, %v3896
      %v3929 = vpack.c.b16 %v3897, %v3897
      %v3930 = vpack.c.b16 %v3898, %v3898
      %v3931 = vpack.c.b16 %v3899, %v3899
      %v3932 = vpack.c.b16 %v3900, %v3900
      %v3933 = vpack.c.b16 %v3901, %v3901
      %v3934 = vpack.c.b16 %v3902, %v3902
      %v3935 = vpack.c.b16 %v3903, %v3903
      %v3936 = vpack.c.b16 %v3904, %v3904
      %v3937 = vpack.c.b16 %v3905, %v3905
      %v3938 = vpack.c.b16 %v3906, %v3906
      %v3939 = vpack.c.b16 %v3907, %v3907
      %3940 = vrot.lane.b32.xlu0 %v3908, 64
      %v3941 = vpop.permute.xlu0 %3940
      %3942 = vrot.lane.b32.xlu0 %v3909, 64
      %v3943 = vpop.permute.xlu0 %3942
      %3944 = vrot.lane.b32.xlu0 %v3910, 64
      %v3945 = vpop.permute.xlu0 %3944
      %3946 = vrot.lane.b32.xlu0 %v3911, 64
      %v3947 = vpop.permute.xlu0 %3946
      %3948 = vrot.lane.b32.xlu0 %v3912, 64
      %v3949 = vpop.permute.xlu0 %3948
      %3950 = vrot.lane.b32.xlu0 %v3913, 64
      %v3951 = vpop.permute.xlu0 %3950
      %3952 = vrot.lane.b32.xlu0 %v3914, 64
      %v3953 = vpop.permute.xlu0 %3952
      %3954 = vrot.lane.b32.xlu0 %v3915, 64
      %v3955 = vpop.permute.xlu0 %3954
      %3956 = vrot.lane.b32.xlu0 %v3916, 64
      %v3957 = vpop.permute.xlu0 %3956
      %3958 = vrot.lane.b32.xlu0 %v3917, 64
      %v3959 = vpop.permute.xlu0 %3958
      %3960 = vrot.lane.b32.xlu0 %v3918, 64
      %v3961 = vpop.permute.xlu0 %3960
      %3962 = vrot.lane.b32.xlu0 %v3919, 64
      %v3963 = vpop.permute.xlu0 %3962
      %3964 = vrot.lane.b32.xlu0 %v3920, 64
      %v3965 = vpop.permute.xlu0 %3964
      %3966 = vrot.lane.b32.xlu0 %v3921, 64
      %v3967 = vpop.permute.xlu0 %3966
      %3968 = vrot.lane.b32.xlu0 %v3922, 64
      %v3969 = vpop.permute.xlu0 %3968
      %3970 = vrot.lane.b32.xlu0 %v3923, 64
      %v3971 = vpop.permute.xlu0 %3970
      %3972 = vrot.lane.b32.xlu0 %v3924, 64
      %v3973 = vpop.permute.xlu0 %3972
      %3974 = vrot.lane.b32.xlu0 %v3925, 64
      %v3975 = vpop.permute.xlu0 %3974
      %3976 = vrot.lane.b32.xlu0 %v3926, 64
      %v3977 = vpop.permute.xlu0 %3976
      %3978 = vrot.lane.b32.xlu0 %v3927, 64
      %v3979 = vpop.permute.xlu0 %3978
      %3980 = vrot.lane.b32.xlu0 %v3928, 64
      %v3981 = vpop.permute.xlu0 %3980
      %3982 = vrot.lane.b32.xlu0 %v3929, 64
      %v3983 = vpop.permute.xlu0 %3982
      %3984 = vrot.lane.b32.xlu0 %v3930, 64
      %v3985 = vpop.permute.xlu0 %3984
      %3986 = vrot.lane.b32.xlu0 %v3931, 64
      %v3987 = vpop.permute.xlu0 %3986
      %3988 = vrot.lane.b32.xlu0 %v3932, 64
      %v3989 = vpop.permute.xlu0 %3988
      %3990 = vrot.lane.b32.xlu0 %v3933, 64
      %v3991 = vpop.permute.xlu0 %3990
      %3992 = vrot.lane.b32.xlu0 %v3934, 64
      %v3993 = vpop.permute.xlu0 %3992
      %3994 = vrot.lane.b32.xlu0 %v3935, 64
      %v3995 = vpop.permute.xlu0 %3994
      %3996 = vrot.lane.b32.xlu0 %v3936, 64
      %v3997 = vpop.permute.xlu0 %3996
      %3998 = vrot.lane.b32.xlu0 %v3937, 64
      %v3999 = vpop.permute.xlu0 %3998
      %4000 = vrot.lane.b32.xlu0 %v3938, 64
      %v4001 = vpop.permute.xlu0 %4000
      %4002 = vrot.lane.b32.xlu0 %v3939, 64
      %v4003 = vpop.permute.xlu0 %4002
      %4036 = vst.msk [vmem:[#allocation2 + $0x10] sm:$0xf] %vm2174, %v3941
      %4037 = vst.msk [vmem:[#allocation2 + $0x18] sm:$0xf] %vm2174, %v3943
      %4038 = vst.msk [vmem:[#allocation2 + $0x20] sm:$0xf] %vm2174, %v3945
      %4039 = vst.msk [vmem:[#allocation2 + $0x28] sm:$0xf] %vm2174, %v3947
      %4040 = vst.msk [vmem:[#allocation2 + $0x30] sm:$0xf] %vm2174, %v3949
      %4041 = vst.msk [vmem:[#allocation2 + $0x38] sm:$0xf] %vm2174, %v3951
      %4042 = vst.msk [vmem:[#allocation2 + $0x40] sm:$0xf] %vm2174, %v3953
      %4043 = vst.msk [vmem:[#allocation2 + $0x48] sm:$0xf] %vm2174, %v3955
      %4044 = vst.msk [vmem:[#allocation2 + $0x50] sm:$0xf] %vm2174, %v3957
      %4045 = vst.msk [vmem:[#allocation2 + $0x58] sm:$0xf] %vm2174, %v3959
      %4046 = vst.msk [vmem:[#allocation2 + $0x60] sm:$0xf] %vm2174, %v3961
      %4047 = vst.msk [vmem:[#allocation2 + $0x68] sm:$0xf] %vm2174, %v3963
      %4048 = vst.msk [vmem:[#allocation2 + $0x70] sm:$0xf] %vm2174, %v3965
      %4049 = vst.msk [vmem:[#allocation2 + $0x78] sm:$0xf] %vm2174, %v3967
      %4050 = vst.msk [vmem:[#allocation2 + $0x80] sm:$0xf] %vm2174, %v3969
      %4051 = vst.msk [vmem:[#allocation2 + $0x88] sm:$0xf] %vm2174, %v3971
      %4052 = vst.msk [vmem:[#allocation2 + $0x90] sm:$0xf] %vm2174, %v3973
      %4053 = vst.msk [vmem:[#allocation2 + $0x98] sm:$0xf] %vm2174, %v3975
      %4054 = vst.msk [vmem:[#allocation2 + $0xa0] sm:$0xf] %vm2174, %v3977
      %4055 = vst.msk [vmem:[#allocation2 + $0xa8] sm:$0xf] %vm2174, %v3979
      %4056 = vst.msk [vmem:[#allocation2 + $0xb0] sm:$0xf] %vm2174, %v3981
      %4057 = vst.msk [vmem:[#allocation2 + $0xb8] sm:$0xf] %vm2174, %v3983
      %4058 = vst.msk [vmem:[#allocation2 + $0xc0] sm:$0xf] %vm2174, %v3985
      %4059 = vst.msk [vmem:[#allocation2 + $0xc8] sm:$0xf] %vm2174, %v3987
      %4060 = vst.msk [vmem:[#allocation2 + $0xd0] sm:$0xf] %vm2174, %v3989
      %4061 = vst.msk [vmem:[#allocation2 + $0xd8] sm:$0xf] %vm2174, %v3991
      %4062 = vst.msk [vmem:[#allocation2 + $0xe0] sm:$0xf] %vm2174, %v3993
      %4063 = vst.msk [vmem:[#allocation2 + $0xe8] sm:$0xf] %vm2174, %v3995
      %4064 = vst.msk [vmem:[#allocation2 + $0xf0] sm:$0xf] %vm2174, %v3997
      %4065 = vst.msk [vmem:[#allocation2 + $0xf8] sm:$0xf] %vm2174, %v3999
      %4066 = vst.msk [vmem:[#allocation2 + $0x100] sm:$0xf] %vm2174, %v4001
      %4067 = vst.msk [vmem:[#allocation2 + $0x108] sm:$0xf] %vm2174, %v4003
      %v4068 = vld [vmem:[#allocation2] sm:$0xf]
      %v4069 = vld [vmem:[#allocation2 + $0x8] sm:$0xf]
      %v4070 = vld [vmem:[#allocation2 + $0x10] sm:$0xf]
      %v4071 = vld [vmem:[#allocation2 + $0x18] sm:$0xf]
      %v4072 = vld [vmem:[#allocation2 + $0x20] sm:$0xf]
      %v4073 = vld [vmem:[#allocation2 + $0x28] sm:$0xf]
      %v4074 = vld [vmem:[#allocation2 + $0x30] sm:$0xf]
      %v4075 = vld [vmem:[#allocation2 + $0x38] sm:$0xf]
      %v4076 = vld [vmem:[#allocation2 + $0x40] sm:$0xf]
      %v4077 = vld [vmem:[#allocation2 + $0x48] sm:$0xf]
      %v4078 = vld [vmem:[#allocation2 + $0x50] sm:$0xf]
      %v4079 = vld [vmem:[#allocation2 + $0x58] sm:$0xf]
      %v4080 = vld [vmem:[#allocation2 + $0x60] sm:$0xf]
      %v4081 = vld [vmem:[#allocation2 + $0x68] sm:$0xf]
      %v4082 = vld [vmem:[#allocation2 + $0x70] sm:$0xf]
      %v4083 = vld [vmem:[#allocation2 + $0x78] sm:$0xf]
      %v4084 = vld [vmem:[#allocation2 + $0x80] sm:$0xf]
      %v4085 = vld [vmem:[#allocation2 + $0x88] sm:$0xf]
      %v4086 = vld [vmem:[#allocation2 + $0x90] sm:$0xf]
      %v4087 = vld [vmem:[#allocation2 + $0x98] sm:$0xf]
      %v4088 = vld [vmem:[#allocation2 + $0xa0] sm:$0xf]
      %v4089 = vld [vmem:[#allocation2 + $0xa8] sm:$0xf]
      %v4090 = vld [vmem:[#allocation2 + $0xb0] sm:$0xf]
      %v4091 = vld [vmem:[#allocation2 + $0xb8] sm:$0xf]
      %v4092 = vld [vmem:[#allocation2 + $0xc0] sm:$0xf]
      %v4093 = vld [vmem:[#allocation2 + $0xc8] sm:$0xf]
      %v4094 = vld [vmem:[#allocation2 + $0xd0] sm:$0xf]
      %v4095 = vld [vmem:[#allocation2 + $0xd8] sm:$0xf]
      %v4096 = vld [vmem:[#allocation2 + $0xe0] sm:$0xf]
      %v4097 = vld [vmem:[#allocation2 + $0xe8] sm:$0xf]
      %v4098 = vld [vmem:[#allocation2 + $0xf0] sm:$0xf]
      %v4099 = vld [vmem:[#allocation2 + $0xf8] sm:$0xf]
      %v4100 = vld [vmem:[%s5] sm:$0xf]
      %v4101 = vld [vmem:[%s5 + $0x4] sm:$0xf]
      %v4102 = vld [vmem:[%s5 + $0x8] sm:$0xf]
      %v4103 = vld [vmem:[%s5 + $0xc] sm:$0xf]
      %v4104 = vld [vmem:[%s5 + $0x10] sm:$0xf]
      %v4105 = vld [vmem:[%s5 + $0x14] sm:$0xf]
      %v4106 = vld [vmem:[%s5 + $0x18] sm:$0xf]
      %v4107 = vld [vmem:[%s5 + $0x1c] sm:$0xf]
      %v4108 = vld [vmem:[%s5 + $0x20] sm:$0xf]
      %v4109 = vld [vmem:[%s5 + $0x24] sm:$0xf]
      %v4110 = vld [vmem:[%s5 + $0x28] sm:$0xf]
      %v4111 = vld [vmem:[%s5 + $0x2c] sm:$0xf]
      %v4112 = vld [vmem:[#allocation2 + $0x100] sm:$0xf]
      %v4113 = vld [vmem:[#allocation2 + $0x108] sm:$0xf]
      %v4114 = vld [vmem:[%s5 + $0x30] sm:$0xf]
      %v4115 = vld [vmem:[%s5 + $0x34] sm:$0xf]
      %v4116 = vld [vmem:[%s5 + $0x38] sm:$0xf]
      %v4117 = vld [vmem:[%s5 + $0x3c] sm:$0xf]
      %v4118 = vld [vmem:[%s5 + $0x40] sm:$0xf]
      %v4119 = vld [vmem:[%s5 + $0x44] sm:$0xf]
      %v4120 = vld [vmem:[%s5 + $0x48] sm:$0xf]
      %v4121 = vld [vmem:[%s5 + $0x4c] sm:$0xf]
      %v4122 = vld [vmem:[%s5 + $0x50] sm:$0xf]
      %v4123 = vld [vmem:[%s5 + $0x54] sm:$0xf]
      %v4124 = vld [vmem:[%s5 + $0x58] sm:$0xf]
      %v4125 = vld [vmem:[%s5 + $0x5c] sm:$0xf]
      %v4158 = vunpack.c.l.b16 %v4070
      %v4159 = vunpack.c.l.b16 %v4071
      %v4160 = vunpack.c.l.b16 %v4072
      %v4161 = vunpack.c.l.b16 %v4073
      %v4162 = vunpack.c.l.b16 %v4074
      %v4163 = vunpack.c.l.b16 %v4075
      %v4164 = vunpack.c.l.b16 %v4076
      %v4165 = vunpack.c.l.b16 %v4077
      %v4166 = vunpack.c.l.b16 %v4078
      %v4167 = vunpack.c.l.b16 %v4079
      %v4168 = vunpack.c.l.b16 %v4080
      %v4169 = vunpack.c.l.b16 %v4081
      %v4170 = vunpack.c.l.b16 %v4082
      %v4171 = vunpack.c.l.b16 %v4083
      %v4172 = vunpack.c.l.b16 %v4084
      %v4173 = vunpack.c.l.b16 %v4085
      %v4174 = vunpack.c.l.b16 %v4086
      %v4175 = vunpack.c.l.b16 %v4087
      %v4176 = vunpack.c.l.b16 %v4088
      %v4177 = vunpack.c.l.b16 %v4089
      %v4178 = vunpack.c.l.b16 %v4090
      %v4179 = vunpack.c.l.b16 %v4091
      %v4180 = vunpack.c.l.b16 %v4092
      %v4181 = vunpack.c.l.b16 %v4093
      %v4182 = vunpack.c.l.b16 %v4094
      %v4183 = vunpack.c.l.b16 %v4095
      %v4184 = vunpack.c.l.b16 %v4096
      %v4185 = vunpack.c.l.b16 %v4097
      %v4186 = vunpack.c.l.b16 %v4098
      %v4187 = vunpack.c.l.b16 %v4099
      %v4188 = vunpack.c.l.b16 %v4112
      %v4189 = vunpack.c.l.b16 %v4113
      %v4190 = vpack.c.b16 %v4159, %v4158
      %v4191 = vpack.c.b16 %v4161, %v4160
      %v4192 = vpack.c.b16 %v4163, %v4162
      %v4193 = vpack.c.b16 %v4165, %v4164
      %v4194 = vpack.c.b16 %v4167, %v4166
      %v4195 = vpack.c.b16 %v4169, %v4168
      %v4196 = vpack.c.b16 %v4171, %v4170
      %v4197 = vpack.c.b16 %v4173, %v4172
      %v4198 = vpack.c.b16 %v4175, %v4174
      %v4199 = vpack.c.b16 %v4177, %v4176
      %v4200 = vpack.c.b16 %v4179, %v4178
      %v4201 = vpack.c.b16 %v4181, %v4180
      %v4202 = vpack.c.b16 %v4183, %v4182
      %v4203 = vpack.c.b16 %v4185, %v4184
      %v4204 = vpack.c.b16 %v4187, %v4186
      %v4205 = vpack.c.b16 %v4189, %v4188
      %v4218 = vunpack.c.l.b16 %v4114
      %v4219 = vunpack.c.l.b16 %v4115
      %v4220 = vunpack.c.l.b16 %v4116
      %v4221 = vunpack.c.l.b16 %v4117
      %v4222 = vunpack.c.l.b16 %v4118
      %v4223 = vunpack.c.l.b16 %v4119
      %v4224 = vunpack.c.l.b16 %v4120
      %v4225 = vunpack.c.l.b16 %v4121
      %v4226 = vunpack.c.l.b16 %v4122
      %v4227 = vunpack.c.l.b16 %v4123
      %v4228 = vunpack.c.l.b16 %v4124
      %v4229 = vunpack.c.l.b16 %v4125
      %v4230 = vpack.c.b16 %v4219, %v4218
      %v4231 = vpack.c.b16 %v4221, %v4220
      %v4232 = vpack.c.b16 %v4223, %v4222
      %v4233 = vpack.c.b16 %v4225, %v4224
      %v4234 = vpack.c.b16 %v4227, %v4226
      %v4235 = vpack.c.b16 %v4229, %v4228
      %v4243 = vsel %vm2381, %v4190, 0
      %v4246 = vsel %vm2381, %v4191, 0
      %v4249 = vsel %vm2381, %v4192, 0
      %v4252 = vsel %vm2381, %v4193, 0
      %v4255 = vsel %vm2381, %v4194, 0
      %v4258 = vsel %vm2381, %v4195, 0
      %v4261 = vsel %vm2381, %v4196, 0
      %v4264 = vsel %vm2381, %v4197, 0
      %v4267 = vsel %vm2381, %v4198, 0
      %v4270 = vsel %vm2381, %v4199, 0
      %v4273 = vsel %vm2381, %v4200, 0
      %v4276 = vsel %vm2381, %v4201, 0
      %v4279 = vsel %vm2381, %v4202, 0
      %v4282 = vsel %vm2381, %v4203, 0
      %v4285 = vsel %vm2381, %v4204, 0
      %v4288 = vsel %vm2381, %v4205, 0
      %4290 = vmatprep.subr.bf16.mxu0 0
      %4291 = vmatpush1.bf16.msra.mxu0 0
      %4292 = vmatprep.subr.bf16.mxu0 0
      %4293 = vmatpush1.bf16.msra.mxu0 0
      %4294 = vmatprep.subr.bf16.mxu0 0
      %4295 = vmatpush1.bf16.msra.mxu0 %v4235
      %4296 = vmatprep.subr.bf16.mxu0 0
      %4297 = vmatpush1.bf16.msra.mxu0 %v4234
      %4298 = vmatprep.subr.bf16.mxu0 0
      %4299 = vmatpush1.bf16.msra.mxu0 %v4233
      %4300 = vmatprep.subr.bf16.mxu0 0
      %4301 = vmatpush1.bf16.msra.mxu0 %v4232
      %4302 = vmatprep.subr.bf16.mxu0 0
      %4303 = vmatpush1.bf16.msra.mxu0 %v4231
      %4304 = vmatprep.subr.bf16.mxu0 0
      %4305 = vmatpush1.bf16.msra.mxu0 %v4230
      %4306 = vmatprep.subr.bf16.mxu0 0
      %4307 = vmatpush2.bf16.msra.mxu0 0
      %4308 = vmatprep.subr.bf16.mxu0 0
      %4309 = vmatpush2.bf16.msra.mxu0 0
      %4310 = vmatprep.subr.bf16.mxu0 0
      %4311 = vmatpush2.bf16.msra.mxu0 0
      %4312 = vmatprep.subr.bf16.mxu0 0
      %4313 = vmatpush2.bf16.msra.mxu0 0
      %4314 = vmatprep.subr.bf16.mxu0 0
      %4315 = vmatpush2.bf16.msra.mxu0 0
      %4316 = vmatprep.subr.bf16.mxu0 0
      %4317 = vmatpush2.bf16.msra.mxu0 0
      %4318 = vmatprep.subr.bf16.mxu0 0
      %4319 = vmatpush2.bf16.msra.mxu0 0
      %4320 = vmatprep.subr.bf16.mxu0 0
      %4321 = vmatpush2.bf16.msra.mxu0 0
      %4322 = vmatprep.mubr.bf16.mxu0 0
      %4323 = vmatmul.mubr.bf16.gmra.mxu0 %v4243
      %v4324 = vpop.f32.mrf.mxu0
      %v4325 = vadd.f32 0.0, %v4324
      %v4326 = vpop.f32.mrf.mxu0
      %v4327 = vpop.f32.mrf.mxu0
      %v4328 = vadd.f32 0.0, %v4327
      %v4329 = vpop.f32.mrf.mxu0
      %4330 = vmatprep.mubr.bf16.mxu0 0
      %4331 = vmatmul.mubr.bf16.gmra.mxu0 %v4246
      %v4332 = vpop.f32.mrf.mxu0
      %v4333 = vadd.f32 0.0, %v4332
      %v4334 = vpop.f32.mrf.mxu0
      %v4335 = vpop.f32.mrf.mxu0
      %v4336 = vadd.f32 0.0, %v4335
      %v4337 = vpop.f32.mrf.mxu0
      %4338 = vmatprep.mubr.bf16.mxu0 0
      %4339 = vmatmul.mubr.bf16.gmra.mxu0 %v4249
      %v4340 = vpop.f32.mrf.mxu0
      %v4341 = vadd.f32 0.0, %v4340
      %v4342 = vpop.f32.mrf.mxu0
      %v4343 = vpop.f32.mrf.mxu0
      %v4344 = vadd.f32 0.0, %v4343
      %v4345 = vpop.f32.mrf.mxu0
      %4346 = vmatprep.mubr.bf16.mxu0 0
      %4347 = vmatmul.mubr.bf16.gmra.mxu0 %v4252
      %v4348 = vpop.f32.mrf.mxu0
      %v4349 = vadd.f32 0.0, %v4348
      %v4350 = vpop.f32.mrf.mxu0
      %v4351 = vpop.f32.mrf.mxu0
      %v4352 = vadd.f32 0.0, %v4351
      %v4353 = vpop.f32.mrf.mxu0
      %4354 = vmatprep.mubr.bf16.mxu0 0
      %4355 = vmatmul.mubr.bf16.gmra.mxu0 %v4255
      %v4356 = vpop.f32.mrf.mxu0
      %v4357 = vadd.f32 0.0, %v4356
      %v4358 = vpop.f32.mrf.mxu0
      %v4359 = vpop.f32.mrf.mxu0
      %v4360 = vadd.f32 0.0, %v4359
      %v4361 = vpop.f32.mrf.mxu0
      %4362 = vmatprep.mubr.bf16.mxu0 0
      %4363 = vmatmul.mubr.bf16.gmra.mxu0 %v4258
      %v4364 = vpop.f32.mrf.mxu0
      %v4365 = vadd.f32 0.0, %v4364
      %v4366 = vpop.f32.mrf.mxu0
      %v4367 = vpop.f32.mrf.mxu0
      %v4368 = vadd.f32 0.0, %v4367
      %v4369 = vpop.f32.mrf.mxu0
      %4370 = vmatprep.mubr.bf16.mxu0 0
      %4371 = vmatmul.mubr.bf16.gmra.mxu0 %v4261
      %v4372 = vpop.f32.mrf.mxu0
      %v4373 = vadd.f32 0.0, %v4372
      %v4374 = vpop.f32.mrf.mxu0
      %v4375 = vpop.f32.mrf.mxu0
      %v4376 = vadd.f32 0.0, %v4375
      %v4377 = vpop.f32.mrf.mxu0
      %4378 = vmatprep.mubr.bf16.mxu0 0
      %4379 = vmatmul.mubr.bf16.gmra.mxu0 %v4264
      %v4380 = vpop.f32.mrf.mxu0
      %v4381 = vadd.f32 0.0, %v4380
      %v4382 = vpop.f32.mrf.mxu0
      %v4383 = vpop.f32.mrf.mxu0
      %v4384 = vadd.f32 0.0, %v4383
      %v4385 = vpop.f32.mrf.mxu0
      %4386 = vmatprep.mubr.bf16.mxu0 0
      %4387 = vmatmul.mubr.bf16.gmra.mxu0 %v4267
      %v4388 = vpop.f32.mrf.mxu0
      %v4389 = vadd.f32 0.0, %v4388
      %v4390 = vpop.f32.mrf.mxu0
      %v4391 = vpop.f32.mrf.mxu0
      %v4392 = vadd.f32 0.0, %v4391
      %v4393 = vpop.f32.mrf.mxu0
      %4394 = vmatprep.mubr.bf16.mxu0 0
      %4395 = vmatmul.mubr.bf16.gmra.mxu0 %v4270
      %v4396 = vpop.f32.mrf.mxu0
      %v4397 = vadd.f32 0.0, %v4396
      %v4398 = vpop.f32.mrf.mxu0
      %v4399 = vpop.f32.mrf.mxu0
      %v4400 = vadd.f32 0.0, %v4399
      %v4401 = vpop.f32.mrf.mxu0
      %4402 = vmatprep.mubr.bf16.mxu0 0
      %4403 = vmatmul.mubr.bf16.gmra.mxu0 %v4273
      %v4404 = vpop.f32.mrf.mxu0
      %v4405 = vadd.f32 0.0, %v4404
      %v4406 = vpop.f32.mrf.mxu0
      %v4407 = vpop.f32.mrf.mxu0
      %v4408 = vadd.f32 0.0, %v4407
      %v4409 = vpop.f32.mrf.mxu0
      %4410 = vmatprep.mubr.bf16.mxu0 0
      %4411 = vmatmul.mubr.bf16.gmra.mxu0 %v4276
      %v4412 = vpop.f32.mrf.mxu0
      %v4413 = vadd.f32 0.0, %v4412
      %v4414 = vpop.f32.mrf.mxu0
      %v4415 = vpop.f32.mrf.mxu0
      %v4416 = vadd.f32 0.0, %v4415
      %v4417 = vpop.f32.mrf.mxu0
      %4418 = vmatprep.mubr.bf16.mxu0 0
      %4419 = vmatmul.mubr.bf16.gmra.mxu0 %v4279
      %v4420 = vpop.f32.mrf.mxu0
      %v4421 = vadd.f32 0.0, %v4420
      %v4422 = vpop.f32.mrf.mxu0
      %v4423 = vpop.f32.mrf.mxu0
      %v4424 = vadd.f32 0.0, %v4423
      %v4425 = vpop.f32.mrf.mxu0
      %4426 = vmatprep.mubr.bf16.mxu0 0
      %4427 = vmatmul.mubr.bf16.gmra.mxu0 %v4282
      %v4428 = vpop.f32.mrf.mxu0
      %v4429 = vadd.f32 0.0, %v4428
      %v4430 = vpop.f32.mrf.mxu0
      %v4431 = vpop.f32.mrf.mxu0
      %v4432 = vadd.f32 0.0, %v4431
      %v4433 = vpop.f32.mrf.mxu0
      %4434 = vmatprep.mubr.bf16.mxu0 0
      %4435 = vmatmul.mubr.bf16.gmra.mxu0 %v4285
      %v4436 = vpop.f32.mrf.mxu0
      %v4437 = vadd.f32 0.0, %v4436
      %v4438 = vpop.f32.mrf.mxu0
      %v4439 = vpop.f32.mrf.mxu0
      %v4440 = vadd.f32 0.0, %v4439
      %v4441 = vpop.f32.mrf.mxu0
      %4442 = vmatprep.mubr.bf16.mxu0 0
      %4443 = vmatmul.mubr.bf16.gmra.mxu0 %v4288
      %v4444 = vpop.f32.mrf.mxu0
      %v4445 = vadd.f32 0.0, %v4444
      %v4446 = vpop.f32.mrf.mxu0
      %v4447 = vpop.f32.mrf.mxu0
      %v4448 = vadd.f32 0.0, %v4447
      %v4449 = vpop.f32.mrf.mxu0
      %4450 = vdwg.mxu0
      %v4453 = vunpack.c.l.b16 %v4068
      %v4454 = vunpack.c.l.b16 %v4069
      %v4455 = vpack.c.b16 %v4454, %v4453
      %v4468 = vunpack.c.l.b16 %v4100
      %v4469 = vunpack.c.l.b16 %v4101
      %v4470 = vunpack.c.l.b16 %v4102
      %v4471 = vunpack.c.l.b16 %v4103
      %v4472 = vunpack.c.l.b16 %v4104
      %v4473 = vunpack.c.l.b16 %v4105
      %v4474 = vunpack.c.l.b16 %v4106
      %v4475 = vunpack.c.l.b16 %v4107
      %v4476 = vunpack.c.l.b16 %v4108
      %v4477 = vunpack.c.l.b16 %v4109
      %v4478 = vunpack.c.l.b16 %v4110
      %v4479 = vunpack.c.l.b16 %v4111
      %v4480 = vpack.c.b16 %v4469, %v4468
      %v4481 = vpack.c.b16 %v4471, %v4470
      %v4482 = vpack.c.b16 %v4473, %v4472
      %v4483 = vpack.c.b16 %v4475, %v4474
      %v4484 = vpack.c.b16 %v4477, %v4476
      %v4485 = vpack.c.b16 %v4479, %v4478
      %v4493 = vsel %vm2381, %v4455, 0
      %4495 = vmatprep.subr.bf16.mxu0 0
      %4496 = vmatpush1.bf16.msra.mxu0 0
      %4497 = vmatprep.subr.bf16.mxu0 0
      %4498 = vmatpush1.bf16.msra.mxu0 0
      %4499 = vmatprep.subr.bf16.mxu0 0
      %4500 = vmatpush1.bf16.msra.mxu0 %v4485
      %4501 = vmatprep.subr.bf16.mxu0 0
      %4502 = vmatpush1.bf16.msra.mxu0 %v4484
      %4503 = vmatprep.subr.bf16.mxu0 0
      %4504 = vmatpush1.bf16.msra.mxu0 %v4483
      %4505 = vmatprep.subr.bf16.mxu0 0
      %4506 = vmatpush1.bf16.msra.mxu0 %v4482
      %4507 = vmatprep.subr.bf16.mxu0 0
      %4508 = vmatpush1.bf16.msra.mxu0 %v4481
      %4509 = vmatprep.subr.bf16.mxu0 0
      %4510 = vmatpush1.bf16.msra.mxu0 %v4480
      %4511 = vmatprep.subr.bf16.mxu0 0
      %4512 = vmatpush2.bf16.msra.mxu0 0
      %4513 = vmatprep.subr.bf16.mxu0 0
      %4514 = vmatpush2.bf16.msra.mxu0 0
      %4515 = vmatprep.subr.bf16.mxu0 0
      %4516 = vmatpush2.bf16.msra.mxu0 0
      %4517 = vmatprep.subr.bf16.mxu0 0
      %4518 = vmatpush2.bf16.msra.mxu0 0
      %4519 = vmatprep.subr.bf16.mxu0 0
      %4520 = vmatpush2.bf16.msra.mxu0 0
      %4521 = vmatprep.subr.bf16.mxu0 0
      %4522 = vmatpush2.bf16.msra.mxu0 0
      %4523 = vmatprep.subr.bf16.mxu0 0
      %4524 = vmatpush2.bf16.msra.mxu0 0
      %4525 = vmatprep.subr.bf16.mxu0 0
      %4526 = vmatpush2.bf16.msra.mxu0 0
      %4527 = vmatprep.mubr.bf16.mxu0 0
      %4528 = vmatmul.mubr.bf16.gmra.mxu0 %v4493
      %v4529 = vpop.f32.mrf.mxu0
      %v4530 = vadd.f32 %v4325, %v4529
      %v4531 = vpop.f32.mrf.mxu0
      %v4532 = vpop.f32.mrf.mxu0
      %v4533 = vadd.f32 %v4328, %v4532
      %v4534 = vpop.f32.mrf.mxu0
      %4535 = vmatprep.mubr.bf16.mxu0 0
      %4536 = vmatmul.mubr.bf16.gmra.mxu0 %v4243
      %v4537 = vpop.f32.mrf.mxu0
      %v4538 = vadd.f32 %v4333, %v4537
      %v4539 = vpop.f32.mrf.mxu0
      %v4540 = vpop.f32.mrf.mxu0
      %v4541 = vadd.f32 %v4336, %v4540
      %v4542 = vpop.f32.mrf.mxu0
      %4543 = vmatprep.mubr.bf16.mxu0 0
      %4544 = vmatmul.mubr.bf16.gmra.mxu0 %v4246
      %v4545 = vpop.f32.mrf.mxu0
      %v4546 = vadd.f32 %v4341, %v4545
      %v4547 = vpop.f32.mrf.mxu0
      %v4548 = vpop.f32.mrf.mxu0
      %v4549 = vadd.f32 %v4344, %v4548
      %v4550 = vpop.f32.mrf.mxu0
      %4551 = vmatprep.mubr.bf16.mxu0 0
      %4552 = vmatmul.mubr.bf16.gmra.mxu0 %v4249
      %v4553 = vpop.f32.mrf.mxu0
      %v4554 = vadd.f32 %v4349, %v4553
      %v4555 = vpop.f32.mrf.mxu0
      %v4556 = vpop.f32.mrf.mxu0
      %v4557 = vadd.f32 %v4352, %v4556
      %v4558 = vpop.f32.mrf.mxu0
      %4559 = vmatprep.mubr.bf16.mxu0 0
      %4560 = vmatmul.mubr.bf16.gmra.mxu0 %v4252
      %v4561 = vpop.f32.mrf.mxu0
      %v4562 = vadd.f32 %v4357, %v4561
      %v4563 = vpop.f32.mrf.mxu0
      %v4564 = vpop.f32.mrf.mxu0
      %v4565 = vadd.f32 %v4360, %v4564
      %v4566 = vpop.f32.mrf.mxu0
      %4567 = vmatprep.mubr.bf16.mxu0 0
      %4568 = vmatmul.mubr.bf16.gmra.mxu0 %v4255
      %v4569 = vpop.f32.mrf.mxu0
      %v4570 = vadd.f32 %v4365, %v4569
      %v4571 = vpop.f32.mrf.mxu0
      %v4572 = vpop.f32.mrf.mxu0
      %v4573 = vadd.f32 %v4368, %v4572
      %v4574 = vpop.f32.mrf.mxu0
      %4575 = vmatprep.mubr.bf16.mxu0 0
      %4576 = vmatmul.mubr.bf16.gmra.mxu0 %v4258
      %v4577 = vpop.f32.mrf.mxu0
      %v4578 = vadd.f32 %v4373, %v4577
      %v4579 = vpop.f32.mrf.mxu0
      %v4580 = vpop.f32.mrf.mxu0
      %v4581 = vadd.f32 %v4376, %v4580
      %v4582 = vpop.f32.mrf.mxu0
      %4583 = vmatprep.mubr.bf16.mxu0 0
      %4584 = vmatmul.mubr.bf16.gmra.mxu0 %v4261
      %v4585 = vpop.f32.mrf.mxu0
      %v4586 = vadd.f32 %v4381, %v4585
      %v4587 = vpop.f32.mrf.mxu0
      %v4588 = vpop.f32.mrf.mxu0
      %v4589 = vadd.f32 %v4384, %v4588
      %v4590 = vpop.f32.mrf.mxu0
      %4591 = vmatprep.mubr.bf16.mxu0 0
      %4592 = vmatmul.mubr.bf16.gmra.mxu0 %v4264
      %v4593 = vpop.f32.mrf.mxu0
      %v4594 = vadd.f32 %v4389, %v4593
      %v4595 = vpop.f32.mrf.mxu0
      %v4596 = vpop.f32.mrf.mxu0
      %v4597 = vadd.f32 %v4392, %v4596
      %v4598 = vpop.f32.mrf.mxu0
      %4599 = vmatprep.mubr.bf16.mxu0 0
      %4600 = vmatmul.mubr.bf16.gmra.mxu0 %v4267
      %v4601 = vpop.f32.mrf.mxu0
      %v4602 = vadd.f32 %v4397, %v4601
      %v4603 = vpop.f32.mrf.mxu0
      %v4604 = vpop.f32.mrf.mxu0
      %v4605 = vadd.f32 %v4400, %v4604
      %v4606 = vpop.f32.mrf.mxu0
      %4607 = vmatprep.mubr.bf16.mxu0 0
      %4608 = vmatmul.mubr.bf16.gmra.mxu0 %v4270
      %v4609 = vpop.f32.mrf.mxu0
      %v4610 = vadd.f32 %v4405, %v4609
      %v4611 = vpop.f32.mrf.mxu0
      %v4612 = vpop.f32.mrf.mxu0
      %v4613 = vadd.f32 %v4408, %v4612
      %v4614 = vpop.f32.mrf.mxu0
      %4615 = vmatprep.mubr.bf16.mxu0 0
      %4616 = vmatmul.mubr.bf16.gmra.mxu0 %v4273
      %v4617 = vpop.f32.mrf.mxu0
      %v4618 = vadd.f32 %v4413, %v4617
      %v4619 = vpop.f32.mrf.mxu0
      %v4620 = vpop.f32.mrf.mxu0
      %v4621 = vadd.f32 %v4416, %v4620
      %v4622 = vpop.f32.mrf.mxu0
      %4623 = vmatprep.mubr.bf16.mxu0 0
      %4624 = vmatmul.mubr.bf16.gmra.mxu0 %v4276
      %v4625 = vpop.f32.mrf.mxu0
      %v4626 = vadd.f32 %v4421, %v4625
      %v4627 = vpop.f32.mrf.mxu0
      %v4628 = vpop.f32.mrf.mxu0
      %v4629 = vadd.f32 %v4424, %v4628
      %v4630 = vpop.f32.mrf.mxu0
      %4631 = vmatprep.mubr.bf16.mxu0 0
      %4632 = vmatmul.mubr.bf16.gmra.mxu0 %v4279
      %v4633 = vpop.f32.mrf.mxu0
      %v4634 = vadd.f32 %v4429, %v4633
      %v4635 = vpop.f32.mrf.mxu0
      %v4636 = vpop.f32.mrf.mxu0
      %v4637 = vadd.f32 %v4432, %v4636
      %v4638 = vpop.f32.mrf.mxu0
      %4639 = vmatprep.mubr.bf16.mxu0 0
      %4640 = vmatmul.mubr.bf16.gmra.mxu0 %v4282
      %v4641 = vpop.f32.mrf.mxu0
      %v4642 = vadd.f32 %v4437, %v4641
      %v4643 = vpop.f32.mrf.mxu0
      %v4644 = vpop.f32.mrf.mxu0
      %v4645 = vadd.f32 %v4440, %v4644
      %v4646 = vpop.f32.mrf.mxu0
      %4647 = vmatprep.mubr.bf16.mxu0 0
      %4648 = vmatmul.mubr.bf16.gmra.mxu0 %v4285
      %v4649 = vpop.f32.mrf.mxu0
      %v4650 = vadd.f32 %v4445, %v4649
      %v4651 = vpop.f32.mrf.mxu0
      %v4652 = vpop.f32.mrf.mxu0
      %v4653 = vadd.f32 %v4448, %v4652
      %v4654 = vpop.f32.mrf.mxu0
      %4655 = vdwg.mxu0
      %v4656 = vld [vmem:[#allocation2 + $0x20] sm:$0xf]
      %v4657 = vld [vmem:[#allocation2 + $0x28] sm:$0xf]
      %v4658 = vld [vmem:[#allocation2 + $0x30] sm:$0xf]
      %v4659 = vld [vmem:[#allocation2 + $0x38] sm:$0xf]
      %v4660 = vld [vmem:[#allocation2 + $0x40] sm:$0xf]
      %v4661 = vld [vmem:[#allocation2 + $0x48] sm:$0xf]
      %v4662 = vld [vmem:[#allocation2 + $0x50] sm:$0xf]
      %v4663 = vld [vmem:[#allocation2 + $0x58] sm:$0xf]
      %v4664 = vld [vmem:[#allocation2 + $0x60] sm:$0xf]
      %v4665 = vld [vmem:[#allocation2 + $0x68] sm:$0xf]
      %v4666 = vld [vmem:[#allocation2 + $0x70] sm:$0xf]
      %v4667 = vld [vmem:[#allocation2 + $0x78] sm:$0xf]
      %v4668 = vld [vmem:[#allocation2 + $0x80] sm:$0xf]
      %v4669 = vld [vmem:[#allocation2 + $0x88] sm:$0xf]
      %v4670 = vld [vmem:[#allocation2 + $0x90] sm:$0xf]
      %v4671 = vld [vmem:[#allocation2 + $0x98] sm:$0xf]
      %v4672 = vld [vmem:[#allocation2 + $0xa0] sm:$0xf]
      %v4673 = vld [vmem:[#allocation2 + $0xa8] sm:$0xf]
      %v4674 = vld [vmem:[#allocation2 + $0xb0] sm:$0xf]
      %v4675 = vld [vmem:[#allocation2 + $0xb8] sm:$0xf]
      %v4676 = vld [vmem:[#allocation2 + $0xc0] sm:$0xf]
      %v4677 = vld [vmem:[#allocation2 + $0xc8] sm:$0xf]
      %v4678 = vld [vmem:[#allocation2 + $0xd0] sm:$0xf]
      %v4679 = vld [vmem:[#allocation2 + $0xd8] sm:$0xf]
      %v4680 = vld [vmem:[#allocation2 + $0xe0] sm:$0xf]
      %v4681 = vld [vmem:[#allocation2 + $0xe8] sm:$0xf]
      %v4682 = vld [vmem:[#allocation2 + $0xf0] sm:$0xf]
      %v4683 = vld [vmem:[#allocation2 + $0xf8] sm:$0xf]
      %v4684 = vld [vmem:[#allocation2 + $0x100] sm:$0xf]
      %v4685 = vld [vmem:[#allocation2 + $0x108] sm:$0xf]
      %v4686 = vld [vmem:[#allocation2 + $0x110] sm:$0xf]
      %v4687 = vld [vmem:[#allocation2 + $0x118] sm:$0xf]
      %v4688 = vld [vmem:[%s5 + $0x60] sm:$0xf]
      %v4689 = vld [vmem:[%s5 + $0x64] sm:$0xf]
      %v4690 = vld [vmem:[%s5 + $0x68] sm:$0xf]
      %v4691 = vld [vmem:[%s5 + $0x6c] sm:$0xf]
      %v4692 = vld [vmem:[%s5 + $0x70] sm:$0xf]
      %v4693 = vld [vmem:[%s5 + $0x74] sm:$0xf]
      %v4694 = vld [vmem:[%s5 + $0x78] sm:$0xf]
      %v4695 = vld [vmem:[%s5 + $0x7c] sm:$0xf]
      %v4696 = vld [vmem:[%s5 + $0x80] sm:$0xf]
      %v4697 = vld [vmem:[%s5 + $0x84] sm:$0xf]
      %v4698 = vld [vmem:[%s5 + $0x88] sm:$0xf]
      %v4699 = vld [vmem:[%s5 + $0x8c] sm:$0xf]
      %v4732 = vunpack.c.l.b16 %v4656
      %v4733 = vunpack.c.l.b16 %v4657
      %v4734 = vunpack.c.l.b16 %v4658
      %v4735 = vunpack.c.l.b16 %v4659
      %v4736 = vunpack.c.l.b16 %v4660
      %v4737 = vunpack.c.l.b16 %v4661
      %v4738 = vunpack.c.l.b16 %v4662
      %v4739 = vunpack.c.l.b16 %v4663
      %v4740 = vunpack.c.l.b16 %v4664
      %v4741 = vunpack.c.l.b16 %v4665
      %v4742 = vunpack.c.l.b16 %v4666
      %v4743 = vunpack.c.l.b16 %v4667
      %v4744 = vunpack.c.l.b16 %v4668
      %v4745 = vunpack.c.l.b16 %v4669
      %v4746 = vunpack.c.l.b16 %v4670
      %v4747 = vunpack.c.l.b16 %v4671
      %v4748 = vunpack.c.l.b16 %v4672
      %v4749 = vunpack.c.l.b16 %v4673
      %v4750 = vunpack.c.l.b16 %v4674
      %v4751 = vunpack.c.l.b16 %v4675
      %v4752 = vunpack.c.l.b16 %v4676
      %v4753 = vunpack.c.l.b16 %v4677
      %v4754 = vunpack.c.l.b16 %v4678
      %v4755 = vunpack.c.l.b16 %v4679
      %v4756 = vunpack.c.l.b16 %v4680
      %v4757 = vunpack.c.l.b16 %v4681
      %v4758 = vunpack.c.l.b16 %v4682
      %v4759 = vunpack.c.l.b16 %v4683
      %v4760 = vunpack.c.l.b16 %v4684
      %v4761 = vunpack.c.l.b16 %v4685
      %v4762 = vunpack.c.l.b16 %v4686
      %v4763 = vunpack.c.l.b16 %v4687
      %v4764 = vpack.c.b16 %v4733, %v4732
      %v4765 = vpack.c.b16 %v4735, %v4734
      %v4766 = vpack.c.b16 %v4737, %v4736
      %v4767 = vpack.c.b16 %v4739, %v4738
      %v4768 = vpack.c.b16 %v4741, %v4740
      %v4769 = vpack.c.b16 %v4743, %v4742
      %v4770 = vpack.c.b16 %v4745, %v4744
      %v4771 = vpack.c.b16 %v4747, %v4746
      %v4772 = vpack.c.b16 %v4749, %v4748
      %v4773 = vpack.c.b16 %v4751, %v4750
      %v4774 = vpack.c.b16 %v4753, %v4752
      %v4775 = vpack.c.b16 %v4755, %v4754
      %v4776 = vpack.c.b16 %v4757, %v4756
      %v4777 = vpack.c.b16 %v4759, %v4758
      %v4778 = vpack.c.b16 %v4761, %v4760
      %v4779 = vpack.c.b16 %v4763, %v4762
      %v4792 = vunpack.c.l.b16 %v4688
      %v4793 = vunpack.c.l.b16 %v4689
      %v4794 = vunpack.c.l.b16 %v4690
      %v4795 = vunpack.c.l.b16 %v4691
      %v4796 = vunpack.c.l.b16 %v4692
      %v4797 = vunpack.c.l.b16 %v4693
      %v4798 = vunpack.c.l.b16 %v4694
      %v4799 = vunpack.c.l.b16 %v4695
      %v4800 = vunpack.c.l.b16 %v4696
      %v4801 = vunpack.c.l.b16 %v4697
      %v4802 = vunpack.c.l.b16 %v4698
      %v4803 = vunpack.c.l.b16 %v4699
      %v4804 = vpack.c.b16 %v4793, %v4792
      %v4805 = vpack.c.b16 %v4795, %v4794
      %v4806 = vpack.c.b16 %v4797, %v4796
      %v4807 = vpack.c.b16 %v4799, %v4798
      %v4808 = vpack.c.b16 %v4801, %v4800
      %v4809 = vpack.c.b16 %v4803, %v4802
      %v4817 = vsel %vm2381, %v4764, 0
      %v4820 = vsel %vm2381, %v4765, 0
      %v4823 = vsel %vm2381, %v4766, 0
      %v4826 = vsel %vm2381, %v4767, 0
      %v4829 = vsel %vm2381, %v4768, 0
      %v4832 = vsel %vm2381, %v4769, 0
      %v4835 = vsel %vm2381, %v4770, 0
      %v4838 = vsel %vm2381, %v4771, 0
      %v4841 = vsel %vm2381, %v4772, 0
      %v4844 = vsel %vm2381, %v4773, 0
      %v4847 = vsel %vm2381, %v4774, 0
      %v4850 = vsel %vm2381, %v4775, 0
      %v4853 = vsel %vm2381, %v4776, 0
      %v4856 = vsel %vm2381, %v4777, 0
      %v4859 = vsel %vm2381, %v4778, 0
      %v4862 = vsel %vm2381, %v4779, 0
      %4864 = vmatprep.subr.bf16.mxu0 0
      %4865 = vmatpush1.bf16.msra.mxu0 0
      %4866 = vmatprep.subr.bf16.mxu0 0
      %4867 = vmatpush1.bf16.msra.mxu0 0
      %4868 = vmatprep.subr.bf16.mxu0 0
      %4869 = vmatpush1.bf16.msra.mxu0 %v4809
      %4870 = vmatprep.subr.bf16.mxu0 0
      %4871 = vmatpush1.bf16.msra.mxu0 %v4808
      %4872 = vmatprep.subr.bf16.mxu0 0
      %4873 = vmatpush1.bf16.msra.mxu0 %v4807
      %4874 = vmatprep.subr.bf16.mxu0 0
      %4875 = vmatpush1.bf16.msra.mxu0 %v4806
      %4876 = vmatprep.subr.bf16.mxu0 0
      %4877 = vmatpush1.bf16.msra.mxu0 %v4805
      %4878 = vmatprep.subr.bf16.mxu0 0
      %4879 = vmatpush1.bf16.msra.mxu0 %v4804
      %4880 = vmatprep.subr.bf16.mxu0 0
      %4881 = vmatpush2.bf16.msra.mxu0 0
      %4882 = vmatprep.subr.bf16.mxu0 0
      %4883 = vmatpush2.bf16.msra.mxu0 0
      %4884 = vmatprep.subr.bf16.mxu0 0
      %4885 = vmatpush2.bf16.msra.mxu0 0
      %4886 = vmatprep.subr.bf16.mxu0 0
      %4887 = vmatpush2.bf16.msra.mxu0 0
      %4888 = vmatprep.subr.bf16.mxu0 0
      %4889 = vmatpush2.bf16.msra.mxu0 0
      %4890 = vmatprep.subr.bf16.mxu0 0
      %4891 = vmatpush2.bf16.msra.mxu0 0
      %4892 = vmatprep.subr.bf16.mxu0 0
      %4893 = vmatpush2.bf16.msra.mxu0 0
      %4894 = vmatprep.subr.bf16.mxu0 0
      %4895 = vmatpush2.bf16.msra.mxu0 0
      %4896 = vmatprep.mubr.bf16.mxu0 0
      %4897 = vmatmul.mubr.bf16.gmra.mxu0 %v4817
      %v4898 = vpop.f32.mrf.mxu0
      %v4899 = vadd.f32 0.0, %v4898
      %v4900 = vpop.f32.mrf.mxu0
      %v4901 = vpop.f32.mrf.mxu0
      %v4902 = vadd.f32 0.0, %v4901
      %v4903 = vpop.f32.mrf.mxu0
      %4904 = vmatprep.mubr.bf16.mxu0 0
      %4905 = vmatmul.mubr.bf16.gmra.mxu0 %v4820
      %v4906 = vpop.f32.mrf.mxu0
      %v4907 = vadd.f32 0.0, %v4906
      %v4908 = vpop.f32.mrf.mxu0
      %v4909 = vpop.f32.mrf.mxu0
      %v4910 = vadd.f32 0.0, %v4909
      %v4911 = vpop.f32.mrf.mxu0
      %4912 = vmatprep.mubr.bf16.mxu0 0
      %4913 = vmatmul.mubr.bf16.gmra.mxu0 %v4823
      %v4914 = vpop.f32.mrf.mxu0
      %v4915 = vadd.f32 0.0, %v4914
      %v4916 = vpop.f32.mrf.mxu0
      %v4917 = vpop.f32.mrf.mxu0
      %v4918 = vadd.f32 0.0, %v4917
      %v4919 = vpop.f32.mrf.mxu0
      %4920 = vmatprep.mubr.bf16.mxu0 0
      %4921 = vmatmul.mubr.bf16.gmra.mxu0 %v4826
      %v4922 = vpop.f32.mrf.mxu0
      %v4923 = vadd.f32 0.0, %v4922
      %v4924 = vpop.f32.mrf.mxu0
      %v4925 = vpop.f32.mrf.mxu0
      %v4926 = vadd.f32 0.0, %v4925
      %v4927 = vpop.f32.mrf.mxu0
      %4928 = vmatprep.mubr.bf16.mxu0 0
      %4929 = vmatmul.mubr.bf16.gmra.mxu0 %v4829
      %v4930 = vpop.f32.mrf.mxu0
      %v4931 = vadd.f32 0.0, %v4930
      %v4932 = vpop.f32.mrf.mxu0
      %v4933 = vpop.f32.mrf.mxu0
      %v4934 = vadd.f32 0.0, %v4933
      %v4935 = vpop.f32.mrf.mxu0
      %4936 = vmatprep.mubr.bf16.mxu0 0
      %4937 = vmatmul.mubr.bf16.gmra.mxu0 %v4832
      %v4938 = vpop.f32.mrf.mxu0
      %v4939 = vadd.f32 0.0, %v4938
      %v4940 = vpop.f32.mrf.mxu0
      %v4941 = vpop.f32.mrf.mxu0
      %v4942 = vadd.f32 0.0, %v4941
      %v4943 = vpop.f32.mrf.mxu0
      %4944 = vmatprep.mubr.bf16.mxu0 0
      %4945 = vmatmul.mubr.bf16.gmra.mxu0 %v4835
      %v4946 = vpop.f32.mrf.mxu0
      %v4947 = vadd.f32 0.0, %v4946
      %v4948 = vpop.f32.mrf.mxu0
      %v4949 = vpop.f32.mrf.mxu0
      %v4950 = vadd.f32 0.0, %v4949
      %v4951 = vpop.f32.mrf.mxu0
      %4952 = vmatprep.mubr.bf16.mxu0 0
      %4953 = vmatmul.mubr.bf16.gmra.mxu0 %v4838
      %v4954 = vpop.f32.mrf.mxu0
      %v4955 = vadd.f32 0.0, %v4954
      %v4956 = vpop.f32.mrf.mxu0
      %v4957 = vpop.f32.mrf.mxu0
      %v4958 = vadd.f32 0.0, %v4957
      %v4959 = vpop.f32.mrf.mxu0
      %4960 = vmatprep.mubr.bf16.mxu0 0
      %4961 = vmatmul.mubr.bf16.gmra.mxu0 %v4841
      %v4962 = vpop.f32.mrf.mxu0
      %v4963 = vadd.f32 0.0, %v4962
      %v4964 = vpop.f32.mrf.mxu0
      %v4965 = vpop.f32.mrf.mxu0
      %v4966 = vadd.f32 0.0, %v4965
      %v4967 = vpop.f32.mrf.mxu0
      %4968 = vmatprep.mubr.bf16.mxu0 0
      %4969 = vmatmul.mubr.bf16.gmra.mxu0 %v4844
      %v4970 = vpop.f32.mrf.mxu0
      %v4971 = vadd.f32 0.0, %v4970
      %v4972 = vpop.f32.mrf.mxu0
      %v4973 = vpop.f32.mrf.mxu0
      %v4974 = vadd.f32 0.0, %v4973
      %v4975 = vpop.f32.mrf.mxu0
      %4976 = vmatprep.mubr.bf16.mxu0 0
      %4977 = vmatmul.mubr.bf16.gmra.mxu0 %v4847
      %v4978 = vpop.f32.mrf.mxu0
      %v4979 = vadd.f32 0.0, %v4978
      %v4980 = vpop.f32.mrf.mxu0
      %v4981 = vpop.f32.mrf.mxu0
      %v4982 = vadd.f32 0.0, %v4981
      %v4983 = vpop.f32.mrf.mxu0
      %4984 = vmatprep.mubr.bf16.mxu0 0
      %4985 = vmatmul.mubr.bf16.gmra.mxu0 %v4850
      %v4986 = vpop.f32.mrf.mxu0
      %v4987 = vadd.f32 0.0, %v4986
      %v4988 = vpop.f32.mrf.mxu0
      %v4989 = vpop.f32.mrf.mxu0
      %v4990 = vadd.f32 0.0, %v4989
      %v4991 = vpop.f32.mrf.mxu0
      %4992 = vmatprep.mubr.bf16.mxu0 0
      %4993 = vmatmul.mubr.bf16.gmra.mxu0 %v4853
      %v4994 = vpop.f32.mrf.mxu0
      %v4995 = vadd.f32 0.0, %v4994
      %v4996 = vpop.f32.mrf.mxu0
      %v4997 = vpop.f32.mrf.mxu0
      %v4998 = vadd.f32 0.0, %v4997
      %v4999 = vpop.f32.mrf.mxu0
      %5000 = vmatprep.mubr.bf16.mxu0 0
      %5001 = vmatmul.mubr.bf16.gmra.mxu0 %v4856
      %v5002 = vpop.f32.mrf.mxu0
      %v5003 = vadd.f32 0.0, %v5002
      %v5004 = vpop.f32.mrf.mxu0
      %v5005 = vpop.f32.mrf.mxu0
      %v5006 = vadd.f32 0.0, %v5005
      %v5007 = vpop.f32.mrf.mxu0
      %5008 = vmatprep.mubr.bf16.mxu0 0
      %5009 = vmatmul.mubr.bf16.gmra.mxu0 %v4859
      %v5010 = vpop.f32.mrf.mxu0
      %v5011 = vadd.f32 0.0, %v5010
      %v5012 = vpop.f32.mrf.mxu0
      %v5013 = vpop.f32.mrf.mxu0
      %v5014 = vadd.f32 0.0, %v5013
      %v5015 = vpop.f32.mrf.mxu0
      %5016 = vmatprep.mubr.bf16.mxu0 0
      %5017 = vmatmul.mubr.bf16.gmra.mxu0 %v4862
      %v5018 = vpop.f32.mrf.mxu0
      %v5019 = vadd.f32 0.0, %v5018
      %v5020 = vpop.f32.mrf.mxu0
      %v5021 = vpop.f32.mrf.mxu0
      %v5022 = vadd.f32 0.0, %v5021
      %v5023 = vpop.f32.mrf.mxu0
      %5024 = vdwg.mxu0
      %v5025 = vadd.f32 %v4530, %v4899
      %v5026 = vadd.f32 %v4533, %v4902
      %v5027 = vadd.f32 %v4538, %v4907
      %v5028 = vadd.f32 %v4541, %v4910
      %v5029 = vadd.f32 %v4546, %v4915
      %v5030 = vadd.f32 %v4549, %v4918
      %v5031 = vadd.f32 %v4554, %v4923
      %v5032 = vadd.f32 %v4557, %v4926
      %v5033 = vadd.f32 %v4562, %v4931
      %v5034 = vadd.f32 %v4565, %v4934
      %v5035 = vadd.f32 %v4570, %v4939
      %v5036 = vadd.f32 %v4573, %v4942
      %v5037 = vadd.f32 %v4578, %v4947
      %v5038 = vadd.f32 %v4581, %v4950
      %v5039 = vadd.f32 %v4586, %v4955
      %v5040 = vadd.f32 %v4589, %v4958
      %v5041 = vadd.f32 %v4594, %v4963
      %v5042 = vadd.f32 %v4597, %v4966
      %v5043 = vadd.f32 %v4602, %v4971
      %v5044 = vadd.f32 %v4605, %v4974
      %v5045 = vadd.f32 %v4610, %v4979
      %v5046 = vadd.f32 %v4613, %v4982
      %v5047 = vadd.f32 %v4618, %v4987
      %v5048 = vadd.f32 %v4621, %v4990
      %v5049 = vadd.f32 %v4626, %v4995
      %v5050 = vadd.f32 %v4629, %v4998
      %v5051 = vadd.f32 %v4634, %v5003
      %v5052 = vadd.f32 %v4637, %v5006
      %v5053 = vadd.f32 %v4642, %v5011
      %v5054 = vadd.f32 %v4645, %v5014
      %v5055 = vadd.f32 %v4650, %v5019
      %v5056 = vadd.f32 %v4653, %v5022
      %v5057 = vld [vmem:[%s6] sm:$0x1]
      %v5059 = vlaneseq
      %v5060 = vshrl.u32 %v5059, 7
      %v5061 = vsub.s32 0, %v5060
      %v5062 = vrot.slane %v5057, %v5061
      %v5064 = vadd.f32 %v5025, %v5062
      %v5065 = vadd.f32 %v5026, %v5062
      %v5066 = vadd.f32 %v5027, %v5062
      %v5067 = vadd.f32 %v5028, %v5062
      %v5068 = vadd.f32 %v5029, %v5062
      %v5069 = vadd.f32 %v5030, %v5062
      %v5070 = vadd.f32 %v5031, %v5062
      %v5071 = vadd.f32 %v5032, %v5062
      %v5072 = vadd.f32 %v5033, %v5062
      %v5073 = vadd.f32 %v5034, %v5062
      %v5074 = vadd.f32 %v5035, %v5062
      %v5075 = vadd.f32 %v5036, %v5062
      %v5076 = vadd.f32 %v5037, %v5062
      %v5077 = vadd.f32 %v5038, %v5062
      %v5078 = vadd.f32 %v5039, %v5062
      %v5079 = vadd.f32 %v5040, %v5062
      %v5080 = vadd.f32 %v5041, %v5062
      %v5081 = vadd.f32 %v5042, %v5062
      %v5082 = vadd.f32 %v5043, %v5062
      %v5083 = vadd.f32 %v5044, %v5062
      %v5084 = vadd.f32 %v5045, %v5062
      %v5085 = vadd.f32 %v5046, %v5062
      %v5086 = vadd.f32 %v5047, %v5062
      %v5087 = vadd.f32 %v5048, %v5062
      %v5088 = vadd.f32 %v5049, %v5062
      %v5089 = vadd.f32 %v5050, %v5062
      %v5090 = vadd.f32 %v5051, %v5062
      %v5091 = vadd.f32 %v5052, %v5062
      %v5092 = vadd.f32 %v5053, %v5062
      %v5093 = vadd.f32 %v5054, %v5062
      %v5094 = vadd.f32 %v5055, %v5062
      %v5095 = vadd.f32 %v5056, %v5062
      %v5096 = vmax.f32 %v5064, 0.0
      %v5097 = vmax.f32 %v5065, 0.0
      %v5098 = vmax.f32 %v5066, 0.0
      %v5099 = vmax.f32 %v5067, 0.0
      %v5100 = vmax.f32 %v5068, 0.0
      %v5101 = vmax.f32 %v5069, 0.0
      %v5102 = vmax.f32 %v5070, 0.0
      %v5103 = vmax.f32 %v5071, 0.0
      %v5104 = vmax.f32 %v5072, 0.0
      %v5105 = vmax.f32 %v5073, 0.0
      %v5106 = vmax.f32 %v5074, 0.0
      %v5107 = vmax.f32 %v5075, 0.0
      %v5108 = vmax.f32 %v5076, 0.0
      %v5109 = vmax.f32 %v5077, 0.0
      %v5110 = vmax.f32 %v5078, 0.0
      %v5111 = vmax.f32 %v5079, 0.0
      %v5112 = vmax.f32 %v5080, 0.0
      %v5113 = vmax.f32 %v5081, 0.0
      %v5114 = vmax.f32 %v5082, 0.0
      %v5115 = vmax.f32 %v5083, 0.0
      %v5116 = vmax.f32 %v5084, 0.0
      %v5117 = vmax.f32 %v5085, 0.0
      %v5118 = vmax.f32 %v5086, 0.0
      %v5119 = vmax.f32 %v5087, 0.0
      %v5120 = vmax.f32 %v5088, 0.0
      %v5121 = vmax.f32 %v5089, 0.0
      %v5122 = vmax.f32 %v5090, 0.0
      %v5123 = vmax.f32 %v5091, 0.0
      %v5124 = vmax.f32 %v5092, 0.0
      %v5125 = vmax.f32 %v5093, 0.0
      %v5126 = vmax.f32 %v5094, 0.0
      %v5127 = vmax.f32 %v5095, 0.0
      %v5128 = vpack.c.bf16 %v5097, %v5096
      %v5129 = vpack.c.bf16 %v5099, %v5098
      %v5130 = vpack.c.bf16 %v5101, %v5100
      %v5131 = vpack.c.bf16 %v5103, %v5102
      %v5132 = vpack.c.bf16 %v5105, %v5104
      %v5133 = vpack.c.bf16 %v5107, %v5106
      %v5134 = vpack.c.bf16 %v5109, %v5108
      %v5135 = vpack.c.bf16 %v5111, %v5110
      %v5136 = vpack.c.bf16 %v5113, %v5112
      %v5137 = vpack.c.bf16 %v5115, %v5114
      %v5138 = vpack.c.bf16 %v5117, %v5116
      %v5139 = vpack.c.bf16 %v5119, %v5118
      %v5140 = vpack.c.bf16 %v5121, %v5120
      %v5141 = vpack.c.bf16 %v5123, %v5122
      %v5142 = vpack.c.bf16 %v5125, %v5124
      %v5143 = vpack.c.bf16 %v5127, %v5126
      %v5144 = vrot.slane %v5096, 7
      %v5145 = vrot.slane %v5097, 7
      %v5146 = vrot.slane %v5098, 7
      %v5147 = vrot.slane %v5099, 7
      %v5148 = vrot.slane %v5100, 7
      %v5149 = vrot.slane %v5101, 7
      %v5150 = vrot.slane %v5102, 7
      %v5151 = vrot.slane %v5103, 7
      %v5152 = vrot.slane %v5104, 7
      %v5153 = vrot.slane %v5105, 7
      %v5154 = vrot.slane %v5106, 7
      %v5155 = vrot.slane %v5107, 7
      %v5156 = vrot.slane %v5108, 7
      %v5157 = vrot.slane %v5109, 7
      %v5158 = vrot.slane %v5110, 7
      %v5159 = vrot.slane %v5111, 7
      %v5160 = vrot.slane %v5112, 7
      %v5161 = vrot.slane %v5113, 7
      %v5162 = vrot.slane %v5114, 7
      %v5163 = vrot.slane %v5115, 7
      %v5164 = vrot.slane %v5116, 7
      %v5165 = vrot.slane %v5117, 7
      %v5166 = vrot.slane %v5118, 7
      %v5167 = vrot.slane %v5119, 7
      %v5168 = vrot.slane %v5120, 7
      %v5169 = vrot.slane %v5121, 7
      %v5170 = vrot.slane %v5122, 7
      %v5171 = vrot.slane %v5123, 7
      %v5172 = vrot.slane %v5124, 7
      %v5173 = vrot.slane %v5125, 7
      %v5174 = vrot.slane %v5126, 7
      %v5175 = vrot.slane %v5127, 7
      %v5176 = vsel %vm1386, %v5174, %v5175
      %v5177 = vsel %vm1386, %v5173, %v5174
      %v5178 = vsel %vm1386, %v5172, %v5173
      %v5179 = vsel %vm1386, %v5171, %v5172
      %v5180 = vsel %vm1386, %v5170, %v5171
      %v5181 = vsel %vm1386, %v5169, %v5170
      %v5182 = vsel %vm1386, %v5168, %v5169
      %v5183 = vsel %vm1386, %v5167, %v5168
      %v5184 = vsel %vm1386, %v5166, %v5167
      %v5185 = vsel %vm1386, %v5165, %v5166
      %v5186 = vsel %vm1386, %v5164, %v5165
      %v5187 = vsel %vm1386, %v5163, %v5164
      %v5188 = vsel %vm1386, %v5162, %v5163
      %v5189 = vsel %vm1386, %v5161, %v5162
      %v5190 = vsel %vm1386, %v5160, %v5161
      %v5191 = vsel %vm1386, %v5159, %v5160
      %v5192 = vsel %vm1386, %v5158, %v5159
      %v5193 = vsel %vm1386, %v5157, %v5158
      %v5194 = vsel %vm1386, %v5156, %v5157
      %v5195 = vsel %vm1386, %v5155, %v5156
      %v5196 = vsel %vm1386, %v5154, %v5155
      %v5197 = vsel %vm1386, %v5153, %v5154
      %v5198 = vsel %vm1386, %v5152, %v5153
      %v5199 = vsel %vm1386, %v5151, %v5152
      %v5200 = vsel %vm1386, %v5150, %v5151
      %v5201 = vsel %vm1386, %v5149, %v5150
      %v5202 = vsel %vm1386, %v5148, %v5149
      %v5203 = vsel %vm1386, %v5147, %v5148
      %v5204 = vsel %vm1386, %v5146, %v5147
      %v5205 = vsel %vm1386, %v5145, %v5146
      %v5206 = vsel %vm1386, %v5144, %v5145
      %v5207 = vsel %vm1386, %v5175, %v5144
      %v5208 = vsel %vm1451, 0.0, %v5207
      %v5209 = vsel %vm1452, 0.0, %v5206
      %v5210 = vsel %vm1453, 0.0, %v5205
      %v5211 = vsel %vm1454, 0.0, %v5204
      %v5212 = vsel %vm1455, 0.0, %v5203
      %v5213 = vsel %vm1456, 0.0, %v5202
      %v5214 = vsel %vm1457, 0.0, %v5201
      %v5215 = vsel %vm1458, 0.0, %v5200
      %v5216 = vsel %vm1459, 0.0, %v5199
      %v5217 = vsel %vm1460, 0.0, %v5198
      %v5218 = vsel %vm1461, 0.0, %v5197
      %v5219 = vsel %vm1462, 0.0, %v5196
      %v5220 = vsel %vm1463, 0.0, %v5195
      %v5221 = vsel %vm1464, 0.0, %v5194
      %v5222 = vsel %vm1465, 0.0, %v5193
      %v5223 = vsel %vm1466, 0.0, %v5192
      %v5224 = vsel %vm1467, 0.0, %v5191
      %v5225 = vsel %vm1468, 0.0, %v5190
      %v5226 = vsel %vm1469, 0.0, %v5189
      %v5227 = vsel %vm1470, 0.0, %v5188
      %v5228 = vsel %vm1471, 0.0, %v5187
      %v5229 = vsel %vm1472, 0.0, %v5186
      %v5230 = vsel %vm1473, 0.0, %v5185
      %v5231 = vsel %vm1474, 0.0, %v5184
      %v5232 = vsel %vm1475, 0.0, %v5183
      %v5233 = vsel %vm1476, 0.0, %v5182
      %v5234 = vsel %vm1477, 0.0, %v5181
      %v5235 = vsel %vm1478, 0.0, %v5180
      %v5236 = vsel %vm1479, 0.0, %v5179
      %v5237 = vsel %vm1480, 0.0, %v5178
      %v5238 = vsel %vm1481, 0.0, %v5177
      %v5239 = vsel %vm1482, 0.0, %v5176
      %v5240 = vpack.c.bf16 %v5209, %v5208
      %v5241 = vpack.c.bf16 %v5211, %v5210
      %v5242 = vpack.c.bf16 %v5213, %v5212
      %v5243 = vpack.c.bf16 %v5215, %v5214
      %v5244 = vpack.c.bf16 %v5217, %v5216
      %v5245 = vpack.c.bf16 %v5219, %v5218
      %v5246 = vpack.c.bf16 %v5221, %v5220
      %v5247 = vpack.c.bf16 %v5223, %v5222
      %v5248 = vpack.c.bf16 %v5225, %v5224
      %v5249 = vpack.c.bf16 %v5227, %v5226
      %v5250 = vpack.c.bf16 %v5229, %v5228
      %v5251 = vpack.c.bf16 %v5231, %v5230
      %v5252 = vpack.c.bf16 %v5233, %v5232
      %v5253 = vpack.c.bf16 %v5235, %v5234
      %v5254 = vpack.c.bf16 %v5237, %v5236
      %v5255 = vpack.c.bf16 %v5239, %v5238
      %v5256 = vrot.slane %v5096, 1
      %v5257 = vrot.slane %v5097, 1
      %v5258 = vrot.slane %v5098, 1
      %v5259 = vrot.slane %v5099, 1
      %v5260 = vrot.slane %v5100, 1
      %v5261 = vrot.slane %v5101, 1
      %v5262 = vrot.slane %v5102, 1
      %v5263 = vrot.slane %v5103, 1
      %v5264 = vrot.slane %v5104, 1
      %v5265 = vrot.slane %v5105, 1
      %v5266 = vrot.slane %v5106, 1
      %v5267 = vrot.slane %v5107, 1
      %v5268 = vrot.slane %v5108, 1
      %v5269 = vrot.slane %v5109, 1
      %v5270 = vrot.slane %v5110, 1
      %v5271 = vrot.slane %v5111, 1
      %v5272 = vrot.slane %v5112, 1
      %v5273 = vrot.slane %v5113, 1
      %v5274 = vrot.slane %v5114, 1
      %v5275 = vrot.slane %v5115, 1
      %v5276 = vrot.slane %v5116, 1
      %v5277 = vrot.slane %v5117, 1
      %v5278 = vrot.slane %v5118, 1
      %v5279 = vrot.slane %v5119, 1
      %v5280 = vrot.slane %v5120, 1
      %v5281 = vrot.slane %v5121, 1
      %v5282 = vrot.slane %v5122, 1
      %v5283 = vrot.slane %v5123, 1
      %v5284 = vrot.slane %v5124, 1
      %v5285 = vrot.slane %v5125, 1
      %v5286 = vrot.slane %v5126, 1
      %v5287 = vrot.slane %v5127, 1
      %v5288 = vsel %vm1563, %v5286, %v5287
      %v5289 = vsel %vm1563, %v5285, %v5286
      %v5290 = vsel %vm1563, %v5284, %v5285
      %v5291 = vsel %vm1563, %v5283, %v5284
      %v5292 = vsel %vm1563, %v5282, %v5283
      %v5293 = vsel %vm1563, %v5281, %v5282
      %v5294 = vsel %vm1563, %v5280, %v5281
      %v5295 = vsel %vm1563, %v5279, %v5280
      %v5296 = vsel %vm1563, %v5278, %v5279
      %v5297 = vsel %vm1563, %v5277, %v5278
      %v5298 = vsel %vm1563, %v5276, %v5277
      %v5299 = vsel %vm1563, %v5275, %v5276
      %v5300 = vsel %vm1563, %v5274, %v5275
      %v5301 = vsel %vm1563, %v5273, %v5274
      %v5302 = vsel %vm1563, %v5272, %v5273
      %v5303 = vsel %vm1563, %v5271, %v5272
      %v5304 = vsel %vm1563, %v5270, %v5271
      %v5305 = vsel %vm1563, %v5269, %v5270
      %v5306 = vsel %vm1563, %v5268, %v5269
      %v5307 = vsel %vm1563, %v5267, %v5268
      %v5308 = vsel %vm1563, %v5266, %v5267
      %v5309 = vsel %vm1563, %v5265, %v5266
      %v5310 = vsel %vm1563, %v5264, %v5265
      %v5311 = vsel %vm1563, %v5263, %v5264
      %v5312 = vsel %vm1563, %v5262, %v5263
      %v5313 = vsel %vm1563, %v5261, %v5262
      %v5314 = vsel %vm1563, %v5260, %v5261
      %v5315 = vsel %vm1563, %v5259, %v5260
      %v5316 = vsel %vm1563, %v5258, %v5259
      %v5317 = vsel %vm1563, %v5257, %v5258
      %v5318 = vsel %vm1563, %v5256, %v5257
      %v5319 = vsel %vm1563, %v5287, %v5256
      %v5320 = vsel %vm1628, 0.0, %v5318
      %v5321 = vsel %vm1629, 0.0, %v5317
      %v5322 = vsel %vm1630, 0.0, %v5316
      %v5323 = vsel %vm1631, 0.0, %v5315
      %v5324 = vsel %vm1632, 0.0, %v5314
      %v5325 = vsel %vm1633, 0.0, %v5313
      %v5326 = vsel %vm1634, 0.0, %v5312
      %v5327 = vsel %vm1635, 0.0, %v5311
      %v5328 = vsel %vm1636, 0.0, %v5310
      %v5329 = vsel %vm1637, 0.0, %v5309
      %v5330 = vsel %vm1638, 0.0, %v5308
      %v5331 = vsel %vm1639, 0.0, %v5307
      %v5332 = vsel %vm1640, 0.0, %v5306
      %v5333 = vsel %vm1641, 0.0, %v5305
      %v5334 = vsel %vm1642, 0.0, %v5304
      %v5335 = vsel %vm1643, 0.0, %v5303
      %v5336 = vsel %vm1644, 0.0, %v5302
      %v5337 = vsel %vm1645, 0.0, %v5301
      %v5338 = vsel %vm1646, 0.0, %v5300
      %v5339 = vsel %vm1647, 0.0, %v5299
      %v5340 = vsel %vm1648, 0.0, %v5298
      %v5341 = vsel %vm1649, 0.0, %v5297
      %v5342 = vsel %vm1650, 0.0, %v5296
      %v5343 = vsel %vm1651, 0.0, %v5295
      %v5344 = vsel %vm1652, 0.0, %v5294
      %v5345 = vsel %vm1653, 0.0, %v5293
      %v5346 = vsel %vm1654, 0.0, %v5292
      %v5347 = vsel %vm1655, 0.0, %v5291
      %v5348 = vsel %vm1656, 0.0, %v5290
      %v5349 = vsel %vm1657, 0.0, %v5289
      %v5350 = vsel %vm1658, 0.0, %v5288
      %v5351 = vsel %vm1659, 0.0, %v5319
      %v5352 = vpack.c.bf16 %v5321, %v5320
      %v5353 = vpack.c.bf16 %v5323, %v5322
      %v5354 = vpack.c.bf16 %v5325, %v5324
      %v5355 = vpack.c.bf16 %v5327, %v5326
      %v5356 = vpack.c.bf16 %v5329, %v5328
      %v5357 = vpack.c.bf16 %v5331, %v5330
      %v5358 = vpack.c.bf16 %v5333, %v5332
      %v5359 = vpack.c.bf16 %v5335, %v5334
      %v5360 = vpack.c.bf16 %v5337, %v5336
      %v5361 = vpack.c.bf16 %v5339, %v5338
      %v5362 = vpack.c.bf16 %v5341, %v5340
      %v5363 = vpack.c.bf16 %v5343, %v5342
      %v5364 = vpack.c.bf16 %v5345, %v5344
      %v5365 = vpack.c.bf16 %v5347, %v5346
      %v5366 = vpack.c.bf16 %v5349, %v5348
      %v5367 = vpack.c.bf16 %v5351, %v5350
      %v5384 = vunpack.c.l.b16 %v5240
      %v5385 = vunpack.c.h.b16 %v5240
      %v5386 = vunpack.c.l.b16 %v5241
      %v5387 = vunpack.c.h.b16 %v5241
      %v5388 = vunpack.c.l.b16 %v5242
      %v5389 = vunpack.c.h.b16 %v5242
      %v5390 = vunpack.c.l.b16 %v5243
      %v5391 = vunpack.c.h.b16 %v5243
      %v5392 = vunpack.c.l.b16 %v5244
      %v5393 = vunpack.c.h.b16 %v5244
      %v5394 = vunpack.c.l.b16 %v5245
      %v5395 = vunpack.c.h.b16 %v5245
      %v5396 = vunpack.c.l.b16 %v5246
      %v5397 = vunpack.c.h.b16 %v5246
      %v5398 = vunpack.c.l.b16 %v5247
      %v5399 = vunpack.c.h.b16 %v5247
      %v5400 = vunpack.c.l.b16 %v5248
      %v5401 = vunpack.c.h.b16 %v5248
      %v5402 = vunpack.c.l.b16 %v5249
      %v5403 = vunpack.c.h.b16 %v5249
      %v5404 = vunpack.c.l.b16 %v5250
      %v5405 = vunpack.c.h.b16 %v5250
      %v5406 = vunpack.c.l.b16 %v5251
      %v5407 = vunpack.c.h.b16 %v5251
      %v5408 = vunpack.c.l.b16 %v5252
      %v5409 = vunpack.c.h.b16 %v5252
      %v5410 = vunpack.c.l.b16 %v5253
      %v5411 = vunpack.c.h.b16 %v5253
      %v5412 = vunpack.c.l.b16 %v5254
      %v5413 = vunpack.c.h.b16 %v5254
      %v5414 = vunpack.c.l.b16 %v5255
      %v5415 = vunpack.c.h.b16 %v5255
      %v5416 = vpack.c.b16 %v5384, %v5384
      %v5417 = vpack.c.b16 %v5385, %v5385
      %v5418 = vpack.c.b16 %v5386, %v5386
      %v5419 = vpack.c.b16 %v5387, %v5387
      %v5420 = vpack.c.b16 %v5388, %v5388
      %v5421 = vpack.c.b16 %v5389, %v5389
      %v5422 = vpack.c.b16 %v5390, %v5390
      %v5423 = vpack.c.b16 %v5391, %v5391
      %v5424 = vpack.c.b16 %v5392, %v5392
      %v5425 = vpack.c.b16 %v5393, %v5393
      %v5426 = vpack.c.b16 %v5394, %v5394
      %v5427 = vpack.c.b16 %v5395, %v5395
      %v5428 = vpack.c.b16 %v5396, %v5396
      %v5429 = vpack.c.b16 %v5397, %v5397
      %v5430 = vpack.c.b16 %v5398, %v5398
      %v5431 = vpack.c.b16 %v5399, %v5399
      %v5432 = vpack.c.b16 %v5400, %v5400
      %v5433 = vpack.c.b16 %v5401, %v5401
      %v5434 = vpack.c.b16 %v5402, %v5402
      %v5435 = vpack.c.b16 %v5403, %v5403
      %v5436 = vpack.c.b16 %v5404, %v5404
      %v5437 = vpack.c.b16 %v5405, %v5405
      %v5438 = vpack.c.b16 %v5406, %v5406
      %v5439 = vpack.c.b16 %v5407, %v5407
      %v5440 = vpack.c.b16 %v5408, %v5408
      %v5441 = vpack.c.b16 %v5409, %v5409
      %v5442 = vpack.c.b16 %v5410, %v5410
      %v5443 = vpack.c.b16 %v5411, %v5411
      %v5444 = vpack.c.b16 %v5412, %v5412
      %v5445 = vpack.c.b16 %v5413, %v5413
      %v5446 = vpack.c.b16 %v5414, %v5414
      %v5447 = vpack.c.b16 %v5415, %v5415
      %vm5480 = vcmask 388096
      %5481 = vst.msk [vmem:[#allocation2 + $0x10] sm:$0xf] %vm5480, %v5416
      %5482 = vst.msk [vmem:[#allocation2 + $0x18] sm:$0xf] %vm5480, %v5417
      %5483 = vst.msk [vmem:[#allocation2 + $0x20] sm:$0xf] %vm5480, %v5418
      %5484 = vst.msk [vmem:[#allocation2 + $0x28] sm:$0xf] %vm5480, %v5419
      %5485 = vst.msk [vmem:[#allocation2 + $0x30] sm:$0xf] %vm5480, %v5420
      %5486 = vst.msk [vmem:[#allocation2 + $0x38] sm:$0xf] %vm5480, %v5421
      %5487 = vst.msk [vmem:[#allocation2 + $0x40] sm:$0xf] %vm5480, %v5422
      %5488 = vst.msk [vmem:[#allocation2 + $0x48] sm:$0xf] %vm5480, %v5423
      %5489 = vst.msk [vmem:[#allocation2 + $0x50] sm:$0xf] %vm5480, %v5424
      %5490 = vst.msk [vmem:[#allocation2 + $0x58] sm:$0xf] %vm5480, %v5425
      %5491 = vst.msk [vmem:[#allocation2 + $0x60] sm:$0xf] %vm5480, %v5426
      %5492 = vst.msk [vmem:[#allocation2 + $0x68] sm:$0xf] %vm5480, %v5427
      %5493 = vst.msk [vmem:[#allocation2 + $0x70] sm:$0xf] %vm5480, %v5428
      %5494 = vst.msk [vmem:[#allocation2 + $0x78] sm:$0xf] %vm5480, %v5429
      %5495 = vst.msk [vmem:[#allocation2 + $0x80] sm:$0xf] %vm5480, %v5430
      %5496 = vst.msk [vmem:[#allocation2 + $0x88] sm:$0xf] %vm5480, %v5431
      %5497 = vst.msk [vmem:[#allocation2 + $0x90] sm:$0xf] %vm5480, %v5432
      %5498 = vst.msk [vmem:[#allocation2 + $0x98] sm:$0xf] %vm5480, %v5433
      %5499 = vst.msk [vmem:[#allocation2 + $0xa0] sm:$0xf] %vm5480, %v5434
      %5500 = vst.msk [vmem:[#allocation2 + $0xa8] sm:$0xf] %vm5480, %v5435
      %5501 = vst.msk [vmem:[#allocation2 + $0xb0] sm:$0xf] %vm5480, %v5436
      %5502 = vst.msk [vmem:[#allocation2 + $0xb8] sm:$0xf] %vm5480, %v5437
      %5503 = vst.msk [vmem:[#allocation2 + $0xc0] sm:$0xf] %vm5480, %v5438
      %5504 = vst.msk [vmem:[#allocation2 + $0xc8] sm:$0xf] %vm5480, %v5439
      %5505 = vst.msk [vmem:[#allocation2 + $0xd0] sm:$0xf] %vm5480, %v5440
      %5506 = vst.msk [vmem:[#allocation2 + $0xd8] sm:$0xf] %vm5480, %v5441
      %5507 = vst.msk [vmem:[#allocation2 + $0xe0] sm:$0xf] %vm5480, %v5442
      %5508 = vst.msk [vmem:[#allocation2 + $0xe8] sm:$0xf] %vm5480, %v5443
      %5509 = vst.msk [vmem:[#allocation2 + $0xf0] sm:$0xf] %vm5480, %v5444
      %5510 = vst.msk [vmem:[#allocation2 + $0xf8] sm:$0xf] %vm5480, %v5445
      %5511 = vst.msk [vmem:[#allocation2 + $0x100] sm:$0xf] %vm5480, %v5446
      %5512 = vst.msk [vmem:[#allocation2 + $0x108] sm:$0xf] %vm5480, %v5447
      %v5529 = vunpack.c.l.b16 %v5128
      %v5530 = vunpack.c.h.b16 %v5128
      %v5531 = vunpack.c.l.b16 %v5129
      %v5532 = vunpack.c.h.b16 %v5129
      %v5533 = vunpack.c.l.b16 %v5130
      %v5534 = vunpack.c.h.b16 %v5130
      %v5535 = vunpack.c.l.b16 %v5131
      %v5536 = vunpack.c.h.b16 %v5131
      %v5537 = vunpack.c.l.b16 %v5132
      %v5538 = vunpack.c.h.b16 %v5132
      %v5539 = vunpack.c.l.b16 %v5133
      %v5540 = vunpack.c.h.b16 %v5133
      %v5541 = vunpack.c.l.b16 %v5134
      %v5542 = vunpack.c.h.b16 %v5134
      %v5543 = vunpack.c.l.b16 %v5135
      %v5544 = vunpack.c.h.b16 %v5135
      %v5545 = vunpack.c.l.b16 %v5136
      %v5546 = vunpack.c.h.b16 %v5136
      %v5547 = vunpack.c.l.b16 %v5137
      %v5548 = vunpack.c.h.b16 %v5137
      %v5549 = vunpack.c.l.b16 %v5138
      %v5550 = vunpack.c.h.b16 %v5138
      %v5551 = vunpack.c.l.b16 %v5139
      %v5552 = vunpack.c.h.b16 %v5139
      %v5553 = vunpack.c.l.b16 %v5140
      %v5554 = vunpack.c.h.b16 %v5140
      %v5555 = vunpack.c.l.b16 %v5141
      %v5556 = vunpack.c.h.b16 %v5141
      %v5557 = vunpack.c.l.b16 %v5142
      %v5558 = vunpack.c.h.b16 %v5142
      %v5559 = vunpack.c.l.b16 %v5143
      %v5560 = vunpack.c.h.b16 %v5143
      %v5561 = vpack.c.b16 %v5529, %v5529
      %v5562 = vpack.c.b16 %v5530, %v5530
      %v5563 = vpack.c.b16 %v5531, %v5531
      %v5564 = vpack.c.b16 %v5532, %v5532
      %v5565 = vpack.c.b16 %v5533, %v5533
      %v5566 = vpack.c.b16 %v5534, %v5534
      %v5567 = vpack.c.b16 %v5535, %v5535
      %v5568 = vpack.c.b16 %v5536, %v5536
      %v5569 = vpack.c.b16 %v5537, %v5537
      %v5570 = vpack.c.b16 %v5538, %v5538
      %v5571 = vpack.c.b16 %v5539, %v5539
      %v5572 = vpack.c.b16 %v5540, %v5540
      %v5573 = vpack.c.b16 %v5541, %v5541
      %v5574 = vpack.c.b16 %v5542, %v5542
      %v5575 = vpack.c.b16 %v5543, %v5543
      %v5576 = vpack.c.b16 %v5544, %v5544
      %v5577 = vpack.c.b16 %v5545, %v5545
      %v5578 = vpack.c.b16 %v5546, %v5546
      %v5579 = vpack.c.b16 %v5547, %v5547
      %v5580 = vpack.c.b16 %v5548, %v5548
      %v5581 = vpack.c.b16 %v5549, %v5549
      %v5582 = vpack.c.b16 %v5550, %v5550
      %v5583 = vpack.c.b16 %v5551, %v5551
      %v5584 = vpack.c.b16 %v5552, %v5552
      %v5585 = vpack.c.b16 %v5553, %v5553
      %v5586 = vpack.c.b16 %v5554, %v5554
      %v5587 = vpack.c.b16 %v5555, %v5555
      %v5588 = vpack.c.b16 %v5556, %v5556
      %v5589 = vpack.c.b16 %v5557, %v5557
      %v5590 = vpack.c.b16 %v5558, %v5558
      %v5591 = vpack.c.b16 %v5559, %v5559
      %v5592 = vpack.c.b16 %v5560, %v5560
      %5593 = vrot.lane.b32.xlu0 %v5561, 48
      %v5594 = vpop.permute.xlu0 %5593
      %5595 = vrot.lane.b32.xlu0 %v5562, 48
      %v5596 = vpop.permute.xlu0 %5595
      %5597 = vrot.lane.b32.xlu0 %v5563, 48
      %v5598 = vpop.permute.xlu0 %5597
      %5599 = vrot.lane.b32.xlu0 %v5564, 48
      %v5600 = vpop.permute.xlu0 %5599
      %5601 = vrot.lane.b32.xlu0 %v5565, 48
      %v5602 = vpop.permute.xlu0 %5601
      %5603 = vrot.lane.b32.xlu0 %v5566, 48
      %v5604 = vpop.permute.xlu0 %5603
      %5605 = vrot.lane.b32.xlu0 %v5567, 48
      %v5606 = vpop.permute.xlu0 %5605
      %5607 = vrot.lane.b32.xlu0 %v5568, 48
      %v5608 = vpop.permute.xlu0 %5607
      %5609 = vrot.lane.b32.xlu0 %v5569, 48
      %v5610 = vpop.permute.xlu0 %5609
      %5611 = vrot.lane.b32.xlu0 %v5570, 48
      %v5612 = vpop.permute.xlu0 %5611
      %5613 = vrot.lane.b32.xlu0 %v5571, 48
      %v5614 = vpop.permute.xlu0 %5613
      %5615 = vrot.lane.b32.xlu0 %v5572, 48
      %v5616 = vpop.permute.xlu0 %5615
      %5617 = vrot.lane.b32.xlu0 %v5573, 48
      %v5618 = vpop.permute.xlu0 %5617
      %5619 = vrot.lane.b32.xlu0 %v5574, 48
      %v5620 = vpop.permute.xlu0 %5619
      %5621 = vrot.lane.b32.xlu0 %v5575, 48
      %v5622 = vpop.permute.xlu0 %5621
      %5623 = vrot.lane.b32.xlu0 %v5576, 48
      %v5624 = vpop.permute.xlu0 %5623
      %5625 = vrot.lane.b32.xlu0 %v5577, 48
      %v5626 = vpop.permute.xlu0 %5625
      %5627 = vrot.lane.b32.xlu0 %v5578, 48
      %v5628 = vpop.permute.xlu0 %5627
      %5629 = vrot.lane.b32.xlu0 %v5579, 48
      %v5630 = vpop.permute.xlu0 %5629
      %5631 = vrot.lane.b32.xlu0 %v5580, 48
      %v5632 = vpop.permute.xlu0 %5631
      %5633 = vrot.lane.b32.xlu0 %v5581, 48
      %v5634 = vpop.permute.xlu0 %5633
      %5635 = vrot.lane.b32.xlu0 %v5582, 48
      %v5636 = vpop.permute.xlu0 %5635
      %5637 = vrot.lane.b32.xlu0 %v5583, 48
      %v5638 = vpop.permute.xlu0 %5637
      %5639 = vrot.lane.b32.xlu0 %v5584, 48
      %v5640 = vpop.permute.xlu0 %5639
      %5641 = vrot.lane.b32.xlu0 %v5585, 48
      %v5642 = vpop.permute.xlu0 %5641
      %5643 = vrot.lane.b32.xlu0 %v5586, 48
      %v5644 = vpop.permute.xlu0 %5643
      %5645 = vrot.lane.b32.xlu0 %v5587, 48
      %v5646 = vpop.permute.xlu0 %5645
      %5647 = vrot.lane.b32.xlu0 %v5588, 48
      %v5648 = vpop.permute.xlu0 %5647
      %5649 = vrot.lane.b32.xlu0 %v5589, 48
      %v5650 = vpop.permute.xlu0 %5649
      %5651 = vrot.lane.b32.xlu0 %v5590, 48
      %v5652 = vpop.permute.xlu0 %5651
      %5653 = vrot.lane.b32.xlu0 %v5591, 48
      %v5654 = vpop.permute.xlu0 %5653
      %5655 = vrot.lane.b32.xlu0 %v5592, 48
      %v5656 = vpop.permute.xlu0 %5655
      %vm5689 = vcmask 781696
      %5690 = vst.msk [vmem:[#allocation2 + $0x10] sm:$0xf] %vm5689, %v5594
      %5691 = vst.msk [vmem:[#allocation2 + $0x18] sm:$0xf] %vm5689, %v5596
      %5692 = vst.msk [vmem:[#allocation2 + $0x20] sm:$0xf] %vm5689, %v5598
      %5693 = vst.msk [vmem:[#allocation2 + $0x28] sm:$0xf] %vm5689, %v5600
      %5694 = vst.msk [vmem:[#allocation2 + $0x30] sm:$0xf] %vm5689, %v5602
      %5695 = vst.msk [vmem:[#allocation2 + $0x38] sm:$0xf] %vm5689, %v5604
      %5696 = vst.msk [vmem:[#allocation2 + $0x40] sm:$0xf] %vm5689, %v5606
      %5697 = vst.msk [vmem:[#allocation2 + $0x48] sm:$0xf] %vm5689, %v5608
      %5698 = vst.msk [vmem:[#allocation2 + $0x50] sm:$0xf] %vm5689, %v5610
      %5699 = vst.msk [vmem:[#allocation2 + $0x58] sm:$0xf] %vm5689, %v5612
      %5700 = vst.msk [vmem:[#allocation2 + $0x60] sm:$0xf] %vm5689, %v5614
      %5701 = vst.msk [vmem:[#allocation2 + $0x68] sm:$0xf] %vm5689, %v5616
      %5702 = vst.msk [vmem:[#allocation2 + $0x70] sm:$0xf] %vm5689, %v5618
      %5703 = vst.msk [vmem:[#allocation2 + $0x78] sm:$0xf] %vm5689, %v5620
      %5704 = vst.msk [vmem:[#allocation2 + $0x80] sm:$0xf] %vm5689, %v5622
      %5705 = vst.msk [vmem:[#allocation2 + $0x88] sm:$0xf] %vm5689, %v5624
      %5706 = vst.msk [vmem:[#allocation2 + $0x90] sm:$0xf] %vm5689, %v5626
      %5707 = vst.msk [vmem:[#allocation2 + $0x98] sm:$0xf] %vm5689, %v5628
      %5708 = vst.msk [vmem:[#allocation2 + $0xa0] sm:$0xf] %vm5689, %v5630
      %5709 = vst.msk [vmem:[#allocation2 + $0xa8] sm:$0xf] %vm5689, %v5632
      %5710 = vst.msk [vmem:[#allocation2 + $0xb0] sm:$0xf] %vm5689, %v5634
      %5711 = vst.msk [vmem:[#allocation2 + $0xb8] sm:$0xf] %vm5689, %v5636
      %5712 = vst.msk [vmem:[#allocation2 + $0xc0] sm:$0xf] %vm5689, %v5638
      %5713 = vst.msk [vmem:[#allocation2 + $0xc8] sm:$0xf] %vm5689, %v5640
      %5714 = vst.msk [vmem:[#allocation2 + $0xd0] sm:$0xf] %vm5689, %v5642
      %5715 = vst.msk [vmem:[#allocation2 + $0xd8] sm:$0xf] %vm5689, %v5644
      %5716 = vst.msk [vmem:[#allocation2 + $0xe0] sm:$0xf] %vm5689, %v5646
      %5717 = vst.msk [vmem:[#allocation2 + $0xe8] sm:$0xf] %vm5689, %v5648
      %5718 = vst.msk [vmem:[#allocation2 + $0xf0] sm:$0xf] %vm5689, %v5650
      %5719 = vst.msk [vmem:[#allocation2 + $0xf8] sm:$0xf] %vm5689, %v5652
      %5720 = vst.msk [vmem:[#allocation2 + $0x100] sm:$0xf] %vm5689, %v5654
      %5721 = vst.msk [vmem:[#allocation2 + $0x108] sm:$0xf] %vm5689, %v5656
      %v5738 = vunpack.c.l.b16 %v5352
      %v5739 = vunpack.c.h.b16 %v5352
      %v5740 = vunpack.c.l.b16 %v5353
      %v5741 = vunpack.c.h.b16 %v5353
      %v5742 = vunpack.c.l.b16 %v5354
      %v5743 = vunpack.c.h.b16 %v5354
      %v5744 = vunpack.c.l.b16 %v5355
      %v5745 = vunpack.c.h.b16 %v5355
      %v5746 = vunpack.c.l.b16 %v5356
      %v5747 = vunpack.c.h.b16 %v5356
      %v5748 = vunpack.c.l.b16 %v5357
      %v5749 = vunpack.c.h.b16 %v5357
      %v5750 = vunpack.c.l.b16 %v5358
      %v5751 = vunpack.c.h.b16 %v5358
      %v5752 = vunpack.c.l.b16 %v5359
      %v5753 = vunpack.c.h.b16 %v5359
      %v5754 = vunpack.c.l.b16 %v5360
      %v5755 = vunpack.c.h.b16 %v5360
      %v5756 = vunpack.c.l.b16 %v5361
      %v5757 = vunpack.c.h.b16 %v5361
      %v5758 = vunpack.c.l.b16 %v5362
      %v5759 = vunpack.c.h.b16 %v5362
      %v5760 = vunpack.c.l.b16 %v5363
      %v5761 = vunpack.c.h.b16 %v5363
      %v5762 = vunpack.c.l.b16 %v5364
      %v5763 = vunpack.c.h.b16 %v5364
      %v5764 = vunpack.c.l.b16 %v5365
      %v5765 = vunpack.c.h.b16 %v5365
      %v5766 = vunpack.c.l.b16 %v5366
      %v5767 = vunpack.c.h.b16 %v5366
      %v5768 = vunpack.c.l.b16 %v5367
      %v5769 = vunpack.c.h.b16 %v5367
      %v5770 = vpack.c.b16 %v5738, %v5738
      %v5771 = vpack.c.b16 %v5739, %v5739
      %v5772 = vpack.c.b16 %v5740, %v5740
      %v5773 = vpack.c.b16 %v5741, %v5741
      %v5774 = vpack.c.b16 %v5742, %v5742
      %v5775 = vpack.c.b16 %v5743, %v5743
      %v5776 = vpack.c.b16 %v5744, %v5744
      %v5777 = vpack.c.b16 %v5745, %v5745
      %v5778 = vpack.c.b16 %v5746, %v5746
      %v5779 = vpack.c.b16 %v5747, %v5747
      %v5780 = vpack.c.b16 %v5748, %v5748
      %v5781 = vpack.c.b16 %v5749, %v5749
      %v5782 = vpack.c.b16 %v5750, %v5750
      %v5783 = vpack.c.b16 %v5751, %v5751
      %v5784 = vpack.c.b16 %v5752, %v5752
      %v5785 = vpack.c.b16 %v5753, %v5753
      %v5786 = vpack.c.b16 %v5754, %v5754
      %v5787 = vpack.c.b16 %v5755, %v5755
      %v5788 = vpack.c.b16 %v5756, %v5756
      %v5789 = vpack.c.b16 %v5757, %v5757
      %v5790 = vpack.c.b16 %v5758, %v5758
      %v5791 = vpack.c.b16 %v5759, %v5759
      %v5792 = vpack.c.b16 %v5760, %v5760
      %v5793 = vpack.c.b16 %v5761, %v5761
      %v5794 = vpack.c.b16 %v5762, %v5762
      %v5795 = vpack.c.b16 %v5763, %v5763
      %v5796 = vpack.c.b16 %v5764, %v5764
      %v5797 = vpack.c.b16 %v5765, %v5765
      %v5798 = vpack.c.b16 %v5766, %v5766
      %v5799 = vpack.c.b16 %v5767, %v5767
      %v5800 = vpack.c.b16 %v5768, %v5768
      %v5801 = vpack.c.b16 %v5769, %v5769
      %5802 = vrot.lane.b32.xlu0 %v5770, 96
      %v5803 = vpop.permute.xlu0 %5802
      %5804 = vrot.lane.b32.xlu0 %v5771, 96
      %v5805 = vpop.permute.xlu0 %5804
      %5806 = vrot.lane.b32.xlu0 %v5772, 96
      %v5807 = vpop.permute.xlu0 %5806
      %5808 = vrot.lane.b32.xlu0 %v5773, 96
      %v5809 = vpop.permute.xlu0 %5808
      %5810 = vrot.lane.b32.xlu0 %v5774, 96
      %v5811 = vpop.permute.xlu0 %5810
      %5812 = vrot.lane.b32.xlu0 %v5775, 96
      %v5813 = vpop.permute.xlu0 %5812
      %5814 = vrot.lane.b32.xlu0 %v5776, 96
      %v5815 = vpop.permute.xlu0 %5814
      %5816 = vrot.lane.b32.xlu0 %v5777, 96
      %v5817 = vpop.permute.xlu0 %5816
      %5818 = vrot.lane.b32.xlu0 %v5778, 96
      %v5819 = vpop.permute.xlu0 %5818
      %5820 = vrot.lane.b32.xlu0 %v5779, 96
      %v5821 = vpop.permute.xlu0 %5820
      %5822 = vrot.lane.b32.xlu0 %v5780, 96
      %v5823 = vpop.permute.xlu0 %5822
      %5824 = vrot.lane.b32.xlu0 %v5781, 96
      %v5825 = vpop.permute.xlu0 %5824
      %5826 = vrot.lane.b32.xlu0 %v5782, 96
      %v5827 = vpop.permute.xlu0 %5826
      %5828 = vrot.lane.b32.xlu0 %v5783, 96
      %v5829 = vpop.permute.xlu0 %5828
      %5830 = vrot.lane.b32.xlu0 %v5784, 96
      %v5831 = vpop.permute.xlu0 %5830
      %5832 = vrot.lane.b32.xlu0 %v5785, 96
      %v5833 = vpop.permute.xlu0 %5832
      %5834 = vrot.lane.b32.xlu0 %v5786, 96
      %v5835 = vpop.permute.xlu0 %5834
      %5836 = vrot.lane.b32.xlu0 %v5787, 96
      %v5837 = vpop.permute.xlu0 %5836
      %5838 = vrot.lane.b32.xlu0 %v5788, 96
      %v5839 = vpop.permute.xlu0 %5838
      %5840 = vrot.lane.b32.xlu0 %v5789, 96
      %v5841 = vpop.permute.xlu0 %5840
      %5842 = vrot.lane.b32.xlu0 %v5790, 96
      %v5843 = vpop.permute.xlu0 %5842
      %5844 = vrot.lane.b32.xlu0 %v5791, 96
      %v5845 = vpop.permute.xlu0 %5844
      %5846 = vrot.lane.b32.xlu0 %v5792, 96
      %v5847 = vpop.permute.xlu0 %5846
      %5848 = vrot.lane.b32.xlu0 %v5793, 96
      %v5849 = vpop.permute.xlu0 %5848
      %5850 = vrot.lane.b32.xlu0 %v5794, 96
      %v5851 = vpop.permute.xlu0 %5850
      %5852 = vrot.lane.b32.xlu0 %v5795, 96
      %v5853 = vpop.permute.xlu0 %5852
      %5854 = vrot.lane.b32.xlu0 %v5796, 96
      %v5855 = vpop.permute.xlu0 %5854
      %5856 = vrot.lane.b32.xlu0 %v5797, 96
      %v5857 = vpop.permute.xlu0 %5856
      %5858 = vrot.lane.b32.xlu0 %v5798, 96
      %v5859 = vpop.permute.xlu0 %5858
      %5860 = vrot.lane.b32.xlu0 %v5799, 96
      %v5861 = vpop.permute.xlu0 %5860
      %5862 = vrot.lane.b32.xlu0 %v5800, 96
      %v5863 = vpop.permute.xlu0 %5862
      %5864 = vrot.lane.b32.xlu0 %v5801, 96
      %v5865 = vpop.permute.xlu0 %5864
      %v5866 = vrot.slane %v5803, 4
      %v5867 = vrot.slane %v5805, 4
      %v5868 = vrot.slane %v5807, 4
      %v5869 = vrot.slane %v5809, 4
      %v5870 = vrot.slane %v5811, 4
      %v5871 = vrot.slane %v5813, 4
      %v5872 = vrot.slane %v5815, 4
      %v5873 = vrot.slane %v5817, 4
      %v5874 = vrot.slane %v5819, 4
      %v5875 = vrot.slane %v5821, 4
      %v5876 = vrot.slane %v5823, 4
      %v5877 = vrot.slane %v5825, 4
      %v5878 = vrot.slane %v5827, 4
      %v5879 = vrot.slane %v5829, 4
      %v5880 = vrot.slane %v5831, 4
      %v5881 = vrot.slane %v5833, 4
      %v5882 = vrot.slane %v5835, 4
      %v5883 = vrot.slane %v5837, 4
      %v5884 = vrot.slane %v5839, 4
      %v5885 = vrot.slane %v5841, 4
      %v5886 = vrot.slane %v5843, 4
      %v5887 = vrot.slane %v5845, 4
      %v5888 = vrot.slane %v5847, 4
      %v5889 = vrot.slane %v5849, 4
      %v5890 = vrot.slane %v5851, 4
      %v5891 = vrot.slane %v5853, 4
      %v5892 = vrot.slane %v5855, 4
      %v5893 = vrot.slane %v5857, 4
      %v5894 = vrot.slane %v5859, 4
      %v5895 = vrot.slane %v5861, 4
      %v5896 = vrot.slane %v5863, 4
      %v5897 = vrot.slane %v5865, 4
      %vm5898 = vcmask 785408
      %v5899 = vsel %vm5898, %v5866, %v5803
      %v5900 = vsel %vm5898, %v5867, %v5805
      %v5901 = vsel %vm5898, %v5868, %v5807
      %v5902 = vsel %vm5898, %v5869, %v5809
      %v5903 = vsel %vm5898, %v5870, %v5811
      %v5904 = vsel %vm5898, %v5871, %v5813
      %v5905 = vsel %vm5898, %v5872, %v5815
      %v5906 = vsel %vm5898, %v5873, %v5817
      %v5907 = vsel %vm5898, %v5874, %v5819
      %v5908 = vsel %vm5898, %v5875, %v5821
      %v5909 = vsel %vm5898, %v5876, %v5823
      %v5910 = vsel %vm5898, %v5877, %v5825
      %v5911 = vsel %vm5898, %v5878, %v5827
      %v5912 = vsel %vm5898, %v5879, %v5829
      %v5913 = vsel %vm5898, %v5880, %v5831
      %v5914 = vsel %vm5898, %v5881, %v5833
      %v5915 = vsel %vm5898, %v5882, %v5835
      %v5916 = vsel %vm5898, %v5883, %v5837
      %v5917 = vsel %vm5898, %v5884, %v5839
      %v5918 = vsel %vm5898, %v5885, %v5841
      %v5919 = vsel %vm5898, %v5886, %v5843
      %v5920 = vsel %vm5898, %v5887, %v5845
      %v5921 = vsel %vm5898, %v5888, %v5847
      %v5922 = vsel %vm5898, %v5889, %v5849
      %v5923 = vsel %vm5898, %v5890, %v5851
      %v5924 = vsel %vm5898, %v5891, %v5853
      %v5925 = vsel %vm5898, %v5892, %v5855
      %v5926 = vsel %vm5898, %v5893, %v5857
      %v5927 = vsel %vm5898, %v5894, %v5859
      %v5928 = vsel %vm5898, %v5895, %v5861
      %v5929 = vsel %vm5898, %v5896, %v5863
      %v5930 = vsel %vm5898, %v5897, %v5865
      %vm5963 = vcmask 1044224
      %vm5964 = vmor %vm389, %vm5963
      %5965 = vst.msk [vmem:[#allocation2 + $0x10] sm:$0xff] %vm5964, %v5899
      %5966 = vst.msk [vmem:[#allocation2 + $0x18] sm:$0xff] %vm5964, %v5900
      %5967 = vst.msk [vmem:[#allocation2 + $0x20] sm:$0xff] %vm5964, %v5901
      %5968 = vst.msk [vmem:[#allocation2 + $0x28] sm:$0xff] %vm5964, %v5902
      %5969 = vst.msk [vmem:[#allocation2 + $0x30] sm:$0xff] %vm5964, %v5903
      %5970 = vst.msk [vmem:[#allocation2 + $0x38] sm:$0xff] %vm5964, %v5904
      %5971 = vst.msk [vmem:[#allocation2 + $0x40] sm:$0xff] %vm5964, %v5905
      %5972 = vst.msk [vmem:[#allocation2 + $0x48] sm:$0xff] %vm5964, %v5906
      %5973 = vst.msk [vmem:[#allocation2 + $0x50] sm:$0xff] %vm5964, %v5907
      %5974 = vst.msk [vmem:[#allocation2 + $0x58] sm:$0xff] %vm5964, %v5908
      %5975 = vst.msk [vmem:[#allocation2 + $0x60] sm:$0xff] %vm5964, %v5909
      %5976 = vst.msk [vmem:[#allocation2 + $0x68] sm:$0xff] %vm5964, %v5910
      %5977 = vst.msk [vmem:[#allocation2 + $0x70] sm:$0xff] %vm5964, %v5911
      %5978 = vst.msk [vmem:[#allocation2 + $0x78] sm:$0xff] %vm5964, %v5912
      %5979 = vst.msk [vmem:[#allocation2 + $0x80] sm:$0xff] %vm5964, %v5913
      %5980 = vst.msk [vmem:[#allocation2 + $0x88] sm:$0xff] %vm5964, %v5914
      %5981 = vst.msk [vmem:[#allocation2 + $0x90] sm:$0xff] %vm5964, %v5915
      %5982 = vst.msk [vmem:[#allocation2 + $0x98] sm:$0xff] %vm5964, %v5916
      %5983 = vst.msk [vmem:[#allocation2 + $0xa0] sm:$0xff] %vm5964, %v5917
      %5984 = vst.msk [vmem:[#allocation2 + $0xa8] sm:$0xff] %vm5964, %v5918
      %5985 = vst.msk [vmem:[#allocation2 + $0xb0] sm:$0xff] %vm5964, %v5919
      %5986 = vst.msk [vmem:[#allocation2 + $0xb8] sm:$0xff] %vm5964, %v5920
      %5987 = vst.msk [vmem:[#allocation2 + $0xc0] sm:$0xff] %vm5964, %v5921
      %5988 = vst.msk [vmem:[#allocation2 + $0xc8] sm:$0xff] %vm5964, %v5922
      %5989 = vst.msk [vmem:[#allocation2 + $0xd0] sm:$0xff] %vm5964, %v5923
      %5990 = vst.msk [vmem:[#allocation2 + $0xd8] sm:$0xff] %vm5964, %v5924
      %5991 = vst.msk [vmem:[#allocation2 + $0xe0] sm:$0xff] %vm5964, %v5925
      %5992 = vst.msk [vmem:[#allocation2 + $0xe8] sm:$0xff] %vm5964, %v5926
      %5993 = vst.msk [vmem:[#allocation2 + $0xf0] sm:$0xff] %vm5964, %v5927
      %5994 = vst.msk [vmem:[#allocation2 + $0xf8] sm:$0xff] %vm5964, %v5928
      %5995 = vst.msk [vmem:[#allocation2 + $0x100] sm:$0xff] %vm5964, %v5929
      %5996 = vst.msk [vmem:[#allocation2 + $0x108] sm:$0xff] %vm5964, %v5930
      %v5997 = vld [vmem:[#allocation2] sm:$0xff]
      %v5998 = vld [vmem:[#allocation2 + $0x8] sm:$0xff]
      %v5999 = vld [vmem:[#allocation2 + $0x10] sm:$0xff]
      %v6000 = vld [vmem:[#allocation2 + $0x18] sm:$0xff]
      %v6001 = vld [vmem:[#allocation2 + $0x20] sm:$0xff]
      %v6002 = vld [vmem:[#allocation2 + $0x28] sm:$0xff]
      %v6003 = vld [vmem:[#allocation2 + $0x30] sm:$0xff]
      %v6004 = vld [vmem:[#allocation2 + $0x38] sm:$0xff]
      %v6005 = vld [vmem:[#allocation2 + $0x40] sm:$0xff]
      %v6006 = vld [vmem:[#allocation2 + $0x48] sm:$0xff]
      %v6007 = vld [vmem:[#allocation2 + $0x50] sm:$0xff]
      %v6008 = vld [vmem:[#allocation2 + $0x58] sm:$0xff]
      %v6009 = vld [vmem:[#allocation2 + $0x60] sm:$0xff]
      %v6010 = vld [vmem:[#allocation2 + $0x68] sm:$0xff]
      %v6011 = vld [vmem:[#allocation2 + $0x70] sm:$0xff]
      %v6012 = vld [vmem:[#allocation2 + $0x78] sm:$0xff]
      %v6013 = vld [vmem:[#allocation2 + $0x80] sm:$0xff]
      %v6014 = vld [vmem:[#allocation2 + $0x88] sm:$0xff]
      %v6015 = vld [vmem:[#allocation2 + $0x90] sm:$0xff]
      %v6016 = vld [vmem:[#allocation2 + $0x98] sm:$0xff]
      %v6017 = vld [vmem:[#allocation2 + $0xa0] sm:$0xff]
      %v6018 = vld [vmem:[#allocation2 + $0xa8] sm:$0xff]
      %v6019 = vld [vmem:[#allocation2 + $0xb0] sm:$0xff]
      %v6020 = vld [vmem:[#allocation2 + $0xb8] sm:$0xff]
      %v6021 = vld [vmem:[#allocation2 + $0xc0] sm:$0xff]
      %v6022 = vld [vmem:[#allocation2 + $0xc8] sm:$0xff]
      %v6023 = vld [vmem:[#allocation2 + $0xd0] sm:$0xff]
      %v6024 = vld [vmem:[#allocation2 + $0xd8] sm:$0xff]
      %v6025 = vld [vmem:[#allocation2 + $0xe0] sm:$0xff]
      %v6026 = vld [vmem:[#allocation2 + $0xe8] sm:$0xff]
      %v6027 = vld [vmem:[#allocation2 + $0xf0] sm:$0xff]
      %v6028 = vld [vmem:[#allocation2 + $0xf8] sm:$0xff]
      %v6029 = vld [vmem:[%s7] sm:$0xf]
      %v6030 = vld [vmem:[%s7 + $0x4] sm:$0xf]
      %v6031 = vld [vmem:[%s7 + $0x8] sm:$0xf]
      %v6032 = vld [vmem:[%s7 + $0xc] sm:$0xf]
      %v6033 = vld [vmem:[%s7 + $0x10] sm:$0xf]
      %v6034 = vld [vmem:[%s7 + $0x14] sm:$0xf]
      %v6035 = vld [vmem:[%s7 + $0x18] sm:$0xf]
      %v6036 = vld [vmem:[%s7 + $0x1c] sm:$0xf]
      %v6037 = vld [vmem:[%s7 + $0x20] sm:$0xf]
      %v6038 = vld [vmem:[%s7 + $0x24] sm:$0xf]
      %v6039 = vld [vmem:[%s7 + $0x28] sm:$0xf]
      %v6040 = vld [vmem:[%s7 + $0x2c] sm:$0xf]
      %v6041 = vld [vmem:[%s7 + $0x30] sm:$0xf]
      %v6042 = vld [vmem:[%s7 + $0x34] sm:$0xf]
      %v6043 = vld [vmem:[%s7 + $0x38] sm:$0xf]
      %v6044 = vld [vmem:[%s7 + $0x3c] sm:$0xf]
      %v6045 = vld [vmem:[%s7 + $0x40] sm:$0xf]
      %v6046 = vld [vmem:[%s7 + $0x44] sm:$0xf]
      %v6047 = vld [vmem:[#allocation2 + $0x100] sm:$0xff]
      %v6048 = vld [vmem:[#allocation2 + $0x108] sm:$0xff]
      %v6049 = vld [vmem:[%s7 + $0x48] sm:$0xf]
      %v6050 = vld [vmem:[%s7 + $0x4c] sm:$0xf]
      %v6051 = vld [vmem:[%s7 + $0x50] sm:$0xf]
      %v6052 = vld [vmem:[%s7 + $0x54] sm:$0xf]
      %v6053 = vld [vmem:[%s7 + $0x58] sm:$0xf]
      %v6054 = vld [vmem:[%s7 + $0x5c] sm:$0xf]
      %v6055 = vld [vmem:[%s7 + $0x60] sm:$0xf]
      %v6056 = vld [vmem:[%s7 + $0x64] sm:$0xf]
      %v6057 = vld [vmem:[%s7 + $0x68] sm:$0xf]
      %v6058 = vld [vmem:[%s7 + $0x6c] sm:$0xf]
      %v6059 = vld [vmem:[%s7 + $0x70] sm:$0xf]
      %v6060 = vld [vmem:[%s7 + $0x74] sm:$0xf]
      %v6061 = vld [vmem:[%s7 + $0x78] sm:$0xf]
      %v6062 = vld [vmem:[%s7 + $0x7c] sm:$0xf]
      %v6063 = vld [vmem:[%s7 + $0x80] sm:$0xf]
      %v6064 = vld [vmem:[%s7 + $0x84] sm:$0xf]
      %v6065 = vld [vmem:[%s7 + $0x88] sm:$0xf]
      %v6066 = vld [vmem:[%s7 + $0x8c] sm:$0xf]
      %v6099 = vunpack.c.l.b16 %v5999
      %v6100 = vunpack.c.h.b16 %v5999
      %v6101 = vunpack.c.l.b16 %v6000
      %v6102 = vunpack.c.h.b16 %v6000
      %v6103 = vunpack.c.l.b16 %v6001
      %v6104 = vunpack.c.h.b16 %v6001
      %v6105 = vunpack.c.l.b16 %v6002
      %v6106 = vunpack.c.h.b16 %v6002
      %v6107 = vunpack.c.l.b16 %v6003
      %v6108 = vunpack.c.h.b16 %v6003
      %v6109 = vunpack.c.l.b16 %v6004
      %v6110 = vunpack.c.h.b16 %v6004
      %v6111 = vunpack.c.l.b16 %v6005
      %v6112 = vunpack.c.h.b16 %v6005
      %v6113 = vunpack.c.l.b16 %v6006
      %v6114 = vunpack.c.h.b16 %v6006
      %v6115 = vunpack.c.l.b16 %v6007
      %v6116 = vunpack.c.h.b16 %v6007
      %v6117 = vunpack.c.l.b16 %v6008
      %v6118 = vunpack.c.h.b16 %v6008
      %v6119 = vunpack.c.l.b16 %v6009
      %v6120 = vunpack.c.h.b16 %v6009
      %v6121 = vunpack.c.l.b16 %v6010
      %v6122 = vunpack.c.h.b16 %v6010
      %v6123 = vunpack.c.l.b16 %v6011
      %v6124 = vunpack.c.h.b16 %v6011
      %v6125 = vunpack.c.l.b16 %v6012
      %v6126 = vunpack.c.h.b16 %v6012
      %v6127 = vunpack.c.l.b16 %v6013
      %v6128 = vunpack.c.h.b16 %v6013
      %v6129 = vunpack.c.l.b16 %v6014
      %v6130 = vunpack.c.h.b16 %v6014
      %v6131 = vunpack.c.l.b16 %v6015
      %v6132 = vunpack.c.h.b16 %v6015
      %v6133 = vunpack.c.l.b16 %v6016
      %v6134 = vunpack.c.h.b16 %v6016
      %v6135 = vunpack.c.l.b16 %v6017
      %v6136 = vunpack.c.h.b16 %v6017
      %v6137 = vunpack.c.l.b16 %v6018
      %v6138 = vunpack.c.h.b16 %v6018
      %v6139 = vunpack.c.l.b16 %v6019
      %v6140 = vunpack.c.h.b16 %v6019
      %v6141 = vunpack.c.l.b16 %v6020
      %v6142 = vunpack.c.h.b16 %v6020
      %v6143 = vunpack.c.l.b16 %v6021
      %v6144 = vunpack.c.h.b16 %v6021
      %v6145 = vunpack.c.l.b16 %v6022
      %v6146 = vunpack.c.h.b16 %v6022
      %v6147 = vunpack.c.l.b16 %v6023
      %v6148 = vunpack.c.h.b16 %v6023
      %v6149 = vunpack.c.l.b16 %v6024
      %v6150 = vunpack.c.h.b16 %v6024
      %v6151 = vunpack.c.l.b16 %v6025
      %v6152 = vunpack.c.h.b16 %v6025
      %v6153 = vunpack.c.l.b16 %v6026
      %v6154 = vunpack.c.h.b16 %v6026
      %v6155 = vunpack.c.l.b16 %v6027
      %v6156 = vunpack.c.h.b16 %v6027
      %v6157 = vunpack.c.l.b16 %v6028
      %v6158 = vunpack.c.h.b16 %v6028
      %v6159 = vunpack.c.l.b16 %v6047
      %v6160 = vunpack.c.h.b16 %v6047
      %v6161 = vunpack.c.l.b16 %v6048
      %v6162 = vunpack.c.h.b16 %v6048
      %v6163 = vpack.c.b16 %v6101, %v6099
      %v6164 = vpack.c.b16 %v6102, %v6100
      %v6165 = vpack.c.b16 %v6105, %v6103
      %v6166 = vpack.c.b16 %v6106, %v6104
      %v6167 = vpack.c.b16 %v6109, %v6107
      %v6168 = vpack.c.b16 %v6110, %v6108
      %v6169 = vpack.c.b16 %v6113, %v6111
      %v6170 = vpack.c.b16 %v6114, %v6112
      %v6171 = vpack.c.b16 %v6117, %v6115
      %v6172 = vpack.c.b16 %v6118, %v6116
      %v6173 = vpack.c.b16 %v6121, %v6119
      %v6174 = vpack.c.b16 %v6122, %v6120
      %v6175 = vpack.c.b16 %v6125, %v6123
      %v6176 = vpack.c.b16 %v6126, %v6124
      %v6177 = vpack.c.b16 %v6129, %v6127
      %v6178 = vpack.c.b16 %v6130, %v6128
      %v6179 = vpack.c.b16 %v6133, %v6131
      %v6180 = vpack.c.b16 %v6134, %v6132
      %v6181 = vpack.c.b16 %v6137, %v6135
      %v6182 = vpack.c.b16 %v6138, %v6136
      %v6183 = vpack.c.b16 %v6141, %v6139
      %v6184 = vpack.c.b16 %v6142, %v6140
      %v6185 = vpack.c.b16 %v6145, %v6143
      %v6186 = vpack.c.b16 %v6146, %v6144
      %v6187 = vpack.c.b16 %v6149, %v6147
      %v6188 = vpack.c.b16 %v6150, %v6148
      %v6189 = vpack.c.b16 %v6153, %v6151
      %v6190 = vpack.c.b16 %v6154, %v6152
      %v6191 = vpack.c.b16 %v6157, %v6155
      %v6192 = vpack.c.b16 %v6158, %v6156
      %v6193 = vpack.c.b16 %v6161, %v6159
      %v6194 = vpack.c.b16 %v6162, %v6160
      %v6229 = vunpack.c.l.b16 %v6049
      %v6230 = vunpack.c.l.b16 %v6050
      %v6231 = vunpack.c.l.b16 %v6051
      %v6232 = vunpack.c.l.b16 %v6052
      %v6233 = vunpack.c.l.b16 %v6053
      %v6234 = vunpack.c.l.b16 %v6054
      %v6235 = vunpack.c.l.b16 %v6055
      %v6236 = vunpack.c.l.b16 %v6056
      %v6237 = vunpack.c.l.b16 %v6057
      %v6238 = vunpack.c.l.b16 %v6058
      %v6239 = vunpack.c.l.b16 %v6059
      %v6240 = vunpack.c.l.b16 %v6060
      %v6241 = vunpack.c.l.b16 %v6061
      %v6242 = vunpack.c.l.b16 %v6062
      %v6243 = vunpack.c.l.b16 %v6063
      %v6244 = vunpack.c.l.b16 %v6064
      %v6245 = vunpack.c.l.b16 %v6065
      %v6246 = vunpack.c.l.b16 %v6066
      %v6247 = vpack.c.b16 %v6230, %v6229
      %v6248 = vpack.c.b16 %v6232, %v6231
      %v6249 = vpack.c.b16 %v6234, %v6233
      %v6250 = vpack.c.b16 %v6236, %v6235
      %v6251 = vpack.c.b16 %v6238, %v6237
      %v6252 = vpack.c.b16 %v6240, %v6239
      %v6253 = vpack.c.b16 %v6242, %v6241
      %v6254 = vpack.c.b16 %v6244, %v6243
      %v6255 = vpack.c.b16 %v6246, %v6245
      %vm6265 = vcmask 130048
      %v6267 = vsel %vm6265, %v6164, 0
      %v6270 = vsel %vm6265, %v6166, 0
      %v6273 = vsel %vm6265, %v6168, 0
      %v6276 = vsel %vm6265, %v6170, 0
      %v6279 = vsel %vm6265, %v6172, 0
      %v6282 = vsel %vm6265, %v6174, 0
      %v6285 = vsel %vm6265, %v6176, 0
      %v6288 = vsel %vm6265, %v6178, 0
      %v6291 = vsel %vm6265, %v6180, 0
      %v6294 = vsel %vm6265, %v6182, 0
      %v6297 = vsel %vm6265, %v6184, 0
      %v6300 = vsel %vm6265, %v6186, 0
      %v6303 = vsel %vm6265, %v6188, 0
      %v6306 = vsel %vm6265, %v6190, 0
      %v6309 = vsel %vm6265, %v6192, 0
      %v6312 = vsel %vm6265, %v6194, 0
      %6314 = vmatprep.subr.bf16.mxu0 0
      %6315 = vmatpush1.bf16.msra.mxu0 %v6254
      %6316 = vmatprep.subr.bf16.mxu0 0
      %6317 = vmatpush1.bf16.msra.mxu0 %v6253
      %6318 = vmatprep.subr.bf16.mxu0 0
      %6319 = vmatpush1.bf16.msra.mxu0 %v6252
      %6320 = vmatprep.subr.bf16.mxu0 0
      %6321 = vmatpush1.bf16.msra.mxu0 %v6251
      %6322 = vmatprep.subr.bf16.mxu0 0
      %6323 = vmatpush1.bf16.msra.mxu0 %v6250
      %6324 = vmatprep.subr.bf16.mxu0 0
      %6325 = vmatpush1.bf16.msra.mxu0 %v6249
      %6326 = vmatprep.subr.bf16.mxu0 0
      %6327 = vmatpush1.bf16.msra.mxu0 %v6248
      %6328 = vmatprep.subr.bf16.mxu0 0
      %6329 = vmatpush1.bf16.msra.mxu0 %v6247
      %6330 = vmatprep.subr.bf16.mxu0 0
      %6331 = vmatpush2.bf16.msra.mxu0 0
      %6332 = vmatprep.subr.bf16.mxu0 0
      %6333 = vmatpush2.bf16.msra.mxu0 0
      %6334 = vmatprep.subr.bf16.mxu0 0
      %6335 = vmatpush2.bf16.msra.mxu0 0
      %6336 = vmatprep.subr.bf16.mxu0 0
      %6337 = vmatpush2.bf16.msra.mxu0 0
      %6338 = vmatprep.subr.bf16.mxu0 0
      %6339 = vmatpush2.bf16.msra.mxu0 0
      %6340 = vmatprep.subr.bf16.mxu0 0
      %6341 = vmatpush2.bf16.msra.mxu0 0
      %6342 = vmatprep.subr.bf16.mxu0 0
      %6343 = vmatpush2.bf16.msra.mxu0 0
      %6344 = vmatprep.subr.bf16.mxu0 0
      %6345 = vmatpush2.bf16.msra.mxu0 %v6255
      %6346 = vmatprep.mubr.bf16.mxu0 %v6267
      %6347 = vmatmul.mubr.bf16.gmra.mxu0 %v6163
      %v6348 = vpop.f32.mrf.mxu0
      %v6349 = vadd.f32 0.0, %v6348
      %v6350 = vpop.f32.mrf.mxu0
      %v6351 = vpop.f32.mrf.mxu0
      %v6352 = vadd.f32 0.0, %v6351
      %v6353 = vpop.f32.mrf.mxu0
      %6354 = vmatprep.mubr.bf16.mxu0 %v6270
      %6355 = vmatmul.mubr.bf16.gmra.mxu0 %v6165
      %v6356 = vpop.f32.mrf.mxu0
      %v6357 = vadd.f32 0.0, %v6356
      %v6358 = vpop.f32.mrf.mxu0
      %v6359 = vpop.f32.mrf.mxu0
      %v6360 = vadd.f32 0.0, %v6359
      %v6361 = vpop.f32.mrf.mxu0
      %6362 = vmatprep.mubr.bf16.mxu0 %v6273
      %6363 = vmatmul.mubr.bf16.gmra.mxu0 %v6167
      %v6364 = vpop.f32.mrf.mxu0
      %v6365 = vadd.f32 0.0, %v6364
      %v6366 = vpop.f32.mrf.mxu0
      %v6367 = vpop.f32.mrf.mxu0
      %v6368 = vadd.f32 0.0, %v6367
      %v6369 = vpop.f32.mrf.mxu0
      %6370 = vmatprep.mubr.bf16.mxu0 %v6276
      %6371 = vmatmul.mubr.bf16.gmra.mxu0 %v6169
      %v6372 = vpop.f32.mrf.mxu0
      %v6373 = vadd.f32 0.0, %v6372
      %v6374 = vpop.f32.mrf.mxu0
      %v6375 = vpop.f32.mrf.mxu0
      %v6376 = vadd.f32 0.0, %v6375
      %v6377 = vpop.f32.mrf.mxu0
      %6378 = vmatprep.mubr.bf16.mxu0 %v6279
      %6379 = vmatmul.mubr.bf16.gmra.mxu0 %v6171
      %v6380 = vpop.f32.mrf.mxu0
      %v6381 = vadd.f32 0.0, %v6380
      %v6382 = vpop.f32.mrf.mxu0
      %v6383 = vpop.f32.mrf.mxu0
      %v6384 = vadd.f32 0.0, %v6383
      %v6385 = vpop.f32.mrf.mxu0
      %6386 = vmatprep.mubr.bf16.mxu0 %v6282
      %6387 = vmatmul.mubr.bf16.gmra.mxu0 %v6173
      %v6388 = vpop.f32.mrf.mxu0
      %v6389 = vadd.f32 0.0, %v6388
      %v6390 = vpop.f32.mrf.mxu0
      %v6391 = vpop.f32.mrf.mxu0
      %v6392 = vadd.f32 0.0, %v6391
      %v6393 = vpop.f32.mrf.mxu0
      %6394 = vmatprep.mubr.bf16.mxu0 %v6285
      %6395 = vmatmul.mubr.bf16.gmra.mxu0 %v6175
      %v6396 = vpop.f32.mrf.mxu0
      %v6397 = vadd.f32 0.0, %v6396
      %v6398 = vpop.f32.mrf.mxu0
      %v6399 = vpop.f32.mrf.mxu0
      %v6400 = vadd.f32 0.0, %v6399
      %v6401 = vpop.f32.mrf.mxu0
      %6402 = vmatprep.mubr.bf16.mxu0 %v6288
      %6403 = vmatmul.mubr.bf16.gmra.mxu0 %v6177
      %v6404 = vpop.f32.mrf.mxu0
      %v6405 = vadd.f32 0.0, %v6404
      %v6406 = vpop.f32.mrf.mxu0
      %v6407 = vpop.f32.mrf.mxu0
      %v6408 = vadd.f32 0.0, %v6407
      %v6409 = vpop.f32.mrf.mxu0
      %6410 = vmatprep.mubr.bf16.mxu0 %v6291
      %6411 = vmatmul.mubr.bf16.gmra.mxu0 %v6179
      %v6412 = vpop.f32.mrf.mxu0
      %v6413 = vadd.f32 0.0, %v6412
      %v6414 = vpop.f32.mrf.mxu0
      %v6415 = vpop.f32.mrf.mxu0
      %v6416 = vadd.f32 0.0, %v6415
      %v6417 = vpop.f32.mrf.mxu0
      %6418 = vmatprep.mubr.bf16.mxu0 %v6294
      %6419 = vmatmul.mubr.bf16.gmra.mxu0 %v6181
      %v6420 = vpop.f32.mrf.mxu0
      %v6421 = vadd.f32 0.0, %v6420
      %v6422 = vpop.f32.mrf.mxu0
      %v6423 = vpop.f32.mrf.mxu0
      %v6424 = vadd.f32 0.0, %v6423
      %v6425 = vpop.f32.mrf.mxu0
      %6426 = vmatprep.mubr.bf16.mxu0 %v6297
      %6427 = vmatmul.mubr.bf16.gmra.mxu0 %v6183
      %v6428 = vpop.f32.mrf.mxu0
      %v6429 = vadd.f32 0.0, %v6428
      %v6430 = vpop.f32.mrf.mxu0
      %v6431 = vpop.f32.mrf.mxu0
      %v6432 = vadd.f32 0.0, %v6431
      %v6433 = vpop.f32.mrf.mxu0
      %6434 = vmatprep.mubr.bf16.mxu0 %v6300
      %6435 = vmatmul.mubr.bf16.gmra.mxu0 %v6185
      %v6436 = vpop.f32.mrf.mxu0
      %v6437 = vadd.f32 0.0, %v6436
      %v6438 = vpop.f32.mrf.mxu0
      %v6439 = vpop.f32.mrf.mxu0
      %v6440 = vadd.f32 0.0, %v6439
      %v6441 = vpop.f32.mrf.mxu0
      %6442 = vmatprep.mubr.bf16.mxu0 %v6303
      %6443 = vmatmul.mubr.bf16.gmra.mxu0 %v6187
      %v6444 = vpop.f32.mrf.mxu0
      %v6445 = vadd.f32 0.0, %v6444
      %v6446 = vpop.f32.mrf.mxu0
      %v6447 = vpop.f32.mrf.mxu0
      %v6448 = vadd.f32 0.0, %v6447
      %v6449 = vpop.f32.mrf.mxu0
      %6450 = vmatprep.mubr.bf16.mxu0 %v6306
      %6451 = vmatmul.mubr.bf16.gmra.mxu0 %v6189
      %v6452 = vpop.f32.mrf.mxu0
      %v6453 = vadd.f32 0.0, %v6452
      %v6454 = vpop.f32.mrf.mxu0
      %v6455 = vpop.f32.mrf.mxu0
      %v6456 = vadd.f32 0.0, %v6455
      %v6457 = vpop.f32.mrf.mxu0
      %6458 = vmatprep.mubr.bf16.mxu0 %v6309
      %6459 = vmatmul.mubr.bf16.gmra.mxu0 %v6191
      %v6460 = vpop.f32.mrf.mxu0
      %v6461 = vadd.f32 0.0, %v6460
      %v6462 = vpop.f32.mrf.mxu0
      %v6463 = vpop.f32.mrf.mxu0
      %v6464 = vadd.f32 0.0, %v6463
      %v6465 = vpop.f32.mrf.mxu0
      %6466 = vmatprep.mubr.bf16.mxu0 %v6312
      %6467 = vmatmul.mubr.bf16.gmra.mxu0 %v6193
      %v6468 = vpop.f32.mrf.mxu0
      %v6469 = vadd.f32 0.0, %v6468
      %v6470 = vpop.f32.mrf.mxu0
      %v6471 = vpop.f32.mrf.mxu0
      %v6472 = vadd.f32 0.0, %v6471
      %v6473 = vpop.f32.mrf.mxu0
      %6474 = vdwg.mxu0
      %v6477 = vunpack.c.l.b16 %v5997
      %v6478 = vunpack.c.h.b16 %v5997
      %v6479 = vunpack.c.l.b16 %v5998
      %v6480 = vunpack.c.h.b16 %v5998
      %v6481 = vpack.c.b16 %v6479, %v6477
      %v6482 = vpack.c.b16 %v6480, %v6478
      %v6502 = vunpack.c.l.b16 %v6029
      %v6503 = vunpack.c.l.b16 %v6030
      %v6504 = vunpack.c.l.b16 %v6031
      %v6505 = vunpack.c.l.b16 %v6032
      %v6506 = vunpack.c.l.b16 %v6033
      %v6507 = vunpack.c.l.b16 %v6034
      %v6508 = vunpack.c.l.b16 %v6035
      %v6509 = vunpack.c.l.b16 %v6036
      %v6510 = vunpack.c.l.b16 %v6037
      %v6511 = vunpack.c.l.b16 %v6038
      %v6512 = vunpack.c.l.b16 %v6039
      %v6513 = vunpack.c.l.b16 %v6040
      %v6514 = vunpack.c.l.b16 %v6041
      %v6515 = vunpack.c.l.b16 %v6042
      %v6516 = vunpack.c.l.b16 %v6043
      %v6517 = vunpack.c.l.b16 %v6044
      %v6518 = vunpack.c.l.b16 %v6045
      %v6519 = vunpack.c.l.b16 %v6046
      %v6520 = vpack.c.b16 %v6503, %v6502
      %v6521 = vpack.c.b16 %v6505, %v6504
      %v6522 = vpack.c.b16 %v6507, %v6506
      %v6523 = vpack.c.b16 %v6509, %v6508
      %v6524 = vpack.c.b16 %v6511, %v6510
      %v6525 = vpack.c.b16 %v6513, %v6512
      %v6526 = vpack.c.b16 %v6515, %v6514
      %v6527 = vpack.c.b16 %v6517, %v6516
      %v6528 = vpack.c.b16 %v6519, %v6518
      %v6539 = vsel %vm6265, %v6482, 0
      %6541 = vmatprep.subr.bf16.mxu0 0
      %6542 = vmatpush1.bf16.msra.mxu0 %v6527
      %6543 = vmatprep.subr.bf16.mxu0 0
      %6544 = vmatpush1.bf16.msra.mxu0 %v6526
      %6545 = vmatprep.subr.bf16.mxu0 0
      %6546 = vmatpush1.bf16.msra.mxu0 %v6525
      %6547 = vmatprep.subr.bf16.mxu0 0
      %6548 = vmatpush1.bf16.msra.mxu0 %v6524
      %6549 = vmatprep.subr.bf16.mxu0 0
      %6550 = vmatpush1.bf16.msra.mxu0 %v6523
      %6551 = vmatprep.subr.bf16.mxu0 0
      %6552 = vmatpush1.bf16.msra.mxu0 %v6522
      %6553 = vmatprep.subr.bf16.mxu0 0
      %6554 = vmatpush1.bf16.msra.mxu0 %v6521
      %6555 = vmatprep.subr.bf16.mxu0 0
      %6556 = vmatpush1.bf16.msra.mxu0 %v6520
      %6557 = vmatprep.subr.bf16.mxu0 0
      %6558 = vmatpush2.bf16.msra.mxu0 0
      %6559 = vmatprep.subr.bf16.mxu0 0
      %6560 = vmatpush2.bf16.msra.mxu0 0
      %6561 = vmatprep.subr.bf16.mxu0 0
      %6562 = vmatpush2.bf16.msra.mxu0 0
      %6563 = vmatprep.subr.bf16.mxu0 0
      %6564 = vmatpush2.bf16.msra.mxu0 0
      %6565 = vmatprep.subr.bf16.mxu0 0
      %6566 = vmatpush2.bf16.msra.mxu0 0
      %6567 = vmatprep.subr.bf16.mxu0 0
      %6568 = vmatpush2.bf16.msra.mxu0 0
      %6569 = vmatprep.subr.bf16.mxu0 0
      %6570 = vmatpush2.bf16.msra.mxu0 0
      %6571 = vmatprep.subr.bf16.mxu0 0
      %6572 = vmatpush2.bf16.msra.mxu0 %v6528
      %6573 = vmatprep.mubr.bf16.mxu0 %v6539
      %6574 = vmatmul.mubr.bf16.gmra.mxu0 %v6481
      %v6575 = vpop.f32.mrf.mxu0
      %v6576 = vadd.f32 %v6349, %v6575
      %v6577 = vpop.f32.mrf.mxu0
      %v6578 = vpop.f32.mrf.mxu0
      %v6579 = vadd.f32 %v6352, %v6578
      %v6580 = vpop.f32.mrf.mxu0
      %6581 = vmatprep.mubr.bf16.mxu0 %v6267
      %6582 = vmatmul.mubr.bf16.gmra.mxu0 %v6163
      %v6583 = vpop.f32.mrf.mxu0
      %v6584 = vadd.f32 %v6357, %v6583
      %v6585 = vpop.f32.mrf.mxu0
      %v6586 = vpop.f32.mrf.mxu0
      %v6587 = vadd.f32 %v6360, %v6586
      %v6588 = vpop.f32.mrf.mxu0
      %6589 = vmatprep.mubr.bf16.mxu0 %v6270
      %6590 = vmatmul.mubr.bf16.gmra.mxu0 %v6165
      %v6591 = vpop.f32.mrf.mxu0
      %v6592 = vadd.f32 %v6365, %v6591
      %v6593 = vpop.f32.mrf.mxu0
      %v6594 = vpop.f32.mrf.mxu0
      %v6595 = vadd.f32 %v6368, %v6594
      %v6596 = vpop.f32.mrf.mxu0
      %6597 = vmatprep.mubr.bf16.mxu0 %v6273
      %6598 = vmatmul.mubr.bf16.gmra.mxu0 %v6167
      %v6599 = vpop.f32.mrf.mxu0
      %v6600 = vadd.f32 %v6373, %v6599
      %v6601 = vpop.f32.mrf.mxu0
      %v6602 = vpop.f32.mrf.mxu0
      %v6603 = vadd.f32 %v6376, %v6602
      %v6604 = vpop.f32.mrf.mxu0
      %6605 = vmatprep.mubr.bf16.mxu0 %v6276
      %6606 = vmatmul.mubr.bf16.gmra.mxu0 %v6169
      %v6607 = vpop.f32.mrf.mxu0
      %v6608 = vadd.f32 %v6381, %v6607
      %v6609 = vpop.f32.mrf.mxu0
      %v6610 = vpop.f32.mrf.mxu0
      %v6611 = vadd.f32 %v6384, %v6610
      %v6612 = vpop.f32.mrf.mxu0
      %6613 = vmatprep.mubr.bf16.mxu0 %v6279
      %6614 = vmatmul.mubr.bf16.gmra.mxu0 %v6171
      %v6615 = vpop.f32.mrf.mxu0
      %v6616 = vadd.f32 %v6389, %v6615
      %v6617 = vpop.f32.mrf.mxu0
      %v6618 = vpop.f32.mrf.mxu0
      %v6619 = vadd.f32 %v6392, %v6618
      %v6620 = vpop.f32.mrf.mxu0
      %6621 = vmatprep.mubr.bf16.mxu0 %v6282
      %6622 = vmatmul.mubr.bf16.gmra.mxu0 %v6173
      %v6623 = vpop.f32.mrf.mxu0
      %v6624 = vadd.f32 %v6397, %v6623
      %v6625 = vpop.f32.mrf.mxu0
      %v6626 = vpop.f32.mrf.mxu0
      %v6627 = vadd.f32 %v6400, %v6626
      %v6628 = vpop.f32.mrf.mxu0
      %6629 = vmatprep.mubr.bf16.mxu0 %v6285
      %6630 = vmatmul.mubr.bf16.gmra.mxu0 %v6175
      %v6631 = vpop.f32.mrf.mxu0
      %v6632 = vadd.f32 %v6405, %v6631
      %v6633 = vpop.f32.mrf.mxu0
      %v6634 = vpop.f32.mrf.mxu0
      %v6635 = vadd.f32 %v6408, %v6634
      %v6636 = vpop.f32.mrf.mxu0
      %6637 = vmatprep.mubr.bf16.mxu0 %v6288
      %6638 = vmatmul.mubr.bf16.gmra.mxu0 %v6177
      %v6639 = vpop.f32.mrf.mxu0
      %v6640 = vadd.f32 %v6413, %v6639
      %v6641 = vpop.f32.mrf.mxu0
      %v6642 = vpop.f32.mrf.mxu0
      %v6643 = vadd.f32 %v6416, %v6642
      %v6644 = vpop.f32.mrf.mxu0
      %6645 = vmatprep.mubr.bf16.mxu0 %v6291
      %6646 = vmatmul.mubr.bf16.gmra.mxu0 %v6179
      %v6647 = vpop.f32.mrf.mxu0
      %v6648 = vadd.f32 %v6421, %v6647
      %v6649 = vpop.f32.mrf.mxu0
      %v6650 = vpop.f32.mrf.mxu0
      %v6651 = vadd.f32 %v6424, %v6650
      %v6652 = vpop.f32.mrf.mxu0
      %6653 = vmatprep.mubr.bf16.mxu0 %v6294
      %6654 = vmatmul.mubr.bf16.gmra.mxu0 %v6181
      %v6655 = vpop.f32.mrf.mxu0
      %v6656 = vadd.f32 %v6429, %v6655
      %v6657 = vpop.f32.mrf.mxu0
      %v6658 = vpop.f32.mrf.mxu0
      %v6659 = vadd.f32 %v6432, %v6658
      %v6660 = vpop.f32.mrf.mxu0
      %6661 = vmatprep.mubr.bf16.mxu0 %v6297
      %6662 = vmatmul.mubr.bf16.gmra.mxu0 %v6183
      %v6663 = vpop.f32.mrf.mxu0
      %v6664 = vadd.f32 %v6437, %v6663
      %v6665 = vpop.f32.mrf.mxu0
      %v6666 = vpop.f32.mrf.mxu0
      %v6667 = vadd.f32 %v6440, %v6666
      %v6668 = vpop.f32.mrf.mxu0
      %6669 = vmatprep.mubr.bf16.mxu0 %v6300
      %6670 = vmatmul.mubr.bf16.gmra.mxu0 %v6185
      %v6671 = vpop.f32.mrf.mxu0
      %v6672 = vadd.f32 %v6445, %v6671
      %v6673 = vpop.f32.mrf.mxu0
      %v6674 = vpop.f32.mrf.mxu0
      %v6675 = vadd.f32 %v6448, %v6674
      %v6676 = vpop.f32.mrf.mxu0
      %6677 = vmatprep.mubr.bf16.mxu0 %v6303
      %6678 = vmatmul.mubr.bf16.gmra.mxu0 %v6187
      %v6679 = vpop.f32.mrf.mxu0
      %v6680 = vadd.f32 %v6453, %v6679
      %v6681 = vpop.f32.mrf.mxu0
      %v6682 = vpop.f32.mrf.mxu0
      %v6683 = vadd.f32 %v6456, %v6682
      %v6684 = vpop.f32.mrf.mxu0
      %6685 = vmatprep.mubr.bf16.mxu0 %v6306
      %6686 = vmatmul.mubr.bf16.gmra.mxu0 %v6189
      %v6687 = vpop.f32.mrf.mxu0
      %v6688 = vadd.f32 %v6461, %v6687
      %v6689 = vpop.f32.mrf.mxu0
      %v6690 = vpop.f32.mrf.mxu0
      %v6691 = vadd.f32 %v6464, %v6690
      %v6692 = vpop.f32.mrf.mxu0
      %6693 = vmatprep.mubr.bf16.mxu0 %v6309
      %6694 = vmatmul.mubr.bf16.gmra.mxu0 %v6191
      %v6695 = vpop.f32.mrf.mxu0
      %v6696 = vadd.f32 %v6469, %v6695
      %v6697 = vpop.f32.mrf.mxu0
      %v6698 = vpop.f32.mrf.mxu0
      %v6699 = vadd.f32 %v6472, %v6698
      %v6700 = vpop.f32.mrf.mxu0
      %6701 = vdwg.mxu0
      %v6702 = vld [vmem:[#allocation2 + $0x20] sm:$0xff]
      %v6703 = vld [vmem:[#allocation2 + $0x28] sm:$0xff]
      %v6704 = vld [vmem:[#allocation2 + $0x30] sm:$0xff]
      %v6705 = vld [vmem:[#allocation2 + $0x38] sm:$0xff]
      %v6706 = vld [vmem:[#allocation2 + $0x40] sm:$0xff]
      %v6707 = vld [vmem:[#allocation2 + $0x48] sm:$0xff]
      %v6708 = vld [vmem:[#allocation2 + $0x50] sm:$0xff]
      %v6709 = vld [vmem:[#allocation2 + $0x58] sm:$0xff]
      %v6710 = vld [vmem:[#allocation2 + $0x60] sm:$0xff]
      %v6711 = vld [vmem:[#allocation2 + $0x68] sm:$0xff]
      %v6712 = vld [vmem:[#allocation2 + $0x70] sm:$0xff]
      %v6713 = vld [vmem:[#allocation2 + $0x78] sm:$0xff]
      %v6714 = vld [vmem:[#allocation2 + $0x80] sm:$0xff]
      %v6715 = vld [vmem:[#allocation2 + $0x88] sm:$0xff]
      %v6716 = vld [vmem:[#allocation2 + $0x90] sm:$0xff]
      %v6717 = vld [vmem:[#allocation2 + $0x98] sm:$0xff]
      %v6718 = vld [vmem:[#allocation2 + $0xa0] sm:$0xff]
      %v6719 = vld [vmem:[#allocation2 + $0xa8] sm:$0xff]
      %v6720 = vld [vmem:[#allocation2 + $0xb0] sm:$0xff]
      %v6721 = vld [vmem:[#allocation2 + $0xb8] sm:$0xff]
      %v6722 = vld [vmem:[#allocation2 + $0xc0] sm:$0xff]
      %v6723 = vld [vmem:[#allocation2 + $0xc8] sm:$0xff]
      %v6724 = vld [vmem:[#allocation2 + $0xd0] sm:$0xff]
      %v6725 = vld [vmem:[#allocation2 + $0xd8] sm:$0xff]
      %v6726 = vld [vmem:[#allocation2 + $0xe0] sm:$0xff]
      %v6727 = vld [vmem:[#allocation2 + $0xe8] sm:$0xff]
      %v6728 = vld [vmem:[#allocation2 + $0xf0] sm:$0xff]
      %v6729 = vld [vmem:[#allocation2 + $0xf8] sm:$0xff]
      %v6730 = vld [vmem:[#allocation2 + $0x100] sm:$0xff]
      %v6731 = vld [vmem:[#allocation2 + $0x108] sm:$0xff]
      %v6732 = vld [vmem:[#allocation2 + $0x110] sm:$0xff]
      %v6733 = vld [vmem:[#allocation2 + $0x118] sm:$0xff]
      %v6734 = vld [vmem:[%s7 + $0x90] sm:$0xf]
      %v6735 = vld [vmem:[%s7 + $0x94] sm:$0xf]
      %v6736 = vld [vmem:[%s7 + $0x98] sm:$0xf]
      %v6737 = vld [vmem:[%s7 + $0x9c] sm:$0xf]
      %v6738 = vld [vmem:[%s7 + $0xa0] sm:$0xf]
      %v6739 = vld [vmem:[%s7 + $0xa4] sm:$0xf]
      %v6740 = vld [vmem:[%s7 + $0xa8] sm:$0xf]
      %v6741 = vld [vmem:[%s7 + $0xac] sm:$0xf]
      %v6742 = vld [vmem:[%s7 + $0xb0] sm:$0xf]
      %v6743 = vld [vmem:[%s7 + $0xb4] sm:$0xf]
      %v6744 = vld [vmem:[%s7 + $0xb8] sm:$0xf]
      %v6745 = vld [vmem:[%s7 + $0xbc] sm:$0xf]
      %v6746 = vld [vmem:[%s7 + $0xc0] sm:$0xf]
      %v6747 = vld [vmem:[%s7 + $0xc4] sm:$0xf]
      %v6748 = vld [vmem:[%s7 + $0xc8] sm:$0xf]
      %v6749 = vld [vmem:[%s7 + $0xcc] sm:$0xf]
      %v6750 = vld [vmem:[%s7 + $0xd0] sm:$0xf]
      %v6751 = vld [vmem:[%s7 + $0xd4] sm:$0xf]
      %v6784 = vunpack.c.l.b16 %v6702
      %v6785 = vunpack.c.h.b16 %v6702
      %v6786 = vunpack.c.l.b16 %v6703
      %v6787 = vunpack.c.h.b16 %v6703
      %v6788 = vunpack.c.l.b16 %v6704
      %v6789 = vunpack.c.h.b16 %v6704
      %v6790 = vunpack.c.l.b16 %v6705
      %v6791 = vunpack.c.h.b16 %v6705
      %v6792 = vunpack.c.l.b16 %v6706
      %v6793 = vunpack.c.h.b16 %v6706
      %v6794 = vunpack.c.l.b16 %v6707
      %v6795 = vunpack.c.h.b16 %v6707
      %v6796 = vunpack.c.l.b16 %v6708
      %v6797 = vunpack.c.h.b16 %v6708
      %v6798 = vunpack.c.l.b16 %v6709
      %v6799 = vunpack.c.h.b16 %v6709
      %v6800 = vunpack.c.l.b16 %v6710
      %v6801 = vunpack.c.h.b16 %v6710
      %v6802 = vunpack.c.l.b16 %v6711
      %v6803 = vunpack.c.h.b16 %v6711
      %v6804 = vunpack.c.l.b16 %v6712
      %v6805 = vunpack.c.h.b16 %v6712
      %v6806 = vunpack.c.l.b16 %v6713
      %v6807 = vunpack.c.h.b16 %v6713
      %v6808 = vunpack.c.l.b16 %v6714
      %v6809 = vunpack.c.h.b16 %v6714
      %v6810 = vunpack.c.l.b16 %v6715
      %v6811 = vunpack.c.h.b16 %v6715
      %v6812 = vunpack.c.l.b16 %v6716
      %v6813 = vunpack.c.h.b16 %v6716
      %v6814 = vunpack.c.l.b16 %v6717
      %v6815 = vunpack.c.h.b16 %v6717
      %v6816 = vunpack.c.l.b16 %v6718
      %v6817 = vunpack.c.h.b16 %v6718
      %v6818 = vunpack.c.l.b16 %v6719
      %v6819 = vunpack.c.h.b16 %v6719
      %v6820 = vunpack.c.l.b16 %v6720
      %v6821 = vunpack.c.h.b16 %v6720
      %v6822 = vunpack.c.l.b16 %v6721
      %v6823 = vunpack.c.h.b16 %v6721
      %v6824 = vunpack.c.l.b16 %v6722
      %v6825 = vunpack.c.h.b16 %v6722
      %v6826 = vunpack.c.l.b16 %v6723
      %v6827 = vunpack.c.h.b16 %v6723
      %v6828 = vunpack.c.l.b16 %v6724
      %v6829 = vunpack.c.h.b16 %v6724
      %v6830 = vunpack.c.l.b16 %v6725
      %v6831 = vunpack.c.h.b16 %v6725
      %v6832 = vunpack.c.l.b16 %v6726
      %v6833 = vunpack.c.h.b16 %v6726
      %v6834 = vunpack.c.l.b16 %v6727
      %v6835 = vunpack.c.h.b16 %v6727
      %v6836 = vunpack.c.l.b16 %v6728
      %v6837 = vunpack.c.h.b16 %v6728
      %v6838 = vunpack.c.l.b16 %v6729
      %v6839 = vunpack.c.h.b16 %v6729
      %v6840 = vunpack.c.l.b16 %v6730
      %v6841 = vunpack.c.h.b16 %v6730
      %v6842 = vunpack.c.l.b16 %v6731
      %v6843 = vunpack.c.h.b16 %v6731
      %v6844 = vunpack.c.l.b16 %v6732
      %v6845 = vunpack.c.h.b16 %v6732
      %v6846 = vunpack.c.l.b16 %v6733
      %v6847 = vunpack.c.h.b16 %v6733
      %v6848 = vpack.c.b16 %v6786, %v6784
      %v6849 = vpack.c.b16 %v6787, %v6785
      %v6850 = vpack.c.b16 %v6790, %v6788
      %v6851 = vpack.c.b16 %v6791, %v6789
      %v6852 = vpack.c.b16 %v6794, %v6792
      %v6853 = vpack.c.b16 %v6795, %v6793
      %v6854 = vpack.c.b16 %v6798, %v6796
      %v6855 = vpack.c.b16 %v6799, %v6797
      %v6856 = vpack.c.b16 %v6802, %v6800
      %v6857 = vpack.c.b16 %v6803, %v6801
      %v6858 = vpack.c.b16 %v6806, %v6804
      %v6859 = vpack.c.b16 %v6807, %v6805
      %v6860 = vpack.c.b16 %v6810, %v6808
      %v6861 = vpack.c.b16 %v6811, %v6809
      %v6862 = vpack.c.b16 %v6814, %v6812
      %v6863 = vpack.c.b16 %v6815, %v6813
      %v6864 = vpack.c.b16 %v6818, %v6816
      %v6865 = vpack.c.b16 %v6819, %v6817
      %v6866 = vpack.c.b16 %v6822, %v6820
      %v6867 = vpack.c.b16 %v6823, %v6821
      %v6868 = vpack.c.b16 %v6826, %v6824
      %v6869 = vpack.c.b16 %v6827, %v6825
      %v6870 = vpack.c.b16 %v6830, %v6828
      %v6871 = vpack.c.b16 %v6831, %v6829
      %v6872 = vpack.c.b16 %v6834, %v6832
      %v6873 = vpack.c.b16 %v6835, %v6833
      %v6874 = vpack.c.b16 %v6838, %v6836
      %v6875 = vpack.c.b16 %v6839, %v6837
      %v6876 = vpack.c.b16 %v6842, %v6840
      %v6877 = vpack.c.b16 %v6843, %v6841
      %v6878 = vpack.c.b16 %v6846, %v6844
      %v6879 = vpack.c.b16 %v6847, %v6845
      %v6914 = vunpack.c.l.b16 %v6734
      %v6915 = vunpack.c.l.b16 %v6735
      %v6916 = vunpack.c.l.b16 %v6736
      %v6917 = vunpack.c.l.b16 %v6737
      %v6918 = vunpack.c.l.b16 %v6738
      %v6919 = vunpack.c.l.b16 %v6739
      %v6920 = vunpack.c.l.b16 %v6740
      %v6921 = vunpack.c.l.b16 %v6741
      %v6922 = vunpack.c.l.b16 %v6742
      %v6923 = vunpack.c.l.b16 %v6743
      %v6924 = vunpack.c.l.b16 %v6744
      %v6925 = vunpack.c.l.b16 %v6745
      %v6926 = vunpack.c.l.b16 %v6746
      %v6927 = vunpack.c.l.b16 %v6747
      %v6928 = vunpack.c.l.b16 %v6748
      %v6929 = vunpack.c.l.b16 %v6749
      %v6930 = vunpack.c.l.b16 %v6750
      %v6931 = vunpack.c.l.b16 %v6751
      %v6932 = vpack.c.b16 %v6915, %v6914
      %v6933 = vpack.c.b16 %v6917, %v6916
      %v6934 = vpack.c.b16 %v6919, %v6918
      %v6935 = vpack.c.b16 %v6921, %v6920
      %v6936 = vpack.c.b16 %v6923, %v6922
      %v6937 = vpack.c.b16 %v6925, %v6924
      %v6938 = vpack.c.b16 %v6927, %v6926
      %v6939 = vpack.c.b16 %v6929, %v6928
      %v6940 = vpack.c.b16 %v6931, %v6930
      %v6951 = vsel %vm6265, %v6849, 0
      %v6954 = vsel %vm6265, %v6851, 0
      %v6957 = vsel %vm6265, %v6853, 0
      %v6960 = vsel %vm6265, %v6855, 0
      %v6963 = vsel %vm6265, %v6857, 0
      %v6966 = vsel %vm6265, %v6859, 0
      %v6969 = vsel %vm6265, %v6861, 0
      %v6972 = vsel %vm6265, %v6863, 0
      %v6975 = vsel %vm6265, %v6865, 0
      %v6978 = vsel %vm6265, %v6867, 0
      %v6981 = vsel %vm6265, %v6869, 0
      %v6984 = vsel %vm6265, %v6871, 0
      %v6987 = vsel %vm6265, %v6873, 0
      %v6990 = vsel %vm6265, %v6875, 0
      %v6993 = vsel %vm6265, %v6877, 0
      %v6996 = vsel %vm6265, %v6879, 0
      %6998 = vmatprep.subr.bf16.mxu0 0
      %6999 = vmatpush1.bf16.msra.mxu0 %v6939
      %7000 = vmatprep.subr.bf16.mxu0 0
      %7001 = vmatpush1.bf16.msra.mxu0 %v6938
      %7002 = vmatprep.subr.bf16.mxu0 0
      %7003 = vmatpush1.bf16.msra.mxu0 %v6937
      %7004 = vmatprep.subr.bf16.mxu0 0
      %7005 = vmatpush1.bf16.msra.mxu0 %v6936
      %7006 = vmatprep.subr.bf16.mxu0 0
      %7007 = vmatpush1.bf16.msra.mxu0 %v6935
      %7008 = vmatprep.subr.bf16.mxu0 0
      %7009 = vmatpush1.bf16.msra.mxu0 %v6934
      %7010 = vmatprep.subr.bf16.mxu0 0
      %7011 = vmatpush1.bf16.msra.mxu0 %v6933
      %7012 = vmatprep.subr.bf16.mxu0 0
      %7013 = vmatpush1.bf16.msra.mxu0 %v6932
      %7014 = vmatprep.subr.bf16.mxu0 0
      %7015 = vmatpush2.bf16.msra.mxu0 0
      %7016 = vmatprep.subr.bf16.mxu0 0
      %7017 = vmatpush2.bf16.msra.mxu0 0
      %7018 = vmatprep.subr.bf16.mxu0 0
      %7019 = vmatpush2.bf16.msra.mxu0 0
      %7020 = vmatprep.subr.bf16.mxu0 0
      %7021 = vmatpush2.bf16.msra.mxu0 0
      %7022 = vmatprep.subr.bf16.mxu0 0
      %7023 = vmatpush2.bf16.msra.mxu0 0
      %7024 = vmatprep.subr.bf16.mxu0 0
      %7025 = vmatpush2.bf16.msra.mxu0 0
      %7026 = vmatprep.subr.bf16.mxu0 0
      %7027 = vmatpush2.bf16.msra.mxu0 0
      %7028 = vmatprep.subr.bf16.mxu0 0
      %7029 = vmatpush2.bf16.msra.mxu0 %v6940
      %7030 = vmatprep.mubr.bf16.mxu0 %v6951
      %7031 = vmatmul.mubr.bf16.gmra.mxu0 %v6848
      %v7032 = vpop.f32.mrf.mxu0
      %v7033 = vadd.f32 0.0, %v7032
      %v7034 = vpop.f32.mrf.mxu0
      %v7035 = vpop.f32.mrf.mxu0
      %v7036 = vadd.f32 0.0, %v7035
      %v7037 = vpop.f32.mrf.mxu0
      %7038 = vmatprep.mubr.bf16.mxu0 %v6954
      %7039 = vmatmul.mubr.bf16.gmra.mxu0 %v6850
      %v7040 = vpop.f32.mrf.mxu0
      %v7041 = vadd.f32 0.0, %v7040
      %v7042 = vpop.f32.mrf.mxu0
      %v7043 = vpop.f32.mrf.mxu0
      %v7044 = vadd.f32 0.0, %v7043
      %v7045 = vpop.f32.mrf.mxu0
      %7046 = vmatprep.mubr.bf16.mxu0 %v6957
      %7047 = vmatmul.mubr.bf16.gmra.mxu0 %v6852
      %v7048 = vpop.f32.mrf.mxu0
      %v7049 = vadd.f32 0.0, %v7048
      %v7050 = vpop.f32.mrf.mxu0
      %v7051 = vpop.f32.mrf.mxu0
      %v7052 = vadd.f32 0.0, %v7051
      %v7053 = vpop.f32.mrf.mxu0
      %7054 = vmatprep.mubr.bf16.mxu0 %v6960
      %7055 = vmatmul.mubr.bf16.gmra.mxu0 %v6854
      %v7056 = vpop.f32.mrf.mxu0
      %v7057 = vadd.f32 0.0, %v7056
      %v7058 = vpop.f32.mrf.mxu0
      %v7059 = vpop.f32.mrf.mxu0
      %v7060 = vadd.f32 0.0, %v7059
      %v7061 = vpop.f32.mrf.mxu0
      %7062 = vmatprep.mubr.bf16.mxu0 %v6963
      %7063 = vmatmul.mubr.bf16.gmra.mxu0 %v6856
      %v7064 = vpop.f32.mrf.mxu0
      %v7065 = vadd.f32 0.0, %v7064
      %v7066 = vpop.f32.mrf.mxu0
      %v7067 = vpop.f32.mrf.mxu0
      %v7068 = vadd.f32 0.0, %v7067
      %v7069 = vpop.f32.mrf.mxu0
      %7070 = vmatprep.mubr.bf16.mxu0 %v6966
      %7071 = vmatmul.mubr.bf16.gmra.mxu0 %v6858
      %v7072 = vpop.f32.mrf.mxu0
      %v7073 = vadd.f32 0.0, %v7072
      %v7074 = vpop.f32.mrf.mxu0
      %v7075 = vpop.f32.mrf.mxu0
      %v7076 = vadd.f32 0.0, %v7075
      %v7077 = vpop.f32.mrf.mxu0
      %7078 = vmatprep.mubr.bf16.mxu0 %v6969
      %7079 = vmatmul.mubr.bf16.gmra.mxu0 %v6860
      %v7080 = vpop.f32.mrf.mxu0
      %v7081 = vadd.f32 0.0, %v7080
      %v7082 = vpop.f32.mrf.mxu0
      %v7083 = vpop.f32.mrf.mxu0
      %v7084 = vadd.f32 0.0, %v7083
      %v7085 = vpop.f32.mrf.mxu0
      %7086 = vmatprep.mubr.bf16.mxu0 %v6972
      %7087 = vmatmul.mubr.bf16.gmra.mxu0 %v6862
      %v7088 = vpop.f32.mrf.mxu0
      %v7089 = vadd.f32 0.0, %v7088
      %v7090 = vpop.f32.mrf.mxu0
      %v7091 = vpop.f32.mrf.mxu0
      %v7092 = vadd.f32 0.0, %v7091
      %v7093 = vpop.f32.mrf.mxu0
      %7094 = vmatprep.mubr.bf16.mxu0 %v6975
      %7095 = vmatmul.mubr.bf16.gmra.mxu0 %v6864
      %v7096 = vpop.f32.mrf.mxu0
      %v7097 = vadd.f32 0.0, %v7096
      %v7098 = vpop.f32.mrf.mxu0
      %v7099 = vpop.f32.mrf.mxu0
      %v7100 = vadd.f32 0.0, %v7099
      %v7101 = vpop.f32.mrf.mxu0
      %7102 = vmatprep.mubr.bf16.mxu0 %v6978
      %7103 = vmatmul.mubr.bf16.gmra.mxu0 %v6866
      %v7104 = vpop.f32.mrf.mxu0
      %v7105 = vadd.f32 0.0, %v7104
      %v7106 = vpop.f32.mrf.mxu0
      %v7107 = vpop.f32.mrf.mxu0
      %v7108 = vadd.f32 0.0, %v7107
      %v7109 = vpop.f32.mrf.mxu0
      %7110 = vmatprep.mubr.bf16.mxu0 %v6981
      %7111 = vmatmul.mubr.bf16.gmra.mxu0 %v6868
      %v7112 = vpop.f32.mrf.mxu0
      %v7113 = vadd.f32 0.0, %v7112
      %v7114 = vpop.f32.mrf.mxu0
      %v7115 = vpop.f32.mrf.mxu0
      %v7116 = vadd.f32 0.0, %v7115
      %v7117 = vpop.f32.mrf.mxu0
      %7118 = vmatprep.mubr.bf16.mxu0 %v6984
      %7119 = vmatmul.mubr.bf16.gmra.mxu0 %v6870
      %v7120 = vpop.f32.mrf.mxu0
      %v7121 = vadd.f32 0.0, %v7120
      %v7122 = vpop.f32.mrf.mxu0
      %v7123 = vpop.f32.mrf.mxu0
      %v7124 = vadd.f32 0.0, %v7123
      %v7125 = vpop.f32.mrf.mxu0
      %7126 = vmatprep.mubr.bf16.mxu0 %v6987
      %7127 = vmatmul.mubr.bf16.gmra.mxu0 %v6872
      %v7128 = vpop.f32.mrf.mxu0
      %v7129 = vadd.f32 0.0, %v7128
      %v7130 = vpop.f32.mrf.mxu0
      %v7131 = vpop.f32.mrf.mxu0
      %v7132 = vadd.f32 0.0, %v7131
      %v7133 = vpop.f32.mrf.mxu0
      %7134 = vmatprep.mubr.bf16.mxu0 %v6990
      %7135 = vmatmul.mubr.bf16.gmra.mxu0 %v6874
      %v7136 = vpop.f32.mrf.mxu0
      %v7137 = vadd.f32 0.0, %v7136
      %v7138 = vpop.f32.mrf.mxu0
      %v7139 = vpop.f32.mrf.mxu0
      %v7140 = vadd.f32 0.0, %v7139
      %v7141 = vpop.f32.mrf.mxu0
      %7142 = vmatprep.mubr.bf16.mxu0 %v6993
      %7143 = vmatmul.mubr.bf16.gmra.mxu0 %v6876
      %v7144 = vpop.f32.mrf.mxu0
      %v7145 = vadd.f32 0.0, %v7144
      %v7146 = vpop.f32.mrf.mxu0
      %v7147 = vpop.f32.mrf.mxu0
      %v7148 = vadd.f32 0.0, %v7147
      %v7149 = vpop.f32.mrf.mxu0
      %7150 = vmatprep.mubr.bf16.mxu0 %v6996
      %7151 = vmatmul.mubr.bf16.gmra.mxu0 %v6878
      %v7152 = vpop.f32.mrf.mxu0
      %v7153 = vadd.f32 0.0, %v7152
      %v7154 = vpop.f32.mrf.mxu0
      %v7155 = vpop.f32.mrf.mxu0
      %v7156 = vadd.f32 0.0, %v7155
      %v7157 = vpop.f32.mrf.mxu0
      %7158 = vdwg.mxu0
      %v7159 = vadd.f32 %v6576, %v7033
      %v7160 = vadd.f32 %v6579, %v7036
      %v7161 = vadd.f32 %v6584, %v7041
      %v7162 = vadd.f32 %v6587, %v7044
      %v7163 = vadd.f32 %v6592, %v7049
      %v7164 = vadd.f32 %v6595, %v7052
      %v7165 = vadd.f32 %v6600, %v7057
      %v7166 = vadd.f32 %v6603, %v7060
      %v7167 = vadd.f32 %v6608, %v7065
      %v7168 = vadd.f32 %v6611, %v7068
      %v7169 = vadd.f32 %v6616, %v7073
      %v7170 = vadd.f32 %v6619, %v7076
      %v7171 = vadd.f32 %v6624, %v7081
      %v7172 = vadd.f32 %v6627, %v7084
      %v7173 = vadd.f32 %v6632, %v7089
      %v7174 = vadd.f32 %v6635, %v7092
      %v7175 = vadd.f32 %v6640, %v7097
      %v7176 = vadd.f32 %v6643, %v7100
      %v7177 = vadd.f32 %v6648, %v7105
      %v7178 = vadd.f32 %v6651, %v7108
      %v7179 = vadd.f32 %v6656, %v7113
      %v7180 = vadd.f32 %v6659, %v7116
      %v7181 = vadd.f32 %v6664, %v7121
      %v7182 = vadd.f32 %v6667, %v7124
      %v7183 = vadd.f32 %v6672, %v7129
      %v7184 = vadd.f32 %v6675, %v7132
      %v7185 = vadd.f32 %v6680, %v7137
      %v7186 = vadd.f32 %v6683, %v7140
      %v7187 = vadd.f32 %v6688, %v7145
      %v7188 = vadd.f32 %v6691, %v7148
      %v7189 = vadd.f32 %v6696, %v7153
      %v7190 = vadd.f32 %v6699, %v7156
      %v7191 = vld [vmem:[%s8] sm:$0x1]
      %v7193 = vlaneseq
      %v7194 = vshrl.u32 %v7193, 7
      %v7195 = vsub.s32 0, %v7194
      %v7196 = vrot.slane %v7191, %v7195
      %v7198 = vadd.f32 %v7159, %v7196
      %v7199 = vadd.f32 %v7160, %v7196
      %v7200 = vadd.f32 %v7161, %v7196
      %v7201 = vadd.f32 %v7162, %v7196
      %v7202 = vadd.f32 %v7163, %v7196
      %v7203 = vadd.f32 %v7164, %v7196
      %v7204 = vadd.f32 %v7165, %v7196
      %v7205 = vadd.f32 %v7166, %v7196
      %v7206 = vadd.f32 %v7167, %v7196
      %v7207 = vadd.f32 %v7168, %v7196
      %v7208 = vadd.f32 %v7169, %v7196
      %v7209 = vadd.f32 %v7170, %v7196
      %v7210 = vadd.f32 %v7171, %v7196
      %v7211 = vadd.f32 %v7172, %v7196
      %v7212 = vadd.f32 %v7173, %v7196
      %v7213 = vadd.f32 %v7174, %v7196
      %v7214 = vadd.f32 %v7175, %v7196
      %v7215 = vadd.f32 %v7176, %v7196
      %v7216 = vadd.f32 %v7177, %v7196
      %v7217 = vadd.f32 %v7178, %v7196
      %v7218 = vadd.f32 %v7179, %v7196
      %v7219 = vadd.f32 %v7180, %v7196
      %v7220 = vadd.f32 %v7181, %v7196
      %v7221 = vadd.f32 %v7182, %v7196
      %v7222 = vadd.f32 %v7183, %v7196
      %v7223 = vadd.f32 %v7184, %v7196
      %v7224 = vadd.f32 %v7185, %v7196
      %v7225 = vadd.f32 %v7186, %v7196
      %v7226 = vadd.f32 %v7187, %v7196
      %v7227 = vadd.f32 %v7188, %v7196
      %v7228 = vadd.f32 %v7189, %v7196
      %v7229 = vadd.f32 %v7190, %v7196
      %v7230 = vmax.f32 %v7198, 0.0
      %v7231 = vmax.f32 %v7199, 0.0
      %v7232 = vmax.f32 %v7200, 0.0
      %v7233 = vmax.f32 %v7201, 0.0
      %v7234 = vmax.f32 %v7202, 0.0
      %v7235 = vmax.f32 %v7203, 0.0
      %v7236 = vmax.f32 %v7204, 0.0
      %v7237 = vmax.f32 %v7205, 0.0
      %v7238 = vmax.f32 %v7206, 0.0
      %v7239 = vmax.f32 %v7207, 0.0
      %v7240 = vmax.f32 %v7208, 0.0
      %v7241 = vmax.f32 %v7209, 0.0
      %v7242 = vmax.f32 %v7210, 0.0
      %v7243 = vmax.f32 %v7211, 0.0
      %v7244 = vmax.f32 %v7212, 0.0
      %v7245 = vmax.f32 %v7213, 0.0
      %v7246 = vmax.f32 %v7214, 0.0
      %v7247 = vmax.f32 %v7215, 0.0
      %v7248 = vmax.f32 %v7216, 0.0
      %v7249 = vmax.f32 %v7217, 0.0
      %v7250 = vmax.f32 %v7218, 0.0
      %v7251 = vmax.f32 %v7219, 0.0
      %v7252 = vmax.f32 %v7220, 0.0
      %v7253 = vmax.f32 %v7221, 0.0
      %v7254 = vmax.f32 %v7222, 0.0
      %v7255 = vmax.f32 %v7223, 0.0
      %v7256 = vmax.f32 %v7224, 0.0
      %v7257 = vmax.f32 %v7225, 0.0
      %v7258 = vmax.f32 %v7226, 0.0
      %v7259 = vmax.f32 %v7227, 0.0
      %v7260 = vmax.f32 %v7228, 0.0
      %v7261 = vmax.f32 %v7229, 0.0
      %v7262 = vld [vmem:[%s9] sm:$0xf]
      %v7263 = vld [vmem:[%s9 + $0x4] sm:$0xf]
      %v7264 = vld [vmem:[%s9 + $0x8] sm:$0xf]
      %v7265 = vld [vmem:[%s9 + $0xc] sm:$0xf]
      %v7266 = vpack.c.bf16 %v3237, %v3236
      %v7267 = vpack.c.bf16 %v3239, %v3238
      %v7268 = vpack.c.bf16 %v3241, %v3240
      %v7269 = vpack.c.bf16 %v3243, %v3242
      %v7270 = vpack.c.bf16 %v3245, %v3244
      %v7271 = vpack.c.bf16 %v3247, %v3246
      %v7272 = vpack.c.bf16 %v3249, %v3248
      %v7273 = vpack.c.bf16 %v3251, %v3250
      %v7274 = vpack.c.bf16 %v3253, %v3252
      %v7275 = vpack.c.bf16 %v3255, %v3254
      %v7276 = vpack.c.bf16 %v3257, %v3256
      %v7277 = vpack.c.bf16 %v3259, %v3258
      %v7278 = vpack.c.bf16 %v3261, %v3260
      %v7279 = vpack.c.bf16 %v3263, %v3262
      %v7280 = vpack.c.bf16 %v3265, %v3264
      %v7281 = vpack.c.bf16 %v3267, %v3266
      %v7282 = vld [vmem:[%s9 + $0x10] sm:$0xf]
      %v7283 = vld [vmem:[%s9 + $0x14] sm:$0xf]
      %v7284 = vld [vmem:[%s9 + $0x18] sm:$0xf]
      %v7285 = vld [vmem:[%s9 + $0x1c] sm:$0xf]
      %v7290 = vunpack.c.l.b16 %v7282
      %v7291 = vunpack.c.l.b16 %v7283
      %v7292 = vunpack.c.l.b16 %v7284
      %v7293 = vunpack.c.l.b16 %v7285
      %v7294 = vpack.c.b16 %v7291, %v7290
      %v7295 = vpack.c.b16 %v7293, %v7292
      %vm7298 = vcmask 261120
      %v7300 = vsel %vm7298, %v7266, 0
      %v7303 = vsel %vm7298, %v7267, 0
      %v7306 = vsel %vm7298, %v7268, 0
      %v7309 = vsel %vm7298, %v7269, 0
      %v7312 = vsel %vm7298, %v7270, 0
      %v7315 = vsel %vm7298, %v7271, 0
      %v7318 = vsel %vm7298, %v7272, 0
      %v7321 = vsel %vm7298, %v7273, 0
      %v7324 = vsel %vm7298, %v7274, 0
      %v7327 = vsel %vm7298, %v7275, 0
      %v7330 = vsel %vm7298, %v7276, 0
      %v7333 = vsel %vm7298, %v7277, 0
      %v7336 = vsel %vm7298, %v7278, 0
      %v7339 = vsel %vm7298, %v7279, 0
      %v7342 = vsel %vm7298, %v7280, 0
      %v7345 = vsel %vm7298, %v7281, 0
      %7347 = vmatprep.subr.bf16.mxu0 0
      %7348 = vmatpush1.bf16.msra.mxu0 0
      %7349 = vmatprep.subr.bf16.mxu0 0
      %7350 = vmatpush1.bf16.msra.mxu0 0
      %7351 = vmatprep.subr.bf16.mxu0 0
      %7352 = vmatpush1.bf16.msra.mxu0 0
      %7353 = vmatprep.subr.bf16.mxu0 0
      %7354 = vmatpush1.bf16.msra.mxu0 0
      %7355 = vmatprep.subr.bf16.mxu0 0
      %7356 = vmatpush1.bf16.msra.mxu0 0
      %7357 = vmatprep.subr.bf16.mxu0 0
      %7358 = vmatpush1.bf16.msra.mxu0 0
      %7359 = vmatprep.subr.bf16.mxu0 0
      %7360 = vmatpush1.bf16.msra.mxu0 %v7295
      %7361 = vmatprep.subr.bf16.mxu0 0
      %7362 = vmatpush1.bf16.msra.mxu0 %v7294
      %7363 = vmatprep.subr.bf16.mxu0 0
      %7364 = vmatpush2.bf16.msra.mxu0 0
      %7365 = vmatprep.subr.bf16.mxu0 0
      %7366 = vmatpush2.bf16.msra.mxu0 0
      %7367 = vmatprep.subr.bf16.mxu0 0
      %7368 = vmatpush2.bf16.msra.mxu0 0
      %7369 = vmatprep.subr.bf16.mxu0 0
      %7370 = vmatpush2.bf16.msra.mxu0 0
      %7371 = vmatprep.subr.bf16.mxu0 0
      %7372 = vmatpush2.bf16.msra.mxu0 0
      %7373 = vmatprep.subr.bf16.mxu0 0
      %7374 = vmatpush2.bf16.msra.mxu0 0
      %7375 = vmatprep.subr.bf16.mxu0 0
      %7376 = vmatpush2.bf16.msra.mxu0 0
      %7377 = vmatprep.subr.bf16.mxu0 0
      %7378 = vmatpush2.bf16.msra.mxu0 0
      %7379 = vmatprep.mubr.bf16.mxu0 0
      %7380 = vmatmul.mubr.bf16.gmra.mxu0 %v7300
      %v7381 = vpop.f32.mrf.mxu0
      %v7382 = vadd.f32 0.0, %v7381
      %v7383 = vpop.f32.mrf.mxu0
      %v7384 = vpop.f32.mrf.mxu0
      %v7385 = vadd.f32 0.0, %v7384
      %v7386 = vpop.f32.mrf.mxu0
      %7387 = vmatprep.mubr.bf16.mxu0 0
      %7388 = vmatmul.mubr.bf16.gmra.mxu0 %v7303
      %v7389 = vpop.f32.mrf.mxu0
      %v7390 = vadd.f32 0.0, %v7389
      %v7391 = vpop.f32.mrf.mxu0
      %v7392 = vpop.f32.mrf.mxu0
      %v7393 = vadd.f32 0.0, %v7392
      %v7394 = vpop.f32.mrf.mxu0
      %7395 = vmatprep.mubr.bf16.mxu0 0
      %7396 = vmatmul.mubr.bf16.gmra.mxu0 %v7306
      %v7397 = vpop.f32.mrf.mxu0
      %v7398 = vadd.f32 0.0, %v7397
      %v7399 = vpop.f32.mrf.mxu0
      %v7400 = vpop.f32.mrf.mxu0
      %v7401 = vadd.f32 0.0, %v7400
      %v7402 = vpop.f32.mrf.mxu0
      %7403 = vmatprep.mubr.bf16.mxu0 0
      %7404 = vmatmul.mubr.bf16.gmra.mxu0 %v7309
      %v7405 = vpop.f32.mrf.mxu0
      %v7406 = vadd.f32 0.0, %v7405
      %v7407 = vpop.f32.mrf.mxu0
      %v7408 = vpop.f32.mrf.mxu0
      %v7409 = vadd.f32 0.0, %v7408
      %v7410 = vpop.f32.mrf.mxu0
      %7411 = vmatprep.mubr.bf16.mxu0 0
      %7412 = vmatmul.mubr.bf16.gmra.mxu0 %v7312
      %v7413 = vpop.f32.mrf.mxu0
      %v7414 = vadd.f32 0.0, %v7413
      %v7415 = vpop.f32.mrf.mxu0
      %v7416 = vpop.f32.mrf.mxu0
      %v7417 = vadd.f32 0.0, %v7416
      %v7418 = vpop.f32.mrf.mxu0
      %7419 = vmatprep.mubr.bf16.mxu0 0
      %7420 = vmatmul.mubr.bf16.gmra.mxu0 %v7315
      %v7421 = vpop.f32.mrf.mxu0
      %v7422 = vadd.f32 0.0, %v7421
      %v7423 = vpop.f32.mrf.mxu0
      %v7424 = vpop.f32.mrf.mxu0
      %v7425 = vadd.f32 0.0, %v7424
      %v7426 = vpop.f32.mrf.mxu0
      %7427 = vmatprep.mubr.bf16.mxu0 0
      %7428 = vmatmul.mubr.bf16.gmra.mxu0 %v7318
      %v7429 = vpop.f32.mrf.mxu0
      %v7430 = vadd.f32 0.0, %v7429
      %v7431 = vpop.f32.mrf.mxu0
      %v7432 = vpop.f32.mrf.mxu0
      %v7433 = vadd.f32 0.0, %v7432
      %v7434 = vpop.f32.mrf.mxu0
      %7435 = vmatprep.mubr.bf16.mxu0 0
      %7436 = vmatmul.mubr.bf16.gmra.mxu0 %v7321
      %v7437 = vpop.f32.mrf.mxu0
      %v7438 = vadd.f32 0.0, %v7437
      %v7439 = vpop.f32.mrf.mxu0
      %v7440 = vpop.f32.mrf.mxu0
      %v7441 = vadd.f32 0.0, %v7440
      %v7442 = vpop.f32.mrf.mxu0
      %7443 = vmatprep.mubr.bf16.mxu0 0
      %7444 = vmatmul.mubr.bf16.gmra.mxu0 %v7324
      %v7445 = vpop.f32.mrf.mxu0
      %v7446 = vadd.f32 0.0, %v7445
      %v7447 = vpop.f32.mrf.mxu0
      %v7448 = vpop.f32.mrf.mxu0
      %v7449 = vadd.f32 0.0, %v7448
      %v7450 = vpop.f32.mrf.mxu0
      %7451 = vmatprep.mubr.bf16.mxu0 0
      %7452 = vmatmul.mubr.bf16.gmra.mxu0 %v7327
      %v7453 = vpop.f32.mrf.mxu0
      %v7454 = vadd.f32 0.0, %v7453
      %v7455 = vpop.f32.mrf.mxu0
      %v7456 = vpop.f32.mrf.mxu0
      %v7457 = vadd.f32 0.0, %v7456
      %v7458 = vpop.f32.mrf.mxu0
      %7459 = vmatprep.mubr.bf16.mxu0 0
      %7460 = vmatmul.mubr.bf16.gmra.mxu0 %v7330
      %v7461 = vpop.f32.mrf.mxu0
      %v7462 = vadd.f32 0.0, %v7461
      %v7463 = vpop.f32.mrf.mxu0
      %v7464 = vpop.f32.mrf.mxu0
      %v7465 = vadd.f32 0.0, %v7464
      %v7466 = vpop.f32.mrf.mxu0
      %7467 = vmatprep.mubr.bf16.mxu0 0
      %7468 = vmatmul.mubr.bf16.gmra.mxu0 %v7333
      %v7469 = vpop.f32.mrf.mxu0
      %v7470 = vadd.f32 0.0, %v7469
      %v7471 = vpop.f32.mrf.mxu0
      %v7472 = vpop.f32.mrf.mxu0
      %v7473 = vadd.f32 0.0, %v7472
      %v7474 = vpop.f32.mrf.mxu0
      %7475 = vmatprep.mubr.bf16.mxu0 0
      %7476 = vmatmul.mubr.bf16.gmra.mxu0 %v7336
      %v7477 = vpop.f32.mrf.mxu0
      %v7478 = vadd.f32 0.0, %v7477
      %v7479 = vpop.f32.mrf.mxu0
      %v7480 = vpop.f32.mrf.mxu0
      %v7481 = vadd.f32 0.0, %v7480
      %v7482 = vpop.f32.mrf.mxu0
      %7483 = vmatprep.mubr.bf16.mxu0 0
      %7484 = vmatmul.mubr.bf16.gmra.mxu0 %v7339
      %v7485 = vpop.f32.mrf.mxu0
      %v7486 = vadd.f32 0.0, %v7485
      %v7487 = vpop.f32.mrf.mxu0
      %v7488 = vpop.f32.mrf.mxu0
      %v7489 = vadd.f32 0.0, %v7488
      %v7490 = vpop.f32.mrf.mxu0
      %7491 = vmatprep.mubr.bf16.mxu0 0
      %7492 = vmatmul.mubr.bf16.gmra.mxu0 %v7342
      %v7493 = vpop.f32.mrf.mxu0
      %v7494 = vadd.f32 0.0, %v7493
      %v7495 = vpop.f32.mrf.mxu0
      %v7496 = vpop.f32.mrf.mxu0
      %v7497 = vadd.f32 0.0, %v7496
      %v7498 = vpop.f32.mrf.mxu0
      %7499 = vmatprep.mubr.bf16.mxu0 0
      %7500 = vmatmul.mubr.bf16.gmra.mxu0 %v7345
      %v7501 = vpop.f32.mrf.mxu0
      %v7502 = vadd.f32 0.0, %v7501
      %v7503 = vpop.f32.mrf.mxu0
      %v7504 = vpop.f32.mrf.mxu0
      %v7505 = vadd.f32 0.0, %v7504
      %v7506 = vpop.f32.mrf.mxu0
      %7507 = vdwg.mxu0
      %v7512 = vunpack.c.l.b16 %v7262
      %v7513 = vunpack.c.l.b16 %v7263
      %v7514 = vunpack.c.l.b16 %v7264
      %v7515 = vunpack.c.l.b16 %v7265
      %v7516 = vpack.c.b16 %v7513, %v7512
      %v7517 = vpack.c.b16 %v7515, %v7514
      %v7521 = vsel %vm7298, %v1210, 0
      %v7524 = vsel %vm7298, %v1211, 0
      %v7527 = vsel %vm7298, %v1212, 0
      %v7530 = vsel %vm7298, %v1213, 0
      %v7533 = vsel %vm7298, %v1214, 0
      %v7536 = vsel %vm7298, %v1215, 0
      %v7539 = vsel %vm7298, %v1216, 0
      %v7542 = vsel %vm7298, %v1217, 0
      %v7545 = vsel %vm7298, %v1218, 0
      %v7548 = vsel %vm7298, %v1219, 0
      %v7551 = vsel %vm7298, %v1220, 0
      %v7554 = vsel %vm7298, %v1221, 0
      %v7557 = vsel %vm7298, %v1222, 0
      %v7560 = vsel %vm7298, %v1223, 0
      %v7563 = vsel %vm7298, %v1224, 0
      %v7566 = vsel %vm7298, %v1225, 0
      %7568 = vmatprep.subr.bf16.mxu0 0
      %7569 = vmatpush1.bf16.msra.mxu0 0
      %7570 = vmatprep.subr.bf16.mxu0 0
      %7571 = vmatpush1.bf16.msra.mxu0 0
      %7572 = vmatprep.subr.bf16.mxu0 0
      %7573 = vmatpush1.bf16.msra.mxu0 0
      %7574 = vmatprep.subr.bf16.mxu0 0
      %7575 = vmatpush1.bf16.msra.mxu0 0
      %7576 = vmatprep.subr.bf16.mxu0 0
      %7577 = vmatpush1.bf16.msra.mxu0 0
      %7578 = vmatprep.subr.bf16.mxu0 0
      %7579 = vmatpush1.bf16.msra.mxu0 0
      %7580 = vmatprep.subr.bf16.mxu0 0
      %7581 = vmatpush1.bf16.msra.mxu0 %v7517
      %7582 = vmatprep.subr.bf16.mxu0 0
      %7583 = vmatpush1.bf16.msra.mxu0 %v7516
      %7584 = vmatprep.subr.bf16.mxu0 0
      %7585 = vmatpush2.bf16.msra.mxu0 0
      %7586 = vmatprep.subr.bf16.mxu0 0
      %7587 = vmatpush2.bf16.msra.mxu0 0
      %7588 = vmatprep.subr.bf16.mxu0 0
      %7589 = vmatpush2.bf16.msra.mxu0 0
      %7590 = vmatprep.subr.bf16.mxu0 0
      %7591 = vmatpush2.bf16.msra.mxu0 0
      %7592 = vmatprep.subr.bf16.mxu0 0
      %7593 = vmatpush2.bf16.msra.mxu0 0
      %7594 = vmatprep.subr.bf16.mxu0 0
      %7595 = vmatpush2.bf16.msra.mxu0 0
      %7596 = vmatprep.subr.bf16.mxu0 0
      %7597 = vmatpush2.bf16.msra.mxu0 0
      %7598 = vmatprep.subr.bf16.mxu0 0
      %7599 = vmatpush2.bf16.msra.mxu0 0
      %7600 = vmatprep.mubr.bf16.mxu0 0
      %7601 = vmatmul.mubr.bf16.gmra.mxu0 %v7521
      %v7602 = vpop.f32.mrf.mxu0
      %v7603 = vadd.f32 %v7382, %v7602
      %v7604 = vpop.f32.mrf.mxu0
      %v7605 = vpop.f32.mrf.mxu0
      %v7606 = vadd.f32 %v7385, %v7605
      %v7607 = vpop.f32.mrf.mxu0
      %7608 = vmatprep.mubr.bf16.mxu0 0
      %7609 = vmatmul.mubr.bf16.gmra.mxu0 %v7524
      %v7610 = vpop.f32.mrf.mxu0
      %v7611 = vadd.f32 %v7390, %v7610
      %v7612 = vpop.f32.mrf.mxu0
      %v7613 = vpop.f32.mrf.mxu0
      %v7614 = vadd.f32 %v7393, %v7613
      %v7615 = vpop.f32.mrf.mxu0
      %7616 = vmatprep.mubr.bf16.mxu0 0
      %7617 = vmatmul.mubr.bf16.gmra.mxu0 %v7527
      %v7618 = vpop.f32.mrf.mxu0
      %v7619 = vadd.f32 %v7398, %v7618
      %v7620 = vpop.f32.mrf.mxu0
      %v7621 = vpop.f32.mrf.mxu0
      %v7622 = vadd.f32 %v7401, %v7621
      %v7623 = vpop.f32.mrf.mxu0
      %7624 = vmatprep.mubr.bf16.mxu0 0
      %7625 = vmatmul.mubr.bf16.gmra.mxu0 %v7530
      %v7626 = vpop.f32.mrf.mxu0
      %v7627 = vadd.f32 %v7406, %v7626
      %v7628 = vpop.f32.mrf.mxu0
      %v7629 = vpop.f32.mrf.mxu0
      %v7630 = vadd.f32 %v7409, %v7629
      %v7631 = vpop.f32.mrf.mxu0
      %7632 = vmatprep.mubr.bf16.mxu0 0
      %7633 = vmatmul.mubr.bf16.gmra.mxu0 %v7533
      %v7634 = vpop.f32.mrf.mxu0
      %v7635 = vadd.f32 %v7414, %v7634
      %v7636 = vpop.f32.mrf.mxu0
      %v7637 = vpop.f32.mrf.mxu0
      %v7638 = vadd.f32 %v7417, %v7637
      %v7639 = vpop.f32.mrf.mxu0
      %7640 = vmatprep.mubr.bf16.mxu0 0
      %7641 = vmatmul.mubr.bf16.gmra.mxu0 %v7536
      %v7642 = vpop.f32.mrf.mxu0
      %v7643 = vadd.f32 %v7422, %v7642
      %v7644 = vpop.f32.mrf.mxu0
      %v7645 = vpop.f32.mrf.mxu0
      %v7646 = vadd.f32 %v7425, %v7645
      %v7647 = vpop.f32.mrf.mxu0
      %7648 = vmatprep.mubr.bf16.mxu0 0
      %7649 = vmatmul.mubr.bf16.gmra.mxu0 %v7539
      %v7650 = vpop.f32.mrf.mxu0
      %v7651 = vadd.f32 %v7430, %v7650
      %v7652 = vpop.f32.mrf.mxu0
      %v7653 = vpop.f32.mrf.mxu0
      %v7654 = vadd.f32 %v7433, %v7653
      %v7655 = vpop.f32.mrf.mxu0
      %7656 = vmatprep.mubr.bf16.mxu0 0
      %7657 = vmatmul.mubr.bf16.gmra.mxu0 %v7542
      %v7658 = vpop.f32.mrf.mxu0
      %v7659 = vadd.f32 %v7438, %v7658
      %v7660 = vpop.f32.mrf.mxu0
      %v7661 = vpop.f32.mrf.mxu0
      %v7662 = vadd.f32 %v7441, %v7661
      %v7663 = vpop.f32.mrf.mxu0
      %7664 = vmatprep.mubr.bf16.mxu0 0
      %7665 = vmatmul.mubr.bf16.gmra.mxu0 %v7545
      %v7666 = vpop.f32.mrf.mxu0
      %v7667 = vadd.f32 %v7446, %v7666
      %v7668 = vpop.f32.mrf.mxu0
      %v7669 = vpop.f32.mrf.mxu0
      %v7670 = vadd.f32 %v7449, %v7669
      %v7671 = vpop.f32.mrf.mxu0
      %7672 = vmatprep.mubr.bf16.mxu0 0
      %7673 = vmatmul.mubr.bf16.gmra.mxu0 %v7548
      %v7674 = vpop.f32.mrf.mxu0
      %v7675 = vadd.f32 %v7454, %v7674
      %v7676 = vpop.f32.mrf.mxu0
      %v7677 = vpop.f32.mrf.mxu0
      %v7678 = vadd.f32 %v7457, %v7677
      %v7679 = vpop.f32.mrf.mxu0
      %7680 = vmatprep.mubr.bf16.mxu0 0
      %7681 = vmatmul.mubr.bf16.gmra.mxu0 %v7551
      %v7682 = vpop.f32.mrf.mxu0
      %v7683 = vadd.f32 %v7462, %v7682
      %v7684 = vpop.f32.mrf.mxu0
      %v7685 = vpop.f32.mrf.mxu0
      %v7686 = vadd.f32 %v7465, %v7685
      %v7687 = vpop.f32.mrf.mxu0
      %7688 = vmatprep.mubr.bf16.mxu0 0
      %7689 = vmatmul.mubr.bf16.gmra.mxu0 %v7554
      %v7690 = vpop.f32.mrf.mxu0
      %v7691 = vadd.f32 %v7470, %v7690
      %v7692 = vpop.f32.mrf.mxu0
      %v7693 = vpop.f32.mrf.mxu0
      %v7694 = vadd.f32 %v7473, %v7693
      %v7695 = vpop.f32.mrf.mxu0
      %7696 = vmatprep.mubr.bf16.mxu0 0
      %7697 = vmatmul.mubr.bf16.gmra.mxu0 %v7557
      %v7698 = vpop.f32.mrf.mxu0
      %v7699 = vadd.f32 %v7478, %v7698
      %v7700 = vpop.f32.mrf.mxu0
      %v7701 = vpop.f32.mrf.mxu0
      %v7702 = vadd.f32 %v7481, %v7701
      %v7703 = vpop.f32.mrf.mxu0
      %7704 = vmatprep.mubr.bf16.mxu0 0
      %7705 = vmatmul.mubr.bf16.gmra.mxu0 %v7560
      %v7706 = vpop.f32.mrf.mxu0
      %v7707 = vadd.f32 %v7486, %v7706
      %v7708 = vpop.f32.mrf.mxu0
      %v7709 = vpop.f32.mrf.mxu0
      %v7710 = vadd.f32 %v7489, %v7709
      %v7711 = vpop.f32.mrf.mxu0
      %7712 = vmatprep.mubr.bf16.mxu0 0
      %7713 = vmatmul.mubr.bf16.gmra.mxu0 %v7563
      %v7714 = vpop.f32.mrf.mxu0
      %v7715 = vadd.f32 %v7494, %v7714
      %v7716 = vpop.f32.mrf.mxu0
      %v7717 = vpop.f32.mrf.mxu0
      %v7718 = vadd.f32 %v7497, %v7717
      %v7719 = vpop.f32.mrf.mxu0
      %7720 = vmatprep.mubr.bf16.mxu0 0
      %7721 = vmatmul.mubr.bf16.gmra.mxu0 %v7566
      %v7722 = vpop.f32.mrf.mxu0
      %v7723 = vadd.f32 %v7502, %v7722
      %v7724 = vpop.f32.mrf.mxu0
      %v7725 = vpop.f32.mrf.mxu0
      %v7726 = vadd.f32 %v7505, %v7725
      %v7727 = vpop.f32.mrf.mxu0
      %7728 = vdwg.mxu0
      %v7729 = vpack.c.bf16 %v7231, %v7230
      %v7730 = vpack.c.bf16 %v7233, %v7232
      %v7731 = vpack.c.bf16 %v7235, %v7234
      %v7732 = vpack.c.bf16 %v7237, %v7236
      %v7733 = vpack.c.bf16 %v7239, %v7238
      %v7734 = vpack.c.bf16 %v7241, %v7240
      %v7735 = vpack.c.bf16 %v7243, %v7242
      %v7736 = vpack.c.bf16 %v7245, %v7244
      %v7737 = vpack.c.bf16 %v7247, %v7246
      %v7738 = vpack.c.bf16 %v7249, %v7248
      %v7739 = vpack.c.bf16 %v7251, %v7250
      %v7740 = vpack.c.bf16 %v7253, %v7252
      %v7741 = vpack.c.bf16 %v7255, %v7254
      %v7742 = vpack.c.bf16 %v7257, %v7256
      %v7743 = vpack.c.bf16 %v7259, %v7258
      %v7744 = vpack.c.bf16 %v7261, %v7260
      %v7745 = vld [vmem:[%s9 + $0x20] sm:$0xf]
      %v7746 = vld [vmem:[%s9 + $0x24] sm:$0xf]
      %v7747 = vld [vmem:[%s9 + $0x28] sm:$0xf]
      %v7748 = vld [vmem:[%s9 + $0x2c] sm:$0xf]
      %v7749 = vld [vmem:[%s9 + $0x30] sm:$0xf]
      %v7750 = vld [vmem:[%s9 + $0x34] sm:$0xf]
      %v7751 = vld [vmem:[%s9 + $0x38] sm:$0xf]
      %v7752 = vld [vmem:[%s9 + $0x3c] sm:$0xf]
      %v7761 = vunpack.c.l.b16 %v7745
      %v7762 = vunpack.c.l.b16 %v7746
      %v7763 = vunpack.c.l.b16 %v7747
      %v7764 = vunpack.c.l.b16 %v7748
      %v7765 = vunpack.c.l.b16 %v7749
      %v7766 = vunpack.c.l.b16 %v7750
      %v7767 = vunpack.c.l.b16 %v7751
      %v7768 = vunpack.c.l.b16 %v7752
      %v7769 = vpack.c.b16 %v7762, %v7761
      %v7770 = vpack.c.b16 %v7764, %v7763
      %v7771 = vpack.c.b16 %v7766, %v7765
      %v7772 = vpack.c.b16 %v7768, %v7767
      %vm7777 = vcmask 523264
      %v7779 = vsel %vm7777, %v7729, 0
      %v7782 = vsel %vm7777, %v7730, 0
      %v7785 = vsel %vm7777, %v7731, 0
      %v7788 = vsel %vm7777, %v7732, 0
      %v7791 = vsel %vm7777, %v7733, 0
      %v7794 = vsel %vm7777, %v7734, 0
      %v7797 = vsel %vm7777, %v7735, 0
      %v7800 = vsel %vm7777, %v7736, 0
      %v7803 = vsel %vm7777, %v7737, 0
      %v7806 = vsel %vm7777, %v7738, 0
      %v7809 = vsel %vm7777, %v7739, 0
      %v7812 = vsel %vm7777, %v7740, 0
      %v7815 = vsel %vm7777, %v7741, 0
      %v7818 = vsel %vm7777, %v7742, 0
      %v7821 = vsel %vm7777, %v7743, 0
      %v7824 = vsel %vm7777, %v7744, 0
      %7826 = vmatprep.subr.bf16.mxu0 0
      %7827 = vmatpush1.bf16.msra.mxu0 0
      %7828 = vmatprep.subr.bf16.mxu0 0
      %7829 = vmatpush1.bf16.msra.mxu0 0
      %7830 = vmatprep.subr.bf16.mxu0 0
      %7831 = vmatpush1.bf16.msra.mxu0 0
      %7832 = vmatprep.subr.bf16.mxu0 0
      %7833 = vmatpush1.bf16.msra.mxu0 0
      %7834 = vmatprep.subr.bf16.mxu0 0
      %7835 = vmatpush1.bf16.msra.mxu0 %v7772
      %7836 = vmatprep.subr.bf16.mxu0 0
      %7837 = vmatpush1.bf16.msra.mxu0 %v7771
      %7838 = vmatprep.subr.bf16.mxu0 0
      %7839 = vmatpush1.bf16.msra.mxu0 %v7770
      %7840 = vmatprep.subr.bf16.mxu0 0
      %7841 = vmatpush1.bf16.msra.mxu0 %v7769
      %7842 = vmatprep.subr.bf16.mxu0 0
      %7843 = vmatpush2.bf16.msra.mxu0 0
      %7844 = vmatprep.subr.bf16.mxu0 0
      %7845 = vmatpush2.bf16.msra.mxu0 0
      %7846 = vmatprep.subr.bf16.mxu0 0
      %7847 = vmatpush2.bf16.msra.mxu0 0
      %7848 = vmatprep.subr.bf16.mxu0 0
      %7849 = vmatpush2.bf16.msra.mxu0 0
      %7850 = vmatprep.subr.bf16.mxu0 0
      %7851 = vmatpush2.bf16.msra.mxu0 0
      %7852 = vmatprep.subr.bf16.mxu0 0
      %7853 = vmatpush2.bf16.msra.mxu0 0
      %7854 = vmatprep.subr.bf16.mxu0 0
      %7855 = vmatpush2.bf16.msra.mxu0 0
      %7856 = vmatprep.subr.bf16.mxu0 0
      %7857 = vmatpush2.bf16.msra.mxu0 0
      %7858 = vmatprep.mubr.bf16.mxu0 0
      %7859 = vmatmul.mubr.bf16.gmra.mxu0 %v7779
      %v7860 = vpop.f32.mrf.mxu0
      %v7861 = vadd.f32 0.0, %v7860
      %v7862 = vpop.f32.mrf.mxu0
      %v7863 = vpop.f32.mrf.mxu0
      %v7864 = vadd.f32 0.0, %v7863
      %v7865 = vpop.f32.mrf.mxu0
      %7866 = vmatprep.mubr.bf16.mxu0 0
      %7867 = vmatmul.mubr.bf16.gmra.mxu0 %v7782
      %v7868 = vpop.f32.mrf.mxu0
      %v7869 = vadd.f32 0.0, %v7868
      %v7870 = vpop.f32.mrf.mxu0
      %v7871 = vpop.f32.mrf.mxu0
      %v7872 = vadd.f32 0.0, %v7871
      %v7873 = vpop.f32.mrf.mxu0
      %7874 = vmatprep.mubr.bf16.mxu0 0
      %7875 = vmatmul.mubr.bf16.gmra.mxu0 %v7785
      %v7876 = vpop.f32.mrf.mxu0
      %v7877 = vadd.f32 0.0, %v7876
      %v7878 = vpop.f32.mrf.mxu0
      %v7879 = vpop.f32.mrf.mxu0
      %v7880 = vadd.f32 0.0, %v7879
      %v7881 = vpop.f32.mrf.mxu0
      %7882 = vmatprep.mubr.bf16.mxu0 0
      %7883 = vmatmul.mubr.bf16.gmra.mxu0 %v7788
      %v7884 = vpop.f32.mrf.mxu0
      %v7885 = vadd.f32 0.0, %v7884
      %v7886 = vpop.f32.mrf.mxu0
      %v7887 = vpop.f32.mrf.mxu0
      %v7888 = vadd.f32 0.0, %v7887
      %v7889 = vpop.f32.mrf.mxu0
      %7890 = vmatprep.mubr.bf16.mxu0 0
      %7891 = vmatmul.mubr.bf16.gmra.mxu0 %v7791
      %v7892 = vpop.f32.mrf.mxu0
      %v7893 = vadd.f32 0.0, %v7892
      %v7894 = vpop.f32.mrf.mxu0
      %v7895 = vpop.f32.mrf.mxu0
      %v7896 = vadd.f32 0.0, %v7895
      %v7897 = vpop.f32.mrf.mxu0
      %7898 = vmatprep.mubr.bf16.mxu0 0
      %7899 = vmatmul.mubr.bf16.gmra.mxu0 %v7794
      %v7900 = vpop.f32.mrf.mxu0
      %v7901 = vadd.f32 0.0, %v7900
      %v7902 = vpop.f32.mrf.mxu0
      %v7903 = vpop.f32.mrf.mxu0
      %v7904 = vadd.f32 0.0, %v7903
      %v7905 = vpop.f32.mrf.mxu0
      %7906 = vmatprep.mubr.bf16.mxu0 0
      %7907 = vmatmul.mubr.bf16.gmra.mxu0 %v7797
      %v7908 = vpop.f32.mrf.mxu0
      %v7909 = vadd.f32 0.0, %v7908
      %v7910 = vpop.f32.mrf.mxu0
      %v7911 = vpop.f32.mrf.mxu0
      %v7912 = vadd.f32 0.0, %v7911
      %v7913 = vpop.f32.mrf.mxu0
      %7914 = vmatprep.mubr.bf16.mxu0 0
      %7915 = vmatmul.mubr.bf16.gmra.mxu0 %v7800
      %v7916 = vpop.f32.mrf.mxu0
      %v7917 = vadd.f32 0.0, %v7916
      %v7918 = vpop.f32.mrf.mxu0
      %v7919 = vpop.f32.mrf.mxu0
      %v7920 = vadd.f32 0.0, %v7919
      %v7921 = vpop.f32.mrf.mxu0
      %7922 = vmatprep.mubr.bf16.mxu0 0
      %7923 = vmatmul.mubr.bf16.gmra.mxu0 %v7803
      %v7924 = vpop.f32.mrf.mxu0
      %v7925 = vadd.f32 0.0, %v7924
      %v7926 = vpop.f32.mrf.mxu0
      %v7927 = vpop.f32.mrf.mxu0
      %v7928 = vadd.f32 0.0, %v7927
      %v7929 = vpop.f32.mrf.mxu0
      %7930 = vmatprep.mubr.bf16.mxu0 0
      %7931 = vmatmul.mubr.bf16.gmra.mxu0 %v7806
      %v7932 = vpop.f32.mrf.mxu0
      %v7933 = vadd.f32 0.0, %v7932
      %v7934 = vpop.f32.mrf.mxu0
      %v7935 = vpop.f32.mrf.mxu0
      %v7936 = vadd.f32 0.0, %v7935
      %v7937 = vpop.f32.mrf.mxu0
      %7938 = vmatprep.mubr.bf16.mxu0 0
      %7939 = vmatmul.mubr.bf16.gmra.mxu0 %v7809
      %v7940 = vpop.f32.mrf.mxu0
      %v7941 = vadd.f32 0.0, %v7940
      %v7942 = vpop.f32.mrf.mxu0
      %v7943 = vpop.f32.mrf.mxu0
      %v7944 = vadd.f32 0.0, %v7943
      %v7945 = vpop.f32.mrf.mxu0
      %7946 = vmatprep.mubr.bf16.mxu0 0
      %7947 = vmatmul.mubr.bf16.gmra.mxu0 %v7812
      %v7948 = vpop.f32.mrf.mxu0
      %v7949 = vadd.f32 0.0, %v7948
      %v7950 = vpop.f32.mrf.mxu0
      %v7951 = vpop.f32.mrf.mxu0
      %v7952 = vadd.f32 0.0, %v7951
      %v7953 = vpop.f32.mrf.mxu0
      %7954 = vmatprep.mubr.bf16.mxu0 0
      %7955 = vmatmul.mubr.bf16.gmra.mxu0 %v7815
      %v7956 = vpop.f32.mrf.mxu0
      %v7957 = vadd.f32 0.0, %v7956
      %v7958 = vpop.f32.mrf.mxu0
      %v7959 = vpop.f32.mrf.mxu0
      %v7960 = vadd.f32 0.0, %v7959
      %v7961 = vpop.f32.mrf.mxu0
      %7962 = vmatprep.mubr.bf16.mxu0 0
      %7963 = vmatmul.mubr.bf16.gmra.mxu0 %v7818
      %v7964 = vpop.f32.mrf.mxu0
      %v7965 = vadd.f32 0.0, %v7964
      %v7966 = vpop.f32.mrf.mxu0
      %v7967 = vpop.f32.mrf.mxu0
      %v7968 = vadd.f32 0.0, %v7967
      %v7969 = vpop.f32.mrf.mxu0
      %7970 = vmatprep.mubr.bf16.mxu0 0
      %7971 = vmatmul.mubr.bf16.gmra.mxu0 %v7821
      %v7972 = vpop.f32.mrf.mxu0
      %v7973 = vadd.f32 0.0, %v7972
      %v7974 = vpop.f32.mrf.mxu0
      %v7975 = vpop.f32.mrf.mxu0
      %v7976 = vadd.f32 0.0, %v7975
      %v7977 = vpop.f32.mrf.mxu0
      %7978 = vmatprep.mubr.bf16.mxu0 0
      %7979 = vmatmul.mubr.bf16.gmra.mxu0 %v7824
      %v7980 = vpop.f32.mrf.mxu0
      %v7981 = vadd.f32 0.0, %v7980
      %v7982 = vpop.f32.mrf.mxu0
      %v7983 = vpop.f32.mrf.mxu0
      %v7984 = vadd.f32 0.0, %v7983
      %v7985 = vpop.f32.mrf.mxu0
      %7986 = vdwg.mxu0
      %v7987 = vadd.f32 %v7603, %v7861
      %v7988 = vadd.f32 %v7606, %v7864
      %v7989 = vadd.f32 %v7611, %v7869
      %v7990 = vadd.f32 %v7614, %v7872
      %v7991 = vadd.f32 %v7619, %v7877
      %v7992 = vadd.f32 %v7622, %v7880
      %v7993 = vadd.f32 %v7627, %v7885
      %v7994 = vadd.f32 %v7630, %v7888
      %v7995 = vadd.f32 %v7635, %v7893
      %v7996 = vadd.f32 %v7638, %v7896
      %v7997 = vadd.f32 %v7643, %v7901
      %v7998 = vadd.f32 %v7646, %v7904
      %v7999 = vadd.f32 %v7651, %v7909
      %v8000 = vadd.f32 %v7654, %v7912
      %v8001 = vadd.f32 %v7659, %v7917
      %v8002 = vadd.f32 %v7662, %v7920
      %v8003 = vadd.f32 %v7667, %v7925
      %v8004 = vadd.f32 %v7670, %v7928
      %v8005 = vadd.f32 %v7675, %v7933
      %v8006 = vadd.f32 %v7678, %v7936
      %v8007 = vadd.f32 %v7683, %v7941
      %v8008 = vadd.f32 %v7686, %v7944
      %v8009 = vadd.f32 %v7691, %v7949
      %v8010 = vadd.f32 %v7694, %v7952
      %v8011 = vadd.f32 %v7699, %v7957
      %v8012 = vadd.f32 %v7702, %v7960
      %v8013 = vadd.f32 %v7707, %v7965
      %v8014 = vadd.f32 %v7710, %v7968
      %v8015 = vadd.f32 %v7715, %v7973
      %v8016 = vadd.f32 %v7718, %v7976
      %v8017 = vadd.f32 %v7723, %v7981
      %v8018 = vadd.f32 %v7726, %v7984
      %v8019 = vld [vmem:[%s10] sm:$0x1]
      %v8021 = vlaneseq
      %v8022 = vshrl.u32 %v8021, 7
      %v8023 = vsub.s32 0, %v8022
      %v8024 = vrot.slane %v8019, %v8023
      %v8026 = vadd.f32 %v7987, %v8024
      %v8027 = vadd.f32 %v7988, %v8024
      %v8028 = vadd.f32 %v7989, %v8024
      %v8029 = vadd.f32 %v7990, %v8024
      %v8030 = vadd.f32 %v7991, %v8024
      %v8031 = vadd.f32 %v7992, %v8024
      %v8032 = vadd.f32 %v7993, %v8024
      %v8033 = vadd.f32 %v7994, %v8024
      %v8034 = vadd.f32 %v7995, %v8024
      %v8035 = vadd.f32 %v7996, %v8024
      %v8036 = vadd.f32 %v7997, %v8024
      %v8037 = vadd.f32 %v7998, %v8024
      %v8038 = vadd.f32 %v7999, %v8024
      %v8039 = vadd.f32 %v8000, %v8024
      %v8040 = vadd.f32 %v8001, %v8024
      %v8041 = vadd.f32 %v8002, %v8024
      %v8042 = vadd.f32 %v8003, %v8024
      %v8043 = vadd.f32 %v8004, %v8024
      %v8044 = vadd.f32 %v8005, %v8024
      %v8045 = vadd.f32 %v8006, %v8024
      %v8046 = vadd.f32 %v8007, %v8024
      %v8047 = vadd.f32 %v8008, %v8024
      %v8048 = vadd.f32 %v8009, %v8024
      %v8049 = vadd.f32 %v8010, %v8024
      %v8050 = vadd.f32 %v8011, %v8024
      %v8051 = vadd.f32 %v8012, %v8024
      %v8052 = vadd.f32 %v8013, %v8024
      %v8053 = vadd.f32 %v8014, %v8024
      %v8054 = vadd.f32 %v8015, %v8024
      %v8055 = vadd.f32 %v8016, %v8024
      %v8056 = vadd.f32 %v8017, %v8024
      %v8057 = vadd.f32 %v8018, %v8024
      %v8058 = vmax.f32 %v8026, 0.0
      %v8059 = vmax.f32 %v8027, 0.0
      %v8060 = vmax.f32 %v8028, 0.0
      %v8061 = vmax.f32 %v8029, 0.0
      %v8062 = vmax.f32 %v8030, 0.0
      %v8063 = vmax.f32 %v8031, 0.0
      %v8064 = vmax.f32 %v8032, 0.0
      %v8065 = vmax.f32 %v8033, 0.0
      %v8066 = vmax.f32 %v8034, 0.0
      %v8067 = vmax.f32 %v8035, 0.0
      %v8068 = vmax.f32 %v8036, 0.0
      %v8069 = vmax.f32 %v8037, 0.0
      %v8070 = vmax.f32 %v8038, 0.0
      %v8071 = vmax.f32 %v8039, 0.0
      %v8072 = vmax.f32 %v8040, 0.0
      %v8073 = vmax.f32 %v8041, 0.0
      %v8074 = vmax.f32 %v8042, 0.0
      %v8075 = vmax.f32 %v8043, 0.0
      %v8076 = vmax.f32 %v8044, 0.0
      %v8077 = vmax.f32 %v8045, 0.0
      %v8078 = vmax.f32 %v8046, 0.0
      %v8079 = vmax.f32 %v8047, 0.0
      %v8080 = vmax.f32 %v8048, 0.0
      %v8081 = vmax.f32 %v8049, 0.0
      %v8082 = vmax.f32 %v8050, 0.0
      %v8083 = vmax.f32 %v8051, 0.0
      %v8084 = vmax.f32 %v8052, 0.0
      %v8085 = vmax.f32 %v8053, 0.0
      %v8086 = vmax.f32 %v8054, 0.0
      %v8087 = vmax.f32 %v8055, 0.0
      %v8088 = vmax.f32 %v8056, 0.0
      %v8089 = vmax.f32 %v8057, 0.0
      %v8090 = vadd.f32 %v908, %v8058
      %v8091 = vadd.f32 %v909, %v8059
      %v8092 = vadd.f32 %v910, %v8060
      %v8093 = vadd.f32 %v911, %v8061
      %v8094 = vadd.f32 %v912, %v8062
      %v8095 = vadd.f32 %v913, %v8063
      %v8096 = vadd.f32 %v914, %v8064
      %v8097 = vadd.f32 %v915, %v8065
      %v8098 = vadd.f32 %v916, %v8066
      %v8099 = vadd.f32 %v917, %v8067
      %v8100 = vadd.f32 %v918, %v8068
      %v8101 = vadd.f32 %v919, %v8069
      %v8102 = vadd.f32 %v920, %v8070
      %v8103 = vadd.f32 %v921, %v8071
      %v8104 = vadd.f32 %v922, %v8072
      %v8105 = vadd.f32 %v923, %v8073
      %v8106 = vadd.f32 %v924, %v8074
      %v8107 = vadd.f32 %v925, %v8075
      %v8108 = vadd.f32 %v926, %v8076
      %v8109 = vadd.f32 %v927, %v8077
      %v8110 = vadd.f32 %v928, %v8078
      %v8111 = vadd.f32 %v929, %v8079
      %v8112 = vadd.f32 %v930, %v8080
      %v8113 = vadd.f32 %v931, %v8081
      %v8114 = vadd.f32 %v932, %v8082
      %v8115 = vadd.f32 %v933, %v8083
      %v8116 = vadd.f32 %v934, %v8084
      %v8117 = vadd.f32 %v935, %v8085
      %v8118 = vadd.f32 %v936, %v8086
      %v8119 = vadd.f32 %v937, %v8087
      %v8120 = vadd.f32 %v938, %v8088
      %v8121 = vadd.f32 %v939, %v8089
      %v8122 = vmax.f32 %v8090, 0.0
      %v8123 = vmax.f32 %v8091, 0.0
      %v8124 = vmax.f32 %v8092, 0.0
      %v8125 = vmax.f32 %v8093, 0.0
      %v8126 = vmax.f32 %v8094, 0.0
      %v8127 = vmax.f32 %v8095, 0.0
      %v8128 = vmax.f32 %v8096, 0.0
      %v8129 = vmax.f32 %v8097, 0.0
      %v8130 = vmax.f32 %v8098, 0.0
      %v8131 = vmax.f32 %v8099, 0.0
      %v8132 = vmax.f32 %v8100, 0.0
      %v8133 = vmax.f32 %v8101, 0.0
      %v8134 = vmax.f32 %v8102, 0.0
      %v8135 = vmax.f32 %v8103, 0.0
      %v8136 = vmax.f32 %v8104, 0.0
      %v8137 = vmax.f32 %v8105, 0.0
      %v8138 = vmax.f32 %v8106, 0.0
      %v8139 = vmax.f32 %v8107, 0.0
      %v8140 = vmax.f32 %v8108, 0.0
      %v8141 = vmax.f32 %v8109, 0.0
      %v8142 = vmax.f32 %v8110, 0.0
      %v8143 = vmax.f32 %v8111, 0.0
      %v8144 = vmax.f32 %v8112, 0.0
      %v8145 = vmax.f32 %v8113, 0.0
      %v8146 = vmax.f32 %v8114, 0.0
      %v8147 = vmax.f32 %v8115, 0.0
      %v8148 = vmax.f32 %v8116, 0.0
      %v8149 = vmax.f32 %v8117, 0.0
      %v8150 = vmax.f32 %v8118, 0.0
      %v8151 = vmax.f32 %v8119, 0.0
      %v8152 = vmax.f32 %v8120, 0.0
      %v8153 = vmax.f32 %v8121, 0.0
      %8154 = vst.msk [vmem:[%s386] sm:$0xff] %vm964, %v8122
      %8155 = vst.msk [vmem:[%s386 + $0x8] sm:$0xff] %vm964, %v8123
      %8156 = vst.msk [vmem:[%s386 + $0x10] sm:$0xff] %vm964, %v8124
      %8157 = vst.msk [vmem:[%s386 + $0x18] sm:$0xff] %vm964, %v8125
      %8158 = vst.msk [vmem:[%s386 + $0x20] sm:$0xff] %vm964, %v8126
      %8159 = vst.msk [vmem:[%s386 + $0x28] sm:$0xff] %vm964, %v8127
      %8160 = vst.msk [vmem:[%s386 + $0x30] sm:$0xff] %vm964, %v8128
      %8161 = vst.msk [vmem:[%s386 + $0x38] sm:$0xff] %vm964, %v8129
      %8162 = vst.msk [vmem:[%s386 + $0x40] sm:$0xff] %vm964, %v8130
      %8163 = vst.msk [vmem:[%s386 + $0x48] sm:$0xff] %vm964, %v8131
      %8164 = vst.msk [vmem:[%s386 + $0x50] sm:$0xff] %vm964, %v8132
      %8165 = vst.msk [vmem:[%s386 + $0x58] sm:$0xff] %vm964, %v8133
      %8166 = vst.msk [vmem:[%s386 + $0x60] sm:$0xff] %vm964, %v8134
      %8167 = vst.msk [vmem:[%s386 + $0x68] sm:$0xff] %vm964, %v8135
      %8168 = vst.msk [vmem:[%s386 + $0x70] sm:$0xff] %vm964, %v8136
      %8169 = vst.msk [vmem:[%s386 + $0x78] sm:$0xff] %vm964, %v8137
      %8170 = vst.msk [vmem:[%s386 + $0x80] sm:$0xff] %vm964, %v8138
      %8171 = vst.msk [vmem:[%s386 + $0x88] sm:$0xff] %vm964, %v8139
      %8172 = vst.msk [vmem:[%s386 + $0x90] sm:$0xff] %vm964, %v8140
      %8173 = vst.msk [vmem:[%s386 + $0x98] sm:$0xff] %vm964, %v8141
      %8174 = vst.msk [vmem:[%s386 + $0xa0] sm:$0xff] %vm964, %v8142
      %8175 = vst.msk [vmem:[%s386 + $0xa8] sm:$0xff] %vm964, %v8143
      %8176 = vst.msk [vmem:[%s386 + $0xb0] sm:$0xff] %vm964, %v8144
      %8177 = vst.msk [vmem:[%s386 + $0xb8] sm:$0xff] %vm964, %v8145
      %8178 = vst.msk [vmem:[%s386 + $0xc0] sm:$0xff] %vm964, %v8146
      %8179 = vst.msk [vmem:[%s386 + $0xc8] sm:$0xff] %vm964, %v8147
      %8180 = vst.msk [vmem:[%s386 + $0xd0] sm:$0xff] %vm964, %v8148
      %8181 = vst.msk [vmem:[%s386 + $0xd8] sm:$0xff] %vm964, %v8149
      %8182 = vst.msk [vmem:[%s386 + $0xe0] sm:$0xff] %vm964, %v8150
      %8183 = vst.msk [vmem:[%s386 + $0xe8] sm:$0xff] %vm964, %v8151
      %8184 = vst.msk [vmem:[%s386 + $0xf0] sm:$0xff] %vm964, %v8152
      %8185 = vst.msk [vmem:[%s386 + $0xf8] sm:$0xff] %vm964, %v8153
      %p8186 = scmp.lt.s32.totalorder %s22, 1
      %s8187 = scalar_select %p8186, %s22, 1
      %s8188 = smul.addr %s8187, 32
      %s8189 = smul.addr %s8188, 8
      %s8190 = scalar_lea.vmem %s11, %s8189
      // Predicated region
      $region65: #{inception_res_a_forward.1} parent=63 // pred_check
        %p8191 = pneg %p276
      $region66: #{inception_res_a_forward.1} parent=63 // pred_check_branch
        %8193 = sbr.rel (%p8191) target = $region68
      $region67: #{inception_res_a_forward.1} parent=63 // pred_region
        _
      $region68: #{inception_res_a_forward.1} parent=63 // pred_fallthru
        _
    $region64: #{inception_res_a_forward.1} parent=5 // pred_fallthru
      _
    %p8194 = scmp.le.s32.totalorder 2, %s17
    // Predicated region
    $region69: #{inception_res_a_forward.1} parent=5 // pred_check
      %p8195 = pneg %p8194
    $region70: #{inception_res_a_forward.1} parent=5 // pred_check_branch
      %8197 = sbr.rel (%p8195) target = $region72
    $region71: #{inception_res_a_forward.1} parent=5 // pred_region
      %s8198 = ssub.s32 %s17, 2
      // Predicated region
      $region73: #{inception_res_a_forward.1} parent=71 // pred_check
        %p8199 = pneg %p282
      $region74: #{inception_res_a_forward.1} parent=71 // pred_check_branch
        %8201 = sbr.rel (%p8199) target = $region76
      $region75: #{inception_res_a_forward.1} parent=71 // pred_region
        %p8202 = scmp.lt.s32.totalorder %s23, 1
        %s8203 = scalar_select %p8202, %s23, 1
        %s8204 = smul.addr %s8203, 32
        %s8205 = smul.addr %s8204, 8
        %s8206 = scalar_lea.vmem %s11, %s8205
      $region76: #{inception_res_a_forward.1} parent=71 // pred_fallthru
        _
    $region72: #{inception_res_a_forward.1} parent=5 // pred_fallthru
      _
  $region6: #{inception_res_a_forward.1} parent=0 // loop_footer
    %s21 = sadd.s32 1, %s17
  $region7: #{inception_res_a_forward.1} parent=0 // loop_footer_branch
    %16 = sbr.rel target = $region3
  $region8: #{inception_res_a_forward.1} parent=0 // loop_exit
    _

</llo_original>
